<compile_context>
chip_gen: v6e
topology: v6e:2x2x1
jax: 0.10.0
libtpu: 0.0.40
codegen_flags: <defaults>
</compile_context>

<pallas_src>
import math
import jax
import jax.numpy as jnp
from jax import lax
from jax.experimental import pallas as pl
from jax.experimental.pallas import tpu as pltpu

# ---------------- small synthetic Qwen2-style config ----------------
B, S, D = 2, 8, 32          # batch, seq, hidden
H, DH = 4, 8                # heads, head_dim (D == H * DH)
HALF = DH // 2
FF = 64                     # MLP inner dim
V = 256                     # synthetic vocab (real model: 196042)
N_LAYERS = 2
EPS = 1e-6
BS = B * S
TV = 256                    # vocab tile (512 on v6e / 256-512 on v7x at real vocab)

assert D == H * DH


# ---------------- Pallas kernels ----------------
def _rms(x, gamma):
    return x * lax.rsqrt(jnp.mean(x * x, axis=-1, keepdims=True) + EPS) * gamma


def decoder_kernel(x_ref, cos_ref, sin_ref, bias_ref, fg_ref,
                   g1_ref, wqkv_ref, bqkv_ref, wo_ref, g2_ref, wgu_ref, wd_ref,
                   o_ref):
    """All decoder layers + final RMSNorm in a single grid step.

    Activations are a (B*S, D) slab; all stacked layer weights sit in VMEM for
    the whole call.  The layer loop is a compile-time Python loop (fully
    unrolled, full LLO scheduler visibility)."""
    x = x_ref[...].astype(jnp.float32)            # (BS, D) carry
    cos = cos_ref[...]                            # (BS, D)
    sin = sin_ref[...]                            # (BS, D), sign-folded
    bias = bias_ref[...]                          # (BS, BS) additive causal+batch mask

    for l in range(N_LAYERS):
        # ---- RMSNorm (pre-attention), f32 ----
        xn = _rms(x, g1_ref[l])

        # ---- fused QKV: one bf16 MXU pass + fused bias (scale & head-perm
        #      already folded into the weight columns at pack time) ----
        qkv = jnp.dot(xn.astype(jnp.bfloat16), wqkv_ref[l],
                      preferred_element_type=jnp.float32) + bqkv_ref[l]
        q = qkv[:, :D]
        k = qkv[:, D:2 * D]
        v = qkv[:, 2 * D:]

        # ---- RoPE: rotate-half == full-width rotate by D//2 (thanks to the
        #      pack-time column permutation) with sign folded into `sin`.
        # TODO(synk): at production dims (D a multiple of 128) replace the
        # slice-swap with pltpu.roll(q, shift=D // 2, axis=-1) (XLU slot).
        q = q * cos + jnp.concatenate([q[:, D // 2:], q[:, :D // 2]], axis=1) * sin
        k = k * cos + jnp.concatenate([k[:, D // 2:], k[:, :D // 2]], axis=1) * sin

        # ---- attention: heads as a batch dim of the einsums.  The permuted
        #      layout splits each true head into two HALF-wide pseudo-heads;
        #      per-head scores are the sum of the two pseudo-head scores. ----
        q3 = q.reshape(BS, 2 * H, HALF).astype(jnp.bfloat16)
        k3 = k.reshape(BS, 2 * H, HALF).astype(jnp.bfloat16)
        sp = jnp.einsum('qpc,kpc->pqk', q3, k3,
                        preferred_element_type=jnp.float32)      # (2H, BS, BS)
        s = sp[:H] + sp[H:] + bias[None]          # scale pre-folded into wq/bq

        m = jnp.max(s, axis=-1, keepdims=True)
        p = jnp.exp(s - m)
        denom = jnp.sum(p, axis=-1)                               # (H, BS)

        v3 = v.reshape(BS, H, DH).astype(jnp.bfloat16)
        attn = jnp.einsum('hqk,khd->qhd', p.astype(jnp.bfloat16), v3,
                          preferred_element_type=jnp.float32)     # (BS, H, DH)
        # normalize the small (BS, H, DH) output, not the (H, BS, BS) P matrix
        inv = pl.reciprocal(denom, approx=False)                  # exact
        attn = (attn * inv.T[:, :, None]).reshape(BS, D)

        h1 = x + jnp.dot(attn.astype(jnp.bfloat16), wo_ref[l],
                         preferred_element_type=jnp.float32)

        # ---- RMSNorm (pre-MLP) + fused SwiGLU MLP ----
        hn = _rms(h1, g2_ref[l])
        gu = jnp.dot(hn.astype(jnp.bfloat16), wgu_ref[l],
                     preferred_element_type=jnp.float32)          # (BS, 2*FF)
        gate = gu[:, :FF]
        up = gu[:, FF:]
        act = gate * jax.nn.sigmoid(gate) * up                    # SiLU(gate)*up
        x = h1 + jnp.dot(act.astype(jnp.bfloat16), wd_ref[l],
                         preferred_element_type=jnp.float32)

    # final RMSNorm; emit bf16 to halve the HBM round-trip into the LM head
    o_ref[...] = _rms(x, fg_ref[...]).astype(o_ref.dtype)


def lm_head_kernel(xn_ref, w_ref, o_ref):
    """LM-head matmul (norm already applied); tiled over the (padded) vocab."""
    o_ref[...] = jnp.dot(xn_ref[...], w_ref[...],
                         preferred_element_type=jnp.float32).astype(o_ref.dtype)


# ---------------- wrappers ----------------
def run_decoder(x2d, p):
    # Single grid step: whole (tiny) weight stack resident in VMEM.
    return pl.pallas_call(
        decoder_kernel,
        out_shape=jax.ShapeDtypeStruct((BS, D), jnp.bfloat16),
        compiler_params=pltpu.CompilerParams(vmem_limit_bytes=32 * 1024 * 1024),
    )(x2d, p['cos'], p['sin_signed'], p['attn_bias'], p['final_gamma'],
      p['g1'], p['w_qkv'], p['b_qkv'], p['wo'], p['g2'], p['w_gu'], p['wd'])


def run_lm_head(xn2d, w_lm_pad):
    vp = w_lm_pad.shape[1]
    logits = pl.pallas_call(
        lm_head_kernel,
        out_shape=jax.ShapeDtypeStruct((BS, vp), jnp.float32),
        grid=(vp // TV,),
        in_specs=[
            pl.BlockSpec((BS, D), lambda j: (0, 0)),
            pl.BlockSpec((D, TV), lambda j: (0, j)),
        ],
        out_specs=pl.BlockSpec((BS, TV), lambda j: (0, j)),
        compiler_params=pltpu.CompilerParams(
            dimension_semantics=("parallel",),     # v7x: vocab tiles shard across TCs
            vmem_limit_bytes=32 * 1024 * 1024),
    )(xn2d, w_lm_pad)
    return logits[:, :V].reshape(B, S, V)


def sketch_decoder_forward(token_ids, packed):
    # TODO(synk): token-embedding gather stays in plain JAX (data-dependent gather).
    x = packed['embed'][token_ids].reshape(BS, D)     # (B*S, D)
    xn = run_decoder(x, packed)                       # final-normed hidden, bf16
    return run_lm_head(xn, packed['w_lm'])


# ---------------- pure-JAX f32 reference (for correctness check) ----------------
def _rot_half(t):
    t1 = t[..., :HALF]
    t2 = t[..., HALF:]
    return jnp.concatenate([-t2, t1], axis=-1)


def _ref_forward(token_ids, params):
    x = params['embed'][token_ids].astype(jnp.float32)
    cos = params['cos'][None, :, :]
    sin = params['sin'][None, :, :]
    row = jnp.arange(S)[:, None]
    col = jnp.arange(S)[None, :]
    causal = (col <= row)[None, :, :]
    for (g1, wq, bq, wk, bk, wv, bv, wo, g2, wg, wu, wd) in params['layers']:
        var1 = jnp.mean(x * x, -1, keepdims=True)
        xn = x * lax.rsqrt(var1 + EPS) * g1
        q = xn @ wq + bq
        k = xn @ wk + bk
        v = xn @ wv + bv
        outs = []
        for h in range(H):
            lo, hi = h * DH, (h + 1) * DH
            qh, kh, vh = q[..., lo:hi], k[..., lo:hi], v[..., lo:hi]
            qh = qh * cos + _rot_half(qh) * sin
            kh = kh * cos + _rot_half(kh) * sin
            s_h = jnp.einsum('bqe,bke->bqk', qh, kh) / math.sqrt(DH)
            s_h = jnp.where(causal, s_h, -1e30)
            prob = jax.nn.softmax(s_h, axis=-1)
            outs.append(jnp.einsum('bqk,bke->bqe', prob, vh))
        h1 = x + jnp.concatenate(outs, -1) @ wo
        var2 = jnp.mean(h1 * h1, -1, keepdims=True)
        hn = h1 * lax.rsqrt(var2 + EPS) * g2
        gate, up = hn @ wg, hn @ wu
        x = h1 + (gate * jax.nn.sigmoid(gate) * up) @ wd
    var = jnp.mean(x * x, -1, keepdims=True)
    xn = x * lax.rsqrt(var + EPS) * params['final_gamma']
    return xn @ params['w_lm']


# ---------------- deterministic parameter init + packing ----------------
def init_params(key):
    def nrm(k, shape, scale=0.02):
        return (scale * jax.random.normal(k, shape)).astype(jnp.float32)

    keys = jax.random.split(key, 4 + N_LAYERS)
    params = {
        'embed': nrm(keys[0], (V, D)),
        'final_gamma': jnp.ones((1, D), jnp.float32),
        'w_lm': nrm(keys[1], (D, V)),
    }
    # RoPE tables (per-head width DH, Qwen2 "concat halves" convention)
    inv_freq = 1.0 / (10000.0 ** (jnp.arange(0, DH, 2, dtype=jnp.float32) / DH))
    ang = jnp.arange(S, dtype=jnp.float32)[:, None] * inv_freq[None, :]
    params['cos'] = jnp.concatenate([jnp.cos(ang), jnp.cos(ang)], -1)   # (S, DH)
    params['sin'] = jnp.concatenate([jnp.sin(ang), jnp.sin(ang)], -1)

    layers = []
    for li in range(N_LAYERS):
        lk = jax.random.split(keys[4 + li], 12)
        layers.append((
            jnp.ones((1, D), jnp.float32),       # g1
            nrm(lk[0], (D, D)),                  # wq
            nrm(lk[1], (1, D), 0.01),            # bq
            nrm(lk[2], (D, D)),                  # wk
            nrm(lk[3], (1, D), 0.01),            # bk
            nrm(lk[4], (D, D)),                  # wv
            nrm(lk[5], (1, D), 0.01),            # bv
            nrm(lk[6], (D, D)),                  # wo
            jnp.ones((1, D), jnp.float32),       # g2
            nrm(lk[7], (D, FF)),                 # w_gate
            nrm(lk[8], (D, FF)),                 # w_up
            nrm(lk[9], (FF, D)),                 # w_down
        ))
    params['layers'] = layers
    return params


def pack_params(params):
    """Kernel-side parameters: fused QKV / gate-up stacked over a layer axis,
    bf16 matmul weights, 1/sqrt(DH) and the RoPE head-permutation + sin sign
    folded in at pack time, precomputed causal+batch mask, padded LM head."""
    scale = 1.0 / math.sqrt(DH)
    # column permutation: all heads' first halves, then all heads' second halves
    perm = ([h * DH + c for h in range(H) for c in range(HALF)]
            + [h * DH + HALF + c for h in range(H) for c in range(HALF)])
    perm = jnp.array(perm, dtype=jnp.int32)

    g1s, wqkvs, bqkvs, wos, g2s, wgus, wds = [], [], [], [], [], [], []
    for (g1, wq, bq, wk, bk, wv, bv, wo, g2, wg, wu, wd) in params['layers']:
        wq_p = (wq * scale)[:, perm]             # score scale folded into q proj
        bq_p = (bq * scale)[:, perm]
        wk_p = wk[:, perm]
        bk_p = bk[:, perm]
        g1s.append(g1)
        wqkvs.append(jnp.concatenate([wq_p, wk_p, wv], axis=1))   # (D, 3D)
        bqkvs.append(jnp.concatenate([bq_p, bk_p, bv], axis=1))   # (1, 3D)
        wos.append(wo)
        g2s.append(g2)
        wgus.append(jnp.concatenate([wg, wu], axis=1))            # (D, 2FF)
        wds.append(wd)

    # RoPE tables in the permuted layout (cos identical pattern; sin sign-folded:
    # first D/2 channels carry -sin, second D/2 carry +sin).
    cos_half = params['cos'][:, :HALF]                            # (S, HALF)
    sin_half = params['sin'][:, :HALF]
    cos_p = jnp.tile(cos_half, (1, 2 * H))                        # (S, D)
    sin_signed = jnp.concatenate([-jnp.tile(sin_half, (1, H)),
                                  jnp.tile(sin_half, (1, H))], axis=1)

    # causal + same-batch additive mask for the batch-folded (BS, BS) scores
    r = jnp.arange(BS)
    same = (r[:, None] // S) == (r[None, :] // S)
    causal = (r[None, :] % S) <= (r[:, None] % S)
    attn_bias = jnp.where(same & causal, 0.0, -1e30).astype(jnp.float32)

    # LM head: pad vocab to a TV multiple (handles the real 196042 vocab too)
    v_pad = ((V + TV - 1) // TV) * TV
    w_lm = params['w_lm']
    if v_pad != V:
        w_lm = jnp.pad(w_lm, ((0, 0), (0, v_pad - V)))

    return {
        'embed': params['embed'],
        'final_gamma': params['final_gamma'],
        'w_lm': w_lm.astype(jnp.bfloat16),                        # (D, V_pad)
        'cos': jnp.tile(cos_p, (B, 1)),                           # (B*S, D)
        'sin_signed': jnp.tile(sin_signed, (B, 1)),               # (B*S, D)
        'attn_bias': attn_bias,                                   # (B*S, B*S)
        'g1': jnp.stack(g1s),                                     # (L, 1, D)
        'w_qkv': jnp.stack(wqkvs).astype(jnp.bfloat16),           # (L, D, 3D)
        'b_qkv': jnp.stack(bqkvs),                                # (L, 1, 3D)
        'wo': jnp.stack(wos).astype(jnp.bfloat16),                # (L, D, D)
        'g2': jnp.stack(g2s),                                     # (L, 1, D)
        'w_gu': jnp.stack(wgus).astype(jnp.bfloat16),             # (L, D, 2FF)
        'wd': jnp.stack(wds).astype(jnp.bfloat16),                # (L, FF, D)
    }


if __name__ == "__main__":
    key = jax.random.PRNGKey(0)
    pkey, tkey = jax.random.split(key)
    params = init_params(pkey)
    packed = pack_params(params)
    token_ids = jax.random.randint(tkey, (B, S), 0, V, dtype=jnp.int32)

    logits = sketch_decoder_forward(token_ids, packed)
    logits = jax.block_until_ready(logits)

    ref = _ref_forward(token_ids, params)
    assert logits.shape == (B, S, V)
    assert bool(jnp.all(jnp.isfinite(logits)))
    # tolerance covers the intentional bf16 weight/activation storage
    assert bool(jnp.allclose(logits, ref, atol=5e-2, rtol=5e-2)), "mismatch vs reference"

    # TODO(synk): original forward() is NotImplementedError upstream; HF
    # checkpoint loading / resize_token_embeddings has no kernel equivalent.
    print("KERNEL_OK")
</pallas_src>

<mosaic_0001>
module attributes {stable_mosaic.version = 11 : i64} {
  func.func @decoder_kernel(%arg0: memref<16x32xf32, #tpu.memory_space<vmem>>, %arg1: memref<16x32xf32, #tpu.memory_space<vmem>>, %arg2: memref<16x32xf32, #tpu.memory_space<vmem>>, %arg3: memref<16x16xf32, #tpu.memory_space<vmem>>, %arg4: memref<1x32xf32, #tpu.memory_space<vmem>>, %arg5: memref<2x1x32xf32, #tpu.memory_space<vmem>>, %arg6: memref<2x32x96xbf16, #tpu.memory_space<vmem>>, %arg7: memref<2x1x96xf32, #tpu.memory_space<vmem>>, %arg8: memref<2x32x32xbf16, #tpu.memory_space<vmem>>, %arg9: memref<2x1x32xf32, #tpu.memory_space<vmem>>, %arg10: memref<2x32x128xbf16, #tpu.memory_space<vmem>>, %arg11: memref<2x64x32xbf16, #tpu.memory_space<vmem>>, %arg12: memref<16x32xbf16, #tpu.memory_space<vmem>>) attributes {dimension_semantics = [], scalar_prefetch = 0 : i64, scratch_operands = 0 : i64, tpu.core_type = #tpu.core_type<tc>} {
    %c0 = arith.constant 0 : index
    %c0_0 = arith.constant 0 : index
    %0 = vector.load %arg0[%c0, %c0_0] : memref<16x32xf32, #tpu.memory_space<vmem>>, vector<16x32xf32>
    %c0_1 = arith.constant 0 : index
    %c0_2 = arith.constant 0 : index
    %1 = vector.load %arg1[%c0_1, %c0_2] : memref<16x32xf32, #tpu.memory_space<vmem>>, vector<16x32xf32>
    %c0_3 = arith.constant 0 : index
    %c0_4 = arith.constant 0 : index
    %2 = vector.load %arg2[%c0_3, %c0_4] : memref<16x32xf32, #tpu.memory_space<vmem>>, vector<16x32xf32>
    %c0_5 = arith.constant 0 : index
    %c0_6 = arith.constant 0 : index
    %3 = vector.load %arg3[%c0_5, %c0_6] : memref<16x16xf32, #tpu.memory_space<vmem>>, vector<16x16xf32>
    %c0_7 = arith.constant 0 : index
    %c0_8 = arith.constant 0 : index
    %c0_9 = arith.constant 0 : index
    %4 = vector.load %arg5[%c0_7, %c0_8, %c0_9] : memref<2x1x32xf32, #tpu.memory_space<vmem>>, vector<1x1x32xf32>
    %5 = vector.shape_cast %4 : vector<1x1x32xf32> to vector<1x32xf32>
    %6 = arith.mulf %0, %0 : vector<16x32xf32>
    %cst = arith.constant dense<0.000000e+00> : vector<16xf32>
    %7 = vector.multi_reduction <add>, %6, %cst [1] : vector<16x32xf32> to vector<16xf32>
    %8 = vector.shape_cast %7 : vector<16xf32> to vector<16x1xf32>
    %cst_10 = arith.constant 3.200000e+01 : f32
    %9 = vector.broadcast %cst_10 : f32 to vector<16x1xf32>
    %10 = arith.divf %8, %9 : vector<16x1xf32>
    %cst_11 = arith.constant 9.99999997E-7 : f32
    %11 = vector.broadcast %cst_11 : f32 to vector<16x1xf32>
    %12 = arith.addf %10, %11 : vector<16x1xf32>
    %13 = math.rsqrt %12 : vector<16x1xf32>
    %14 = vector.broadcast %13 : vector<16x1xf32> to vector<16x32xf32>
    %15 = arith.mulf %0, %14 : vector<16x32xf32>
    %16 = vector.broadcast %5 : vector<1x32xf32> to vector<16x32xf32>
    %17 = arith.mulf %15, %16 : vector<16x32xf32>
    %18 = arith.truncf %17 : vector<16x32xf32> to vector<16x32xbf16>
    %c0_12 = arith.constant 0 : index
    %c0_13 = arith.constant 0 : index
    %c0_14 = arith.constant 0 : index
    %19 = vector.load %arg6[%c0_12, %c0_13, %c0_14] : memref<2x32x96xbf16, #tpu.memory_space<vmem>>, vector<1x32x96xbf16>
    %20 = vector.shape_cast %19 : vector<1x32x96xbf16> to vector<32x96xbf16>
    %cst_15 = arith.constant dense<0.000000e+00> : vector<16x96xf32>
    %21 = tpu.matmul %18, %20, %cst_15 {dimension_numbers = #tpu.dot_dimension_numbers<[1], [0], [0], [1], [0, 0, 1, 1], [], []>} : vector<16x32xbf16>, vector<32x96xbf16>, vector<16x96xf32> -> vector<16x96xf32>
    %c0_16 = arith.constant 0 : index
    %c0_17 = arith.constant 0 : index
    %c0_18 = arith.constant 0 : index
    %22 = vector.load %arg7[%c0_16, %c0_17, %c0_18] : memref<2x1x96xf32, #tpu.memory_space<vmem>>, vector<1x1x96xf32>
    %23 = vector.shape_cast %22 : vector<1x1x96xf32> to vector<1x96xf32>
    %24 = vector.broadcast %23 : vector<1x96xf32> to vector<16x96xf32>
    %25 = arith.addf %21, %24 : vector<16x96xf32>
    %26 = vector.extract_strided_slice %25 {offsets = [0, 0], sizes = [16, 32], strides = [1, 1]} : vector<16x96xf32> to vector<16x32xf32>
    %27 = vector.extract_strided_slice %25 {offsets = [0, 32], sizes = [16, 32], strides = [1, 1]} : vector<16x96xf32> to vector<16x32xf32>
    %28 = vector.extract_strided_slice %25 {offsets = [0, 64], sizes = [16, 32], strides = [1, 1]} : vector<16x96xf32> to vector<16x32xf32>
    %29 = arith.mulf %26, %1 : vector<16x32xf32>
    %30 = vector.extract_strided_slice %26 {offsets = [0, 16], sizes = [16, 16], strides = [1, 1]} : vector<16x32xf32> to vector<16x16xf32>
    %31 = vector.extract_strided_slice %26 {offsets = [0, 0], sizes = [16, 16], strides = [1, 1]} : vector<16x32xf32> to vector<16x16xf32>
    %32 = tpu.concatenate %30, %31 in 1 : vector<16x16xf32>, vector<16x16xf32> -> vector<16x32xf32>
    %33 = arith.mulf %32, %2 : vector<16x32xf32>
    %34 = arith.addf %29, %33 : vector<16x32xf32>
    %35 = arith.mulf %27, %1 : vector<16x32xf32>
    %36 = vector.extract_strided_slice %27 {offsets = [0, 16], sizes = [16, 16], strides = [1, 1]} : vector<16x32xf32> to vector<16x16xf32>
    %37 = vector.extract_strided_slice %27 {offsets = [0, 0], sizes = [16, 16], strides = [1, 1]} : vector<16x32xf32> to vector<16x16xf32>
    %38 = tpu.concatenate %36, %37 in 1 : vector<16x16xf32>, vector<16x16xf32> -> vector<16x32xf32>
    %39 = arith.mulf %38, %2 : vector<16x32xf32>
    %40 = arith.addf %35, %39 : vector<16x32xf32>
    %41 = vector.shape_cast %34 : vector<16x32xf32> to vector<16x8x4xf32>
    %42 = arith.truncf %41 : vector<16x8x4xf32> to vector<16x8x4xbf16>
    %43 = vector.shape_cast %40 : vector<16x32xf32> to vector<16x8x4xf32>
    %44 = arith.truncf %43 : vector<16x8x4xf32> to vector<16x8x4xbf16>
    "tpu.trace_start"() <{level = 10 : i32, message = "qpc,kpc->pqk"}> : () -> ()
    %cst_19 = arith.constant dense<0.000000e+00> : vector<8x16x16xf32>
    %45 = tpu.matmul %42, %44, %cst_19 {dimension_numbers = #tpu.dot_dimension_numbers<[2], [2], [0], [0], [0, 1, 0, 0, 1, 0], [1], [1]>} : vector<16x8x4xbf16>, vector<16x8x4xbf16>, vector<8x16x16xf32> -> vector<8x16x16xf32>
    "tpu.trace_stop"() : () -> ()
    %46 = vector.extract_strided_slice %45 {offsets = [0, 0, 0], sizes = [4, 16, 16], strides = [1, 1, 1]} : vector<8x16x16xf32> to vector<4x16x16xf32>
    %47 = vector.extract_strided_slice %45 {offsets = [4, 0, 0], sizes = [4, 16, 16], strides = [1, 1, 1]} : vector<8x16x16xf32> to vector<4x16x16xf32>
    %48 = arith.addf %46, %47 : vector<4x16x16xf32>
    %49 = vector.shape_cast %3 : vector<16x16xf32> to vector<1x16x16xf32>
    %50 = vector.broadcast %49 : vector<1x16x16xf32> to vector<4x16x16xf32>
    %51 = arith.addf %48, %50 : vector<4x16x16xf32>
    %cst_20 = arith.constant dense<0xFF800000> : vector<4x16xf32>
    %52 = vector.multi_reduction <maximumf>, %51, %cst_20 [2] : vector<4x16x16xf32> to vector<4x16xf32>
    %53 = vector.shape_cast %52 : vector<4x16xf32> to vector<4x16x1xf32>
    %54 = vector.broadcast %53 : vector<4x16x1xf32> to vector<4x16x16xf32>
    %55 = arith.subf %51, %54 : vector<4x16x16xf32>
    %56 = math.exp %55 : vector<4x16x16xf32>
    %cst_21 = arith.constant dense<0.000000e+00> : vector<4x16xf32>
    %57 = vector.multi_reduction <add>, %56, %cst_21 [2] : vector<4x16x16xf32> to vector<4x16xf32>
    %58 = vector.shape_cast %28 : vector<16x32xf32> to vector<16x4x8xf32>
    %59 = arith.truncf %58 : vector<16x4x8xf32> to vector<16x4x8xbf16>
    %60 = arith.truncf %56 : vector<4x16x16xf32> to vector<4x16x16xbf16>
    "tpu.trace_start"() <{level = 10 : i32, message = "hqk,khd->qhd"}> : () -> ()
    %cst_22 = arith.constant dense<0.000000e+00> : vector<4x8x16xf32>
    %61 = tpu.matmul %59, %60, %cst_22 {dimension_numbers = #tpu.dot_dimension_numbers<[0], [2], [2], [1], [0, 1, 0, 2, 1, 1], [1], [0]>} : vector<16x4x8xbf16>, vector<4x16x16xbf16>, vector<4x8x16xf32> -> vector<4x8x16xf32>
    %62 = tpu.transpose %61, [2, 0, 1] : vector<4x8x16xf32> -> vector<16x4x8xf32>
    "tpu.trace_stop"() : () -> ()
    %63 = tpu.reciprocal %57 : vector<4x16xf32> -> vector<4x16xf32>
    %64 = tpu.transpose %63, [1, 0] : vector<4x16xf32> -> vector<16x4xf32>
    %65 = vector.shape_cast %64 : vector<16x4xf32> to vector<16x4x1xf32>
    %66 = vector.broadcast %65 : vector<16x4x1xf32> to vector<16x4x8xf32>
    %67 = arith.mulf %62, %66 : vector<16x4x8xf32>
    %68 = vector.shape_cast %67 : vector<16x4x8xf32> to vector<16x32xf32>
    %69 = arith.truncf %68 : vector<16x32xf32> to vector<16x32xbf16>
    %c0_23 = arith.constant 0 : index
    %c0_24 = arith.constant 0 : index
    %c0_25 = arith.constant 0 : index
    %70 = vector.load %arg8[%c0_23, %c0_24, %c0_25] : memref<2x32x32xbf16, #tpu.memory_space<vmem>>, vector<1x32x32xbf16>
    %71 = vector.shape_cast %70 : vector<1x32x32xbf16> to vector<32x32xbf16>
    %cst_26 = arith.constant dense<0.000000e+00> : vector<16x32xf32>
    %72 = tpu.matmul %69, %71, %cst_26 {dimension_numbers = #tpu.dot_dimension_numbers<[1], [0], [0], [1], [0, 0, 1, 1], [], []>} : vector<16x32xbf16>, vector<32x32xbf16>, vector<16x32xf32> -> vector<16x32xf32>
    %73 = arith.addf %0, %72 : vector<16x32xf32>
    %c0_27 = arith.constant 0 : index
    %c0_28 = arith.constant 0 : index
    %c0_29 = arith.constant 0 : index
    %74 = vector.load %arg9[%c0_27, %c0_28, %c0_29] : memref<2x1x32xf32, #tpu.memory_space<vmem>>, vector<1x1x32xf32>
    %75 = vector.shape_cast %74 : vector<1x1x32xf32> to vector<1x32xf32>
    %76 = arith.mulf %73, %73 : vector<16x32xf32>
    %cst_30 = arith.constant dense<0.000000e+00> : vector<16xf32>
    %77 = vector.multi_reduction <add>, %76, %cst_30 [1] : vector<16x32xf32> to vector<16xf32>
    %78 = vector.shape_cast %77 : vector<16xf32> to vector<16x1xf32>
    %cst_31 = arith.constant 3.200000e+01 : f32
    %79 = vector.broadcast %cst_31 : f32 to vector<16x1xf32>
    %80 = arith.divf %78, %79 : vector<16x1xf32>
    %cst_32 = arith.constant 9.99999997E-7 : f32
    %81 = vector.broadcast %cst_32 : f32 to vector<16x1xf32>
    %82 = arith.addf %80, %81 : vector<16x1xf32>
    %83 = math.rsqrt %82 : vector<16x1xf32>
    %84 = vector.broadcast %83 : vector<16x1xf32> to vector<16x32xf32>
    %85 = arith.mulf %73, %84 : vector<16x32xf32>
    %86 = vector.broadcast %75 : vector<1x32xf32> to vector<16x32xf32>
    %87 = arith.mulf %85, %86 : vector<16x32xf32>
    %88 = arith.truncf %87 : vector<16x32xf32> to vector<16x32xbf16>
    %c0_33 = arith.constant 0 : index
    %c0_34 = arith.constant 0 : index
    %c0_35 = arith.constant 0 : index
    %89 = vector.load %arg10[%c0_33, %c0_34, %c0_35] : memref<2x32x128xbf16, #tpu.memory_space<vmem>>, vector<1x32x128xbf16>
    %90 = vector.shape_cast %89 : vector<1x32x128xbf16> to vector<32x128xbf16>
    %cst_36 = arith.constant dense<0.000000e+00> : vector<16x128xf32>
    %91 = tpu.matmul %88, %90, %cst_36 {dimension_numbers = #tpu.dot_dimension_numbers<[1], [0], [0], [1], [0, 0, 1, 1], [], []>} : vector<16x32xbf16>, vector<32x128xbf16>, vector<16x128xf32> -> vector<16x128xf32>
    %92 = vector.extract_strided_slice %91 {offsets = [0, 0], sizes = [16, 64], strides = [1, 1]} : vector<16x128xf32> to vector<16x64xf32>
    %93 = vector.extract_strided_slice %91 {offsets = [0, 64], sizes = [16, 64], strides = [1, 1]} : vector<16x128xf32> to vector<16x64xf32>
    %94 = arith.negf %92 : vector<16x64xf32>
    %95 = math.exp %94 : vector<16x64xf32>
    %cst_37 = arith.constant 1.000000e+00 : f32
    %96 = vector.broadcast %cst_37 : f32 to vector<16x64xf32>
    %97 = arith.addf %96, %95 : vector<16x64xf32>
    %98 = arith.divf %96, %97 : vector<16x64xf32>
    %99 = arith.mulf %92, %98 : vector<16x64xf32>
    %100 = arith.mulf %99, %93 : vector<16x64xf32>
    %101 = arith.truncf %100 : vector<16x64xf32> to vector<16x64xbf16>
    %c0_38 = arith.constant 0 : index
    %c0_39 = arith.constant 0 : index
    %c0_40 = arith.constant 0 : index
    %102 = vector.load %arg11[%c0_38, %c0_39, %c0_40] : memref<2x64x32xbf16, #tpu.memory_space<vmem>>, vector<1x64x32xbf16>
    %103 = vector.shape_cast %102 : vector<1x64x32xbf16> to vector<64x32xbf16>
    %cst_41 = arith.constant dense<0.000000e+00> : vector<16x32xf32>
    %104 = tpu.matmul %101, %103, %cst_41 {dimension_numbers = #tpu.dot_dimension_numbers<[1], [0], [0], [1], [0, 0, 1, 1], [], []>} : vector<16x64xbf16>, vector<64x32xbf16>, vector<16x32xf32> -> vector<16x32xf32>
    %105 = arith.addf %73, %104 : vector<16x32xf32>
    %c1 = arith.constant 1 : index
    %c0_42 = arith.constant 0 : index
    %c0_43 = arith.constant 0 : index
    %106 = vector.load %arg5[%c1, %c0_42, %c0_43] : memref<2x1x32xf32, #tpu.memory_space<vmem>>, vector<1x1x32xf32>
    %107 = vector.shape_cast %106 : vector<1x1x32xf32> to vector<1x32xf32>
    %108 = arith.mulf %105, %105 : vector<16x32xf32>
    %cst_44 = arith.constant dense<0.000000e+00> : vector<16xf32>
    %109 = vector.multi_reduction <add>, %108, %cst_44 [1] : vector<16x32xf32> to vector<16xf32>
    %110 = vector.shape_cast %109 : vector<16xf32> to vector<16x1xf32>
    %cst_45 = arith.constant 3.200000e+01 : f32
    %111 = vector.broadcast %cst_45 : f32 to vector<16x1xf32>
    %112 = arith.divf %110, %111 : vector<16x1xf32>
    %cst_46 = arith.constant 9.99999997E-7 : f32
    %113 = vector.broadcast %cst_46 : f32 to vector<16x1xf32>
    %114 = arith.addf %112, %113 : vector<16x1xf32>
    %115 = math.rsqrt %114 : vector<16x1xf32>
    %116 = vector.broadcast %115 : vector<16x1xf32> to vector<16x32xf32>
    %117 = arith.mulf %105, %116 : vector<16x32xf32>
    %118 = vector.broadcast %107 : vector<1x32xf32> to vector<16x32xf32>
    %119 = arith.mulf %117, %118 : vector<16x32xf32>
    %120 = arith.truncf %119 : vector<16x32xf32> to vector<16x32xbf16>
    %c1_47 = arith.constant 1 : index
    %c0_48 = arith.constant 0 : index
    %c0_49 = arith.constant 0 : index
    %121 = vector.load %arg6[%c1_47, %c0_48, %c0_49] : memref<2x32x96xbf16, #tpu.memory_space<vmem>>, vector<1x32x96xbf16>
    %122 = vector.shape_cast %121 : vector<1x32x96xbf16> to vector<32x96xbf16>
    %cst_50 = arith.constant dense<0.000000e+00> : vector<16x96xf32>
    %123 = tpu.matmul %120, %122, %cst_50 {dimension_numbers = #tpu.dot_dimension_numbers<[1], [0], [0], [1], [0, 0, 1, 1], [], []>} : vector<16x32xbf16>, vector<32x96xbf16>, vector<16x96xf32> -> vector<16x96xf32>
    %c1_51 = arith.constant 1 : index
    %c0_52 = arith.constant 0 : index
    %c0_53 = arith.constant 0 : index
    %124 = vector.load %arg7[%c1_51, %c0_52, %c0_53] : memref<2x1x96xf32, #tpu.memory_space<vmem>>, vector<1x1x96xf32>
    %125 = vector.shape_cast %124 : vector<1x1x96xf32> to vector<1x96xf32>
    %126 = vector.broadcast %125 : vector<1x96xf32> to vector<16x96xf32>
    %127 = arith.addf %123, %126 : vector<16x96xf32>
    %128 = vector.extract_strided_slice %127 {offsets = [0, 0], sizes = [16, 32], strides = [1, 1]} : vector<16x96xf32> to vector<16x32xf32>
    %129 = vector.extract_strided_slice %127 {offsets = [0, 32], sizes = [16, 32], strides = [1, 1]} : vector<16x96xf32> to vector<16x32xf32>
    %130 = vector.extract_strided_slice %127 {offsets = [0, 64], sizes = [16, 32], strides = [1, 1]} : vector<16x96xf32> to vector<16x32xf32>
    %131 = arith.mulf %128, %1 : vector<16x32xf32>
    %132 = vector.extract_strided_slice %128 {offsets = [0, 16], sizes = [16, 16], strides = [1, 1]} : vector<16x32xf32> to vector<16x16xf32>
    %133 = vector.extract_strided_slice %128 {offsets = [0, 0], sizes = [16, 16], strides = [1, 1]} : vector<16x32xf32> to vector<16x16xf32>
    %134 = tpu.concatenate %132, %133 in 1 : vector<16x16xf32>, vector<16x16xf32> -> vector<16x32xf32>
    %135 = arith.mulf %134, %2 : vector<16x32xf32>
    %136 = arith.addf %131, %135 : vector<16x32xf32>
    %137 = arith.mulf %129, %1 : vector<16x32xf32>
    %138 = vector.extract_strided_slice %129 {offsets = [0, 16], sizes = [16, 16], strides = [1, 1]} : vector<16x32xf32> to vector<16x16xf32>
    %139 = vector.extract_strided_slice %129 {offsets = [0, 0], sizes = [16, 16], strides = [1, 1]} : vector<16x32xf32> to vector<16x16xf32>
    %140 = tpu.concatenate %138, %139 in 1 : vector<16x16xf32>, vector<16x16xf32> -> vector<16x32xf32>
    %141 = arith.mulf %140, %2 : vector<16x32xf32>
    %142 = arith.addf %137, %141 : vector<16x32xf32>
    %143 = vector.shape_cast %136 : vector<16x32xf32> to vector<16x8x4xf32>
    %144 = arith.truncf %143 : vector<16x8x4xf32> to vector<16x8x4xbf16>
    %145 = vector.shape_cast %142 : vector<16x32xf32> to vector<16x8x4xf32>
    %146 = arith.truncf %145 : vector<16x8x4xf32> to vector<16x8x4xbf16>
    "tpu.trace_start"() <{level = 10 : i32, message = "qpc,kpc->pqk"}> : () -> ()
    %cst_54 = arith.constant dense<0.000000e+00> : vector<8x16x16xf32>
    %147 = tpu.matmul %144, %146, %cst_54 {dimension_numbers = #tpu.dot_dimension_numbers<[2], [2], [0], [0], [0, 1, 0, 0, 1, 0], [1], [1]>} : vector<16x8x4xbf16>, vector<16x8x4xbf16>, vector<8x16x16xf32> -> vector<8x16x16xf32>
    "tpu.trace_stop"() : () -> ()
    %148 = vector.extract_strided_slice %147 {offsets = [0, 0, 0], sizes = [4, 16, 16], strides = [1, 1, 1]} : vector<8x16x16xf32> to vector<4x16x16xf32>
    %149 = vector.extract_strided_slice %147 {offsets = [4, 0, 0], sizes = [4, 16, 16], strides = [1, 1, 1]} : vector<8x16x16xf32> to vector<4x16x16xf32>
    %150 = arith.addf %148, %149 : vector<4x16x16xf32>
    %151 = vector.shape_cast %3 : vector<16x16xf32> to vector<1x16x16xf32>
    %152 = vector.broadcast %151 : vector<1x16x16xf32> to vector<4x16x16xf32>
    %153 = arith.addf %150, %152 : vector<4x16x16xf32>
    %cst_55 = arith.constant dense<0xFF800000> : vector<4x16xf32>
    %154 = vector.multi_reduction <maximumf>, %153, %cst_55 [2] : vector<4x16x16xf32> to vector<4x16xf32>
    %155 = vector.shape_cast %154 : vector<4x16xf32> to vector<4x16x1xf32>
    %156 = vector.broadcast %155 : vector<4x16x1xf32> to vector<4x16x16xf32>
    %157 = arith.subf %153, %156 : vector<4x16x16xf32>
    %158 = math.exp %157 : vector<4x16x16xf32>
    %cst_56 = arith.constant dense<0.000000e+00> : vector<4x16xf32>
    %159 = vector.multi_reduction <add>, %158, %cst_56 [2] : vector<4x16x16xf32> to vector<4x16xf32>
    %160 = vector.shape_cast %130 : vector<16x32xf32> to vector<16x4x8xf32>
    %161 = arith.truncf %160 : vector<16x4x8xf32> to vector<16x4x8xbf16>
    %162 = arith.truncf %158 : vector<4x16x16xf32> to vector<4x16x16xbf16>
    "tpu.trace_start"() <{level = 10 : i32, message = "hqk,khd->qhd"}> : () -> ()
    %cst_57 = arith.constant dense<0.000000e+00> : vector<4x8x16xf32>
    %163 = tpu.matmul %161, %162, %cst_57 {dimension_numbers = #tpu.dot_dimension_numbers<[0], [2], [2], [1], [0, 1, 0, 2, 1, 1], [1], [0]>} : vector<16x4x8xbf16>, vector<4x16x16xbf16>, vector<4x8x16xf32> -> vector<4x8x16xf32>
    %164 = tpu.transpose %163, [2, 0, 1] : vector<4x8x16xf32> -> vector<16x4x8xf32>
    "tpu.trace_stop"() : () -> ()
    %165 = tpu.reciprocal %159 : vector<4x16xf32> -> vector<4x16xf32>
    %166 = tpu.transpose %165, [1, 0] : vector<4x16xf32> -> vector<16x4xf32>
    %167 = vector.shape_cast %166 : vector<16x4xf32> to vector<16x4x1xf32>
    %168 = vector.broadcast %167 : vector<16x4x1xf32> to vector<16x4x8xf32>
    %169 = arith.mulf %164, %168 : vector<16x4x8xf32>
    %170 = vector.shape_cast %169 : vector<16x4x8xf32> to vector<16x32xf32>
    %171 = arith.truncf %170 : vector<16x32xf32> to vector<16x32xbf16>
    %c1_58 = arith.constant 1 : index
    %c0_59 = arith.constant 0 : index
    %c0_60 = arith.constant 0 : index
    %172 = vector.load %arg8[%c1_58, %c0_59, %c0_60] : memref<2x32x32xbf16, #tpu.memory_space<vmem>>, vector<1x32x32xbf16>
    %173 = vector.shape_cast %172 : vector<1x32x32xbf16> to vector<32x32xbf16>
    %cst_61 = arith.constant dense<0.000000e+00> : vector<16x32xf32>
    %174 = tpu.matmul %171, %173, %cst_61 {dimension_numbers = #tpu.dot_dimension_numbers<[1], [0], [0], [1], [0, 0, 1, 1], [], []>} : vector<16x32xbf16>, vector<32x32xbf16>, vector<16x32xf32> -> vector<16x32xf32>
    %175 = arith.addf %105, %174 : vector<16x32xf32>
    %c1_62 = arith.constant 1 : index
    %c0_63 = arith.constant 0 : index
    %c0_64 = arith.constant 0 : index
    %176 = vector.load %arg9[%c1_62, %c0_63, %c0_64] : memref<2x1x32xf32, #tpu.memory_space<vmem>>, vector<1x1x32xf32>
    %177 = vector.shape_cast %176 : vector<1x1x32xf32> to vector<1x32xf32>
    %178 = arith.mulf %175, %175 : vector<16x32xf32>
    %cst_65 = arith.constant dense<0.000000e+00> : vector<16xf32>
    %179 = vector.multi_reduction <add>, %178, %cst_65 [1] : vector<16x32xf32> to vector<16xf32>
    %180 = vector.shape_cast %179 : vector<16xf32> to vector<16x1xf32>
    %cst_66 = arith.constant 3.200000e+01 : f32
    %181 = vector.broadcast %cst_66 : f32 to vector<16x1xf32>
    %182 = arith.divf %180, %181 : vector<16x1xf32>
    %cst_67 = arith.constant 9.99999997E-7 : f32
    %183 = vector.broadcast %cst_67 : f32 to vector<16x1xf32>
    %184 = arith.addf %182, %183 : vector<16x1xf32>
    %185 = math.rsqrt %184 : vector<16x1xf32>
    %186 = vector.broadcast %185 : vector<16x1xf32> to vector<16x32xf32>
    %187 = arith.mulf %175, %186 : vector<16x32xf32>
    %188 = vector.broadcast %177 : vector<1x32xf32> to vector<16x32xf32>
    %189 = arith.mulf %187, %188 : vector<16x32xf32>
    %190 = arith.truncf %189 : vector<16x32xf32> to vector<16x32xbf16>
    %c1_68 = arith.constant 1 : index
    %c0_69 = arith.constant 0 : index
    %c0_70 = arith.constant 0 : index
    %191 = vector.load %arg10[%c1_68, %c0_69, %c0_70] : memref<2x32x128xbf16, #tpu.memory_space<vmem>>, vector<1x32x128xbf16>
    %192 = vector.shape_cast %191 : vector<1x32x128xbf16> to vector<32x128xbf16>
    %cst_71 = arith.constant dense<0.000000e+00> : vector<16x128xf32>
    %193 = tpu.matmul %190, %192, %cst_71 {dimension_numbers = #tpu.dot_dimension_numbers<[1], [0], [0], [1], [0, 0, 1, 1], [], []>} : vector<16x32xbf16>, vector<32x128xbf16>, vector<16x128xf32> -> vector<16x128xf32>
    %194 = vector.extract_strided_slice %193 {offsets = [0, 0], sizes = [16, 64], strides = [1, 1]} : vector<16x128xf32> to vector<16x64xf32>
    %195 = vector.extract_strided_slice %193 {offsets = [0, 64], sizes = [16, 64], strides = [1, 1]} : vector<16x128xf32> to vector<16x64xf32>
    %196 = arith.negf %194 : vector<16x64xf32>
    %197 = math.exp %196 : vector<16x64xf32>
    %cst_72 = arith.constant 1.000000e+00 : f32
    %198 = vector.broadcast %cst_72 : f32 to vector<16x64xf32>
    %199 = arith.addf %198, %197 : vector<16x64xf32>
    %200 = arith.divf %198, %199 : vector<16x64xf32>
    %201 = arith.mulf %194, %200 : vector<16x64xf32>
    %202 = arith.mulf %201, %195 : vector<16x64xf32>
    %203 = arith.truncf %202 : vector<16x64xf32> to vector<16x64xbf16>
    %c1_73 = arith.constant 1 : index
    %c0_74 = arith.constant 0 : index
    %c0_75 = arith.constant 0 : index
    %204 = vector.load %arg11[%c1_73, %c0_74, %c0_75] : memref<2x64x32xbf16, #tpu.memory_space<vmem>>, vector<1x64x32xbf16>
    %205 = vector.shape_cast %204 : vector<1x64x32xbf16> to vector<64x32xbf16>
    %cst_76 = arith.constant dense<0.000000e+00> : vector<16x32xf32>
    %206 = tpu.matmul %203, %205, %cst_76 {dimension_numbers = #tpu.dot_dimension_numbers<[1], [0], [0], [1], [0, 0, 1, 1], [], []>} : vector<16x64xbf16>, vector<64x32xbf16>, vector<16x32xf32> -> vector<16x32xf32>
    %207 = arith.addf %175, %206 : vector<16x32xf32>
    %c0_77 = arith.constant 0 : index
    %c0_78 = arith.constant 0 : index
    %208 = vector.load %arg4[%c0_77, %c0_78] : memref<1x32xf32, #tpu.memory_space<vmem>>, vector<1x32xf32>
    %209 = arith.mulf %207, %207 : vector<16x32xf32>
    %cst_79 = arith.constant dense<0.000000e+00> : vector<16xf32>
    %210 = vector.multi_reduction <add>, %209, %cst_79 [1] : vector<16x32xf32> to vector<16xf32>
    %211 = vector.shape_cast %210 : vector<16xf32> to vector<16x1xf32>
    %cst_80 = arith.constant 3.200000e+01 : f32
    %212 = vector.broadcast %cst_80 : f32 to vector<16x1xf32>
    %213 = arith.divf %211, %212 : vector<16x1xf32>
    %cst_81 = arith.constant 9.99999997E-7 : f32
    %214 = vector.broadcast %cst_81 : f32 to vector<16x1xf32>
    %215 = arith.addf %213, %214 : vector<16x1xf32>
    %216 = math.rsqrt %215 : vector<16x1xf32>
    %217 = vector.broadcast %216 : vector<16x1xf32> to vector<16x32xf32>
    %218 = arith.mulf %207, %217 : vector<16x32xf32>
    %219 = vector.broadcast %208 : vector<1x32xf32> to vector<16x32xf32>
    %220 = arith.mulf %218, %219 : vector<16x32xf32>
    %221 = arith.truncf %220 : vector<16x32xf32> to vector<16x32xbf16>
    %c0_82 = arith.constant 0 : index
    %c0_83 = arith.constant 0 : index
    %222 = vector.load %arg12[%c0_82, %c0_83] : memref<16x32xbf16, #tpu.memory_space<vmem>>, vector<16x32xbf16>
    tpu.vector_store %arg12[%c0_82, %c0_83], %221 {strides = array<i32>} : memref<16x32xbf16, #tpu.memory_space<vmem>>, vector<16x32xbf16>,
    return
  }
}

</mosaic_0001>

<llo_original>
// kernel: tpu_custom_call.1
$region0: #{tpu_custom_call.1}
  #allocation0 [shape = 'u32[]', space=smem, size = 0x4, offset = 0x4, fixed_abs, tag = 'smem constant byte address 0x4 - core index']
  #allocation1 [shape = 'u32[144,128]{1,0:T(1,128)}', space=vmem, size = 0x12000, scoped, tag = 'internal scratch']
  %s0 = inlined_call_operand.hbm [shape: f32[16,32], index: 0, kind: input, shape index: {}]
  %s1 = inlined_call_operand.hbm [shape: f32[16,32], index: 1, kind: input, shape index: {}]
  %s2 = inlined_call_operand.hbm [shape: f32[16,32], index: 2, kind: input, shape index: {}]
  %s3 = inlined_call_operand.hbm [shape: f32[16,16], index: 3, kind: input, shape index: {}]
  %s4 = inlined_call_operand.vmem [shape: f32[1,32], index: 4, kind: input, shape index: {}]
  %s5 = inlined_call_operand.vmem [shape: f32[2,1,32], index: 5, kind: input, shape index: {}]
  %s6 = inlined_call_operand.vmem [shape: bf16[2,32,96], index: 6, kind: input, shape index: {}]
  %s7 = inlined_call_operand.vmem [shape: f32[2,1,96], index: 7, kind: input, shape index: {}]
  %s8 = inlined_call_operand.vmem [shape: bf16[2,32,32], index: 8, kind: input, shape index: {}]
  %s9 = inlined_call_operand.vmem [shape: f32[2,1,32], index: 9, kind: input, shape index: {}]
  %s10 = inlined_call_operand.vmem [shape: bf16[2,32,128], index: 10, kind: input, shape index: {}]
  %s11 = inlined_call_operand.vmem [shape: bf16[2,64,32], index: 11, kind: input, shape index: {}]
  %s12 = inlined_call_operand.hbm [shape: bf16[16,32], index: 12, kind: output, shape index: {}]
  %s13 = sld [smem:[#allocation0]]
  $region74: #{tpu_custom_call.1} parent=0
    _
  %s15 = ssub.s32 1, %s13
  %s16 = scalar_select 0, %s15, %s13
  $region1: #{tpu_custom_call.1} parent=0
    #allocation2 [shape = 'u8[8192]{0}', space=vmem, size = 0x2000, scoped, tag = 'input window, operand 0, single buffered']
    #allocation3 [shape = 's32[1]{0}', space=sflag, size = 0x4, scoped, tag = 'scoped memory for tpu_custom_call.1']
    #allocation4 [shape = 's32[1]{0}', space=sflag, size = 0x4, scoped, tag = 'scoped memory for tpu_custom_call.1']
    #allocation5 [shape = 'u8[8192]{0}', space=vmem, size = 0x2000, scoped, tag = 'input window, operand 1, single buffered']
    #allocation6 [shape = 's32[1]{0}', space=sflag, size = 0x4, scoped, tag = 'scoped memory for tpu_custom_call.1']
    #allocation7 [shape = 'u8[8192]{0}', space=vmem, size = 0x2000, scoped, tag = 'input window, operand 2, single buffered']
    #allocation8 [shape = 'u8[8192]{0}', space=vmem, size = 0x2000, scoped, tag = 'input window, operand 3, single buffered']
    #allocation9 [shape = 's32[1]{0}', space=sflag, size = 0x4, scoped, tag = 'scoped memory for tpu_custom_call.1']
    #allocation10 [shape = 'u8[4096]{0}', space=vmem, size = 0x1000, scoped, tag = 'output window, operand 0, single buffered']
    %17 = vsyncpa [#allocation3], 0
    %18 = vsyncpa [#allocation6], 0
    %19 = vsyncpa [#allocation9], 0
    %20 = vsyncpa [#allocation4], 0
    // Predicated region
    $region2: #{tpu_custom_call.1} parent=1 // pred_check
      _
    $region3: #{tpu_custom_call.1} parent=1 // pred_check_branch
      %22 = sbr.rel (0) target = $region5
    $region4: #{tpu_custom_call.1} parent=1 // pred_region
      %s24 = ssub.s32 256, 256
      %25 = vsyncadd [#allocation3], %s24
      %s26 = sshll.u32 [#allocation2], 4
      %s27 = int_to_ptr.vmem [resolvable:$true] %s26
      %32 = dma.hbm_to_vmem [thread:$0]  %s0, 256, %s27, [#allocation3], 128, 128, 8
    $region5: #{tpu_custom_call.1} parent=1 // pred_fallthru
      _
    // Predicated region
    $region6: #{tpu_custom_call.1} parent=1 // pred_check
      _
    $region7: #{tpu_custom_call.1} parent=1 // pred_check_branch
      %34 = sbr.rel (0) target = $region9
    $region8: #{tpu_custom_call.1} parent=1 // pred_region
      %s36 = ssub.s32 256, 256
      %37 = vsyncadd [#allocation6], %s36
      %s38 = sshll.u32 [#allocation5], 4
      %s39 = int_to_ptr.vmem [resolvable:$true] %s38
      %44 = dma.hbm_to_vmem [thread:$0]  %s1, 256, %s39, [#allocation6], 128, 128, 8
    $region9: #{tpu_custom_call.1} parent=1 // pred_fallthru
      _
    // Predicated region
    $region10: #{tpu_custom_call.1} parent=1 // pred_check
      _
    $region11: #{tpu_custom_call.1} parent=1 // pred_check_branch
      %46 = sbr.rel (0) target = $region13
    $region12: #{tpu_custom_call.1} parent=1 // pred_region
      %s48 = ssub.s32 256, 256
      %49 = vsyncadd [#allocation6], %s48
      %s50 = sshll.u32 [#allocation7], 4
      %s51 = int_to_ptr.vmem [resolvable:$true] %s50
      %56 = dma.hbm_to_vmem [thread:$0]  %s2, 256, %s51, [#allocation6], 128, 128, 8
    $region13: #{tpu_custom_call.1} parent=1 // pred_fallthru
      _
    // Predicated region
    $region14: #{tpu_custom_call.1} parent=1 // pred_check
      _
    $region15: #{tpu_custom_call.1} parent=1 // pred_check_branch
      %58 = sbr.rel (0) target = $region17
    $region16: #{tpu_custom_call.1} parent=1 // pred_region
      %s60 = ssub.s32 256, 256
      %61 = vsyncadd [#allocation9], %s60
      %s62 = sshll.u32 [#allocation8], 4
      %s63 = int_to_ptr.vmem [resolvable:$true] %s62
      %68 = dma.hbm_to_vmem [thread:$0]  %s3, 256, %s63, [#allocation9], 128, 128, 8
    $region17: #{tpu_custom_call.1} parent=1 // pred_fallthru
      _
    // Predicated region
    $region18: #{tpu_custom_call.1} parent=1 // pred_check
      _
    $region19: #{tpu_custom_call.1} parent=1 // pred_check_branch
      %70 = sbr.rel (0) target = $region21
    $region20: #{tpu_custom_call.1} parent=1 // pred_region
      _
    $region21: #{tpu_custom_call.1} parent=1 // pred_fallthru
      _
    // Predicated region
    $region22: #{tpu_custom_call.1} parent=1 // pred_check
      _
    $region23: #{tpu_custom_call.1} parent=1 // pred_check_branch
      %72 = sbr.rel (0) target = $region25
    $region24: #{tpu_custom_call.1} parent=1 // pred_region
      _
    $region25: #{tpu_custom_call.1} parent=1 // pred_fallthru
      _
    // Predicated region
    $region26: #{tpu_custom_call.1} parent=1 // pred_check
      _
    $region27: #{tpu_custom_call.1} parent=1 // pred_check_branch
      %74 = sbr.rel (0) target = $region29
    $region28: #{tpu_custom_call.1} parent=1 // pred_region
      _
    $region29: #{tpu_custom_call.1} parent=1 // pred_fallthru
      _
    // Predicated region
    $region30: #{tpu_custom_call.1} parent=1 // pred_check
      _
    $region31: #{tpu_custom_call.1} parent=1 // pred_check_branch
      %76 = sbr.rel (0) target = $region33
    $region32: #{tpu_custom_call.1} parent=1 // pred_region
      _
    $region33: #{tpu_custom_call.1} parent=1 // pred_fallthru
      _
    // Predicated region
    $region34: #{tpu_custom_call.1} parent=1 // pred_check
      _
    $region35: #{tpu_custom_call.1} parent=1 // pred_check_branch
      %78 = sbr.rel (0) target = $region37
    $region36: #{tpu_custom_call.1} parent=1 // pred_region
      _
    $region37: #{tpu_custom_call.1} parent=1 // pred_fallthru
      _
    // Predicated region
    $region38: #{tpu_custom_call.1} parent=1 // pred_check
      _
    $region39: #{tpu_custom_call.1} parent=1 // pred_check_branch
      %80 = sbr.rel (0) target = $region41
    $region40: #{tpu_custom_call.1} parent=1 // pred_region
      _
    $region41: #{tpu_custom_call.1} parent=1 // pred_fallthru
      _
    // Predicated region
    $region42: #{tpu_custom_call.1} parent=1 // pred_check
      _
    $region43: #{tpu_custom_call.1} parent=1 // pred_check_branch
      %82 = sbr.rel (0) target = $region45
    $region44: #{tpu_custom_call.1} parent=1 // pred_region
      _
    $region45: #{tpu_custom_call.1} parent=1 // pred_fallthru
      _
    // Predicated region
    $region46: #{tpu_custom_call.1} parent=1 // pred_check
      _
    $region47: #{tpu_custom_call.1} parent=1 // pred_check_branch
      %84 = sbr.rel (0) target = $region49
    $region48: #{tpu_custom_call.1} parent=1 // pred_region
      _
    $region49: #{tpu_custom_call.1} parent=1 // pred_fallthru
      _
    // Predicated region
    $region50: #{tpu_custom_call.1} parent=1 // pred_check
      _
    $region51: #{tpu_custom_call.1} parent=1 // pred_check_branch
      %86 = sbr.rel (0) target = $region53
    $region52: #{tpu_custom_call.1} parent=1 // pred_region
      %87 = dma.done [#allocation3], 256
    $region53: #{tpu_custom_call.1} parent=1 // pred_fallthru
      _
    // Predicated region
    $region54: #{tpu_custom_call.1} parent=1 // pred_check
      _
    $region55: #{tpu_custom_call.1} parent=1 // pred_check_branch
      %89 = sbr.rel (0) target = $region57
    $region56: #{tpu_custom_call.1} parent=1 // pred_region
      %90 = dma.done [#allocation6], 256
    $region57: #{tpu_custom_call.1} parent=1 // pred_fallthru
      _
    // Predicated region
    $region58: #{tpu_custom_call.1} parent=1 // pred_check
      _
    $region59: #{tpu_custom_call.1} parent=1 // pred_check_branch
      %92 = sbr.rel (0) target = $region61
    $region60: #{tpu_custom_call.1} parent=1 // pred_region
      %93 = dma.done [#allocation6], 256
    $region61: #{tpu_custom_call.1} parent=1 // pred_fallthru
      _
    // Predicated region
    $region62: #{tpu_custom_call.1} parent=1 // pred_check
      _
    $region63: #{tpu_custom_call.1} parent=1 // pred_check_branch
      %95 = sbr.rel (0) target = $region65
    $region64: #{tpu_custom_call.1} parent=1 // pred_region
      %96 = dma.done [#allocation9], 256
    $region65: #{tpu_custom_call.1} parent=1 // pred_fallthru
      _
    %v98 = vld [vmem:[#allocation2] sm:$0xff]
    %v99 = vld [vmem:[#allocation2 + $0x8] sm:$0xff]
    %v100 = vld [vmem:[#allocation5] sm:$0xff]
    %v101 = vld [vmem:[#allocation5 + $0x8] sm:$0xff]
    %v102 = vld [vmem:[#allocation7] sm:$0xff]
    %v103 = vld [vmem:[#allocation7 + $0x8] sm:$0xff]
    %v104 = vld [vmem:[#allocation8] sm:$0xff]
    %v105 = vld [vmem:[#allocation8 + $0x8] sm:$0xff]
    %v106 = vld [vmem:[%s5] sm:$0x1]
    %v107 = vmul.f32 %v98, %v98
    %v108 = vmul.f32 %v99, %v99
    %vm109 = vcmask 261120
    %v110 = vsel %vm109, %v107, 0.0
    %111 = vadd.xlane.f32.xlu0 %v110
    %v112 = vpop.xlane.xlu0 %111
    %v113 = vsel %vm109, %v108, 0.0
    %114 = vadd.xlane.f32.xlu0 %v113
    %v115 = vpop.xlane.xlu0 %114
    %v116 = vrcp.pop 32.0
    %v117 = vmul.f32 %v112, %v116
    %v118 = vmul.f32 %v115, %v116
    %v119 = vadd.f32 %v117, 1e-06
    %v120 = vadd.f32 %v118, 1e-06
    %v121 = vrsqrt.pop %v119
    %v122 = vrsqrt.pop %v120
    %v123 = vmul.f32 %v98, %v121
    %v124 = vmul.f32 %v99, %v122
    %v126 = vlaneseq
    %v127 = vshrl.u32 %v126, 7
    %v128 = vsub.s32 0, %v127
    %v129 = vrot.slane %v106, %v128
    %v131 = vmul.f32 %v123, %v129
    %v132 = vmul.f32 %v124, %v129
    %v133 = vpack.c.bf16 %v132, %v131
    %v134 = vld [vmem:[%s6] sm:$0xf]
    %v135 = vld [vmem:[%s6 + $0x4] sm:$0xf]
    %v136 = vld [vmem:[%s6 + $0x8] sm:$0xf]
    %v137 = vld [vmem:[%s6 + $0xc] sm:$0xf]
    %v138 = vld [vmem:[%s7] sm:$0x1]
    %v140 = vlaneseq
    %v141 = vshrl.u32 %v140, 7
    %v142 = vsub.s32 0, %v141
    %v143 = vrot.slane %v138, %v142
    %v149 = vunpack.c.l.b16 %v134
    %v150 = vunpack.c.l.b16 %v135
    %v151 = vunpack.c.l.b16 %v136
    %v152 = vunpack.c.l.b16 %v137
    %v153 = vpack.c.b16 %v150, %v149
    %v154 = vpack.c.b16 %v152, %v151
    %v158 = vsel %vm109, %v133, 0
    %160 = vmatprep.subr.bf16.mxu0 0
    %161 = vmatpush1.bf16.msra.mxu0 0
    %162 = vmatprep.subr.bf16.mxu0 0
    %163 = vmatpush1.bf16.msra.mxu0 0
    %164 = vmatprep.subr.bf16.mxu0 0
    %165 = vmatpush1.bf16.msra.mxu0 0
    %166 = vmatprep.subr.bf16.mxu0 0
    %167 = vmatpush1.bf16.msra.mxu0 0
    %168 = vmatprep.subr.bf16.mxu0 0
    %169 = vmatpush1.bf16.msra.mxu0 0
    %170 = vmatprep.subr.bf16.mxu0 0
    %171 = vmatpush1.bf16.msra.mxu0 0
    %172 = vmatprep.subr.bf16.mxu0 0
    %173 = vmatpush1.bf16.msra.mxu0 %v154
    %174 = vmatprep.subr.bf16.mxu0 0
    %175 = vmatpush1.bf16.msra.mxu0 %v153
    %176 = vmatprep.subr.bf16.mxu0 0
    %177 = vmatpush2.bf16.msra.mxu0 0
    %178 = vmatprep.subr.bf16.mxu0 0
    %179 = vmatpush2.bf16.msra.mxu0 0
    %180 = vmatprep.subr.bf16.mxu0 0
    %181 = vmatpush2.bf16.msra.mxu0 0
    %182 = vmatprep.subr.bf16.mxu0 0
    %183 = vmatpush2.bf16.msra.mxu0 0
    %184 = vmatprep.subr.bf16.mxu0 0
    %185 = vmatpush2.bf16.msra.mxu0 0
    %186 = vmatprep.subr.bf16.mxu0 0
    %187 = vmatpush2.bf16.msra.mxu0 0
    %188 = vmatprep.subr.bf16.mxu0 0
    %189 = vmatpush2.bf16.msra.mxu0 0
    %190 = vmatprep.subr.bf16.mxu0 0
    %191 = vmatpush2.bf16.msra.mxu0 0
    %192 = vmatprep.mubr.bf16.mxu0 0
    %193 = vmatmul.mubr.bf16.gmra.mxu0 %v158
    %v194 = vpop.f32.mrf.mxu0
    %v195 = vadd.f32 %v143, %v194
    %v196 = vpop.f32.mrf.mxu0
    %v197 = vpop.f32.mrf.mxu0
    %v198 = vadd.f32 %v143, %v197
    %v199 = vpop.f32.mrf.mxu0
    %200 = vdwg.mxu0
    %v201 = vmul.f32 %v195, %v100
    %v202 = vmul.f32 %v198, %v101
    %205 = vrot.lane.b32.xlu0 %v195, 112
    %v206 = vpop.permute.xlu0 %205
    %207 = vrot.lane.b32.xlu0 %v198, 112
    %v208 = vpop.permute.xlu0 %207
    %211 = vrot.lane.b32.xlu0 %v195, 16
    %v212 = vpop.permute.xlu0 %211
    %213 = vrot.lane.b32.xlu0 %v198, 16
    %v214 = vpop.permute.xlu0 %213
    %vm217 = vcmask 130048
    %v218 = vsel %vm217, %v206, %v212
    %v219 = vsel %vm217, %v208, %v214
    %v220 = vmul.f32 %v218, %v102
    %v221 = vmul.f32 %v219, %v103
    %v222 = vadd.f32 %v201, %v220
    %v223 = vadd.f32 %v202, %v221
    %226 = vrot.lane.b32.xlu0 %v100, 32
    %v227 = vpop.permute.xlu0 %226
    %228 = vrot.lane.b32.xlu0 %v101, 32
    %v229 = vpop.permute.xlu0 %228
    %v232 = vmul.f32 %v195, %v227
    %v233 = vmul.f32 %v198, %v229
    %234 = vrot.lane.b32.xlu0 %v195, 80
    %v235 = vpop.permute.xlu0 %234
    %236 = vrot.lane.b32.xlu0 %v198, 80
    %v237 = vpop.permute.xlu0 %236
    %v240 = vsel %vm217, %v235, %v206
    %v241 = vsel %vm217, %v237, %v208
    %v242 = vmul.f32 %v240, %v102
    %v243 = vmul.f32 %v241, %v103
    %246 = vrot.lane.b32.xlu0 %v242, 32
    %v247 = vpop.permute.xlu0 %246
    %248 = vrot.lane.b32.xlu0 %v243, 32
    %v249 = vpop.permute.xlu0 %248
    %v252 = vadd.f32 %v232, %v247
    %v253 = vadd.f32 %v233, %v249
    %256 = vrot.lane.b32.xlu0 %v222, 124
    %v257 = vpop.permute.xlu0 %256
    %258 = vrot.lane.b32.xlu0 %v223, 124
    %v259 = vpop.permute.xlu0 %258
    %262 = vrot.lane.b32.xlu0 %v222, 120
    %v263 = vpop.permute.xlu0 %262
    %264 = vrot.lane.b32.xlu0 %v223, 120
    %v265 = vpop.permute.xlu0 %264
    %268 = vrot.lane.b32.xlu0 %v222, 116
    %v269 = vpop.permute.xlu0 %268
    %270 = vrot.lane.b32.xlu0 %v223, 116
    %v271 = vpop.permute.xlu0 %270
    %274 = vrot.lane.b32.xlu0 %v222, 112
    %v275 = vpop.permute.xlu0 %274
    %276 = vrot.lane.b32.xlu0 %v223, 112
    %v277 = vpop.permute.xlu0 %276
    %280 = vrot.lane.b32.xlu0 %v222, 108
    %v281 = vpop.permute.xlu0 %280
    %282 = vrot.lane.b32.xlu0 %v223, 108
    %v283 = vpop.permute.xlu0 %282
    %286 = vrot.lane.b32.xlu0 %v222, 104
    %v287 = vpop.permute.xlu0 %286
    %288 = vrot.lane.b32.xlu0 %v223, 104
    %v289 = vpop.permute.xlu0 %288
    %292 = vrot.lane.b32.xlu0 %v222, 100
    %v293 = vpop.permute.xlu0 %292
    %294 = vrot.lane.b32.xlu0 %v223, 100
    %v295 = vpop.permute.xlu0 %294
    %v298 = vcombine.low %v222, %v263
    %v299 = vcombine.high %v222, %v263
    %v301 = vunpack.c.l.s4 1983009808
    %v302 = vunpack.c.0.s8 %v301
    %v303 = vlaneseq
    %v304 = vshrl.u32 %v303, 7
    %v305 = vsub.s32 %v302, %v304
    %v306 = vrot.slane %v298, %v305
    %v308 = vunpack.c.l.s4 1983009808
    %v309 = vunpack.c.0.s8 %v308
    %v310 = vlaneseq
    %v311 = vshrl.u32 %v310, 7
    %v312 = vsub.s32 %v309, %v311
    %v313 = vrot.slane %v299, %v312
    %v314 = vcombine.low %v257, %v269
    %v315 = vcombine.high %v257, %v269
    %v317 = vunpack.c.l.s4 1983009808
    %v318 = vunpack.c.0.s8 %v317
    %v319 = vlaneseq
    %v320 = vshrl.u32 %v319, 7
    %v321 = vsub.s32 %v318, %v320
    %v322 = vrot.slane %v314, %v321
    %v324 = vunpack.c.l.s4 1983009808
    %v325 = vunpack.c.0.s8 %v324
    %v326 = vlaneseq
    %v327 = vshrl.u32 %v326, 7
    %v328 = vsub.s32 %v325, %v327
    %v329 = vrot.slane %v315, %v328
    %v330 = vcombine.low %v275, %v287
    %v331 = vcombine.high %v275, %v287
    %v333 = vunpack.c.l.s4 1983009808
    %v334 = vunpack.c.0.s8 %v333
    %v335 = vlaneseq
    %v336 = vshrl.u32 %v335, 7
    %v337 = vsub.s32 %v334, %v336
    %v338 = vrot.slane %v330, %v337
    %v340 = vunpack.c.l.s4 1983009808
    %v341 = vunpack.c.0.s8 %v340
    %v342 = vlaneseq
    %v343 = vshrl.u32 %v342, 7
    %v344 = vsub.s32 %v341, %v343
    %v345 = vrot.slane %v331, %v344
    %v346 = vcombine.low %v281, %v293
    %v347 = vcombine.high %v281, %v293
    %v349 = vunpack.c.l.s4 1983009808
    %v350 = vunpack.c.0.s8 %v349
    %v351 = vlaneseq
    %v352 = vshrl.u32 %v351, 7
    %v353 = vsub.s32 %v350, %v352
    %v354 = vrot.slane %v346, %v353
    %v356 = vunpack.c.l.s4 1983009808
    %v357 = vunpack.c.0.s8 %v356
    %v358 = vlaneseq
    %v359 = vshrl.u32 %v358, 7
    %v360 = vsub.s32 %v357, %v359
    %v361 = vrot.slane %v347, %v360
    %v362 = vcombine.low %v306, %v322
    %v363 = vcombine.high %v306, %v322
    %v365 = vunpack.c.l.s4 1934713408
    %v366 = vunpack.c.0.s8 %v365
    %v367 = vlaneseq
    %v368 = vshrl.u32 %v367, 7
    %v369 = vsub.s32 %v366, %v368
    %v370 = vrot.slane %v362, %v369
    %v372 = vunpack.c.l.s4 1934713408
    %v373 = vunpack.c.0.s8 %v372
    %v374 = vlaneseq
    %v375 = vshrl.u32 %v374, 7
    %v376 = vsub.s32 %v373, %v375
    %v377 = vrot.slane %v363, %v376
    %v378 = vcombine.low %v313, %v329
    %v379 = vcombine.high %v313, %v329
    %v381 = vunpack.c.l.s4 1934713408
    %v382 = vunpack.c.0.s8 %v381
    %v383 = vlaneseq
    %v384 = vshrl.u32 %v383, 7
    %v385 = vsub.s32 %v382, %v384
    %v386 = vrot.slane %v378, %v385
    %v388 = vunpack.c.l.s4 1934713408
    %v389 = vunpack.c.0.s8 %v388
    %v390 = vlaneseq
    %v391 = vshrl.u32 %v390, 7
    %v392 = vsub.s32 %v389, %v391
    %v393 = vrot.slane %v379, %v392
    %v394 = vcombine.low %v338, %v354
    %v395 = vcombine.high %v338, %v354
    %v397 = vunpack.c.l.s4 1934713408
    %v398 = vunpack.c.0.s8 %v397
    %v399 = vlaneseq
    %v400 = vshrl.u32 %v399, 7
    %v401 = vsub.s32 %v398, %v400
    %v402 = vrot.slane %v394, %v401
    %v404 = vunpack.c.l.s4 1934713408
    %v405 = vunpack.c.0.s8 %v404
    %v406 = vlaneseq
    %v407 = vshrl.u32 %v406, 7
    %v408 = vsub.s32 %v405, %v407
    %v409 = vrot.slane %v395, %v408
    %v410 = vcombine.low %v345, %v361
    %v411 = vcombine.high %v345, %v361
    %v413 = vunpack.c.l.s4 1934713408
    %v414 = vunpack.c.0.s8 %v413
    %v415 = vlaneseq
    %v416 = vshrl.u32 %v415, 7
    %v417 = vsub.s32 %v414, %v416
    %v418 = vrot.slane %v410, %v417
    %v420 = vunpack.c.l.s4 1934713408
    %v421 = vunpack.c.0.s8 %v420
    %v422 = vlaneseq
    %v423 = vshrl.u32 %v422, 7
    %v424 = vsub.s32 %v421, %v423
    %v425 = vrot.slane %v411, %v424
    %v426 = vcombine.low %v370, %v402
    %v427 = vcombine.high %v370, %v402
    %v428 = vcombine.low %v377, %v409
    %v429 = vcombine.high %v377, %v409
    %v430 = vcombine.low %v386, %v418
    %v431 = vcombine.high %v386, %v418
    %v432 = vcombine.low %v393, %v425
    %v433 = vcombine.high %v393, %v425
    %v434 = vcombine.low %v223, %v265
    %v435 = vcombine.high %v223, %v265
    %v437 = vunpack.c.l.s4 1983009808
    %v438 = vunpack.c.0.s8 %v437
    %v439 = vlaneseq
    %v440 = vshrl.u32 %v439, 7
    %v441 = vsub.s32 %v438, %v440
    %v442 = vrot.slane %v434, %v441
    %v444 = vunpack.c.l.s4 1983009808
    %v445 = vunpack.c.0.s8 %v444
    %v446 = vlaneseq
    %v447 = vshrl.u32 %v446, 7
    %v448 = vsub.s32 %v445, %v447
    %v449 = vrot.slane %v435, %v448
    %v450 = vcombine.low %v259, %v271
    %v451 = vcombine.high %v259, %v271
    %v453 = vunpack.c.l.s4 1983009808
    %v454 = vunpack.c.0.s8 %v453
    %v455 = vlaneseq
    %v456 = vshrl.u32 %v455, 7
    %v457 = vsub.s32 %v454, %v456
    %v458 = vrot.slane %v450, %v457
    %v460 = vunpack.c.l.s4 1983009808
    %v461 = vunpack.c.0.s8 %v460
    %v462 = vlaneseq
    %v463 = vshrl.u32 %v462, 7
    %v464 = vsub.s32 %v461, %v463
    %v465 = vrot.slane %v451, %v464
    %v466 = vcombine.low %v277, %v289
    %v467 = vcombine.high %v277, %v289
    %v469 = vunpack.c.l.s4 1983009808
    %v470 = vunpack.c.0.s8 %v469
    %v471 = vlaneseq
    %v472 = vshrl.u32 %v471, 7
    %v473 = vsub.s32 %v470, %v472
    %v474 = vrot.slane %v466, %v473
    %v476 = vunpack.c.l.s4 1983009808
    %v477 = vunpack.c.0.s8 %v476
    %v478 = vlaneseq
    %v479 = vshrl.u32 %v478, 7
    %v480 = vsub.s32 %v477, %v479
    %v481 = vrot.slane %v467, %v480
    %v482 = vcombine.low %v283, %v295
    %v483 = vcombine.high %v283, %v295
    %v485 = vunpack.c.l.s4 1983009808
    %v486 = vunpack.c.0.s8 %v485
    %v487 = vlaneseq
    %v488 = vshrl.u32 %v487, 7
    %v489 = vsub.s32 %v486, %v488
    %v490 = vrot.slane %v482, %v489
    %v492 = vunpack.c.l.s4 1983009808
    %v493 = vunpack.c.0.s8 %v492
    %v494 = vlaneseq
    %v495 = vshrl.u32 %v494, 7
    %v496 = vsub.s32 %v493, %v495
    %v497 = vrot.slane %v483, %v496
    %v498 = vcombine.low %v442, %v458
    %v499 = vcombine.high %v442, %v458
    %v501 = vunpack.c.l.s4 1934713408
    %v502 = vunpack.c.0.s8 %v501
    %v503 = vlaneseq
    %v504 = vshrl.u32 %v503, 7
    %v505 = vsub.s32 %v502, %v504
    %v506 = vrot.slane %v498, %v505
    %v508 = vunpack.c.l.s4 1934713408
    %v509 = vunpack.c.0.s8 %v508
    %v510 = vlaneseq
    %v511 = vshrl.u32 %v510, 7
    %v512 = vsub.s32 %v509, %v511
    %v513 = vrot.slane %v499, %v512
    %v514 = vcombine.low %v449, %v465
    %v515 = vcombine.high %v449, %v465
    %v517 = vunpack.c.l.s4 1934713408
    %v518 = vunpack.c.0.s8 %v517
    %v519 = vlaneseq
    %v520 = vshrl.u32 %v519, 7
    %v521 = vsub.s32 %v518, %v520
    %v522 = vrot.slane %v514, %v521
    %v524 = vunpack.c.l.s4 1934713408
    %v525 = vunpack.c.0.s8 %v524
    %v526 = vlaneseq
    %v527 = vshrl.u32 %v526, 7
    %v528 = vsub.s32 %v525, %v527
    %v529 = vrot.slane %v515, %v528
    %v530 = vcombine.low %v474, %v490
    %v531 = vcombine.high %v474, %v490
    %v533 = vunpack.c.l.s4 1934713408
    %v534 = vunpack.c.0.s8 %v533
    %v535 = vlaneseq
    %v536 = vshrl.u32 %v535, 7
    %v537 = vsub.s32 %v534, %v536
    %v538 = vrot.slane %v530, %v537
    %v540 = vunpack.c.l.s4 1934713408
    %v541 = vunpack.c.0.s8 %v540
    %v542 = vlaneseq
    %v543 = vshrl.u32 %v542, 7
    %v544 = vsub.s32 %v541, %v543
    %v545 = vrot.slane %v531, %v544
    %v546 = vcombine.low %v481, %v497
    %v547 = vcombine.high %v481, %v497
    %v549 = vunpack.c.l.s4 1934713408
    %v550 = vunpack.c.0.s8 %v549
    %v551 = vlaneseq
    %v552 = vshrl.u32 %v551, 7
    %v553 = vsub.s32 %v550, %v552
    %v554 = vrot.slane %v546, %v553
    %v556 = vunpack.c.l.s4 1934713408
    %v557 = vunpack.c.0.s8 %v556
    %v558 = vlaneseq
    %v559 = vshrl.u32 %v558, 7
    %v560 = vsub.s32 %v557, %v559
    %v561 = vrot.slane %v547, %v560
    %v562 = vcombine.low %v506, %v538
    %v563 = vcombine.high %v506, %v538
    %v564 = vcombine.low %v513, %v545
    %v565 = vcombine.high %v513, %v545
    %v566 = vcombine.low %v522, %v554
    %v567 = vcombine.high %v522, %v554
    %v568 = vcombine.low %v529, %v561
    %v569 = vcombine.high %v529, %v561
    %v570 = vpack.c.bf16 %v426, %v426
    %v571 = vpack.c.bf16 %v427, %v427
    %v572 = vpack.c.bf16 %v428, %v428
    %v573 = vpack.c.bf16 %v429, %v429
    %v574 = vpack.c.bf16 %v430, %v430
    %v575 = vpack.c.bf16 %v431, %v431
    %v576 = vpack.c.bf16 %v432, %v432
    %v577 = vpack.c.bf16 %v433, %v433
    %v578 = vpack.c.bf16 %v562, %v562
    %v579 = vpack.c.bf16 %v563, %v563
    %v580 = vpack.c.bf16 %v564, %v564
    %v581 = vpack.c.bf16 %v565, %v565
    %v582 = vpack.c.bf16 %v566, %v566
    %v583 = vpack.c.bf16 %v567, %v567
    %v584 = vpack.c.bf16 %v568, %v568
    %v585 = vpack.c.bf16 %v569, %v569
    %588 = vrot.lane.b32.xlu0 %v252, 124
    %v589 = vpop.permute.xlu0 %588
    %590 = vrot.lane.b32.xlu0 %v253, 124
    %v591 = vpop.permute.xlu0 %590
    %592 = vrot.lane.b32.xlu0 %v252, 120
    %v593 = vpop.permute.xlu0 %592
    %594 = vrot.lane.b32.xlu0 %v253, 120
    %v595 = vpop.permute.xlu0 %594
    %596 = vrot.lane.b32.xlu0 %v252, 116
    %v597 = vpop.permute.xlu0 %596
    %598 = vrot.lane.b32.xlu0 %v253, 116
    %v599 = vpop.permute.xlu0 %598
    %600 = vrot.lane.b32.xlu0 %v252, 112
    %v601 = vpop.permute.xlu0 %600
    %602 = vrot.lane.b32.xlu0 %v253, 112
    %v603 = vpop.permute.xlu0 %602
    %604 = vrot.lane.b32.xlu0 %v252, 108
    %v605 = vpop.permute.xlu0 %604
    %606 = vrot.lane.b32.xlu0 %v253, 108
    %v607 = vpop.permute.xlu0 %606
    %608 = vrot.lane.b32.xlu0 %v252, 104
    %v609 = vpop.permute.xlu0 %608
    %610 = vrot.lane.b32.xlu0 %v253, 104
    %v611 = vpop.permute.xlu0 %610
    %612 = vrot.lane.b32.xlu0 %v252, 100
    %v613 = vpop.permute.xlu0 %612
    %614 = vrot.lane.b32.xlu0 %v253, 100
    %v615 = vpop.permute.xlu0 %614
    %616 = vrot.lane.b32.xlu0 %v252, 96
    %v617 = vpop.permute.xlu0 %616
    %618 = vrot.lane.b32.xlu0 %v253, 96
    %v619 = vpop.permute.xlu0 %618
    %620 = vrot.lane.b32.xlu0 %v589, 96
    %v621 = vpop.permute.xlu0 %620
    %622 = vrot.lane.b32.xlu0 %v591, 96
    %v623 = vpop.permute.xlu0 %622
    %624 = vrot.lane.b32.xlu0 %v593, 96
    %v625 = vpop.permute.xlu0 %624
    %626 = vrot.lane.b32.xlu0 %v595, 96
    %v627 = vpop.permute.xlu0 %626
    %628 = vrot.lane.b32.xlu0 %v597, 96
    %v629 = vpop.permute.xlu0 %628
    %630 = vrot.lane.b32.xlu0 %v599, 96
    %v631 = vpop.permute.xlu0 %630
    %632 = vrot.lane.b32.xlu0 %v601, 96
    %v633 = vpop.permute.xlu0 %632
    %634 = vrot.lane.b32.xlu0 %v603, 96
    %v635 = vpop.permute.xlu0 %634
    %636 = vrot.lane.b32.xlu0 %v605, 96
    %v637 = vpop.permute.xlu0 %636
    %638 = vrot.lane.b32.xlu0 %v607, 96
    %v639 = vpop.permute.xlu0 %638
    %640 = vrot.lane.b32.xlu0 %v609, 96
    %v641 = vpop.permute.xlu0 %640
    %642 = vrot.lane.b32.xlu0 %v611, 96
    %v643 = vpop.permute.xlu0 %642
    %644 = vrot.lane.b32.xlu0 %v613, 96
    %v645 = vpop.permute.xlu0 %644
    %646 = vrot.lane.b32.xlu0 %v615, 96
    %v647 = vpop.permute.xlu0 %646
    %v664 = vcombine.low %v617, %v625
    %v665 = vcombine.high %v617, %v625
    %v667 = vunpack.c.l.s4 1983009808
    %v668 = vunpack.c.0.s8 %v667
    %v669 = vlaneseq
    %v670 = vshrl.u32 %v669, 7
    %v671 = vsub.s32 %v668, %v670
    %v672 = vrot.slane %v664, %v671
    %v674 = vunpack.c.l.s4 1983009808
    %v675 = vunpack.c.0.s8 %v674
    %v676 = vlaneseq
    %v677 = vshrl.u32 %v676, 7
    %v678 = vsub.s32 %v675, %v677
    %v679 = vrot.slane %v665, %v678
    %v680 = vcombine.low %v621, %v629
    %v681 = vcombine.high %v621, %v629
    %v683 = vunpack.c.l.s4 1983009808
    %v684 = vunpack.c.0.s8 %v683
    %v685 = vlaneseq
    %v686 = vshrl.u32 %v685, 7
    %v687 = vsub.s32 %v684, %v686
    %v688 = vrot.slane %v680, %v687
    %v690 = vunpack.c.l.s4 1983009808
    %v691 = vunpack.c.0.s8 %v690
    %v692 = vlaneseq
    %v693 = vshrl.u32 %v692, 7
    %v694 = vsub.s32 %v691, %v693
    %v695 = vrot.slane %v681, %v694
    %v696 = vcombine.low %v633, %v641
    %v697 = vcombine.high %v633, %v641
    %v699 = vunpack.c.l.s4 1983009808
    %v700 = vunpack.c.0.s8 %v699
    %v701 = vlaneseq
    %v702 = vshrl.u32 %v701, 7
    %v703 = vsub.s32 %v700, %v702
    %v704 = vrot.slane %v696, %v703
    %v706 = vunpack.c.l.s4 1983009808
    %v707 = vunpack.c.0.s8 %v706
    %v708 = vlaneseq
    %v709 = vshrl.u32 %v708, 7
    %v710 = vsub.s32 %v707, %v709
    %v711 = vrot.slane %v697, %v710
    %v712 = vcombine.low %v637, %v645
    %v713 = vcombine.high %v637, %v645
    %v715 = vunpack.c.l.s4 1983009808
    %v716 = vunpack.c.0.s8 %v715
    %v717 = vlaneseq
    %v718 = vshrl.u32 %v717, 7
    %v719 = vsub.s32 %v716, %v718
    %v720 = vrot.slane %v712, %v719
    %v722 = vunpack.c.l.s4 1983009808
    %v723 = vunpack.c.0.s8 %v722
    %v724 = vlaneseq
    %v725 = vshrl.u32 %v724, 7
    %v726 = vsub.s32 %v723, %v725
    %v727 = vrot.slane %v713, %v726
    %v728 = vcombine.low %v672, %v688
    %v729 = vcombine.high %v672, %v688
    %v731 = vunpack.c.l.s4 1934713408
    %v732 = vunpack.c.0.s8 %v731
    %v733 = vlaneseq
    %v734 = vshrl.u32 %v733, 7
    %v735 = vsub.s32 %v732, %v734
    %v736 = vrot.slane %v728, %v735
    %v738 = vunpack.c.l.s4 1934713408
    %v739 = vunpack.c.0.s8 %v738
    %v740 = vlaneseq
    %v741 = vshrl.u32 %v740, 7
    %v742 = vsub.s32 %v739, %v741
    %v743 = vrot.slane %v729, %v742
    %v744 = vcombine.low %v679, %v695
    %v745 = vcombine.high %v679, %v695
    %v747 = vunpack.c.l.s4 1934713408
    %v748 = vunpack.c.0.s8 %v747
    %v749 = vlaneseq
    %v750 = vshrl.u32 %v749, 7
    %v751 = vsub.s32 %v748, %v750
    %v752 = vrot.slane %v744, %v751
    %v754 = vunpack.c.l.s4 1934713408
    %v755 = vunpack.c.0.s8 %v754
    %v756 = vlaneseq
    %v757 = vshrl.u32 %v756, 7
    %v758 = vsub.s32 %v755, %v757
    %v759 = vrot.slane %v745, %v758
    %v760 = vcombine.low %v704, %v720
    %v761 = vcombine.high %v704, %v720
    %v763 = vunpack.c.l.s4 1934713408
    %v764 = vunpack.c.0.s8 %v763
    %v765 = vlaneseq
    %v766 = vshrl.u32 %v765, 7
    %v767 = vsub.s32 %v764, %v766
    %v768 = vrot.slane %v760, %v767
    %v770 = vunpack.c.l.s4 1934713408
    %v771 = vunpack.c.0.s8 %v770
    %v772 = vlaneseq
    %v773 = vshrl.u32 %v772, 7
    %v774 = vsub.s32 %v771, %v773
    %v775 = vrot.slane %v761, %v774
    %v776 = vcombine.low %v711, %v727
    %v777 = vcombine.high %v711, %v727
    %v779 = vunpack.c.l.s4 1934713408
    %v780 = vunpack.c.0.s8 %v779
    %v781 = vlaneseq
    %v782 = vshrl.u32 %v781, 7
    %v783 = vsub.s32 %v780, %v782
    %v784 = vrot.slane %v776, %v783
    %v786 = vunpack.c.l.s4 1934713408
    %v787 = vunpack.c.0.s8 %v786
    %v788 = vlaneseq
    %v789 = vshrl.u32 %v788, 7
    %v790 = vsub.s32 %v787, %v789
    %v791 = vrot.slane %v777, %v790
    %v792 = vcombine.low %v736, %v768
    %v793 = vcombine.high %v736, %v768
    %v794 = vcombine.low %v743, %v775
    %v795 = vcombine.high %v743, %v775
    %v796 = vcombine.low %v752, %v784
    %v797 = vcombine.high %v752, %v784
    %v798 = vcombine.low %v759, %v791
    %v799 = vcombine.high %v759, %v791
    %v800 = vcombine.low %v619, %v627
    %v801 = vcombine.high %v619, %v627
    %v803 = vunpack.c.l.s4 1983009808
    %v804 = vunpack.c.0.s8 %v803
    %v805 = vlaneseq
    %v806 = vshrl.u32 %v805, 7
    %v807 = vsub.s32 %v804, %v806
    %v808 = vrot.slane %v800, %v807
    %v810 = vunpack.c.l.s4 1983009808
    %v811 = vunpack.c.0.s8 %v810
    %v812 = vlaneseq
    %v813 = vshrl.u32 %v812, 7
    %v814 = vsub.s32 %v811, %v813
    %v815 = vrot.slane %v801, %v814
    %v816 = vcombine.low %v623, %v631
    %v817 = vcombine.high %v623, %v631
    %v819 = vunpack.c.l.s4 1983009808
    %v820 = vunpack.c.0.s8 %v819
    %v821 = vlaneseq
    %v822 = vshrl.u32 %v821, 7
    %v823 = vsub.s32 %v820, %v822
    %v824 = vrot.slane %v816, %v823
    %v826 = vunpack.c.l.s4 1983009808
    %v827 = vunpack.c.0.s8 %v826
    %v828 = vlaneseq
    %v829 = vshrl.u32 %v828, 7
    %v830 = vsub.s32 %v827, %v829
    %v831 = vrot.slane %v817, %v830
    %v832 = vcombine.low %v635, %v643
    %v833 = vcombine.high %v635, %v643
    %v835 = vunpack.c.l.s4 1983009808
    %v836 = vunpack.c.0.s8 %v835
    %v837 = vlaneseq
    %v838 = vshrl.u32 %v837, 7
    %v839 = vsub.s32 %v836, %v838
    %v840 = vrot.slane %v832, %v839
    %v842 = vunpack.c.l.s4 1983009808
    %v843 = vunpack.c.0.s8 %v842
    %v844 = vlaneseq
    %v845 = vshrl.u32 %v844, 7
    %v846 = vsub.s32 %v843, %v845
    %v847 = vrot.slane %v833, %v846
    %v848 = vcombine.low %v639, %v647
    %v849 = vcombine.high %v639, %v647
    %v851 = vunpack.c.l.s4 1983009808
    %v852 = vunpack.c.0.s8 %v851
    %v853 = vlaneseq
    %v854 = vshrl.u32 %v853, 7
    %v855 = vsub.s32 %v852, %v854
    %v856 = vrot.slane %v848, %v855
    %v858 = vunpack.c.l.s4 1983009808
    %v859 = vunpack.c.0.s8 %v858
    %v860 = vlaneseq
    %v861 = vshrl.u32 %v860, 7
    %v862 = vsub.s32 %v859, %v861
    %v863 = vrot.slane %v849, %v862
    %v864 = vcombine.low %v808, %v824
    %v865 = vcombine.high %v808, %v824
    %v867 = vunpack.c.l.s4 1934713408
    %v868 = vunpack.c.0.s8 %v867
    %v869 = vlaneseq
    %v870 = vshrl.u32 %v869, 7
    %v871 = vsub.s32 %v868, %v870
    %v872 = vrot.slane %v864, %v871
    %v874 = vunpack.c.l.s4 1934713408
    %v875 = vunpack.c.0.s8 %v874
    %v876 = vlaneseq
    %v877 = vshrl.u32 %v876, 7
    %v878 = vsub.s32 %v875, %v877
    %v879 = vrot.slane %v865, %v878
    %v880 = vcombine.low %v815, %v831
    %v881 = vcombine.high %v815, %v831
    %v883 = vunpack.c.l.s4 1934713408
    %v884 = vunpack.c.0.s8 %v883
    %v885 = vlaneseq
    %v886 = vshrl.u32 %v885, 7
    %v887 = vsub.s32 %v884, %v886
    %v888 = vrot.slane %v880, %v887
    %v890 = vunpack.c.l.s4 1934713408
    %v891 = vunpack.c.0.s8 %v890
    %v892 = vlaneseq
    %v893 = vshrl.u32 %v892, 7
    %v894 = vsub.s32 %v891, %v893
    %v895 = vrot.slane %v881, %v894
    %v896 = vcombine.low %v840, %v856
    %v897 = vcombine.high %v840, %v856
    %v899 = vunpack.c.l.s4 1934713408
    %v900 = vunpack.c.0.s8 %v899
    %v901 = vlaneseq
    %v902 = vshrl.u32 %v901, 7
    %v903 = vsub.s32 %v900, %v902
    %v904 = vrot.slane %v896, %v903
    %v906 = vunpack.c.l.s4 1934713408
    %v907 = vunpack.c.0.s8 %v906
    %v908 = vlaneseq
    %v909 = vshrl.u32 %v908, 7
    %v910 = vsub.s32 %v907, %v909
    %v911 = vrot.slane %v897, %v910
    %v912 = vcombine.low %v847, %v863
    %v913 = vcombine.high %v847, %v863
    %v915 = vunpack.c.l.s4 1934713408
    %v916 = vunpack.c.0.s8 %v915
    %v917 = vlaneseq
    %v918 = vshrl.u32 %v917, 7
    %v919 = vsub.s32 %v916, %v918
    %v920 = vrot.slane %v912, %v919
    %v922 = vunpack.c.l.s4 1934713408
    %v923 = vunpack.c.0.s8 %v922
    %v924 = vlaneseq
    %v925 = vshrl.u32 %v924, 7
    %v926 = vsub.s32 %v923, %v925
    %v927 = vrot.slane %v913, %v926
    %v928 = vcombine.low %v872, %v904
    %v929 = vcombine.high %v872, %v904
    %v930 = vcombine.low %v879, %v911
    %v931 = vcombine.high %v879, %v911
    %v932 = vcombine.low %v888, %v920
    %v933 = vcombine.high %v888, %v920
    %v934 = vcombine.low %v895, %v927
    %v935 = vcombine.high %v895, %v927
    %v936 = vpack.c.bf16 %v792, %v792
    %v937 = vpack.c.bf16 %v793, %v793
    %v938 = vpack.c.bf16 %v794, %v794
    %v939 = vpack.c.bf16 %v795, %v795
    %v940 = vpack.c.bf16 %v796, %v796
    %v941 = vpack.c.bf16 %v797, %v797
    %v942 = vpack.c.bf16 %v798, %v798
    %v943 = vpack.c.bf16 %v799, %v799
    %v944 = vpack.c.bf16 %v928, %v928
    %v945 = vpack.c.bf16 %v929, %v929
    %v946 = vpack.c.bf16 %v930, %v930
    %v947 = vpack.c.bf16 %v931, %v931
    %v948 = vpack.c.bf16 %v932, %v932
    %v949 = vpack.c.bf16 %v933, %v933
    %v950 = vpack.c.bf16 %v934, %v934
    %v951 = vpack.c.bf16 %v935, %v935
    %v952 = vcombine.low %v570, %v574
    %v954 = vunpack.c.l.s4 1983009808
    %v955 = vunpack.c.0.s8 %v954
    %v956 = vlaneseq
    %v957 = vshrl.u32 %v956, 7
    %v958 = vsub.s32 %v955, %v957
    %v959 = vrot.slane %v952, %v958
    %v960 = vcombine.low %v572, %v576
    %v962 = vunpack.c.l.s4 1983009808
    %v963 = vunpack.c.0.s8 %v962
    %v964 = vlaneseq
    %v965 = vshrl.u32 %v964, 7
    %v966 = vsub.s32 %v963, %v965
    %v967 = vrot.slane %v960, %v966
    %v968 = vcombine.low %v578, %v582
    %v970 = vunpack.c.l.s4 1983009808
    %v971 = vunpack.c.0.s8 %v970
    %v972 = vlaneseq
    %v973 = vshrl.u32 %v972, 7
    %v974 = vsub.s32 %v971, %v973
    %v975 = vrot.slane %v968, %v974
    %v976 = vcombine.low %v580, %v584
    %v978 = vunpack.c.l.s4 1983009808
    %v979 = vunpack.c.0.s8 %v978
    %v980 = vlaneseq
    %v981 = vshrl.u32 %v980, 7
    %v982 = vsub.s32 %v979, %v981
    %v983 = vrot.slane %v976, %v982
    %v984 = vcombine.low %v959, %v967
    %v985 = vcombine.high %v959, %v967
    %v987 = vunpack.c.l.s4 1934713408
    %v988 = vunpack.c.0.s8 %v987
    %v989 = vlaneseq
    %v990 = vshrl.u32 %v989, 7
    %v991 = vsub.s32 %v988, %v990
    %v992 = vrot.slane %v984, %v991
    %v994 = vunpack.c.l.s4 1934713408
    %v995 = vunpack.c.0.s8 %v994
    %v996 = vlaneseq
    %v997 = vshrl.u32 %v996, 7
    %v998 = vsub.s32 %v995, %v997
    %v999 = vrot.slane %v985, %v998
    %v1000 = vcombine.low %v975, %v983
    %v1001 = vcombine.high %v975, %v983
    %v1003 = vunpack.c.l.s4 1934713408
    %v1004 = vunpack.c.0.s8 %v1003
    %v1005 = vlaneseq
    %v1006 = vshrl.u32 %v1005, 7
    %v1007 = vsub.s32 %v1004, %v1006
    %v1008 = vrot.slane %v1000, %v1007
    %v1010 = vunpack.c.l.s4 1934713408
    %v1011 = vunpack.c.0.s8 %v1010
    %v1012 = vlaneseq
    %v1013 = vshrl.u32 %v1012, 7
    %v1014 = vsub.s32 %v1011, %v1013
    %v1015 = vrot.slane %v1001, %v1014
    %v1016 = vcombine.low %v992, %v1008
    %v1017 = vcombine.high %v992, %v1008
    %v1018 = vcombine.low %v999, %v1015
    %v1019 = vcombine.high %v999, %v1015
    %v1020 = vcombine.low %v571, %v575
    %v1022 = vunpack.c.l.s4 1983009808
    %v1023 = vunpack.c.0.s8 %v1022
    %v1024 = vlaneseq
    %v1025 = vshrl.u32 %v1024, 7
    %v1026 = vsub.s32 %v1023, %v1025
    %v1027 = vrot.slane %v1020, %v1026
    %v1028 = vcombine.low %v573, %v577
    %v1030 = vunpack.c.l.s4 1983009808
    %v1031 = vunpack.c.0.s8 %v1030
    %v1032 = vlaneseq
    %v1033 = vshrl.u32 %v1032, 7
    %v1034 = vsub.s32 %v1031, %v1033
    %v1035 = vrot.slane %v1028, %v1034
    %v1036 = vcombine.low %v579, %v583
    %v1038 = vunpack.c.l.s4 1983009808
    %v1039 = vunpack.c.0.s8 %v1038
    %v1040 = vlaneseq
    %v1041 = vshrl.u32 %v1040, 7
    %v1042 = vsub.s32 %v1039, %v1041
    %v1043 = vrot.slane %v1036, %v1042
    %v1044 = vcombine.low %v581, %v585
    %v1046 = vunpack.c.l.s4 1983009808
    %v1047 = vunpack.c.0.s8 %v1046
    %v1048 = vlaneseq
    %v1049 = vshrl.u32 %v1048, 7
    %v1050 = vsub.s32 %v1047, %v1049
    %v1051 = vrot.slane %v1044, %v1050
    %v1052 = vcombine.low %v1027, %v1035
    %v1053 = vcombine.high %v1027, %v1035
    %v1055 = vunpack.c.l.s4 1934713408
    %v1056 = vunpack.c.0.s8 %v1055
    %v1057 = vlaneseq
    %v1058 = vshrl.u32 %v1057, 7
    %v1059 = vsub.s32 %v1056, %v1058
    %v1060 = vrot.slane %v1052, %v1059
    %v1062 = vunpack.c.l.s4 1934713408
    %v1063 = vunpack.c.0.s8 %v1062
    %v1064 = vlaneseq
    %v1065 = vshrl.u32 %v1064, 7
    %v1066 = vsub.s32 %v1063, %v1065
    %v1067 = vrot.slane %v1053, %v1066
    %v1068 = vcombine.low %v1043, %v1051
    %v1069 = vcombine.high %v1043, %v1051
    %v1071 = vunpack.c.l.s4 1934713408
    %v1072 = vunpack.c.0.s8 %v1071
    %v1073 = vlaneseq
    %v1074 = vshrl.u32 %v1073, 7
    %v1075 = vsub.s32 %v1072, %v1074
    %v1076 = vrot.slane %v1068, %v1075
    %v1078 = vunpack.c.l.s4 1934713408
    %v1079 = vunpack.c.0.s8 %v1078
    %v1080 = vlaneseq
    %v1081 = vshrl.u32 %v1080, 7
    %v1082 = vsub.s32 %v1079, %v1081
    %v1083 = vrot.slane %v1069, %v1082
    %v1084 = vcombine.low %v1060, %v1076
    %v1085 = vcombine.high %v1060, %v1076
    %v1086 = vcombine.low %v1067, %v1083
    %v1087 = vcombine.high %v1067, %v1083
    %v1090 = vpack.i.b16 %v1084, %v1016
    %v1091 = vshrl.u32 %v1016, 16
    %v1092 = vshrl.u32 %v1084, 16
    %v1093 = vpack.i.b16 %v1092, %v1091
    %v1096 = vpack.i.b16 %v1085, %v1017
    %v1097 = vshrl.u32 %v1017, 16
    %v1098 = vshrl.u32 %v1085, 16
    %v1099 = vpack.i.b16 %v1098, %v1097
    %v1102 = vpack.i.b16 %v1086, %v1018
    %v1103 = vshrl.u32 %v1018, 16
    %v1104 = vshrl.u32 %v1086, 16
    %v1105 = vpack.i.b16 %v1104, %v1103
    %v1108 = vpack.i.b16 %v1087, %v1019
    %v1109 = vshrl.u32 %v1019, 16
    %v1110 = vshrl.u32 %v1087, 16
    %v1111 = vpack.i.b16 %v1110, %v1109
    %1112 = vxpose.xlu0.c.b16.start [1/8] %v936, 128
    %1113 = vxpose.xlu0.c.b16.cont [2/8] 0, 128
    %1114 = vxpose.xlu0.c.b16.cont [3/8] 0, 128
    %1115 = vxpose.xlu0.c.b16.cont [4/8] 0, 128
    %1116 = vxpose.xlu0.c.b16.cont [5/8] 0, 128
    %1117 = vxpose.xlu0.c.b16.cont [6/8] 0, 128
    %1118 = vxpose.xlu0.c.b16.cont [7/8] 0, 128
    %1119 = vxpose.xlu0.c.b16.end [8/8] 0, 128
    %v1120 = vpop.trf.xlu0
    %v1121 = vpop.trf.xlu0
    %v1122 = vpop.trf.xlu0
    %v1123 = vpop.trf.xlu0
    %v1124 = vpop.trf.xlu0
    %v1125 = vpop.trf.xlu0
    %v1126 = vpop.trf.xlu0
    %v1127 = vpop.trf.xlu0
    %1128 = vxpose.xlu0.c.b16.start [1/8] %v937, 128
    %1129 = vxpose.xlu0.c.b16.cont [2/8] 0, 128
    %1130 = vxpose.xlu0.c.b16.cont [3/8] 0, 128
    %1131 = vxpose.xlu0.c.b16.cont [4/8] 0, 128
    %1132 = vxpose.xlu0.c.b16.cont [5/8] 0, 128
    %1133 = vxpose.xlu0.c.b16.cont [6/8] 0, 128
    %1134 = vxpose.xlu0.c.b16.cont [7/8] 0, 128
    %1135 = vxpose.xlu0.c.b16.end [8/8] 0, 128
    %v1136 = vpop.trf.xlu0
    %v1137 = vpop.trf.xlu0
    %v1138 = vpop.trf.xlu0
    %v1139 = vpop.trf.xlu0
    %v1140 = vpop.trf.xlu0
    %v1141 = vpop.trf.xlu0
    %v1142 = vpop.trf.xlu0
    %v1143 = vpop.trf.xlu0
    %1144 = vxpose.xlu0.c.b16.start [1/8] %v938, 128
    %1145 = vxpose.xlu0.c.b16.cont [2/8] 0, 128
    %1146 = vxpose.xlu0.c.b16.cont [3/8] 0, 128
    %1147 = vxpose.xlu0.c.b16.cont [4/8] 0, 128
    %1148 = vxpose.xlu0.c.b16.cont [5/8] 0, 128
    %1149 = vxpose.xlu0.c.b16.cont [6/8] 0, 128
    %1150 = vxpose.xlu0.c.b16.cont [7/8] 0, 128
    %1151 = vxpose.xlu0.c.b16.end [8/8] 0, 128
    %v1152 = vpop.trf.xlu0
    %v1153 = vpop.trf.xlu0
    %v1154 = vpop.trf.xlu0
    %v1155 = vpop.trf.xlu0
    %v1156 = vpop.trf.xlu0
    %v1157 = vpop.trf.xlu0
    %v1158 = vpop.trf.xlu0
    %v1159 = vpop.trf.xlu0
    %1160 = vxpose.xlu0.c.b16.start [1/8] %v939, 128
    %1161 = vxpose.xlu0.c.b16.cont [2/8] 0, 128
    %1162 = vxpose.xlu0.c.b16.cont [3/8] 0, 128
    %1163 = vxpose.xlu0.c.b16.cont [4/8] 0, 128
    %1164 = vxpose.xlu0.c.b16.cont [5/8] 0, 128
    %1165 = vxpose.xlu0.c.b16.cont [6/8] 0, 128
    %1166 = vxpose.xlu0.c.b16.cont [7/8] 0, 128
    %1167 = vxpose.xlu0.c.b16.end [8/8] 0, 128
    %v1168 = vpop.trf.xlu0
    %v1169 = vpop.trf.xlu0
    %v1170 = vpop.trf.xlu0
    %v1171 = vpop.trf.xlu0
    %v1172 = vpop.trf.xlu0
    %v1173 = vpop.trf.xlu0
    %v1174 = vpop.trf.xlu0
    %v1175 = vpop.trf.xlu0
    %1176 = vxpose.xlu0.c.b16.start [1/8] %v940, 128
    %1177 = vxpose.xlu0.c.b16.cont [2/8] 0, 128
    %1178 = vxpose.xlu0.c.b16.cont [3/8] 0, 128
    %1179 = vxpose.xlu0.c.b16.cont [4/8] 0, 128
    %1180 = vxpose.xlu0.c.b16.cont [5/8] 0, 128
    %1181 = vxpose.xlu0.c.b16.cont [6/8] 0, 128
    %1182 = vxpose.xlu0.c.b16.cont [7/8] 0, 128
    %1183 = vxpose.xlu0.c.b16.end [8/8] 0, 128
    %v1184 = vpop.trf.xlu0
    %v1185 = vpop.trf.xlu0
    %v1186 = vpop.trf.xlu0
    %v1187 = vpop.trf.xlu0
    %v1188 = vpop.trf.xlu0
    %v1189 = vpop.trf.xlu0
    %v1190 = vpop.trf.xlu0
    %v1191 = vpop.trf.xlu0
    %1192 = vxpose.xlu0.c.b16.start [1/8] %v941, 128
    %1193 = vxpose.xlu0.c.b16.cont [2/8] 0, 128
    %1194 = vxpose.xlu0.c.b16.cont [3/8] 0, 128
    %1195 = vxpose.xlu0.c.b16.cont [4/8] 0, 128
    %1196 = vxpose.xlu0.c.b16.cont [5/8] 0, 128
    %1197 = vxpose.xlu0.c.b16.cont [6/8] 0, 128
    %1198 = vxpose.xlu0.c.b16.cont [7/8] 0, 128
    %1199 = vxpose.xlu0.c.b16.end [8/8] 0, 128
    %v1200 = vpop.trf.xlu0
    %v1201 = vpop.trf.xlu0
    %v1202 = vpop.trf.xlu0
    %v1203 = vpop.trf.xlu0
    %v1204 = vpop.trf.xlu0
    %v1205 = vpop.trf.xlu0
    %v1206 = vpop.trf.xlu0
    %v1207 = vpop.trf.xlu0
    %1208 = vxpose.xlu0.c.b16.start [1/8] %v942, 128
    %1209 = vxpose.xlu0.c.b16.cont [2/8] 0, 128
    %1210 = vxpose.xlu0.c.b16.cont [3/8] 0, 128
    %1211 = vxpose.xlu0.c.b16.cont [4/8] 0, 128
    %1212 = vxpose.xlu0.c.b16.cont [5/8] 0, 128
    %1213 = vxpose.xlu0.c.b16.cont [6/8] 0, 128
    %1214 = vxpose.xlu0.c.b16.cont [7/8] 0, 128
    %1215 = vxpose.xlu0.c.b16.end [8/8] 0, 128
    %v1216 = vpop.trf.xlu0
    %v1217 = vpop.trf.xlu0
    %v1218 = vpop.trf.xlu0
    %v1219 = vpop.trf.xlu0
    %v1220 = vpop.trf.xlu0
    %v1221 = vpop.trf.xlu0
    %v1222 = vpop.trf.xlu0
    %v1223 = vpop.trf.xlu0
    %1224 = vxpose.xlu0.c.b16.start [1/8] %v943, 128
    %1225 = vxpose.xlu0.c.b16.cont [2/8] 0, 128
    %1226 = vxpose.xlu0.c.b16.cont [3/8] 0, 128
    %1227 = vxpose.xlu0.c.b16.cont [4/8] 0, 128
    %1228 = vxpose.xlu0.c.b16.cont [5/8] 0, 128
    %1229 = vxpose.xlu0.c.b16.cont [6/8] 0, 128
    %1230 = vxpose.xlu0.c.b16.cont [7/8] 0, 128
    %1231 = vxpose.xlu0.c.b16.end [8/8] 0, 128
    %v1232 = vpop.trf.xlu0
    %v1233 = vpop.trf.xlu0
    %v1234 = vpop.trf.xlu0
    %v1235 = vpop.trf.xlu0
    %v1236 = vpop.trf.xlu0
    %v1237 = vpop.trf.xlu0
    %v1238 = vpop.trf.xlu0
    %v1239 = vpop.trf.xlu0
    %1240 = vxpose.xlu0.c.b16.start [1/8] %v944, 128
    %1241 = vxpose.xlu0.c.b16.cont [2/8] 0, 128
    %1242 = vxpose.xlu0.c.b16.cont [3/8] 0, 128
    %1243 = vxpose.xlu0.c.b16.cont [4/8] 0, 128
    %1244 = vxpose.xlu0.c.b16.cont [5/8] 0, 128
    %1245 = vxpose.xlu0.c.b16.cont [6/8] 0, 128
    %1246 = vxpose.xlu0.c.b16.cont [7/8] 0, 128
    %1247 = vxpose.xlu0.c.b16.end [8/8] 0, 128
    %v1248 = vpop.trf.xlu0
    %v1249 = vpop.trf.xlu0
    %v1250 = vpop.trf.xlu0
    %v1251 = vpop.trf.xlu0
    %v1252 = vpop.trf.xlu0
    %v1253 = vpop.trf.xlu0
    %v1254 = vpop.trf.xlu0
    %v1255 = vpop.trf.xlu0
    %1256 = vxpose.xlu0.c.b16.start [1/8] %v945, 128
    %1257 = vxpose.xlu0.c.b16.cont [2/8] 0, 128
    %1258 = vxpose.xlu0.c.b16.cont [3/8] 0, 128
    %1259 = vxpose.xlu0.c.b16.cont [4/8] 0, 128
    %1260 = vxpose.xlu0.c.b16.cont [5/8] 0, 128
    %1261 = vxpose.xlu0.c.b16.cont [6/8] 0, 128
    %1262 = vxpose.xlu0.c.b16.cont [7/8] 0, 128
    %1263 = vxpose.xlu0.c.b16.end [8/8] 0, 128
    %v1264 = vpop.trf.xlu0
    %v1265 = vpop.trf.xlu0
    %v1266 = vpop.trf.xlu0
    %v1267 = vpop.trf.xlu0
    %v1268 = vpop.trf.xlu0
    %v1269 = vpop.trf.xlu0
    %v1270 = vpop.trf.xlu0
    %v1271 = vpop.trf.xlu0
    %1272 = vxpose.xlu0.c.b16.start [1/8] %v946, 128
    %1273 = vxpose.xlu0.c.b16.cont [2/8] 0, 128
    %1274 = vxpose.xlu0.c.b16.cont [3/8] 0, 128
    %1275 = vxpose.xlu0.c.b16.cont [4/8] 0, 128
    %1276 = vxpose.xlu0.c.b16.cont [5/8] 0, 128
    %1277 = vxpose.xlu0.c.b16.cont [6/8] 0, 128
    %1278 = vxpose.xlu0.c.b16.cont [7/8] 0, 128
    %1279 = vxpose.xlu0.c.b16.end [8/8] 0, 128
    %v1280 = vpop.trf.xlu0
    %v1281 = vpop.trf.xlu0
    %v1282 = vpop.trf.xlu0
    %v1283 = vpop.trf.xlu0
    %v1284 = vpop.trf.xlu0
    %v1285 = vpop.trf.xlu0
    %v1286 = vpop.trf.xlu0
    %v1287 = vpop.trf.xlu0
    %1288 = vxpose.xlu0.c.b16.start [1/8] %v947, 128
    %1289 = vxpose.xlu0.c.b16.cont [2/8] 0, 128
    %1290 = vxpose.xlu0.c.b16.cont [3/8] 0, 128
    %1291 = vxpose.xlu0.c.b16.cont [4/8] 0, 128
    %1292 = vxpose.xlu0.c.b16.cont [5/8] 0, 128
    %1293 = vxpose.xlu0.c.b16.cont [6/8] 0, 128
    %1294 = vxpose.xlu0.c.b16.cont [7/8] 0, 128
    %1295 = vxpose.xlu0.c.b16.end [8/8] 0, 128
    %v1296 = vpop.trf.xlu0
    %v1297 = vpop.trf.xlu0
    %v1298 = vpop.trf.xlu0
    %v1299 = vpop.trf.xlu0
    %v1300 = vpop.trf.xlu0
    %v1301 = vpop.trf.xlu0
    %v1302 = vpop.trf.xlu0
    %v1303 = vpop.trf.xlu0
    %1304 = vxpose.xlu0.c.b16.start [1/8] %v948, 128
    %1305 = vxpose.xlu0.c.b16.cont [2/8] 0, 128
    %1306 = vxpose.xlu0.c.b16.cont [3/8] 0, 128
    %1307 = vxpose.xlu0.c.b16.cont [4/8] 0, 128
    %1308 = vxpose.xlu0.c.b16.cont [5/8] 0, 128
    %1309 = vxpose.xlu0.c.b16.cont [6/8] 0, 128
    %1310 = vxpose.xlu0.c.b16.cont [7/8] 0, 128
    %1311 = vxpose.xlu0.c.b16.end [8/8] 0, 128
    %v1312 = vpop.trf.xlu0
    %v1313 = vpop.trf.xlu0
    %v1314 = vpop.trf.xlu0
    %v1315 = vpop.trf.xlu0
    %v1316 = vpop.trf.xlu0
    %v1317 = vpop.trf.xlu0
    %v1318 = vpop.trf.xlu0
    %v1319 = vpop.trf.xlu0
    %1320 = vxpose.xlu0.c.b16.start [1/8] %v949, 128
    %1321 = vxpose.xlu0.c.b16.cont [2/8] 0, 128
    %1322 = vxpose.xlu0.c.b16.cont [3/8] 0, 128
    %1323 = vxpose.xlu0.c.b16.cont [4/8] 0, 128
    %1324 = vxpose.xlu0.c.b16.cont [5/8] 0, 128
    %1325 = vxpose.xlu0.c.b16.cont [6/8] 0, 128
    %1326 = vxpose.xlu0.c.b16.cont [7/8] 0, 128
    %1327 = vxpose.xlu0.c.b16.end [8/8] 0, 128
    %v1328 = vpop.trf.xlu0
    %v1329 = vpop.trf.xlu0
    %v1330 = vpop.trf.xlu0
    %v1331 = vpop.trf.xlu0
    %v1332 = vpop.trf.xlu0
    %v1333 = vpop.trf.xlu0
    %v1334 = vpop.trf.xlu0
    %v1335 = vpop.trf.xlu0
    %1336 = vxpose.xlu0.c.b16.start [1/8] %v950, 128
    %1337 = vxpose.xlu0.c.b16.cont [2/8] 0, 128
    %1338 = vxpose.xlu0.c.b16.cont [3/8] 0, 128
    %1339 = vxpose.xlu0.c.b16.cont [4/8] 0, 128
    %1340 = vxpose.xlu0.c.b16.cont [5/8] 0, 128
    %1341 = vxpose.xlu0.c.b16.cont [6/8] 0, 128
    %1342 = vxpose.xlu0.c.b16.cont [7/8] 0, 128
    %1343 = vxpose.xlu0.c.b16.end [8/8] 0, 128
    %v1344 = vpop.trf.xlu0
    %v1345 = vpop.trf.xlu0
    %v1346 = vpop.trf.xlu0
    %v1347 = vpop.trf.xlu0
    %v1348 = vpop.trf.xlu0
    %v1349 = vpop.trf.xlu0
    %v1350 = vpop.trf.xlu0
    %v1351 = vpop.trf.xlu0
    %1352 = vxpose.xlu0.c.b16.start [1/8] %v951, 128
    %1353 = vxpose.xlu0.c.b16.cont [2/8] 0, 128
    %1354 = vxpose.xlu0.c.b16.cont [3/8] 0, 128
    %1355 = vxpose.xlu0.c.b16.cont [4/8] 0, 128
    %1356 = vxpose.xlu0.c.b16.cont [5/8] 0, 128
    %1357 = vxpose.xlu0.c.b16.cont [6/8] 0, 128
    %1358 = vxpose.xlu0.c.b16.cont [7/8] 0, 128
    %1359 = vxpose.xlu0.c.b16.end [8/8] 0, 128
    %v1360 = vpop.trf.xlu0
    %v1361 = vpop.trf.xlu0
    %v1362 = vpop.trf.xlu0
    %v1363 = vpop.trf.xlu0
    %v1364 = vpop.trf.xlu0
    %v1365 = vpop.trf.xlu0
    %v1366 = vpop.trf.xlu0
    %v1367 = vpop.trf.xlu0
    %v1368 = vcombine.low %v1120, %v1184
    %v1370 = vunpack.c.l.s4 1983009808
    %v1371 = vunpack.c.0.s8 %v1370
    %v1372 = vlaneseq
    %v1373 = vshrl.u32 %v1372, 7
    %v1374 = vsub.s32 %v1371, %v1373
    %v1375 = vrot.slane %v1368, %v1374
    %v1376 = vcombine.low %v1152, %v1216
    %v1378 = vunpack.c.l.s4 1983009808
    %v1379 = vunpack.c.0.s8 %v1378
    %v1380 = vlaneseq
    %v1381 = vshrl.u32 %v1380, 7
    %v1382 = vsub.s32 %v1379, %v1381
    %v1383 = vrot.slane %v1376, %v1382
    %v1384 = vcombine.low %v1248, %v1312
    %v1386 = vunpack.c.l.s4 1983009808
    %v1387 = vunpack.c.0.s8 %v1386
    %v1388 = vlaneseq
    %v1389 = vshrl.u32 %v1388, 7
    %v1390 = vsub.s32 %v1387, %v1389
    %v1391 = vrot.slane %v1384, %v1390
    %v1392 = vcombine.low %v1280, %v1344
    %v1394 = vunpack.c.l.s4 1983009808
    %v1395 = vunpack.c.0.s8 %v1394
    %v1396 = vlaneseq
    %v1397 = vshrl.u32 %v1396, 7
    %v1398 = vsub.s32 %v1395, %v1397
    %v1399 = vrot.slane %v1392, %v1398
    %v1400 = vcombine.low %v1375, %v1383
    %v1402 = vunpack.c.l.s4 1934713408
    %v1403 = vunpack.c.0.s8 %v1402
    %v1404 = vlaneseq
    %v1405 = vshrl.u32 %v1404, 7
    %v1406 = vsub.s32 %v1403, %v1405
    %v1407 = vrot.slane %v1400, %v1406
    %v1408 = vcombine.low %v1391, %v1399
    %v1410 = vunpack.c.l.s4 1934713408
    %v1411 = vunpack.c.0.s8 %v1410
    %v1412 = vlaneseq
    %v1413 = vshrl.u32 %v1412, 7
    %v1414 = vsub.s32 %v1411, %v1413
    %v1415 = vrot.slane %v1408, %v1414
    %v1416 = vcombine.low %v1407, %v1415
    %v1417 = vcombine.high %v1407, %v1415
    %v1418 = vcombine.low %v1136, %v1200
    %v1420 = vunpack.c.l.s4 1983009808
    %v1421 = vunpack.c.0.s8 %v1420
    %v1422 = vlaneseq
    %v1423 = vshrl.u32 %v1422, 7
    %v1424 = vsub.s32 %v1421, %v1423
    %v1425 = vrot.slane %v1418, %v1424
    %v1426 = vcombine.low %v1168, %v1232
    %v1428 = vunpack.c.l.s4 1983009808
    %v1429 = vunpack.c.0.s8 %v1428
    %v1430 = vlaneseq
    %v1431 = vshrl.u32 %v1430, 7
    %v1432 = vsub.s32 %v1429, %v1431
    %v1433 = vrot.slane %v1426, %v1432
    %v1434 = vcombine.low %v1264, %v1328
    %v1436 = vunpack.c.l.s4 1983009808
    %v1437 = vunpack.c.0.s8 %v1436
    %v1438 = vlaneseq
    %v1439 = vshrl.u32 %v1438, 7
    %v1440 = vsub.s32 %v1437, %v1439
    %v1441 = vrot.slane %v1434, %v1440
    %v1442 = vcombine.low %v1296, %v1360
    %v1444 = vunpack.c.l.s4 1983009808
    %v1445 = vunpack.c.0.s8 %v1444
    %v1446 = vlaneseq
    %v1447 = vshrl.u32 %v1446, 7
    %v1448 = vsub.s32 %v1445, %v1447
    %v1449 = vrot.slane %v1442, %v1448
    %v1450 = vcombine.low %v1425, %v1433
    %v1452 = vunpack.c.l.s4 1934713408
    %v1453 = vunpack.c.0.s8 %v1452
    %v1454 = vlaneseq
    %v1455 = vshrl.u32 %v1454, 7
    %v1456 = vsub.s32 %v1453, %v1455
    %v1457 = vrot.slane %v1450, %v1456
    %v1458 = vcombine.low %v1441, %v1449
    %v1460 = vunpack.c.l.s4 1934713408
    %v1461 = vunpack.c.0.s8 %v1460
    %v1462 = vlaneseq
    %v1463 = vshrl.u32 %v1462, 7
    %v1464 = vsub.s32 %v1461, %v1463
    %v1465 = vrot.slane %v1458, %v1464
    %v1466 = vcombine.low %v1457, %v1465
    %v1467 = vcombine.high %v1457, %v1465
    %v1470 = vpack.i.b16 %v1466, %v1416
    %v1472 = vshrl.u32 %v1416, 16
    %v1473 = vshrl.u32 %v1466, 16
    %v1474 = vpack.i.b16 %v1473, %v1472
    %v1478 = vpack.i.b16 %v1467, %v1417
    %v1480 = vshrl.u32 %v1417, 16
    %v1481 = vshrl.u32 %v1467, 16
    %v1482 = vpack.i.b16 %v1481, %v1480
    %1484 = vxpose.xlu0.c.b16.start [1/8] %v1470, 128
    %1485 = vxpose.xlu0.c.b16.cont [2/8] 0, 128
    %1486 = vxpose.xlu0.c.b16.cont [3/8] 0, 128
    %1487 = vxpose.xlu0.c.b16.cont [4/8] 0, 128
    %1488 = vxpose.xlu0.c.b16.cont [5/8] 0, 128
    %1489 = vxpose.xlu0.c.b16.cont [6/8] 0, 128
    %1490 = vxpose.xlu0.c.b16.cont [7/8] 0, 128
    %1491 = vxpose.xlu0.c.b16.end [8/8] 0, 128
    %v1492 = vpop.trf.xlu0
    %v1493 = vpop.trf.xlu0
    %v1494 = vpop.trf.xlu0
    %v1495 = vpop.trf.xlu0
    %v1496 = vpop.trf.xlu0
    %v1497 = vpop.trf.xlu0
    %v1498 = vpop.trf.xlu0
    %v1499 = vpop.trf.xlu0
    %1500 = vxpose.xlu0.c.b16.start [1/8] %v1474, 128
    %1501 = vxpose.xlu0.c.b16.cont [2/8] 0, 128
    %1502 = vxpose.xlu0.c.b16.cont [3/8] 0, 128
    %1503 = vxpose.xlu0.c.b16.cont [4/8] 0, 128
    %1504 = vxpose.xlu0.c.b16.cont [5/8] 0, 128
    %1505 = vxpose.xlu0.c.b16.cont [6/8] 0, 128
    %1506 = vxpose.xlu0.c.b16.cont [7/8] 0, 128
    %1507 = vxpose.xlu0.c.b16.end [8/8] 0, 128
    %v1508 = vpop.trf.xlu0
    %v1509 = vpop.trf.xlu0
    %v1510 = vpop.trf.xlu0
    %v1511 = vpop.trf.xlu0
    %v1512 = vpop.trf.xlu0
    %v1513 = vpop.trf.xlu0
    %v1514 = vpop.trf.xlu0
    %v1515 = vpop.trf.xlu0
    %1516 = vxpose.xlu0.c.b16.start [1/8] %v1478, 128
    %1517 = vxpose.xlu0.c.b16.cont [2/8] 0, 128
    %1518 = vxpose.xlu0.c.b16.cont [3/8] 0, 128
    %1519 = vxpose.xlu0.c.b16.cont [4/8] 0, 128
    %1520 = vxpose.xlu0.c.b16.cont [5/8] 0, 128
    %1521 = vxpose.xlu0.c.b16.cont [6/8] 0, 128
    %1522 = vxpose.xlu0.c.b16.cont [7/8] 0, 128
    %1523 = vxpose.xlu0.c.b16.end [8/8] 0, 128
    %v1524 = vpop.trf.xlu0
    %v1525 = vpop.trf.xlu0
    %v1526 = vpop.trf.xlu0
    %v1527 = vpop.trf.xlu0
    %v1528 = vpop.trf.xlu0
    %v1529 = vpop.trf.xlu0
    %v1530 = vpop.trf.xlu0
    %v1531 = vpop.trf.xlu0
    %1532 = vxpose.xlu0.c.b16.start [1/8] %v1482, 128
    %1533 = vxpose.xlu0.c.b16.cont [2/8] 0, 128
    %1534 = vxpose.xlu0.c.b16.cont [3/8] 0, 128
    %1535 = vxpose.xlu0.c.b16.cont [4/8] 0, 128
    %1536 = vxpose.xlu0.c.b16.cont [5/8] 0, 128
    %1537 = vxpose.xlu0.c.b16.cont [6/8] 0, 128
    %1538 = vxpose.xlu0.c.b16.cont [7/8] 0, 128
    %1539 = vxpose.xlu0.c.b16.end [8/8] 0, 128
    %v1540 = vpop.trf.xlu0
    %v1541 = vpop.trf.xlu0
    %v1542 = vpop.trf.xlu0
    %v1543 = vpop.trf.xlu0
    %v1544 = vpop.trf.xlu0
    %v1545 = vpop.trf.xlu0
    %v1546 = vpop.trf.xlu0
    %v1547 = vpop.trf.xlu0
    %v1549 = vunpack.c.l.s4 1983009808
    %v1550 = vunpack.c.0.s8 %v1549
    %v1551 = vlaneseq
    %v1552 = vshrl.u32 %v1551, 7
    %v1553 = vsub.s32 %v1550, %v1552
    %v1554 = vrot.slane %v1492, %v1553
    %v1556 = vunpack.c.l.s4 1983009808
    %v1557 = vunpack.c.0.s8 %v1556
    %v1558 = vlaneseq
    %v1559 = vshrl.u32 %v1558, 7
    %v1560 = vsub.s32 %v1557, %v1559
    %v1561 = vrot.slane %v1524, %v1560
    %v1562 = vcombine.low %v1554, %v1561
    %v1563 = vcombine.high %v1554, %v1561
    %v1565 = vunpack.c.l.s4 1934713408
    %v1566 = vunpack.c.0.s8 %v1565
    %v1567 = vlaneseq
    %v1568 = vshrl.u32 %v1567, 7
    %v1569 = vsub.s32 %v1566, %v1568
    %v1570 = vrot.slane %v1562, %v1569
    %v1572 = vunpack.c.l.s4 1934713408
    %v1573 = vunpack.c.0.s8 %v1572
    %v1574 = vlaneseq
    %v1575 = vshrl.u32 %v1574, 7
    %v1576 = vsub.s32 %v1573, %v1575
    %v1577 = vrot.slane %v1563, %v1576
    %v1578 = vcombine.high %v1570, 0
    %v1579 = vcombine.high %v1577, 0
    %v1581 = vunpack.c.l.s4 1983009808
    %v1582 = vunpack.c.0.s8 %v1581
    %v1583 = vlaneseq
    %v1584 = vshrl.u32 %v1583, 7
    %v1585 = vsub.s32 %v1582, %v1584
    %v1586 = vrot.slane %v1508, %v1585
    %v1588 = vunpack.c.l.s4 1983009808
    %v1589 = vunpack.c.0.s8 %v1588
    %v1590 = vlaneseq
    %v1591 = vshrl.u32 %v1590, 7
    %v1592 = vsub.s32 %v1589, %v1591
    %v1593 = vrot.slane %v1540, %v1592
    %v1594 = vcombine.low %v1586, %v1593
    %v1595 = vcombine.high %v1586, %v1593
    %v1597 = vunpack.c.l.s4 1934713408
    %v1598 = vunpack.c.0.s8 %v1597
    %v1599 = vlaneseq
    %v1600 = vshrl.u32 %v1599, 7
    %v1601 = vsub.s32 %v1598, %v1600
    %v1602 = vrot.slane %v1594, %v1601
    %v1604 = vunpack.c.l.s4 1934713408
    %v1605 = vunpack.c.0.s8 %v1604
    %v1606 = vlaneseq
    %v1607 = vshrl.u32 %v1606, 7
    %v1608 = vsub.s32 %v1605, %v1607
    %v1609 = vrot.slane %v1595, %v1608
    %v1610 = vcombine.high %v1602, 0
    %v1611 = vcombine.high %v1609, 0
    %v1614 = vpack.i.b16 %v1602, %v1570
    %v1615 = vshrl.u32 %v1570, 16
    %v1616 = vshrl.u32 %v1602, 16
    %v1617 = vpack.i.b16 %v1616, %v1615
    %v1620 = vpack.i.b16 %v1610, %v1578
    %v1621 = vshrl.u32 %v1578, 16
    %v1622 = vshrl.u32 %v1610, 16
    %v1623 = vpack.i.b16 %v1622, %v1621
    %v1626 = vpack.i.b16 %v1609, %v1577
    %v1627 = vshrl.u32 %v1577, 16
    %v1628 = vshrl.u32 %v1609, 16
    %v1629 = vpack.i.b16 %v1628, %v1627
    %v1632 = vpack.i.b16 %v1611, %v1579
    %v1633 = vshrl.u32 %v1579, 16
    %v1634 = vshrl.u32 %v1611, 16
    %v1635 = vpack.i.b16 %v1634, %v1633
    %vm1636 = vcmask 31744
    %v1638 = vsel %vm1636, %v1090, 0
    %vm1640 = vcmask 1041408
    %v1642 = vsel %vm1640, %v1614, 0
    %1644 = vmatprep.subr.bf16.mxu0 0
    %1645 = vmatpush1.bf16.msra.mxu0 0
    %1646 = vmatprep.subr.bf16.mxu0 0
    %1647 = vmatpush1.bf16.msra.mxu0 0
    %1648 = vmatprep.subr.bf16.mxu0 0
    %1649 = vmatpush1.bf16.msra.mxu0 0
    %1650 = vmatprep.subr.bf16.mxu0 0
    %1651 = vmatpush1.bf16.msra.mxu0 0
    %1652 = vmatprep.subr.bf16.mxu0 0
    %1653 = vmatpush1.bf16.msra.mxu0 0
    %1654 = vmatprep.subr.bf16.mxu0 0
    %1655 = vmatpush1.bf16.msra.mxu0 0
    %1656 = vmatprep.subr.bf16.mxu0 0
    %1657 = vmatpush1.bf16.msra.mxu0 0
    %1658 = vmatprep.subr.bf16.mxu0 0
    %1659 = vmatpush1.bf16.msra.mxu0 %v1642
    %1660 = vmatprep.subr.bf16.mxu0 0
    %1661 = vmatpush2.bf16.msra.mxu0 0
    %1662 = vmatprep.subr.bf16.mxu0 0
    %1663 = vmatpush2.bf16.msra.mxu0 0
    %1664 = vmatprep.subr.bf16.mxu0 0
    %1665 = vmatpush2.bf16.msra.mxu0 0
    %1666 = vmatprep.subr.bf16.mxu0 0
    %1667 = vmatpush2.bf16.msra.mxu0 0
    %1668 = vmatprep.subr.bf16.mxu0 0
    %1669 = vmatpush2.bf16.msra.mxu0 0
    %1670 = vmatprep.subr.bf16.mxu0 0
    %1671 = vmatpush2.bf16.msra.mxu0 0
    %1672 = vmatprep.subr.bf16.mxu0 0
    %1673 = vmatpush2.bf16.msra.mxu0 0
    %1674 = vmatprep.subr.bf16.mxu0 0
    %1675 = vmatpush2.bf16.msra.mxu0 0
    %1676 = vmatprep.mubr.bf16.mxu0 0
    %1677 = vmatmul.mubr.bf16.gmra.mxu0 %v1638
    %v1678 = vpop.f32.mrf.mxu0
    %v1679 = vadd.f32 0.0, %v1678
    %v1680 = vpop.f32.mrf.mxu0
    %v1681 = vpop.f32.mrf.mxu0
    %v1682 = vadd.f32 0.0, %v1681
    %v1683 = vpop.f32.mrf.mxu0
    %1684 = vdwg.mxu0
    %v1686 = vsel %vm1636, %v1093, 0
    %v1689 = vsel %vm1640, %v1617, 0
    %1691 = vmatprep.subr.bf16.mxu0 0
    %1692 = vmatpush1.bf16.msra.mxu0 0
    %1693 = vmatprep.subr.bf16.mxu0 0
    %1694 = vmatpush1.bf16.msra.mxu0 0
    %1695 = vmatprep.subr.bf16.mxu0 0
    %1696 = vmatpush1.bf16.msra.mxu0 0
    %1697 = vmatprep.subr.bf16.mxu0 0
    %1698 = vmatpush1.bf16.msra.mxu0 0
    %1699 = vmatprep.subr.bf16.mxu0 0
    %1700 = vmatpush1.bf16.msra.mxu0 0
    %1701 = vmatprep.subr.bf16.mxu0 0
    %1702 = vmatpush1.bf16.msra.mxu0 0
    %1703 = vmatprep.subr.bf16.mxu0 0
    %1704 = vmatpush1.bf16.msra.mxu0 0
    %1705 = vmatprep.subr.bf16.mxu0 0
    %1706 = vmatpush1.bf16.msra.mxu0 %v1689
    %1707 = vmatprep.subr.bf16.mxu0 0
    %1708 = vmatpush2.bf16.msra.mxu0 0
    %1709 = vmatprep.subr.bf16.mxu0 0
    %1710 = vmatpush2.bf16.msra.mxu0 0
    %1711 = vmatprep.subr.bf16.mxu0 0
    %1712 = vmatpush2.bf16.msra.mxu0 0
    %1713 = vmatprep.subr.bf16.mxu0 0
    %1714 = vmatpush2.bf16.msra.mxu0 0
    %1715 = vmatprep.subr.bf16.mxu0 0
    %1716 = vmatpush2.bf16.msra.mxu0 0
    %1717 = vmatprep.subr.bf16.mxu0 0
    %1718 = vmatpush2.bf16.msra.mxu0 0
    %1719 = vmatprep.subr.bf16.mxu0 0
    %1720 = vmatpush2.bf16.msra.mxu0 0
    %1721 = vmatprep.subr.bf16.mxu0 0
    %1722 = vmatpush2.bf16.msra.mxu0 0
    %1723 = vmatprep.mubr.bf16.mxu0 0
    %1724 = vmatmul.mubr.bf16.gmra.mxu0 %v1686
    %v1725 = vpop.f32.mrf.mxu0
    %v1726 = vadd.f32 0.0, %v1725
    %v1727 = vpop.f32.mrf.mxu0
    %v1728 = vpop.f32.mrf.mxu0
    %v1729 = vadd.f32 0.0, %v1728
    %v1730 = vpop.f32.mrf.mxu0
    %1731 = vdwg.mxu0
    %v1733 = vsel %vm1636, %v1096, 0
    %v1736 = vsel %vm1640, %v1620, 0
    %1738 = vmatprep.subr.bf16.mxu0 0
    %1739 = vmatpush1.bf16.msra.mxu0 0
    %1740 = vmatprep.subr.bf16.mxu0 0
    %1741 = vmatpush1.bf16.msra.mxu0 0
    %1742 = vmatprep.subr.bf16.mxu0 0
    %1743 = vmatpush1.bf16.msra.mxu0 0
    %1744 = vmatprep.subr.bf16.mxu0 0
    %1745 = vmatpush1.bf16.msra.mxu0 0
    %1746 = vmatprep.subr.bf16.mxu0 0
    %1747 = vmatpush1.bf16.msra.mxu0 0
    %1748 = vmatprep.subr.bf16.mxu0 0
    %1749 = vmatpush1.bf16.msra.mxu0 0
    %1750 = vmatprep.subr.bf16.mxu0 0
    %1751 = vmatpush1.bf16.msra.mxu0 0
    %1752 = vmatprep.subr.bf16.mxu0 0
    %1753 = vmatpush1.bf16.msra.mxu0 %v1736
    %1754 = vmatprep.subr.bf16.mxu0 0
    %1755 = vmatpush2.bf16.msra.mxu0 0
    %1756 = vmatprep.subr.bf16.mxu0 0
    %1757 = vmatpush2.bf16.msra.mxu0 0
    %1758 = vmatprep.subr.bf16.mxu0 0
    %1759 = vmatpush2.bf16.msra.mxu0 0
    %1760 = vmatprep.subr.bf16.mxu0 0
    %1761 = vmatpush2.bf16.msra.mxu0 0
    %1762 = vmatprep.subr.bf16.mxu0 0
    %1763 = vmatpush2.bf16.msra.mxu0 0
    %1764 = vmatprep.subr.bf16.mxu0 0
    %1765 = vmatpush2.bf16.msra.mxu0 0
    %1766 = vmatprep.subr.bf16.mxu0 0
    %1767 = vmatpush2.bf16.msra.mxu0 0
    %1768 = vmatprep.subr.bf16.mxu0 0
    %1769 = vmatpush2.bf16.msra.mxu0 0
    %1770 = vmatprep.mubr.bf16.mxu0 0
    %1771 = vmatmul.mubr.bf16.gmra.mxu0 %v1733
    %v1772 = vpop.f32.mrf.mxu0
    %v1773 = vadd.f32 0.0, %v1772
    %v1774 = vpop.f32.mrf.mxu0
    %v1775 = vpop.f32.mrf.mxu0
    %v1776 = vadd.f32 0.0, %v1775
    %v1777 = vpop.f32.mrf.mxu0
    %1778 = vdwg.mxu0
    %v1780 = vsel %vm1636, %v1099, 0
    %v1783 = vsel %vm1640, %v1623, 0
    %1785 = vmatprep.subr.bf16.mxu0 0
    %1786 = vmatpush1.bf16.msra.mxu0 0
    %1787 = vmatprep.subr.bf16.mxu0 0
    %1788 = vmatpush1.bf16.msra.mxu0 0
    %1789 = vmatprep.subr.bf16.mxu0 0
    %1790 = vmatpush1.bf16.msra.mxu0 0
    %1791 = vmatprep.subr.bf16.mxu0 0
    %1792 = vmatpush1.bf16.msra.mxu0 0
    %1793 = vmatprep.subr.bf16.mxu0 0
    %1794 = vmatpush1.bf16.msra.mxu0 0
    %1795 = vmatprep.subr.bf16.mxu0 0
    %1796 = vmatpush1.bf16.msra.mxu0 0
    %1797 = vmatprep.subr.bf16.mxu0 0
    %1798 = vmatpush1.bf16.msra.mxu0 0
    %1799 = vmatprep.subr.bf16.mxu0 0
    %1800 = vmatpush1.bf16.msra.mxu0 %v1783
    %1801 = vmatprep.subr.bf16.mxu0 0
    %1802 = vmatpush2.bf16.msra.mxu0 0
    %1803 = vmatprep.subr.bf16.mxu0 0
    %1804 = vmatpush2.bf16.msra.mxu0 0
    %1805 = vmatprep.subr.bf16.mxu0 0
    %1806 = vmatpush2.bf16.msra.mxu0 0
    %1807 = vmatprep.subr.bf16.mxu0 0
    %1808 = vmatpush2.bf16.msra.mxu0 0
    %1809 = vmatprep.subr.bf16.mxu0 0
    %1810 = vmatpush2.bf16.msra.mxu0 0
    %1811 = vmatprep.subr.bf16.mxu0 0
    %1812 = vmatpush2.bf16.msra.mxu0 0
    %1813 = vmatprep.subr.bf16.mxu0 0
    %1814 = vmatpush2.bf16.msra.mxu0 0
    %1815 = vmatprep.subr.bf16.mxu0 0
    %1816 = vmatpush2.bf16.msra.mxu0 0
    %1817 = vmatprep.mubr.bf16.mxu0 0
    %1818 = vmatmul.mubr.bf16.gmra.mxu0 %v1780
    %v1819 = vpop.f32.mrf.mxu0
    %v1820 = vadd.f32 0.0, %v1819
    %v1821 = vpop.f32.mrf.mxu0
    %v1822 = vpop.f32.mrf.mxu0
    %v1823 = vadd.f32 0.0, %v1822
    %v1824 = vpop.f32.mrf.mxu0
    %1825 = vdwg.mxu0
    %v1827 = vsel %vm1636, %v1102, 0
    %v1830 = vsel %vm1640, %v1626, 0
    %1832 = vmatprep.subr.bf16.mxu0 0
    %1833 = vmatpush1.bf16.msra.mxu0 0
    %1834 = vmatprep.subr.bf16.mxu0 0
    %1835 = vmatpush1.bf16.msra.mxu0 0
    %1836 = vmatprep.subr.bf16.mxu0 0
    %1837 = vmatpush1.bf16.msra.mxu0 0
    %1838 = vmatprep.subr.bf16.mxu0 0
    %1839 = vmatpush1.bf16.msra.mxu0 0
    %1840 = vmatprep.subr.bf16.mxu0 0
    %1841 = vmatpush1.bf16.msra.mxu0 0
    %1842 = vmatprep.subr.bf16.mxu0 0
    %1843 = vmatpush1.bf16.msra.mxu0 0
    %1844 = vmatprep.subr.bf16.mxu0 0
    %1845 = vmatpush1.bf16.msra.mxu0 0
    %1846 = vmatprep.subr.bf16.mxu0 0
    %1847 = vmatpush1.bf16.msra.mxu0 %v1830
    %1848 = vmatprep.subr.bf16.mxu0 0
    %1849 = vmatpush2.bf16.msra.mxu0 0
    %1850 = vmatprep.subr.bf16.mxu0 0
    %1851 = vmatpush2.bf16.msra.mxu0 0
    %1852 = vmatprep.subr.bf16.mxu0 0
    %1853 = vmatpush2.bf16.msra.mxu0 0
    %1854 = vmatprep.subr.bf16.mxu0 0
    %1855 = vmatpush2.bf16.msra.mxu0 0
    %1856 = vmatprep.subr.bf16.mxu0 0
    %1857 = vmatpush2.bf16.msra.mxu0 0
    %1858 = vmatprep.subr.bf16.mxu0 0
    %1859 = vmatpush2.bf16.msra.mxu0 0
    %1860 = vmatprep.subr.bf16.mxu0 0
    %1861 = vmatpush2.bf16.msra.mxu0 0
    %1862 = vmatprep.subr.bf16.mxu0 0
    %1863 = vmatpush2.bf16.msra.mxu0 0
    %1864 = vmatprep.mubr.bf16.mxu0 0
    %1865 = vmatmul.mubr.bf16.gmra.mxu0 %v1827
    %v1866 = vpop.f32.mrf.mxu0
    %v1867 = vadd.f32 0.0, %v1866
    %v1868 = vpop.f32.mrf.mxu0
    %v1869 = vpop.f32.mrf.mxu0
    %v1870 = vadd.f32 0.0, %v1869
    %v1871 = vpop.f32.mrf.mxu0
    %1872 = vdwg.mxu0
    %v1874 = vsel %vm1636, %v1105, 0
    %v1877 = vsel %vm1640, %v1629, 0
    %1879 = vmatprep.subr.bf16.mxu0 0
    %1880 = vmatpush1.bf16.msra.mxu0 0
    %1881 = vmatprep.subr.bf16.mxu0 0
    %1882 = vmatpush1.bf16.msra.mxu0 0
    %1883 = vmatprep.subr.bf16.mxu0 0
    %1884 = vmatpush1.bf16.msra.mxu0 0
    %1885 = vmatprep.subr.bf16.mxu0 0
    %1886 = vmatpush1.bf16.msra.mxu0 0
    %1887 = vmatprep.subr.bf16.mxu0 0
    %1888 = vmatpush1.bf16.msra.mxu0 0
    %1889 = vmatprep.subr.bf16.mxu0 0
    %1890 = vmatpush1.bf16.msra.mxu0 0
    %1891 = vmatprep.subr.bf16.mxu0 0
    %1892 = vmatpush1.bf16.msra.mxu0 0
    %1893 = vmatprep.subr.bf16.mxu0 0
    %1894 = vmatpush1.bf16.msra.mxu0 %v1877
    %1895 = vmatprep.subr.bf16.mxu0 0
    %1896 = vmatpush2.bf16.msra.mxu0 0
    %1897 = vmatprep.subr.bf16.mxu0 0
    %1898 = vmatpush2.bf16.msra.mxu0 0
    %1899 = vmatprep.subr.bf16.mxu0 0
    %1900 = vmatpush2.bf16.msra.mxu0 0
    %1901 = vmatprep.subr.bf16.mxu0 0
    %1902 = vmatpush2.bf16.msra.mxu0 0
    %1903 = vmatprep.subr.bf16.mxu0 0
    %1904 = vmatpush2.bf16.msra.mxu0 0
    %1905 = vmatprep.subr.bf16.mxu0 0
    %1906 = vmatpush2.bf16.msra.mxu0 0
    %1907 = vmatprep.subr.bf16.mxu0 0
    %1908 = vmatpush2.bf16.msra.mxu0 0
    %1909 = vmatprep.subr.bf16.mxu0 0
    %1910 = vmatpush2.bf16.msra.mxu0 0
    %1911 = vmatprep.mubr.bf16.mxu0 0
    %1912 = vmatmul.mubr.bf16.gmra.mxu0 %v1874
    %v1913 = vpop.f32.mrf.mxu0
    %v1914 = vadd.f32 0.0, %v1913
    %v1915 = vpop.f32.mrf.mxu0
    %v1916 = vpop.f32.mrf.mxu0
    %v1917 = vadd.f32 0.0, %v1916
    %v1918 = vpop.f32.mrf.mxu0
    %1919 = vdwg.mxu0
    %v1921 = vsel %vm1636, %v1108, 0
    %v1924 = vsel %vm1640, %v1632, 0
    %1926 = vmatprep.subr.bf16.mxu0 0
    %1927 = vmatpush1.bf16.msra.mxu0 0
    %1928 = vmatprep.subr.bf16.mxu0 0
    %1929 = vmatpush1.bf16.msra.mxu0 0
    %1930 = vmatprep.subr.bf16.mxu0 0
    %1931 = vmatpush1.bf16.msra.mxu0 0
    %1932 = vmatprep.subr.bf16.mxu0 0
    %1933 = vmatpush1.bf16.msra.mxu0 0
    %1934 = vmatprep.subr.bf16.mxu0 0
    %1935 = vmatpush1.bf16.msra.mxu0 0
    %1936 = vmatprep.subr.bf16.mxu0 0
    %1937 = vmatpush1.bf16.msra.mxu0 0
    %1938 = vmatprep.subr.bf16.mxu0 0
    %1939 = vmatpush1.bf16.msra.mxu0 0
    %1940 = vmatprep.subr.bf16.mxu0 0
    %1941 = vmatpush1.bf16.msra.mxu0 %v1924
    %1942 = vmatprep.subr.bf16.mxu0 0
    %1943 = vmatpush2.bf16.msra.mxu0 0
    %1944 = vmatprep.subr.bf16.mxu0 0
    %1945 = vmatpush2.bf16.msra.mxu0 0
    %1946 = vmatprep.subr.bf16.mxu0 0
    %1947 = vmatpush2.bf16.msra.mxu0 0
    %1948 = vmatprep.subr.bf16.mxu0 0
    %1949 = vmatpush2.bf16.msra.mxu0 0
    %1950 = vmatprep.subr.bf16.mxu0 0
    %1951 = vmatpush2.bf16.msra.mxu0 0
    %1952 = vmatprep.subr.bf16.mxu0 0
    %1953 = vmatpush2.bf16.msra.mxu0 0
    %1954 = vmatprep.subr.bf16.mxu0 0
    %1955 = vmatpush2.bf16.msra.mxu0 0
    %1956 = vmatprep.subr.bf16.mxu0 0
    %1957 = vmatpush2.bf16.msra.mxu0 0
    %1958 = vmatprep.mubr.bf16.mxu0 0
    %1959 = vmatmul.mubr.bf16.gmra.mxu0 %v1921
    %v1960 = vpop.f32.mrf.mxu0
    %v1961 = vadd.f32 0.0, %v1960
    %v1962 = vpop.f32.mrf.mxu0
    %v1963 = vpop.f32.mrf.mxu0
    %v1964 = vadd.f32 0.0, %v1963
    %v1965 = vpop.f32.mrf.mxu0
    %1966 = vdwg.mxu0
    %v1968 = vsel %vm1636, %v1111, 0
    %v1971 = vsel %vm1640, %v1635, 0
    %1973 = vmatprep.subr.bf16.mxu0 0
    %1974 = vmatpush1.bf16.msra.mxu0 0
    %1975 = vmatprep.subr.bf16.mxu0 0
    %1976 = vmatpush1.bf16.msra.mxu0 0
    %1977 = vmatprep.subr.bf16.mxu0 0
    %1978 = vmatpush1.bf16.msra.mxu0 0
    %1979 = vmatprep.subr.bf16.mxu0 0
    %1980 = vmatpush1.bf16.msra.mxu0 0
    %1981 = vmatprep.subr.bf16.mxu0 0
    %1982 = vmatpush1.bf16.msra.mxu0 0
    %1983 = vmatprep.subr.bf16.mxu0 0
    %1984 = vmatpush1.bf16.msra.mxu0 0
    %1985 = vmatprep.subr.bf16.mxu0 0
    %1986 = vmatpush1.bf16.msra.mxu0 0
    %1987 = vmatprep.subr.bf16.mxu0 0
    %1988 = vmatpush1.bf16.msra.mxu0 %v1971
    %1989 = vmatprep.subr.bf16.mxu0 0
    %1990 = vmatpush2.bf16.msra.mxu0 0
    %1991 = vmatprep.subr.bf16.mxu0 0
    %1992 = vmatpush2.bf16.msra.mxu0 0
    %1993 = vmatprep.subr.bf16.mxu0 0
    %1994 = vmatpush2.bf16.msra.mxu0 0
    %1995 = vmatprep.subr.bf16.mxu0 0
    %1996 = vmatpush2.bf16.msra.mxu0 0
    %1997 = vmatprep.subr.bf16.mxu0 0
    %1998 = vmatpush2.bf16.msra.mxu0 0
    %1999 = vmatprep.subr.bf16.mxu0 0
    %2000 = vmatpush2.bf16.msra.mxu0 0
    %2001 = vmatprep.subr.bf16.mxu0 0
    %2002 = vmatpush2.bf16.msra.mxu0 0
    %2003 = vmatprep.subr.bf16.mxu0 0
    %2004 = vmatpush2.bf16.msra.mxu0 0
    %2005 = vmatprep.mubr.bf16.mxu0 0
    %2006 = vmatmul.mubr.bf16.gmra.mxu0 %v1968
    %v2007 = vpop.f32.mrf.mxu0
    %v2008 = vadd.f32 0.0, %v2007
    %v2009 = vpop.f32.mrf.mxu0
    %v2010 = vpop.f32.mrf.mxu0
    %v2011 = vadd.f32 0.0, %v2010
    %v2012 = vpop.f32.mrf.mxu0
    %2013 = vdwg.mxu0
    %v2014 = vadd.f32 %v1679, %v1867
    %v2015 = vadd.f32 %v1682, %v1870
    %v2016 = vadd.f32 %v1726, %v1914
    %v2017 = vadd.f32 %v1729, %v1917
    %v2018 = vadd.f32 %v1773, %v1961
    %v2019 = vadd.f32 %v1776, %v1964
    %v2020 = vadd.f32 %v1820, %v2008
    %v2021 = vadd.f32 %v1823, %v2011
    %v2022 = vadd.f32 %v2014, %v104
    %v2023 = vadd.f32 %v2015, %v105
    %v2024 = vadd.f32 %v2016, %v104
    %v2025 = vadd.f32 %v2017, %v105
    %v2026 = vadd.f32 %v2018, %v104
    %v2027 = vadd.f32 %v2019, %v105
    %v2028 = vadd.f32 %v2020, %v104
    %v2029 = vadd.f32 %v2021, %v105
    %v2030 = vsel %vm217, %v2022, -inf
    %2031 = vmax.xlane.f32.xlu0 %v2030
    %v2032 = vpop.xlane.xlu0 %2031
    %v2033 = vsel %vm217, %v2023, -inf
    %2034 = vmax.xlane.f32.xlu0 %v2033
    %v2035 = vpop.xlane.xlu0 %2034
    %v2036 = vsel %vm217, %v2024, -inf
    %2037 = vmax.xlane.f32.xlu0 %v2036
    %v2038 = vpop.xlane.xlu0 %2037
    %v2039 = vsel %vm217, %v2025, -inf
    %2040 = vmax.xlane.f32.xlu0 %v2039
    %v2041 = vpop.xlane.xlu0 %2040
    %v2042 = vsel %vm217, %v2026, -inf
    %2043 = vmax.xlane.f32.xlu0 %v2042
    %v2044 = vpop.xlane.xlu0 %2043
    %v2045 = vsel %vm217, %v2027, -inf
    %2046 = vmax.xlane.f32.xlu0 %v2045
    %v2047 = vpop.xlane.xlu0 %2046
    %v2048 = vsel %vm217, %v2028, -inf
    %2049 = vmax.xlane.f32.xlu0 %v2048
    %v2050 = vpop.xlane.xlu0 %2049
    %v2051 = vsel %vm217, %v2029, -inf
    %2052 = vmax.xlane.f32.xlu0 %v2051
    %v2053 = vpop.xlane.xlu0 %2052
    %v2054 = vsub.f32 %v2022, %v2032
    %v2055 = vsub.f32 %v2023, %v2035
    %v2056 = vsub.f32 %v2024, %v2038
    %v2057 = vsub.f32 %v2025, %v2041
    %v2058 = vsub.f32 %v2026, %v2044
    %v2059 = vsub.f32 %v2027, %v2047
    %v2060 = vsub.f32 %v2028, %v2050
    %v2061 = vsub.f32 %v2029, %v2053
    %v2062 = vmul.f32 %v2054, 1.442695
    %v2063 = vpow.pop %v2062
    %v2064 = vmul.f32 %v2055, 1.442695
    %v2065 = vpow.pop %v2064
    %v2066 = vmul.f32 %v2056, 1.442695
    %v2067 = vpow.pop %v2066
    %v2068 = vmul.f32 %v2057, 1.442695
    %v2069 = vpow.pop %v2068
    %v2070 = vmul.f32 %v2058, 1.442695
    %v2071 = vpow.pop %v2070
    %v2072 = vmul.f32 %v2059, 1.442695
    %v2073 = vpow.pop %v2072
    %v2074 = vmul.f32 %v2060, 1.442695
    %v2075 = vpow.pop %v2074
    %v2076 = vmul.f32 %v2061, 1.442695
    %v2077 = vpow.pop %v2076
    %v2078 = vsel %vm217, %v2063, 0.0
    %2079 = vadd.xlane.f32.xlu0 %v2078
    %v2080 = vpop.xlane.xlu0 %2079
    %v2081 = vsel %vm217, %v2065, 0.0
    %2082 = vadd.xlane.f32.xlu0 %v2081
    %v2083 = vpop.xlane.xlu0 %2082
    %v2084 = vsel %vm217, %v2067, 0.0
    %2085 = vadd.xlane.f32.xlu0 %v2084
    %v2086 = vpop.xlane.xlu0 %2085
    %v2087 = vsel %vm217, %v2069, 0.0
    %2088 = vadd.xlane.f32.xlu0 %v2087
    %v2089 = vpop.xlane.xlu0 %2088
    %v2090 = vsel %vm217, %v2071, 0.0
    %2091 = vadd.xlane.f32.xlu0 %v2090
    %v2092 = vpop.xlane.xlu0 %2091
    %v2093 = vsel %vm217, %v2073, 0.0
    %2094 = vadd.xlane.f32.xlu0 %v2093
    %v2095 = vpop.xlane.xlu0 %2094
    %v2096 = vsel %vm217, %v2075, 0.0
    %2097 = vadd.xlane.f32.xlu0 %v2096
    %v2098 = vpop.xlane.xlu0 %2097
    %v2099 = vsel %vm217, %v2077, 0.0
    %2100 = vadd.xlane.f32.xlu0 %v2099
    %v2101 = vpop.xlane.xlu0 %2100
    %2102 = vrot.lane.b32.xlu0 %v195, 120
    %v2103 = vpop.permute.xlu0 %2102
    %2104 = vrot.lane.b32.xlu0 %v198, 120
    %v2105 = vpop.permute.xlu0 %2104
    %2106 = vrot.lane.b32.xlu0 %v195, 104
    %v2107 = vpop.permute.xlu0 %2106
    %2108 = vrot.lane.b32.xlu0 %v198, 104
    %v2109 = vpop.permute.xlu0 %2108
    %2110 = vrot.lane.b32.xlu0 %v195, 64
    %v2111 = vpop.permute.xlu0 %2110
    %2112 = vrot.lane.b32.xlu0 %v198, 64
    %v2113 = vpop.permute.xlu0 %2112
    %2114 = vrot.lane.b32.xlu0 %v2103, 64
    %v2115 = vpop.permute.xlu0 %2114
    %2116 = vrot.lane.b32.xlu0 %v2105, 64
    %v2117 = vpop.permute.xlu0 %2116
    %2118 = vrot.lane.b32.xlu0 %v206, 64
    %v2119 = vpop.permute.xlu0 %2118
    %2120 = vrot.lane.b32.xlu0 %v208, 64
    %v2121 = vpop.permute.xlu0 %2120
    %2122 = vrot.lane.b32.xlu0 %v2107, 64
    %v2123 = vpop.permute.xlu0 %2122
    %2124 = vrot.lane.b32.xlu0 %v2109, 64
    %v2125 = vpop.permute.xlu0 %2124
    %v2134 = vcombine.low %v2111, %v2119
    %v2135 = vcombine.high %v2111, %v2119
    %v2137 = vunpack.c.l.s4 1983009808
    %v2138 = vunpack.c.0.s8 %v2137
    %v2139 = vlaneseq
    %v2140 = vshrl.u32 %v2139, 7
    %v2141 = vsub.s32 %v2138, %v2140
    %v2142 = vrot.slane %v2134, %v2141
    %v2144 = vunpack.c.l.s4 1983009808
    %v2145 = vunpack.c.0.s8 %v2144
    %v2146 = vlaneseq
    %v2147 = vshrl.u32 %v2146, 7
    %v2148 = vsub.s32 %v2145, %v2147
    %v2149 = vrot.slane %v2135, %v2148
    %v2150 = vcombine.low %v2115, %v2123
    %v2151 = vcombine.high %v2115, %v2123
    %v2153 = vunpack.c.l.s4 1983009808
    %v2154 = vunpack.c.0.s8 %v2153
    %v2155 = vlaneseq
    %v2156 = vshrl.u32 %v2155, 7
    %v2157 = vsub.s32 %v2154, %v2156
    %v2158 = vrot.slane %v2150, %v2157
    %v2160 = vunpack.c.l.s4 1983009808
    %v2161 = vunpack.c.0.s8 %v2160
    %v2162 = vlaneseq
    %v2163 = vshrl.u32 %v2162, 7
    %v2164 = vsub.s32 %v2161, %v2163
    %v2165 = vrot.slane %v2151, %v2164
    %v2166 = vcombine.low %v2142, %v2158
    %v2167 = vcombine.high %v2142, %v2158
    %v2169 = vunpack.c.l.s4 1934713408
    %v2170 = vunpack.c.0.s8 %v2169
    %v2171 = vlaneseq
    %v2172 = vshrl.u32 %v2171, 7
    %v2173 = vsub.s32 %v2170, %v2172
    %v2174 = vrot.slane %v2166, %v2173
    %v2176 = vunpack.c.l.s4 1934713408
    %v2177 = vunpack.c.0.s8 %v2176
    %v2178 = vlaneseq
    %v2179 = vshrl.u32 %v2178, 7
    %v2180 = vsub.s32 %v2177, %v2179
    %v2181 = vrot.slane %v2167, %v2180
    %v2182 = vcombine.low %v2149, %v2165
    %v2183 = vcombine.high %v2149, %v2165
    %v2185 = vunpack.c.l.s4 1934713408
    %v2186 = vunpack.c.0.s8 %v2185
    %v2187 = vlaneseq
    %v2188 = vshrl.u32 %v2187, 7
    %v2189 = vsub.s32 %v2186, %v2188
    %v2190 = vrot.slane %v2182, %v2189
    %v2192 = vunpack.c.l.s4 1934713408
    %v2193 = vunpack.c.0.s8 %v2192
    %v2194 = vlaneseq
    %v2195 = vshrl.u32 %v2194, 7
    %v2196 = vsub.s32 %v2193, %v2195
    %v2197 = vrot.slane %v2183, %v2196
    %v2198 = vcombine.high %v2174, 0.0
    %v2199 = vcombine.high %v2181, 0.0
    %v2200 = vcombine.high %v2190, 0.0
    %v2201 = vcombine.high %v2197, 0.0
    %v2202 = vcombine.low %v2113, %v2121
    %v2203 = vcombine.high %v2113, %v2121
    %v2205 = vunpack.c.l.s4 1983009808
    %v2206 = vunpack.c.0.s8 %v2205
    %v2207 = vlaneseq
    %v2208 = vshrl.u32 %v2207, 7
    %v2209 = vsub.s32 %v2206, %v2208
    %v2210 = vrot.slane %v2202, %v2209
    %v2212 = vunpack.c.l.s4 1983009808
    %v2213 = vunpack.c.0.s8 %v2212
    %v2214 = vlaneseq
    %v2215 = vshrl.u32 %v2214, 7
    %v2216 = vsub.s32 %v2213, %v2215
    %v2217 = vrot.slane %v2203, %v2216
    %v2218 = vcombine.low %v2117, %v2125
    %v2219 = vcombine.high %v2117, %v2125
    %v2221 = vunpack.c.l.s4 1983009808
    %v2222 = vunpack.c.0.s8 %v2221
    %v2223 = vlaneseq
    %v2224 = vshrl.u32 %v2223, 7
    %v2225 = vsub.s32 %v2222, %v2224
    %v2226 = vrot.slane %v2218, %v2225
    %v2228 = vunpack.c.l.s4 1983009808
    %v2229 = vunpack.c.0.s8 %v2228
    %v2230 = vlaneseq
    %v2231 = vshrl.u32 %v2230, 7
    %v2232 = vsub.s32 %v2229, %v2231
    %v2233 = vrot.slane %v2219, %v2232
    %v2234 = vcombine.low %v2210, %v2226
    %v2235 = vcombine.high %v2210, %v2226
    %v2237 = vunpack.c.l.s4 1934713408
    %v2238 = vunpack.c.0.s8 %v2237
    %v2239 = vlaneseq
    %v2240 = vshrl.u32 %v2239, 7
    %v2241 = vsub.s32 %v2238, %v2240
    %v2242 = vrot.slane %v2234, %v2241
    %v2244 = vunpack.c.l.s4 1934713408
    %v2245 = vunpack.c.0.s8 %v2244
    %v2246 = vlaneseq
    %v2247 = vshrl.u32 %v2246, 7
    %v2248 = vsub.s32 %v2245, %v2247
    %v2249 = vrot.slane %v2235, %v2248
    %v2250 = vcombine.low %v2217, %v2233
    %v2251 = vcombine.high %v2217, %v2233
    %v2253 = vunpack.c.l.s4 1934713408
    %v2254 = vunpack.c.0.s8 %v2253
    %v2255 = vlaneseq
    %v2256 = vshrl.u32 %v2255, 7
    %v2257 = vsub.s32 %v2254, %v2256
    %v2258 = vrot.slane %v2250, %v2257
    %v2260 = vunpack.c.l.s4 1934713408
    %v2261 = vunpack.c.0.s8 %v2260
    %v2262 = vlaneseq
    %v2263 = vshrl.u32 %v2262, 7
    %v2264 = vsub.s32 %v2261, %v2263
    %v2265 = vrot.slane %v2251, %v2264
    %v2266 = vcombine.high %v2242, 0.0
    %v2267 = vcombine.high %v2249, 0.0
    %v2268 = vcombine.high %v2258, 0.0
    %v2269 = vcombine.high %v2265, 0.0
    %v2270 = vpack.c.bf16 %v2174, %v2174
    %v2271 = vpack.c.bf16 %v2198, %v2198
    %v2272 = vpack.c.bf16 %v2181, %v2181
    %v2273 = vpack.c.bf16 %v2199, %v2199
    %v2274 = vpack.c.bf16 %v2190, %v2190
    %v2275 = vpack.c.bf16 %v2200, %v2200
    %v2276 = vpack.c.bf16 %v2197, %v2197
    %v2277 = vpack.c.bf16 %v2201, %v2201
    %v2278 = vpack.c.bf16 %v2242, %v2242
    %v2279 = vpack.c.bf16 %v2266, %v2266
    %v2280 = vpack.c.bf16 %v2249, %v2249
    %v2281 = vpack.c.bf16 %v2267, %v2267
    %v2282 = vpack.c.bf16 %v2258, %v2258
    %v2283 = vpack.c.bf16 %v2268, %v2268
    %v2284 = vpack.c.bf16 %v2265, %v2265
    %v2285 = vpack.c.bf16 %v2269, %v2269
    %v2286 = vpack.c.bf16 %v2065, %v2063
    %v2287 = vpack.c.bf16 %v2069, %v2067
    %v2288 = vpack.c.bf16 %v2073, %v2071
    %v2289 = vpack.c.bf16 %v2077, %v2075
    %2290 = vxpose.xlu0.c.b16.start [1/8] %v2270, 128
    %2291 = vxpose.xlu0.c.b16.cont [2/8] 0, 128
    %2292 = vxpose.xlu0.c.b16.cont [3/8] 0, 128
    %2293 = vxpose.xlu0.c.b16.cont [4/8] 0, 128
    %2294 = vxpose.xlu0.c.b16.cont [5/8] 0, 128
    %2295 = vxpose.xlu0.c.b16.cont [6/8] 0, 128
    %2296 = vxpose.xlu0.c.b16.cont [7/8] 0, 128
    %2297 = vxpose.xlu0.c.b16.end [8/8] 0, 128
    %v2298 = vpop.trf.xlu0
    %v2299 = vpop.trf.xlu0
    %v2300 = vpop.trf.xlu0
    %v2301 = vpop.trf.xlu0
    %v2302 = vpop.trf.xlu0
    %v2303 = vpop.trf.xlu0
    %v2304 = vpop.trf.xlu0
    %v2305 = vpop.trf.xlu0
    %2306 = vxpose.xlu0.c.b16.start [1/8] %v2271, 128
    %2307 = vxpose.xlu0.c.b16.cont [2/8] 0, 128
    %2308 = vxpose.xlu0.c.b16.cont [3/8] 0, 128
    %2309 = vxpose.xlu0.c.b16.cont [4/8] 0, 128
    %2310 = vxpose.xlu0.c.b16.cont [5/8] 0, 128
    %2311 = vxpose.xlu0.c.b16.cont [6/8] 0, 128
    %2312 = vxpose.xlu0.c.b16.cont [7/8] 0, 128
    %2313 = vxpose.xlu0.c.b16.end [8/8] 0, 128
    %v2314 = vpop.trf.xlu0
    %v2315 = vpop.trf.xlu0
    %v2316 = vpop.trf.xlu0
    %v2317 = vpop.trf.xlu0
    %v2318 = vpop.trf.xlu0
    %v2319 = vpop.trf.xlu0
    %v2320 = vpop.trf.xlu0
    %v2321 = vpop.trf.xlu0
    %2322 = vxpose.xlu0.c.b16.start [1/8] %v2272, 128
    %2323 = vxpose.xlu0.c.b16.cont [2/8] 0, 128
    %2324 = vxpose.xlu0.c.b16.cont [3/8] 0, 128
    %2325 = vxpose.xlu0.c.b16.cont [4/8] 0, 128
    %2326 = vxpose.xlu0.c.b16.cont [5/8] 0, 128
    %2327 = vxpose.xlu0.c.b16.cont [6/8] 0, 128
    %2328 = vxpose.xlu0.c.b16.cont [7/8] 0, 128
    %2329 = vxpose.xlu0.c.b16.end [8/8] 0, 128
    %v2330 = vpop.trf.xlu0
    %v2331 = vpop.trf.xlu0
    %v2332 = vpop.trf.xlu0
    %v2333 = vpop.trf.xlu0
    %v2334 = vpop.trf.xlu0
    %v2335 = vpop.trf.xlu0
    %v2336 = vpop.trf.xlu0
    %v2337 = vpop.trf.xlu0
    %2338 = vxpose.xlu0.c.b16.start [1/8] %v2273, 128
    %2339 = vxpose.xlu0.c.b16.cont [2/8] 0, 128
    %2340 = vxpose.xlu0.c.b16.cont [3/8] 0, 128
    %2341 = vxpose.xlu0.c.b16.cont [4/8] 0, 128
    %2342 = vxpose.xlu0.c.b16.cont [5/8] 0, 128
    %2343 = vxpose.xlu0.c.b16.cont [6/8] 0, 128
    %2344 = vxpose.xlu0.c.b16.cont [7/8] 0, 128
    %2345 = vxpose.xlu0.c.b16.end [8/8] 0, 128
    %v2346 = vpop.trf.xlu0
    %v2347 = vpop.trf.xlu0
    %v2348 = vpop.trf.xlu0
    %v2349 = vpop.trf.xlu0
    %v2350 = vpop.trf.xlu0
    %v2351 = vpop.trf.xlu0
    %v2352 = vpop.trf.xlu0
    %v2353 = vpop.trf.xlu0
    %2354 = vxpose.xlu0.c.b16.start [1/8] %v2274, 128
    %2355 = vxpose.xlu0.c.b16.cont [2/8] 0, 128
    %2356 = vxpose.xlu0.c.b16.cont [3/8] 0, 128
    %2357 = vxpose.xlu0.c.b16.cont [4/8] 0, 128
    %2358 = vxpose.xlu0.c.b16.cont [5/8] 0, 128
    %2359 = vxpose.xlu0.c.b16.cont [6/8] 0, 128
    %2360 = vxpose.xlu0.c.b16.cont [7/8] 0, 128
    %2361 = vxpose.xlu0.c.b16.end [8/8] 0, 128
    %v2362 = vpop.trf.xlu0
    %v2363 = vpop.trf.xlu0
    %v2364 = vpop.trf.xlu0
    %v2365 = vpop.trf.xlu0
    %v2366 = vpop.trf.xlu0
    %v2367 = vpop.trf.xlu0
    %v2368 = vpop.trf.xlu0
    %v2369 = vpop.trf.xlu0
    %2370 = vxpose.xlu0.c.b16.start [1/8] %v2275, 128
    %2371 = vxpose.xlu0.c.b16.cont [2/8] 0, 128
    %2372 = vxpose.xlu0.c.b16.cont [3/8] 0, 128
    %2373 = vxpose.xlu0.c.b16.cont [4/8] 0, 128
    %2374 = vxpose.xlu0.c.b16.cont [5/8] 0, 128
    %2375 = vxpose.xlu0.c.b16.cont [6/8] 0, 128
    %2376 = vxpose.xlu0.c.b16.cont [7/8] 0, 128
    %2377 = vxpose.xlu0.c.b16.end [8/8] 0, 128
    %v2378 = vpop.trf.xlu0
    %v2379 = vpop.trf.xlu0
    %v2380 = vpop.trf.xlu0
    %v2381 = vpop.trf.xlu0
    %v2382 = vpop.trf.xlu0
    %v2383 = vpop.trf.xlu0
    %v2384 = vpop.trf.xlu0
    %v2385 = vpop.trf.xlu0
    %2386 = vxpose.xlu0.c.b16.start [1/8] %v2276, 128
    %2387 = vxpose.xlu0.c.b16.cont [2/8] 0, 128
    %2388 = vxpose.xlu0.c.b16.cont [3/8] 0, 128
    %2389 = vxpose.xlu0.c.b16.cont [4/8] 0, 128
    %2390 = vxpose.xlu0.c.b16.cont [5/8] 0, 128
    %2391 = vxpose.xlu0.c.b16.cont [6/8] 0, 128
    %2392 = vxpose.xlu0.c.b16.cont [7/8] 0, 128
    %2393 = vxpose.xlu0.c.b16.end [8/8] 0, 128
    %v2394 = vpop.trf.xlu0
    %v2395 = vpop.trf.xlu0
    %v2396 = vpop.trf.xlu0
    %v2397 = vpop.trf.xlu0
    %v2398 = vpop.trf.xlu0
    %v2399 = vpop.trf.xlu0
    %v2400 = vpop.trf.xlu0
    %v2401 = vpop.trf.xlu0
    %2402 = vxpose.xlu0.c.b16.start [1/8] %v2277, 128
    %2403 = vxpose.xlu0.c.b16.cont [2/8] 0, 128
    %2404 = vxpose.xlu0.c.b16.cont [3/8] 0, 128
    %2405 = vxpose.xlu0.c.b16.cont [4/8] 0, 128
    %2406 = vxpose.xlu0.c.b16.cont [5/8] 0, 128
    %2407 = vxpose.xlu0.c.b16.cont [6/8] 0, 128
    %2408 = vxpose.xlu0.c.b16.cont [7/8] 0, 128
    %2409 = vxpose.xlu0.c.b16.end [8/8] 0, 128
    %v2410 = vpop.trf.xlu0
    %v2411 = vpop.trf.xlu0
    %v2412 = vpop.trf.xlu0
    %v2413 = vpop.trf.xlu0
    %v2414 = vpop.trf.xlu0
    %v2415 = vpop.trf.xlu0
    %v2416 = vpop.trf.xlu0
    %v2417 = vpop.trf.xlu0
    %2418 = vxpose.xlu0.c.b16.start [1/8] %v2278, 128
    %2419 = vxpose.xlu0.c.b16.cont [2/8] 0, 128
    %2420 = vxpose.xlu0.c.b16.cont [3/8] 0, 128
    %2421 = vxpose.xlu0.c.b16.cont [4/8] 0, 128
    %2422 = vxpose.xlu0.c.b16.cont [5/8] 0, 128
    %2423 = vxpose.xlu0.c.b16.cont [6/8] 0, 128
    %2424 = vxpose.xlu0.c.b16.cont [7/8] 0, 128
    %2425 = vxpose.xlu0.c.b16.end [8/8] 0, 128
    %v2426 = vpop.trf.xlu0
    %v2427 = vpop.trf.xlu0
    %v2428 = vpop.trf.xlu0
    %v2429 = vpop.trf.xlu0
    %v2430 = vpop.trf.xlu0
    %v2431 = vpop.trf.xlu0
    %v2432 = vpop.trf.xlu0
    %v2433 = vpop.trf.xlu0
    %2434 = vxpose.xlu0.c.b16.start [1/8] %v2279, 128
    %2435 = vxpose.xlu0.c.b16.cont [2/8] 0, 128
    %2436 = vxpose.xlu0.c.b16.cont [3/8] 0, 128
    %2437 = vxpose.xlu0.c.b16.cont [4/8] 0, 128
    %2438 = vxpose.xlu0.c.b16.cont [5/8] 0, 128
    %2439 = vxpose.xlu0.c.b16.cont [6/8] 0, 128
    %2440 = vxpose.xlu0.c.b16.cont [7/8] 0, 128
    %2441 = vxpose.xlu0.c.b16.end [8/8] 0, 128
    %v2442 = vpop.trf.xlu0
    %v2443 = vpop.trf.xlu0
    %v2444 = vpop.trf.xlu0
    %v2445 = vpop.trf.xlu0
    %v2446 = vpop.trf.xlu0
    %v2447 = vpop.trf.xlu0
    %v2448 = vpop.trf.xlu0
    %v2449 = vpop.trf.xlu0
    %2450 = vxpose.xlu0.c.b16.start [1/8] %v2280, 128
    %2451 = vxpose.xlu0.c.b16.cont [2/8] 0, 128
    %2452 = vxpose.xlu0.c.b16.cont [3/8] 0, 128
    %2453 = vxpose.xlu0.c.b16.cont [4/8] 0, 128
    %2454 = vxpose.xlu0.c.b16.cont [5/8] 0, 128
    %2455 = vxpose.xlu0.c.b16.cont [6/8] 0, 128
    %2456 = vxpose.xlu0.c.b16.cont [7/8] 0, 128
    %2457 = vxpose.xlu0.c.b16.end [8/8] 0, 128
    %v2458 = vpop.trf.xlu0
    %v2459 = vpop.trf.xlu0
    %v2460 = vpop.trf.xlu0
    %v2461 = vpop.trf.xlu0
    %v2462 = vpop.trf.xlu0
    %v2463 = vpop.trf.xlu0
    %v2464 = vpop.trf.xlu0
    %v2465 = vpop.trf.xlu0
    %2466 = vxpose.xlu0.c.b16.start [1/8] %v2281, 128
    %2467 = vxpose.xlu0.c.b16.cont [2/8] 0, 128
    %2468 = vxpose.xlu0.c.b16.cont [3/8] 0, 128
    %2469 = vxpose.xlu0.c.b16.cont [4/8] 0, 128
    %2470 = vxpose.xlu0.c.b16.cont [5/8] 0, 128
    %2471 = vxpose.xlu0.c.b16.cont [6/8] 0, 128
    %2472 = vxpose.xlu0.c.b16.cont [7/8] 0, 128
    %2473 = vxpose.xlu0.c.b16.end [8/8] 0, 128
    %v2474 = vpop.trf.xlu0
    %v2475 = vpop.trf.xlu0
    %v2476 = vpop.trf.xlu0
    %v2477 = vpop.trf.xlu0
    %v2478 = vpop.trf.xlu0
    %v2479 = vpop.trf.xlu0
    %v2480 = vpop.trf.xlu0
    %v2481 = vpop.trf.xlu0
    %2482 = vxpose.xlu0.c.b16.start [1/8] %v2282, 128
    %2483 = vxpose.xlu0.c.b16.cont [2/8] 0, 128
    %2484 = vxpose.xlu0.c.b16.cont [3/8] 0, 128
    %2485 = vxpose.xlu0.c.b16.cont [4/8] 0, 128
    %2486 = vxpose.xlu0.c.b16.cont [5/8] 0, 128
    %2487 = vxpose.xlu0.c.b16.cont [6/8] 0, 128
    %2488 = vxpose.xlu0.c.b16.cont [7/8] 0, 128
    %2489 = vxpose.xlu0.c.b16.end [8/8] 0, 128
    %v2490 = vpop.trf.xlu0
    %v2491 = vpop.trf.xlu0
    %v2492 = vpop.trf.xlu0
    %v2493 = vpop.trf.xlu0
    %v2494 = vpop.trf.xlu0
    %v2495 = vpop.trf.xlu0
    %v2496 = vpop.trf.xlu0
    %v2497 = vpop.trf.xlu0
    %2498 = vxpose.xlu0.c.b16.start [1/8] %v2283, 128
    %2499 = vxpose.xlu0.c.b16.cont [2/8] 0, 128
    %2500 = vxpose.xlu0.c.b16.cont [3/8] 0, 128
    %2501 = vxpose.xlu0.c.b16.cont [4/8] 0, 128
    %2502 = vxpose.xlu0.c.b16.cont [5/8] 0, 128
    %2503 = vxpose.xlu0.c.b16.cont [6/8] 0, 128
    %2504 = vxpose.xlu0.c.b16.cont [7/8] 0, 128
    %2505 = vxpose.xlu0.c.b16.end [8/8] 0, 128
    %v2506 = vpop.trf.xlu0
    %v2507 = vpop.trf.xlu0
    %v2508 = vpop.trf.xlu0
    %v2509 = vpop.trf.xlu0
    %v2510 = vpop.trf.xlu0
    %v2511 = vpop.trf.xlu0
    %v2512 = vpop.trf.xlu0
    %v2513 = vpop.trf.xlu0
    %2514 = vxpose.xlu0.c.b16.start [1/8] %v2284, 128
    %2515 = vxpose.xlu0.c.b16.cont [2/8] 0, 128
    %2516 = vxpose.xlu0.c.b16.cont [3/8] 0, 128
    %2517 = vxpose.xlu0.c.b16.cont [4/8] 0, 128
    %2518 = vxpose.xlu0.c.b16.cont [5/8] 0, 128
    %2519 = vxpose.xlu0.c.b16.cont [6/8] 0, 128
    %2520 = vxpose.xlu0.c.b16.cont [7/8] 0, 128
    %2521 = vxpose.xlu0.c.b16.end [8/8] 0, 128
    %v2522 = vpop.trf.xlu0
    %v2523 = vpop.trf.xlu0
    %v2524 = vpop.trf.xlu0
    %v2525 = vpop.trf.xlu0
    %v2526 = vpop.trf.xlu0
    %v2527 = vpop.trf.xlu0
    %v2528 = vpop.trf.xlu0
    %v2529 = vpop.trf.xlu0
    %2530 = vxpose.xlu0.c.b16.start [1/8] %v2285, 128
    %2531 = vxpose.xlu0.c.b16.cont [2/8] 0, 128
    %2532 = vxpose.xlu0.c.b16.cont [3/8] 0, 128
    %2533 = vxpose.xlu0.c.b16.cont [4/8] 0, 128
    %2534 = vxpose.xlu0.c.b16.cont [5/8] 0, 128
    %2535 = vxpose.xlu0.c.b16.cont [6/8] 0, 128
    %2536 = vxpose.xlu0.c.b16.cont [7/8] 0, 128
    %2537 = vxpose.xlu0.c.b16.end [8/8] 0, 128
    %v2538 = vpop.trf.xlu0
    %v2539 = vpop.trf.xlu0
    %v2540 = vpop.trf.xlu0
    %v2541 = vpop.trf.xlu0
    %v2542 = vpop.trf.xlu0
    %v2543 = vpop.trf.xlu0
    %v2544 = vpop.trf.xlu0
    %v2545 = vpop.trf.xlu0
    %v2546 = vcombine.low %v2298, %v2362
    %v2548 = vunpack.c.l.s4 1983009808
    %v2549 = vunpack.c.0.s8 %v2548
    %v2550 = vlaneseq
    %v2551 = vshrl.u32 %v2550, 7
    %v2552 = vsub.s32 %v2549, %v2551
    %v2553 = vrot.slane %v2546, %v2552
    %v2554 = vcombine.low %v2330, %v2394
    %v2556 = vunpack.c.l.s4 1983009808
    %v2557 = vunpack.c.0.s8 %v2556
    %v2558 = vlaneseq
    %v2559 = vshrl.u32 %v2558, 7
    %v2560 = vsub.s32 %v2557, %v2559
    %v2561 = vrot.slane %v2554, %v2560
    %v2562 = vcombine.low %v2426, %v2490
    %v2564 = vunpack.c.l.s4 1983009808
    %v2565 = vunpack.c.0.s8 %v2564
    %v2566 = vlaneseq
    %v2567 = vshrl.u32 %v2566, 7
    %v2568 = vsub.s32 %v2565, %v2567
    %v2569 = vrot.slane %v2562, %v2568
    %v2570 = vcombine.low %v2458, %v2522
    %v2572 = vunpack.c.l.s4 1983009808
    %v2573 = vunpack.c.0.s8 %v2572
    %v2574 = vlaneseq
    %v2575 = vshrl.u32 %v2574, 7
    %v2576 = vsub.s32 %v2573, %v2575
    %v2577 = vrot.slane %v2570, %v2576
    %v2578 = vcombine.low %v2553, %v2561
    %v2579 = vcombine.high %v2553, %v2561
    %v2581 = vunpack.c.l.s4 1934713408
    %v2582 = vunpack.c.0.s8 %v2581
    %v2583 = vlaneseq
    %v2584 = vshrl.u32 %v2583, 7
    %v2585 = vsub.s32 %v2582, %v2584
    %v2586 = vrot.slane %v2578, %v2585
    %v2588 = vunpack.c.l.s4 1934713408
    %v2589 = vunpack.c.0.s8 %v2588
    %v2590 = vlaneseq
    %v2591 = vshrl.u32 %v2590, 7
    %v2592 = vsub.s32 %v2589, %v2591
    %v2593 = vrot.slane %v2579, %v2592
    %v2594 = vcombine.low %v2569, %v2577
    %v2595 = vcombine.high %v2569, %v2577
    %v2597 = vunpack.c.l.s4 1934713408
    %v2598 = vunpack.c.0.s8 %v2597
    %v2599 = vlaneseq
    %v2600 = vshrl.u32 %v2599, 7
    %v2601 = vsub.s32 %v2598, %v2600
    %v2602 = vrot.slane %v2594, %v2601
    %v2604 = vunpack.c.l.s4 1934713408
    %v2605 = vunpack.c.0.s8 %v2604
    %v2606 = vlaneseq
    %v2607 = vshrl.u32 %v2606, 7
    %v2608 = vsub.s32 %v2605, %v2607
    %v2609 = vrot.slane %v2595, %v2608
    %v2610 = vcombine.low %v2586, %v2602
    %v2611 = vcombine.high %v2586, %v2602
    %v2612 = vcombine.low %v2593, %v2609
    %v2613 = vcombine.high %v2593, %v2609
    %v2614 = vcombine.low %v2314, %v2378
    %v2616 = vunpack.c.l.s4 1983009808
    %v2617 = vunpack.c.0.s8 %v2616
    %v2618 = vlaneseq
    %v2619 = vshrl.u32 %v2618, 7
    %v2620 = vsub.s32 %v2617, %v2619
    %v2621 = vrot.slane %v2614, %v2620
    %v2622 = vcombine.low %v2346, %v2410
    %v2624 = vunpack.c.l.s4 1983009808
    %v2625 = vunpack.c.0.s8 %v2624
    %v2626 = vlaneseq
    %v2627 = vshrl.u32 %v2626, 7
    %v2628 = vsub.s32 %v2625, %v2627
    %v2629 = vrot.slane %v2622, %v2628
    %v2630 = vcombine.low %v2442, %v2506
    %v2632 = vunpack.c.l.s4 1983009808
    %v2633 = vunpack.c.0.s8 %v2632
    %v2634 = vlaneseq
    %v2635 = vshrl.u32 %v2634, 7
    %v2636 = vsub.s32 %v2633, %v2635
    %v2637 = vrot.slane %v2630, %v2636
    %v2638 = vcombine.low %v2474, %v2538
    %v2640 = vunpack.c.l.s4 1983009808
    %v2641 = vunpack.c.0.s8 %v2640
    %v2642 = vlaneseq
    %v2643 = vshrl.u32 %v2642, 7
    %v2644 = vsub.s32 %v2641, %v2643
    %v2645 = vrot.slane %v2638, %v2644
    %v2646 = vcombine.low %v2621, %v2629
    %v2647 = vcombine.high %v2621, %v2629
    %v2649 = vunpack.c.l.s4 1934713408
    %v2650 = vunpack.c.0.s8 %v2649
    %v2651 = vlaneseq
    %v2652 = vshrl.u32 %v2651, 7
    %v2653 = vsub.s32 %v2650, %v2652
    %v2654 = vrot.slane %v2646, %v2653
    %v2656 = vunpack.c.l.s4 1934713408
    %v2657 = vunpack.c.0.s8 %v2656
    %v2658 = vlaneseq
    %v2659 = vshrl.u32 %v2658, 7
    %v2660 = vsub.s32 %v2657, %v2659
    %v2661 = vrot.slane %v2647, %v2660
    %v2662 = vcombine.low %v2637, %v2645
    %v2663 = vcombine.high %v2637, %v2645
    %v2665 = vunpack.c.l.s4 1934713408
    %v2666 = vunpack.c.0.s8 %v2665
    %v2667 = vlaneseq
    %v2668 = vshrl.u32 %v2667, 7
    %v2669 = vsub.s32 %v2666, %v2668
    %v2670 = vrot.slane %v2662, %v2669
    %v2672 = vunpack.c.l.s4 1934713408
    %v2673 = vunpack.c.0.s8 %v2672
    %v2674 = vlaneseq
    %v2675 = vshrl.u32 %v2674, 7
    %v2676 = vsub.s32 %v2673, %v2675
    %v2677 = vrot.slane %v2663, %v2676
    %v2678 = vcombine.low %v2654, %v2670
    %v2679 = vcombine.high %v2654, %v2670
    %v2680 = vcombine.low %v2661, %v2677
    %v2681 = vcombine.high %v2661, %v2677
    %v2684 = vpack.i.b16 %v2678, %v2610
    %v2686 = vshrl.u32 %v2610, 16
    %v2687 = vshrl.u32 %v2678, 16
    %v2688 = vpack.i.b16 %v2687, %v2686
    %v2692 = vpack.i.b16 %v2679, %v2611
    %v2694 = vshrl.u32 %v2611, 16
    %v2695 = vshrl.u32 %v2679, 16
    %v2696 = vpack.i.b16 %v2695, %v2694
    %v2700 = vpack.i.b16 %v2680, %v2612
    %v2702 = vshrl.u32 %v2612, 16
    %v2703 = vshrl.u32 %v2680, 16
    %v2704 = vpack.i.b16 %v2703, %v2702
    %v2708 = vpack.i.b16 %v2681, %v2613
    %v2710 = vshrl.u32 %v2613, 16
    %v2711 = vshrl.u32 %v2681, 16
    %v2712 = vpack.i.b16 %v2711, %v2710
    %2714 = vxpose.xlu0.c.b16.start [1/8] %v2684, 128
    %2715 = vxpose.xlu0.c.b16.cont [2/8] 0, 128
    %2716 = vxpose.xlu0.c.b16.cont [3/8] 0, 128
    %2717 = vxpose.xlu0.c.b16.cont [4/8] 0, 128
    %2718 = vxpose.xlu0.c.b16.cont [5/8] 0, 128
    %2719 = vxpose.xlu0.c.b16.cont [6/8] 0, 128
    %2720 = vxpose.xlu0.c.b16.cont [7/8] 0, 128
    %2721 = vxpose.xlu0.c.b16.end [8/8] 0, 128
    %v2722 = vpop.trf.xlu0
    %v2723 = vpop.trf.xlu0
    %v2724 = vpop.trf.xlu0
    %v2725 = vpop.trf.xlu0
    %v2726 = vpop.trf.xlu0
    %v2727 = vpop.trf.xlu0
    %v2728 = vpop.trf.xlu0
    %v2729 = vpop.trf.xlu0
    %2730 = vxpose.xlu0.c.b16.start [1/8] %v2688, 128
    %2731 = vxpose.xlu0.c.b16.cont [2/8] 0, 128
    %2732 = vxpose.xlu0.c.b16.cont [3/8] 0, 128
    %2733 = vxpose.xlu0.c.b16.cont [4/8] 0, 128
    %2734 = vxpose.xlu0.c.b16.cont [5/8] 0, 128
    %2735 = vxpose.xlu0.c.b16.cont [6/8] 0, 128
    %2736 = vxpose.xlu0.c.b16.cont [7/8] 0, 128
    %2737 = vxpose.xlu0.c.b16.end [8/8] 0, 128
    %v2738 = vpop.trf.xlu0
    %v2739 = vpop.trf.xlu0
    %v2740 = vpop.trf.xlu0
    %v2741 = vpop.trf.xlu0
    %v2742 = vpop.trf.xlu0
    %v2743 = vpop.trf.xlu0
    %v2744 = vpop.trf.xlu0
    %v2745 = vpop.trf.xlu0
    %2746 = vxpose.xlu0.c.b16.start [1/8] %v2692, 128
    %2747 = vxpose.xlu0.c.b16.cont [2/8] 0, 128
    %2748 = vxpose.xlu0.c.b16.cont [3/8] 0, 128
    %2749 = vxpose.xlu0.c.b16.cont [4/8] 0, 128
    %2750 = vxpose.xlu0.c.b16.cont [5/8] 0, 128
    %2751 = vxpose.xlu0.c.b16.cont [6/8] 0, 128
    %2752 = vxpose.xlu0.c.b16.cont [7/8] 0, 128
    %2753 = vxpose.xlu0.c.b16.end [8/8] 0, 128
    %v2754 = vpop.trf.xlu0
    %v2755 = vpop.trf.xlu0
    %v2756 = vpop.trf.xlu0
    %v2757 = vpop.trf.xlu0
    %v2758 = vpop.trf.xlu0
    %v2759 = vpop.trf.xlu0
    %v2760 = vpop.trf.xlu0
    %v2761 = vpop.trf.xlu0
    %2762 = vxpose.xlu0.c.b16.start [1/8] %v2696, 128
    %2763 = vxpose.xlu0.c.b16.cont [2/8] 0, 128
    %2764 = vxpose.xlu0.c.b16.cont [3/8] 0, 128
    %2765 = vxpose.xlu0.c.b16.cont [4/8] 0, 128
    %2766 = vxpose.xlu0.c.b16.cont [5/8] 0, 128
    %2767 = vxpose.xlu0.c.b16.cont [6/8] 0, 128
    %2768 = vxpose.xlu0.c.b16.cont [7/8] 0, 128
    %2769 = vxpose.xlu0.c.b16.end [8/8] 0, 128
    %v2770 = vpop.trf.xlu0
    %v2771 = vpop.trf.xlu0
    %v2772 = vpop.trf.xlu0
    %v2773 = vpop.trf.xlu0
    %v2774 = vpop.trf.xlu0
    %v2775 = vpop.trf.xlu0
    %v2776 = vpop.trf.xlu0
    %v2777 = vpop.trf.xlu0
    %2778 = vxpose.xlu0.c.b16.start [1/8] %v2700, 128
    %2779 = vxpose.xlu0.c.b16.cont [2/8] 0, 128
    %2780 = vxpose.xlu0.c.b16.cont [3/8] 0, 128
    %2781 = vxpose.xlu0.c.b16.cont [4/8] 0, 128
    %2782 = vxpose.xlu0.c.b16.cont [5/8] 0, 128
    %2783 = vxpose.xlu0.c.b16.cont [6/8] 0, 128
    %2784 = vxpose.xlu0.c.b16.cont [7/8] 0, 128
    %2785 = vxpose.xlu0.c.b16.end [8/8] 0, 128
    %v2786 = vpop.trf.xlu0
    %v2787 = vpop.trf.xlu0
    %v2788 = vpop.trf.xlu0
    %v2789 = vpop.trf.xlu0
    %v2790 = vpop.trf.xlu0
    %v2791 = vpop.trf.xlu0
    %v2792 = vpop.trf.xlu0
    %v2793 = vpop.trf.xlu0
    %2794 = vxpose.xlu0.c.b16.start [1/8] %v2704, 128
    %2795 = vxpose.xlu0.c.b16.cont [2/8] 0, 128
    %2796 = vxpose.xlu0.c.b16.cont [3/8] 0, 128
    %2797 = vxpose.xlu0.c.b16.cont [4/8] 0, 128
    %2798 = vxpose.xlu0.c.b16.cont [5/8] 0, 128
    %2799 = vxpose.xlu0.c.b16.cont [6/8] 0, 128
    %2800 = vxpose.xlu0.c.b16.cont [7/8] 0, 128
    %2801 = vxpose.xlu0.c.b16.end [8/8] 0, 128
    %v2802 = vpop.trf.xlu0
    %v2803 = vpop.trf.xlu0
    %v2804 = vpop.trf.xlu0
    %v2805 = vpop.trf.xlu0
    %v2806 = vpop.trf.xlu0
    %v2807 = vpop.trf.xlu0
    %v2808 = vpop.trf.xlu0
    %v2809 = vpop.trf.xlu0
    %2810 = vxpose.xlu0.c.b16.start [1/8] %v2708, 128
    %2811 = vxpose.xlu0.c.b16.cont [2/8] 0, 128
    %2812 = vxpose.xlu0.c.b16.cont [3/8] 0, 128
    %2813 = vxpose.xlu0.c.b16.cont [4/8] 0, 128
    %2814 = vxpose.xlu0.c.b16.cont [5/8] 0, 128
    %2815 = vxpose.xlu0.c.b16.cont [6/8] 0, 128
    %2816 = vxpose.xlu0.c.b16.cont [7/8] 0, 128
    %2817 = vxpose.xlu0.c.b16.end [8/8] 0, 128
    %v2818 = vpop.trf.xlu0
    %v2819 = vpop.trf.xlu0
    %v2820 = vpop.trf.xlu0
    %v2821 = vpop.trf.xlu0
    %v2822 = vpop.trf.xlu0
    %v2823 = vpop.trf.xlu0
    %v2824 = vpop.trf.xlu0
    %v2825 = vpop.trf.xlu0
    %2826 = vxpose.xlu0.c.b16.start [1/8] %v2712, 128
    %2827 = vxpose.xlu0.c.b16.cont [2/8] 0, 128
    %2828 = vxpose.xlu0.c.b16.cont [3/8] 0, 128
    %2829 = vxpose.xlu0.c.b16.cont [4/8] 0, 128
    %2830 = vxpose.xlu0.c.b16.cont [5/8] 0, 128
    %2831 = vxpose.xlu0.c.b16.cont [6/8] 0, 128
    %2832 = vxpose.xlu0.c.b16.cont [7/8] 0, 128
    %2833 = vxpose.xlu0.c.b16.end [8/8] 0, 128
    %v2834 = vpop.trf.xlu0
    %v2835 = vpop.trf.xlu0
    %v2836 = vpop.trf.xlu0
    %v2837 = vpop.trf.xlu0
    %v2838 = vpop.trf.xlu0
    %v2839 = vpop.trf.xlu0
    %v2840 = vpop.trf.xlu0
    %v2841 = vpop.trf.xlu0
    %v2842 = vcombine.low %v2722, %v2786
    %v2844 = vunpack.c.l.s4 1983009808
    %v2845 = vunpack.c.0.s8 %v2844
    %v2846 = vlaneseq
    %v2847 = vshrl.u32 %v2846, 7
    %v2848 = vsub.s32 %v2845, %v2847
    %v2849 = vrot.slane %v2842, %v2848
    %v2850 = vcombine.low %v2754, %v2818
    %v2852 = vunpack.c.l.s4 1983009808
    %v2853 = vunpack.c.0.s8 %v2852
    %v2854 = vlaneseq
    %v2855 = vshrl.u32 %v2854, 7
    %v2856 = vsub.s32 %v2853, %v2855
    %v2857 = vrot.slane %v2850, %v2856
    %v2858 = vcombine.low %v2849, %v2857
    %v2860 = vunpack.c.l.s4 1934713408
    %v2861 = vunpack.c.0.s8 %v2860
    %v2862 = vlaneseq
    %v2863 = vshrl.u32 %v2862, 7
    %v2864 = vsub.s32 %v2861, %v2863
    %v2865 = vrot.slane %v2858, %v2864
    %v2866 = vcombine.high %v2865, 0
    %v2867 = vcombine.low %v2738, %v2802
    %v2869 = vunpack.c.l.s4 1983009808
    %v2870 = vunpack.c.0.s8 %v2869
    %v2871 = vlaneseq
    %v2872 = vshrl.u32 %v2871, 7
    %v2873 = vsub.s32 %v2870, %v2872
    %v2874 = vrot.slane %v2867, %v2873
    %v2875 = vcombine.low %v2770, %v2834
    %v2877 = vunpack.c.l.s4 1983009808
    %v2878 = vunpack.c.0.s8 %v2877
    %v2879 = vlaneseq
    %v2880 = vshrl.u32 %v2879, 7
    %v2881 = vsub.s32 %v2878, %v2880
    %v2882 = vrot.slane %v2875, %v2881
    %v2883 = vcombine.low %v2874, %v2882
    %v2885 = vunpack.c.l.s4 1934713408
    %v2886 = vunpack.c.0.s8 %v2885
    %v2887 = vlaneseq
    %v2888 = vshrl.u32 %v2887, 7
    %v2889 = vsub.s32 %v2886, %v2888
    %v2890 = vrot.slane %v2883, %v2889
    %v2891 = vcombine.high %v2890, 0
    %v2894 = vpack.i.b16 %v2890, %v2865
    %v2895 = vshrl.u32 %v2865, 16
    %v2896 = vshrl.u32 %v2890, 16
    %v2897 = vpack.i.b16 %v2896, %v2895
    %v2900 = vpack.i.b16 %v2891, %v2866
    %v2901 = vshrl.u32 %v2866, 16
    %v2902 = vshrl.u32 %v2891, 16
    %v2903 = vpack.i.b16 %v2902, %v2901
    %v2905 = vsel %vm217, %v2894, 0
    %v2908 = vsel %vm217, %v2286, 0
    %2910 = vmatprep.subr.bf16.mxu0 0
    %2911 = vmatpush1.bf16.xpose.msra.mxu0 0
    %2912 = vmatprep.subr.bf16.mxu0 0
    %2913 = vmatpush1.bf16.xpose.msra.mxu0 0
    %2914 = vmatprep.subr.bf16.mxu0 0
    %2915 = vmatpush1.bf16.xpose.msra.mxu0 0
    %2916 = vmatprep.subr.bf16.mxu0 0
    %2917 = vmatpush1.bf16.xpose.msra.mxu0 0
    %2918 = vmatprep.subr.bf16.mxu0 0
    %2919 = vmatpush1.bf16.xpose.msra.mxu0 0
    %2920 = vmatprep.subr.bf16.mxu0 0
    %2921 = vmatpush1.bf16.xpose.msra.mxu0 0
    %2922 = vmatprep.subr.bf16.mxu0 0
    %2923 = vmatpush1.bf16.xpose.msra.mxu0 0
    %2924 = vmatprep.subr.bf16.mxu0 0
    %2925 = vmatpush1.bf16.xpose.msra.mxu0 %v2908
    %2926 = vmatprep.subr.bf16.mxu0 0
    %2927 = vmatpush2.bf16.xpose.msra.mxu0 0
    %2928 = vmatprep.subr.bf16.mxu0 0
    %2929 = vmatpush2.bf16.xpose.msra.mxu0 0
    %2930 = vmatprep.subr.bf16.mxu0 0
    %2931 = vmatpush2.bf16.xpose.msra.mxu0 0
    %2932 = vmatprep.subr.bf16.mxu0 0
    %2933 = vmatpush2.bf16.xpose.msra.mxu0 0
    %2934 = vmatprep.subr.bf16.mxu0 0
    %2935 = vmatpush2.bf16.xpose.msra.mxu0 0
    %2936 = vmatprep.subr.bf16.mxu0 0
    %2937 = vmatpush2.bf16.xpose.msra.mxu0 0
    %2938 = vmatprep.subr.bf16.mxu0 0
    %2939 = vmatpush2.bf16.xpose.msra.mxu0 0
    %2940 = vmatprep.subr.bf16.mxu0 0
    %2941 = vmatpush2.bf16.xpose.msra.mxu0 0
    %2942 = vmatprep.mubr.bf16.mxu0 0
    %2943 = vmatmul.mubr.bf16.gmra.mxu0 %v2905
    %v2944 = vpop.f32.mrf.mxu0
    %v2945 = vadd.f32 0.0, %v2944
    %v2946 = vpop.f32.mrf.mxu0
    %v2947 = vpop.f32.mrf.mxu0
    %v2948 = vpop.f32.mrf.mxu0
    %2949 = vdwg.mxu0
    %v2951 = vsel %vm217, %v2897, 0
    %v2954 = vsel %vm217, %v2287, 0
    %2956 = vmatprep.subr.bf16.mxu0 0
    %2957 = vmatpush1.bf16.xpose.msra.mxu0 0
    %2958 = vmatprep.subr.bf16.mxu0 0
    %2959 = vmatpush1.bf16.xpose.msra.mxu0 0
    %2960 = vmatprep.subr.bf16.mxu0 0
    %2961 = vmatpush1.bf16.xpose.msra.mxu0 0
    %2962 = vmatprep.subr.bf16.mxu0 0
    %2963 = vmatpush1.bf16.xpose.msra.mxu0 0
    %2964 = vmatprep.subr.bf16.mxu0 0
    %2965 = vmatpush1.bf16.xpose.msra.mxu0 0
    %2966 = vmatprep.subr.bf16.mxu0 0
    %2967 = vmatpush1.bf16.xpose.msra.mxu0 0
    %2968 = vmatprep.subr.bf16.mxu0 0
    %2969 = vmatpush1.bf16.xpose.msra.mxu0 0
    %2970 = vmatprep.subr.bf16.mxu0 0
    %2971 = vmatpush1.bf16.xpose.msra.mxu0 %v2954
    %2972 = vmatprep.subr.bf16.mxu0 0
    %2973 = vmatpush2.bf16.xpose.msra.mxu0 0
    %2974 = vmatprep.subr.bf16.mxu0 0
    %2975 = vmatpush2.bf16.xpose.msra.mxu0 0
    %2976 = vmatprep.subr.bf16.mxu0 0
    %2977 = vmatpush2.bf16.xpose.msra.mxu0 0
    %2978 = vmatprep.subr.bf16.mxu0 0
    %2979 = vmatpush2.bf16.xpose.msra.mxu0 0
    %2980 = vmatprep.subr.bf16.mxu0 0
    %2981 = vmatpush2.bf16.xpose.msra.mxu0 0
    %2982 = vmatprep.subr.bf16.mxu0 0
    %2983 = vmatpush2.bf16.xpose.msra.mxu0 0
    %2984 = vmatprep.subr.bf16.mxu0 0
    %2985 = vmatpush2.bf16.xpose.msra.mxu0 0
    %2986 = vmatprep.subr.bf16.mxu0 0
    %2987 = vmatpush2.bf16.xpose.msra.mxu0 0
    %2988 = vmatprep.mubr.bf16.mxu0 0
    %2989 = vmatmul.mubr.bf16.gmra.mxu0 %v2951
    %v2990 = vpop.f32.mrf.mxu0
    %v2991 = vadd.f32 0.0, %v2990
    %v2992 = vpop.f32.mrf.mxu0
    %v2993 = vpop.f32.mrf.mxu0
    %v2994 = vpop.f32.mrf.mxu0
    %2995 = vdwg.mxu0
    %v2997 = vsel %vm217, %v2900, 0
    %v3000 = vsel %vm217, %v2288, 0
    %3002 = vmatprep.subr.bf16.mxu0 0
    %3003 = vmatpush1.bf16.xpose.msra.mxu0 0
    %3004 = vmatprep.subr.bf16.mxu0 0
    %3005 = vmatpush1.bf16.xpose.msra.mxu0 0
    %3006 = vmatprep.subr.bf16.mxu0 0
    %3007 = vmatpush1.bf16.xpose.msra.mxu0 0
    %3008 = vmatprep.subr.bf16.mxu0 0
    %3009 = vmatpush1.bf16.xpose.msra.mxu0 0
    %3010 = vmatprep.subr.bf16.mxu0 0
    %3011 = vmatpush1.bf16.xpose.msra.mxu0 0
    %3012 = vmatprep.subr.bf16.mxu0 0
    %3013 = vmatpush1.bf16.xpose.msra.mxu0 0
    %3014 = vmatprep.subr.bf16.mxu0 0
    %3015 = vmatpush1.bf16.xpose.msra.mxu0 0
    %3016 = vmatprep.subr.bf16.mxu0 0
    %3017 = vmatpush1.bf16.xpose.msra.mxu0 %v3000
    %3018 = vmatprep.subr.bf16.mxu0 0
    %3019 = vmatpush2.bf16.xpose.msra.mxu0 0
    %3020 = vmatprep.subr.bf16.mxu0 0
    %3021 = vmatpush2.bf16.xpose.msra.mxu0 0
    %3022 = vmatprep.subr.bf16.mxu0 0
    %3023 = vmatpush2.bf16.xpose.msra.mxu0 0
    %3024 = vmatprep.subr.bf16.mxu0 0
    %3025 = vmatpush2.bf16.xpose.msra.mxu0 0
    %3026 = vmatprep.subr.bf16.mxu0 0
    %3027 = vmatpush2.bf16.xpose.msra.mxu0 0
    %3028 = vmatprep.subr.bf16.mxu0 0
    %3029 = vmatpush2.bf16.xpose.msra.mxu0 0
    %3030 = vmatprep.subr.bf16.mxu0 0
    %3031 = vmatpush2.bf16.xpose.msra.mxu0 0
    %3032 = vmatprep.subr.bf16.mxu0 0
    %3033 = vmatpush2.bf16.xpose.msra.mxu0 0
    %3034 = vmatprep.mubr.bf16.mxu0 0
    %3035 = vmatmul.mubr.bf16.gmra.mxu0 %v2997
    %v3036 = vpop.f32.mrf.mxu0
    %v3037 = vadd.f32 0.0, %v3036
    %v3038 = vpop.f32.mrf.mxu0
    %v3039 = vpop.f32.mrf.mxu0
    %v3040 = vpop.f32.mrf.mxu0
    %3041 = vdwg.mxu0
    %v3043 = vsel %vm217, %v2903, 0
    %v3046 = vsel %vm217, %v2289, 0
    %3048 = vmatprep.subr.bf16.mxu0 0
    %3049 = vmatpush1.bf16.xpose.msra.mxu0 0
    %3050 = vmatprep.subr.bf16.mxu0 0
    %3051 = vmatpush1.bf16.xpose.msra.mxu0 0
    %3052 = vmatprep.subr.bf16.mxu0 0
    %3053 = vmatpush1.bf16.xpose.msra.mxu0 0
    %3054 = vmatprep.subr.bf16.mxu0 0
    %3055 = vmatpush1.bf16.xpose.msra.mxu0 0
    %3056 = vmatprep.subr.bf16.mxu0 0
    %3057 = vmatpush1.bf16.xpose.msra.mxu0 0
    %3058 = vmatprep.subr.bf16.mxu0 0
    %3059 = vmatpush1.bf16.xpose.msra.mxu0 0
    %3060 = vmatprep.subr.bf16.mxu0 0
    %3061 = vmatpush1.bf16.xpose.msra.mxu0 0
    %3062 = vmatprep.subr.bf16.mxu0 0
    %3063 = vmatpush1.bf16.xpose.msra.mxu0 %v3046
    %3064 = vmatprep.subr.bf16.mxu0 0
    %3065 = vmatpush2.bf16.xpose.msra.mxu0 0
    %3066 = vmatprep.subr.bf16.mxu0 0
    %3067 = vmatpush2.bf16.xpose.msra.mxu0 0
    %3068 = vmatprep.subr.bf16.mxu0 0
    %3069 = vmatpush2.bf16.xpose.msra.mxu0 0
    %3070 = vmatprep.subr.bf16.mxu0 0
    %3071 = vmatpush2.bf16.xpose.msra.mxu0 0
    %3072 = vmatprep.subr.bf16.mxu0 0
    %3073 = vmatpush2.bf16.xpose.msra.mxu0 0
    %3074 = vmatprep.subr.bf16.mxu0 0
    %3075 = vmatpush2.bf16.xpose.msra.mxu0 0
    %3076 = vmatprep.subr.bf16.mxu0 0
    %3077 = vmatpush2.bf16.xpose.msra.mxu0 0
    %3078 = vmatprep.subr.bf16.mxu0 0
    %3079 = vmatpush2.bf16.xpose.msra.mxu0 0
    %3080 = vmatprep.mubr.bf16.mxu0 0
    %3081 = vmatmul.mubr.bf16.gmra.mxu0 %v3043
    %v3082 = vpop.f32.mrf.mxu0
    %v3083 = vadd.f32 0.0, %v3082
    %v3084 = vpop.f32.mrf.mxu0
    %v3085 = vpop.f32.mrf.mxu0
    %v3086 = vpop.f32.mrf.mxu0
    %3087 = vdwg.mxu0
    %3088 = vxpose.xlu0.b32.start [1/16] %v2945, 128
    %3089 = vxpose.xlu0.b32.cont [2/16] 0.0, 128
    %3090 = vxpose.xlu0.b32.cont [3/16] 0.0, 128
    %3091 = vxpose.xlu0.b32.cont [4/16] 0.0, 128
    %3092 = vxpose.xlu0.b32.cont [5/16] 0.0, 128
    %3093 = vxpose.xlu0.b32.cont [6/16] 0.0, 128
    %3094 = vxpose.xlu0.b32.cont [7/16] 0.0, 128
    %3095 = vxpose.xlu0.b32.cont [8/16] 0.0, 128
    %3096 = vxpose.xlu0.b32.cont [9/16] 0.0, 128
    %3097 = vxpose.xlu0.b32.cont [10/16] 0.0, 128
    %3098 = vxpose.xlu0.b32.cont [11/16] 0.0, 128
    %3099 = vxpose.xlu0.b32.cont [12/16] 0.0, 128
    %3100 = vxpose.xlu0.b32.cont [13/16] 0.0, 128
    %3101 = vxpose.xlu0.b32.cont [14/16] 0.0, 128
    %3102 = vxpose.xlu0.b32.cont [15/16] 0.0, 128
    %3103 = vxpose.xlu0.b32.end [16/16] 0.0, 128
    %v3104 = vpop.trf.xlu0
    %v3105 = vpop.trf.xlu0
    %v3106 = vpop.trf.xlu0
    %v3107 = vpop.trf.xlu0
    %v3108 = vpop.trf.xlu0
    %v3109 = vpop.trf.xlu0
    %v3110 = vpop.trf.xlu0
    %v3111 = vpop.trf.xlu0
    %v3112 = vpop.trf.xlu0
    %v3113 = vpop.trf.xlu0
    %v3114 = vpop.trf.xlu0
    %v3115 = vpop.trf.xlu0
    %v3116 = vpop.trf.xlu0
    %v3117 = vpop.trf.xlu0
    %v3118 = vpop.trf.xlu0
    %v3119 = vpop.trf.xlu0
    %3120 = vxpose.xlu0.b32.start [1/16] %v2991, 128
    %3121 = vxpose.xlu0.b32.cont [2/16] 0.0, 128
    %3122 = vxpose.xlu0.b32.cont [3/16] 0.0, 128
    %3123 = vxpose.xlu0.b32.cont [4/16] 0.0, 128
    %3124 = vxpose.xlu0.b32.cont [5/16] 0.0, 128
    %3125 = vxpose.xlu0.b32.cont [6/16] 0.0, 128
    %3126 = vxpose.xlu0.b32.cont [7/16] 0.0, 128
    %3127 = vxpose.xlu0.b32.cont [8/16] 0.0, 128
    %3128 = vxpose.xlu0.b32.cont [9/16] 0.0, 128
    %3129 = vxpose.xlu0.b32.cont [10/16] 0.0, 128
    %3130 = vxpose.xlu0.b32.cont [11/16] 0.0, 128
    %3131 = vxpose.xlu0.b32.cont [12/16] 0.0, 128
    %3132 = vxpose.xlu0.b32.cont [13/16] 0.0, 128
    %3133 = vxpose.xlu0.b32.cont [14/16] 0.0, 128
    %3134 = vxpose.xlu0.b32.cont [15/16] 0.0, 128
    %3135 = vxpose.xlu0.b32.end [16/16] 0.0, 128
    %v3136 = vpop.trf.xlu0
    %v3137 = vpop.trf.xlu0
    %v3138 = vpop.trf.xlu0
    %v3139 = vpop.trf.xlu0
    %v3140 = vpop.trf.xlu0
    %v3141 = vpop.trf.xlu0
    %v3142 = vpop.trf.xlu0
    %v3143 = vpop.trf.xlu0
    %v3144 = vpop.trf.xlu0
    %v3145 = vpop.trf.xlu0
    %v3146 = vpop.trf.xlu0
    %v3147 = vpop.trf.xlu0
    %v3148 = vpop.trf.xlu0
    %v3149 = vpop.trf.xlu0
    %v3150 = vpop.trf.xlu0
    %v3151 = vpop.trf.xlu0
    %3152 = vxpose.xlu0.b32.start [1/16] %v3037, 128
    %3153 = vxpose.xlu0.b32.cont [2/16] 0.0, 128
    %3154 = vxpose.xlu0.b32.cont [3/16] 0.0, 128
    %3155 = vxpose.xlu0.b32.cont [4/16] 0.0, 128
    %3156 = vxpose.xlu0.b32.cont [5/16] 0.0, 128
    %3157 = vxpose.xlu0.b32.cont [6/16] 0.0, 128
    %3158 = vxpose.xlu0.b32.cont [7/16] 0.0, 128
    %3159 = vxpose.xlu0.b32.cont [8/16] 0.0, 128
    %3160 = vxpose.xlu0.b32.cont [9/16] 0.0, 128
    %3161 = vxpose.xlu0.b32.cont [10/16] 0.0, 128
    %3162 = vxpose.xlu0.b32.cont [11/16] 0.0, 128
    %3163 = vxpose.xlu0.b32.cont [12/16] 0.0, 128
    %3164 = vxpose.xlu0.b32.cont [13/16] 0.0, 128
    %3165 = vxpose.xlu0.b32.cont [14/16] 0.0, 128
    %3166 = vxpose.xlu0.b32.cont [15/16] 0.0, 128
    %3167 = vxpose.xlu0.b32.end [16/16] 0.0, 128
    %v3168 = vpop.trf.xlu0
    %v3169 = vpop.trf.xlu0
    %v3170 = vpop.trf.xlu0
    %v3171 = vpop.trf.xlu0
    %v3172 = vpop.trf.xlu0
    %v3173 = vpop.trf.xlu0
    %v3174 = vpop.trf.xlu0
    %v3175 = vpop.trf.xlu0
    %v3176 = vpop.trf.xlu0
    %v3177 = vpop.trf.xlu0
    %v3178 = vpop.trf.xlu0
    %v3179 = vpop.trf.xlu0
    %v3180 = vpop.trf.xlu0
    %v3181 = vpop.trf.xlu0
    %v3182 = vpop.trf.xlu0
    %v3183 = vpop.trf.xlu0
    %3184 = vxpose.xlu0.b32.start [1/16] %v3083, 128
    %3185 = vxpose.xlu0.b32.cont [2/16] 0.0, 128
    %3186 = vxpose.xlu0.b32.cont [3/16] 0.0, 128
    %3187 = vxpose.xlu0.b32.cont [4/16] 0.0, 128
    %3188 = vxpose.xlu0.b32.cont [5/16] 0.0, 128
    %3189 = vxpose.xlu0.b32.cont [6/16] 0.0, 128
    %3190 = vxpose.xlu0.b32.cont [7/16] 0.0, 128
    %3191 = vxpose.xlu0.b32.cont [8/16] 0.0, 128
    %3192 = vxpose.xlu0.b32.cont [9/16] 0.0, 128
    %3193 = vxpose.xlu0.b32.cont [10/16] 0.0, 128
    %3194 = vxpose.xlu0.b32.cont [11/16] 0.0, 128
    %3195 = vxpose.xlu0.b32.cont [12/16] 0.0, 128
    %3196 = vxpose.xlu0.b32.cont [13/16] 0.0, 128
    %3197 = vxpose.xlu0.b32.cont [14/16] 0.0, 128
    %3198 = vxpose.xlu0.b32.cont [15/16] 0.0, 128
    %3199 = vxpose.xlu0.b32.end [16/16] 0.0, 128
    %v3200 = vpop.trf.xlu0
    %v3201 = vpop.trf.xlu0
    %v3202 = vpop.trf.xlu0
    %v3203 = vpop.trf.xlu0
    %v3204 = vpop.trf.xlu0
    %v3205 = vpop.trf.xlu0
    %v3206 = vpop.trf.xlu0
    %v3207 = vpop.trf.xlu0
    %v3208 = vpop.trf.xlu0
    %v3209 = vpop.trf.xlu0
    %v3210 = vpop.trf.xlu0
    %v3211 = vpop.trf.xlu0
    %v3212 = vpop.trf.xlu0
    %v3213 = vpop.trf.xlu0
    %v3214 = vpop.trf.xlu0
    %v3215 = vpop.trf.xlu0
    %v3216 = vcombine.low %v3104, %v3168
    %v3217 = vcombine.high %v3104, %v3168
    %v3219 = vunpack.c.l.s4 1983009808
    %v3220 = vunpack.c.0.s8 %v3219
    %v3221 = vlaneseq
    %v3222 = vshrl.u32 %v3221, 7
    %v3223 = vsub.s32 %v3220, %v3222
    %v3224 = vrot.slane %v3216, %v3223
    %v3226 = vunpack.c.l.s4 1983009808
    %v3227 = vunpack.c.0.s8 %v3226
    %v3228 = vlaneseq
    %v3229 = vshrl.u32 %v3228, 7
    %v3230 = vsub.s32 %v3227, %v3229
    %v3231 = vrot.slane %v3217, %v3230
    %v3232 = vcombine.low %v3136, %v3200
    %v3233 = vcombine.high %v3136, %v3200
    %v3235 = vunpack.c.l.s4 1983009808
    %v3236 = vunpack.c.0.s8 %v3235
    %v3237 = vlaneseq
    %v3238 = vshrl.u32 %v3237, 7
    %v3239 = vsub.s32 %v3236, %v3238
    %v3240 = vrot.slane %v3232, %v3239
    %v3242 = vunpack.c.l.s4 1983009808
    %v3243 = vunpack.c.0.s8 %v3242
    %v3244 = vlaneseq
    %v3245 = vshrl.u32 %v3244, 7
    %v3246 = vsub.s32 %v3243, %v3245
    %v3247 = vrot.slane %v3233, %v3246
    %v3248 = vcombine.low %v3224, %v3240
    %v3249 = vcombine.high %v3224, %v3240
    %v3251 = vunpack.c.l.s4 1934713408
    %v3252 = vunpack.c.0.s8 %v3251
    %v3253 = vlaneseq
    %v3254 = vshrl.u32 %v3253, 7
    %v3255 = vsub.s32 %v3252, %v3254
    %v3256 = vrot.slane %v3248, %v3255
    %v3258 = vunpack.c.l.s4 1934713408
    %v3259 = vunpack.c.0.s8 %v3258
    %v3260 = vlaneseq
    %v3261 = vshrl.u32 %v3260, 7
    %v3262 = vsub.s32 %v3259, %v3261
    %v3263 = vrot.slane %v3249, %v3262
    %v3264 = vcombine.low %v3231, %v3247
    %v3265 = vcombine.high %v3231, %v3247
    %v3267 = vunpack.c.l.s4 1934713408
    %v3268 = vunpack.c.0.s8 %v3267
    %v3269 = vlaneseq
    %v3270 = vshrl.u32 %v3269, 7
    %v3271 = vsub.s32 %v3268, %v3270
    %v3272 = vrot.slane %v3264, %v3271
    %v3274 = vunpack.c.l.s4 1934713408
    %v3275 = vunpack.c.0.s8 %v3274
    %v3276 = vlaneseq
    %v3277 = vshrl.u32 %v3276, 7
    %v3278 = vsub.s32 %v3275, %v3277
    %v3279 = vrot.slane %v3265, %v3278
    %v3280 = vcombine.high %v3256, 0.0
    %v3281 = vcombine.high %v3263, 0.0
    %v3282 = vcombine.high %v3272, 0.0
    %v3283 = vcombine.high %v3279, 0.0
    %v3284 = vcombine.low %v3105, %v3169
    %v3285 = vcombine.high %v3105, %v3169
    %v3287 = vunpack.c.l.s4 1983009808
    %v3288 = vunpack.c.0.s8 %v3287
    %v3289 = vlaneseq
    %v3290 = vshrl.u32 %v3289, 7
    %v3291 = vsub.s32 %v3288, %v3290
    %v3292 = vrot.slane %v3284, %v3291
    %v3294 = vunpack.c.l.s4 1983009808
    %v3295 = vunpack.c.0.s8 %v3294
    %v3296 = vlaneseq
    %v3297 = vshrl.u32 %v3296, 7
    %v3298 = vsub.s32 %v3295, %v3297
    %v3299 = vrot.slane %v3285, %v3298
    %v3300 = vcombine.low %v3137, %v3201
    %v3301 = vcombine.high %v3137, %v3201
    %v3303 = vunpack.c.l.s4 1983009808
    %v3304 = vunpack.c.0.s8 %v3303
    %v3305 = vlaneseq
    %v3306 = vshrl.u32 %v3305, 7
    %v3307 = vsub.s32 %v3304, %v3306
    %v3308 = vrot.slane %v3300, %v3307
    %v3310 = vunpack.c.l.s4 1983009808
    %v3311 = vunpack.c.0.s8 %v3310
    %v3312 = vlaneseq
    %v3313 = vshrl.u32 %v3312, 7
    %v3314 = vsub.s32 %v3311, %v3313
    %v3315 = vrot.slane %v3301, %v3314
    %v3316 = vcombine.low %v3292, %v3308
    %v3317 = vcombine.high %v3292, %v3308
    %v3319 = vunpack.c.l.s4 1934713408
    %v3320 = vunpack.c.0.s8 %v3319
    %v3321 = vlaneseq
    %v3322 = vshrl.u32 %v3321, 7
    %v3323 = vsub.s32 %v3320, %v3322
    %v3324 = vrot.slane %v3316, %v3323
    %v3326 = vunpack.c.l.s4 1934713408
    %v3327 = vunpack.c.0.s8 %v3326
    %v3328 = vlaneseq
    %v3329 = vshrl.u32 %v3328, 7
    %v3330 = vsub.s32 %v3327, %v3329
    %v3331 = vrot.slane %v3317, %v3330
    %v3332 = vcombine.low %v3299, %v3315
    %v3333 = vcombine.high %v3299, %v3315
    %v3335 = vunpack.c.l.s4 1934713408
    %v3336 = vunpack.c.0.s8 %v3335
    %v3337 = vlaneseq
    %v3338 = vshrl.u32 %v3337, 7
    %v3339 = vsub.s32 %v3336, %v3338
    %v3340 = vrot.slane %v3332, %v3339
    %v3342 = vunpack.c.l.s4 1934713408
    %v3343 = vunpack.c.0.s8 %v3342
    %v3344 = vlaneseq
    %v3345 = vshrl.u32 %v3344, 7
    %v3346 = vsub.s32 %v3343, %v3345
    %v3347 = vrot.slane %v3333, %v3346
    %v3348 = vcombine.high %v3324, 0.0
    %v3349 = vcombine.high %v3331, 0.0
    %v3350 = vcombine.high %v3340, 0.0
    %v3351 = vcombine.high %v3347, 0.0
    %v3352 = vrcp.pop %v2080
    %v3353 = vrcp.pop %v2083
    %v3354 = vrcp.pop %v2086
    %v3355 = vrcp.pop %v2089
    %v3356 = vrcp.pop %v2092
    %v3357 = vrcp.pop %v2095
    %v3358 = vrcp.pop %v2098
    %v3359 = vrcp.pop %v2101
    %v3368 = vlaneseq
    %v3369 = vand.u32 %v3368, 127
    %v3370 = vlaneseq
    %v3371 = vshrl.u32 %v3370, 7
    %v3372 = vsub.s32 %v3369, %v3371
    %v3373 = vrot.slane %v3352, %v3372
    %v3374 = vadd.s32 %v3369, 4294967288
    %v3375 = vlaneseq
    %v3376 = vshrl.u32 %v3375, 7
    %v3377 = vsub.s32 %v3374, %v3376
    %v3378 = vrot.slane %v3353, %v3377
    %vm3379 = vcmask 130112
    %v3380 = vsel %vm3379, %v3378, %v3373
    %v3381 = vlaneseq
    %v3382 = vshrl.u32 %v3381, 7
    %v3383 = vsub.s32 %v3369, %v3382
    %v3384 = vrot.slane %v3354, %v3383
    %v3385 = vlaneseq
    %v3386 = vshrl.u32 %v3385, 7
    %v3387 = vsub.s32 %v3374, %v3386
    %v3388 = vrot.slane %v3355, %v3387
    %v3389 = vsel %vm3379, %v3388, %v3384
    %v3390 = vlaneseq
    %v3391 = vshrl.u32 %v3390, 7
    %v3392 = vsub.s32 %v3369, %v3391
    %v3393 = vrot.slane %v3356, %v3392
    %v3394 = vlaneseq
    %v3395 = vshrl.u32 %v3394, 7
    %v3396 = vsub.s32 %v3374, %v3395
    %v3397 = vrot.slane %v3357, %v3396
    %v3398 = vsel %vm3379, %v3397, %v3393
    %v3399 = vlaneseq
    %v3400 = vshrl.u32 %v3399, 7
    %v3401 = vsub.s32 %v3369, %v3400
    %v3402 = vrot.slane %v3358, %v3401
    %v3403 = vlaneseq
    %v3404 = vshrl.u32 %v3403, 7
    %v3405 = vsub.s32 %v3374, %v3404
    %v3406 = vrot.slane %v3359, %v3405
    %v3407 = vsel %vm3379, %v3406, %v3402
    %vm3408 = vcmask 1041409
    %v3409 = vsel %vm3408, %v3389, %v3380
    %vm3410 = vcmask 1042434
    %v3411 = vsel %vm3410, %v3398, %v3409
    %vm3412 = vcmask 1043459
    %v3413 = vsel %vm3412, %v3407, %v3411
    %3415 = vxpose.xlu0.b32.start [1/16] %v3413, 128
    %3416 = vxpose.xlu0.b32.cont [2/16] 0.0, 128
    %3417 = vxpose.xlu0.b32.cont [3/16] 0.0, 128
    %3418 = vxpose.xlu0.b32.cont [4/16] 0.0, 128
    %3419 = vxpose.xlu0.b32.cont [5/16] 0.0, 128
    %3420 = vxpose.xlu0.b32.cont [6/16] 0.0, 128
    %3421 = vxpose.xlu0.b32.cont [7/16] 0.0, 128
    %3422 = vxpose.xlu0.b32.cont [8/16] 0.0, 128
    %3423 = vxpose.xlu0.b32.cont [9/16] 0.0, 128
    %3424 = vxpose.xlu0.b32.cont [10/16] 0.0, 128
    %3425 = vxpose.xlu0.b32.cont [11/16] 0.0, 128
    %3426 = vxpose.xlu0.b32.cont [12/16] 0.0, 128
    %3427 = vxpose.xlu0.b32.cont [13/16] 0.0, 128
    %3428 = vxpose.xlu0.b32.cont [14/16] 0.0, 128
    %3429 = vxpose.xlu0.b32.cont [15/16] 0.0, 128
    %3430 = vxpose.xlu0.b32.end [16/16] 0.0, 128
    %v3431 = vpop.trf.xlu0
    %v3432 = vpop.trf.xlu0
    %v3433 = vpop.trf.xlu0
    %v3434 = vpop.trf.xlu0
    %v3435 = vpop.trf.xlu0
    %v3436 = vpop.trf.xlu0
    %v3437 = vpop.trf.xlu0
    %v3438 = vpop.trf.xlu0
    %v3439 = vpop.trf.xlu0
    %v3440 = vpop.trf.xlu0
    %v3441 = vpop.trf.xlu0
    %v3442 = vpop.trf.xlu0
    %v3443 = vpop.trf.xlu0
    %v3444 = vpop.trf.xlu0
    %v3445 = vpop.trf.xlu0
    %v3446 = vpop.trf.xlu0
    %v3447 = vlaneseq
    %v3448 = vshrl.u32 %v3447, 7
    %v3449 = vsub.s32 0, %v3448
    %v3450 = vrot.slane %v3431, %v3449
    %3452 = vbcast.lane.b32.xlu0 %v3450, 256
    %v3453 = vpop.permute.xlu0 %3452
    %v3454 = vlaneseq
    %v3455 = vshrl.u32 %v3454, 7
    %v3456 = vsub.s32 1, %v3455
    %v3457 = vrot.slane %v3431, %v3456
    %3459 = vbcast.lane.b32.xlu0 %v3457, 256
    %v3460 = vpop.permute.xlu0 %3459
    %v3461 = vlaneseq
    %v3462 = vshrl.u32 %v3461, 7
    %v3463 = vsub.s32 2, %v3462
    %v3464 = vrot.slane %v3431, %v3463
    %3466 = vbcast.lane.b32.xlu0 %v3464, 256
    %v3467 = vpop.permute.xlu0 %3466
    %v3468 = vlaneseq
    %v3469 = vshrl.u32 %v3468, 7
    %v3470 = vsub.s32 3, %v3469
    %v3471 = vrot.slane %v3431, %v3470
    %3473 = vbcast.lane.b32.xlu0 %v3471, 256
    %v3474 = vpop.permute.xlu0 %3473
    %v3475 = vlaneseq
    %v3476 = vshrl.u32 %v3475, 7
    %v3477 = vsub.s32 4, %v3476
    %v3478 = vrot.slane %v3431, %v3477
    %3480 = vbcast.lane.b32.xlu0 %v3478, 256
    %v3481 = vpop.permute.xlu0 %3480
    %v3482 = vlaneseq
    %v3483 = vshrl.u32 %v3482, 7
    %v3484 = vsub.s32 5, %v3483
    %v3485 = vrot.slane %v3431, %v3484
    %3487 = vbcast.lane.b32.xlu0 %v3485, 256
    %v3488 = vpop.permute.xlu0 %3487
    %v3489 = vlaneseq
    %v3490 = vshrl.u32 %v3489, 7
    %v3491 = vsub.s32 6, %v3490
    %v3492 = vrot.slane %v3431, %v3491
    %3494 = vbcast.lane.b32.xlu0 %v3492, 256
    %v3495 = vpop.permute.xlu0 %3494
    %v3496 = vlaneseq
    %v3497 = vshrl.u32 %v3496, 7
    %v3498 = vsub.s32 7, %v3497
    %v3499 = vrot.slane %v3431, %v3498
    %3501 = vbcast.lane.b32.xlu0 %v3499, 256
    %v3502 = vpop.permute.xlu0 %3501
    %v3503 = vlaneseq
    %v3504 = vshrl.u32 %v3503, 7
    %v3505 = vsub.s32 0, %v3504
    %v3506 = vrot.slane %v3432, %v3505
    %3508 = vbcast.lane.b32.xlu0 %v3506, 256
    %v3509 = vpop.permute.xlu0 %3508
    %v3510 = vlaneseq
    %v3511 = vshrl.u32 %v3510, 7
    %v3512 = vsub.s32 1, %v3511
    %v3513 = vrot.slane %v3432, %v3512
    %3515 = vbcast.lane.b32.xlu0 %v3513, 256
    %v3516 = vpop.permute.xlu0 %3515
    %v3517 = vlaneseq
    %v3518 = vshrl.u32 %v3517, 7
    %v3519 = vsub.s32 2, %v3518
    %v3520 = vrot.slane %v3432, %v3519
    %3522 = vbcast.lane.b32.xlu0 %v3520, 256
    %v3523 = vpop.permute.xlu0 %3522
    %v3524 = vlaneseq
    %v3525 = vshrl.u32 %v3524, 7
    %v3526 = vsub.s32 3, %v3525
    %v3527 = vrot.slane %v3432, %v3526
    %3529 = vbcast.lane.b32.xlu0 %v3527, 256
    %v3530 = vpop.permute.xlu0 %3529
    %v3531 = vlaneseq
    %v3532 = vshrl.u32 %v3531, 7
    %v3533 = vsub.s32 4, %v3532
    %v3534 = vrot.slane %v3432, %v3533
    %3536 = vbcast.lane.b32.xlu0 %v3534, 256
    %v3537 = vpop.permute.xlu0 %3536
    %v3538 = vlaneseq
    %v3539 = vshrl.u32 %v3538, 7
    %v3540 = vsub.s32 5, %v3539
    %v3541 = vrot.slane %v3432, %v3540
    %3543 = vbcast.lane.b32.xlu0 %v3541, 256
    %v3544 = vpop.permute.xlu0 %3543
    %v3545 = vlaneseq
    %v3546 = vshrl.u32 %v3545, 7
    %v3547 = vsub.s32 6, %v3546
    %v3548 = vrot.slane %v3432, %v3547
    %3550 = vbcast.lane.b32.xlu0 %v3548, 256
    %v3551 = vpop.permute.xlu0 %3550
    %v3552 = vlaneseq
    %v3553 = vshrl.u32 %v3552, 7
    %v3554 = vsub.s32 7, %v3553
    %v3555 = vrot.slane %v3432, %v3554
    %3557 = vbcast.lane.b32.xlu0 %v3555, 256
    %v3558 = vpop.permute.xlu0 %3557
    %v3559 = vmul.f32 %v3256, %v3453
    %v3560 = vmul.f32 %v3280, %v3460
    %v3561 = vmul.f32 %v3263, %v3467
    %v3562 = vmul.f32 %v3281, %v3474
    %v3563 = vmul.f32 %v3272, %v3481
    %v3564 = vmul.f32 %v3282, %v3488
    %v3565 = vmul.f32 %v3279, %v3495
    %v3566 = vmul.f32 %v3283, %v3502
    %v3567 = vmul.f32 %v3324, %v3509
    %v3568 = vmul.f32 %v3348, %v3516
    %v3569 = vmul.f32 %v3331, %v3523
    %v3570 = vmul.f32 %v3349, %v3530
    %v3571 = vmul.f32 %v3340, %v3537
    %v3572 = vmul.f32 %v3350, %v3544
    %v3573 = vmul.f32 %v3347, %v3551
    %v3574 = vmul.f32 %v3351, %v3558
    %v3575 = vcombine.low %v3559, %v3561
    %v3577 = vunpack.c.l.s4 1983009808
    %v3578 = vunpack.c.0.s8 %v3577
    %v3579 = vlaneseq
    %v3580 = vshrl.u32 %v3579, 7
    %v3581 = vsub.s32 %v3578, %v3580
    %v3582 = vrot.slane %v3575, %v3581
    %v3583 = vcombine.low %v3560, %v3562
    %v3585 = vunpack.c.l.s4 1983009808
    %v3586 = vunpack.c.0.s8 %v3585
    %v3587 = vlaneseq
    %v3588 = vshrl.u32 %v3587, 7
    %v3589 = vsub.s32 %v3586, %v3588
    %v3590 = vrot.slane %v3583, %v3589
    %v3591 = vcombine.low %v3563, %v3565
    %v3593 = vunpack.c.l.s4 1983009808
    %v3594 = vunpack.c.0.s8 %v3593
    %v3595 = vlaneseq
    %v3596 = vshrl.u32 %v3595, 7
    %v3597 = vsub.s32 %v3594, %v3596
    %v3598 = vrot.slane %v3591, %v3597
    %v3599 = vcombine.low %v3564, %v3566
    %v3601 = vunpack.c.l.s4 1983009808
    %v3602 = vunpack.c.0.s8 %v3601
    %v3603 = vlaneseq
    %v3604 = vshrl.u32 %v3603, 7
    %v3605 = vsub.s32 %v3602, %v3604
    %v3606 = vrot.slane %v3599, %v3605
    %v3607 = vcombine.low %v3582, %v3590
    %v3608 = vcombine.high %v3582, %v3590
    %v3610 = vunpack.c.l.s4 1934713408
    %v3611 = vunpack.c.0.s8 %v3610
    %v3612 = vlaneseq
    %v3613 = vshrl.u32 %v3612, 7
    %v3614 = vsub.s32 %v3611, %v3613
    %v3615 = vrot.slane %v3607, %v3614
    %v3617 = vunpack.c.l.s4 1934713408
    %v3618 = vunpack.c.0.s8 %v3617
    %v3619 = vlaneseq
    %v3620 = vshrl.u32 %v3619, 7
    %v3621 = vsub.s32 %v3618, %v3620
    %v3622 = vrot.slane %v3608, %v3621
    %v3623 = vcombine.low %v3598, %v3606
    %v3624 = vcombine.high %v3598, %v3606
    %v3626 = vunpack.c.l.s4 1934713408
    %v3627 = vunpack.c.0.s8 %v3626
    %v3628 = vlaneseq
    %v3629 = vshrl.u32 %v3628, 7
    %v3630 = vsub.s32 %v3627, %v3629
    %v3631 = vrot.slane %v3623, %v3630
    %v3633 = vunpack.c.l.s4 1934713408
    %v3634 = vunpack.c.0.s8 %v3633
    %v3635 = vlaneseq
    %v3636 = vshrl.u32 %v3635, 7
    %v3637 = vsub.s32 %v3634, %v3636
    %v3638 = vrot.slane %v3624, %v3637
    %v3639 = vcombine.low %v3615, %v3631
    %v3640 = vcombine.high %v3615, %v3631
    %v3641 = vcombine.low %v3622, %v3638
    %v3642 = vcombine.high %v3622, %v3638
    %v3643 = vcombine.low %v3567, %v3569
    %v3645 = vunpack.c.l.s4 1983009808
    %v3646 = vunpack.c.0.s8 %v3645
    %v3647 = vlaneseq
    %v3648 = vshrl.u32 %v3647, 7
    %v3649 = vsub.s32 %v3646, %v3648
    %v3650 = vrot.slane %v3643, %v3649
    %v3651 = vcombine.low %v3568, %v3570
    %v3653 = vunpack.c.l.s4 1983009808
    %v3654 = vunpack.c.0.s8 %v3653
    %v3655 = vlaneseq
    %v3656 = vshrl.u32 %v3655, 7
    %v3657 = vsub.s32 %v3654, %v3656
    %v3658 = vrot.slane %v3651, %v3657
    %v3659 = vcombine.low %v3571, %v3573
    %v3661 = vunpack.c.l.s4 1983009808
    %v3662 = vunpack.c.0.s8 %v3661
    %v3663 = vlaneseq
    %v3664 = vshrl.u32 %v3663, 7
    %v3665 = vsub.s32 %v3662, %v3664
    %v3666 = vrot.slane %v3659, %v3665
    %v3667 = vcombine.low %v3572, %v3574
    %v3669 = vunpack.c.l.s4 1983009808
    %v3670 = vunpack.c.0.s8 %v3669
    %v3671 = vlaneseq
    %v3672 = vshrl.u32 %v3671, 7
    %v3673 = vsub.s32 %v3670, %v3672
    %v3674 = vrot.slane %v3667, %v3673
    %v3675 = vcombine.low %v3650, %v3658
    %v3676 = vcombine.high %v3650, %v3658
    %v3678 = vunpack.c.l.s4 1934713408
    %v3679 = vunpack.c.0.s8 %v3678
    %v3680 = vlaneseq
    %v3681 = vshrl.u32 %v3680, 7
    %v3682 = vsub.s32 %v3679, %v3681
    %v3683 = vrot.slane %v3675, %v3682
    %v3685 = vunpack.c.l.s4 1934713408
    %v3686 = vunpack.c.0.s8 %v3685
    %v3687 = vlaneseq
    %v3688 = vshrl.u32 %v3687, 7
    %v3689 = vsub.s32 %v3686, %v3688
    %v3690 = vrot.slane %v3676, %v3689
    %v3691 = vcombine.low %v3666, %v3674
    %v3692 = vcombine.high %v3666, %v3674
    %v3694 = vunpack.c.l.s4 1934713408
    %v3695 = vunpack.c.0.s8 %v3694
    %v3696 = vlaneseq
    %v3697 = vshrl.u32 %v3696, 7
    %v3698 = vsub.s32 %v3695, %v3697
    %v3699 = vrot.slane %v3691, %v3698
    %v3701 = vunpack.c.l.s4 1934713408
    %v3702 = vunpack.c.0.s8 %v3701
    %v3703 = vlaneseq
    %v3704 = vshrl.u32 %v3703, 7
    %v3705 = vsub.s32 %v3702, %v3704
    %v3706 = vrot.slane %v3692, %v3705
    %v3707 = vcombine.low %v3683, %v3699
    %v3708 = vcombine.high %v3683, %v3699
    %v3709 = vcombine.low %v3690, %v3706
    %v3710 = vcombine.high %v3690, %v3706
    %3713 = vrot.lane.b32.xlu0 %v3640, 8
    %v3714 = vpop.permute.xlu0 %3713
    %3715 = vrot.lane.b32.xlu0 %v3708, 8
    %v3716 = vpop.permute.xlu0 %3715
    %3721 = vrot.lane.b32.xlu0 %v3641, 16
    %v3722 = vpop.permute.xlu0 %3721
    %3723 = vrot.lane.b32.xlu0 %v3709, 16
    %v3724 = vpop.permute.xlu0 %3723
    %3729 = vrot.lane.b32.xlu0 %v3642, 24
    %v3730 = vpop.permute.xlu0 %3729
    %3731 = vrot.lane.b32.xlu0 %v3710, 24
    %v3732 = vpop.permute.xlu0 %3731
    %vm3735 = vcmask 64512
    %v3736 = vsel %vm3735, %v3639, %v3714
    %v3737 = vsel %vm3735, %v3707, %v3716
    %v3738 = vsel %vm217, %v3736, %v3722
    %v3739 = vsel %vm217, %v3737, %v3724
    %vm3740 = vcmask 195584
    %v3741 = vsel %vm3740, %v3738, %v3730
    %v3742 = vsel %vm3740, %v3739, %v3732
    %v3743 = vpack.c.bf16 %v3742, %v3741
    %v3744 = vld [vmem:[%s8] sm:$0xf]
    %v3745 = vld [vmem:[%s8 + $0x4] sm:$0xf]
    %v3746 = vld [vmem:[%s8 + $0x8] sm:$0xf]
    %v3747 = vld [vmem:[%s8 + $0xc] sm:$0xf]
    %v3752 = vunpack.c.l.b16 %v3744
    %v3753 = vunpack.c.l.b16 %v3745
    %v3754 = vunpack.c.l.b16 %v3746
    %v3755 = vunpack.c.l.b16 %v3747
    %v3756 = vpack.c.b16 %v3753, %v3752
    %v3757 = vpack.c.b16 %v3755, %v3754
    %v3761 = vsel %vm109, %v3743, 0
    %3763 = vmatprep.subr.bf16.mxu0 0
    %3764 = vmatpush1.bf16.msra.mxu0 0
    %3765 = vmatprep.subr.bf16.mxu0 0
    %3766 = vmatpush1.bf16.msra.mxu0 0
    %3767 = vmatprep.subr.bf16.mxu0 0
    %3768 = vmatpush1.bf16.msra.mxu0 0
    %3769 = vmatprep.subr.bf16.mxu0 0
    %3770 = vmatpush1.bf16.msra.mxu0 0
    %3771 = vmatprep.subr.bf16.mxu0 0
    %3772 = vmatpush1.bf16.msra.mxu0 0
    %3773 = vmatprep.subr.bf16.mxu0 0
    %3774 = vmatpush1.bf16.msra.mxu0 0
    %3775 = vmatprep.subr.bf16.mxu0 0
    %3776 = vmatpush1.bf16.msra.mxu0 %v3757
    %3777 = vmatprep.subr.bf16.mxu0 0
    %3778 = vmatpush1.bf16.msra.mxu0 %v3756
    %3779 = vmatprep.subr.bf16.mxu0 0
    %3780 = vmatpush2.bf16.msra.mxu0 0
    %3781 = vmatprep.subr.bf16.mxu0 0
    %3782 = vmatpush2.bf16.msra.mxu0 0
    %3783 = vmatprep.subr.bf16.mxu0 0
    %3784 = vmatpush2.bf16.msra.mxu0 0
    %3785 = vmatprep.subr.bf16.mxu0 0
    %3786 = vmatpush2.bf16.msra.mxu0 0
    %3787 = vmatprep.subr.bf16.mxu0 0
    %3788 = vmatpush2.bf16.msra.mxu0 0
    %3789 = vmatprep.subr.bf16.mxu0 0
    %3790 = vmatpush2.bf16.msra.mxu0 0
    %3791 = vmatprep.subr.bf16.mxu0 0
    %3792 = vmatpush2.bf16.msra.mxu0 0
    %3793 = vmatprep.subr.bf16.mxu0 0
    %3794 = vmatpush2.bf16.msra.mxu0 0
    %3795 = vmatprep.mubr.bf16.mxu0 0
    %3796 = vmatmul.mubr.bf16.gmra.mxu0 %v3761
    %v3797 = vpop.f32.mrf.mxu0
    %v3798 = vadd.f32 0.0, %v3797
    %v3799 = vpop.f32.mrf.mxu0
    %v3800 = vpop.f32.mrf.mxu0
    %v3801 = vadd.f32 0.0, %v3800
    %v3802 = vpop.f32.mrf.mxu0
    %3803 = vdwg.mxu0
    %v3804 = vadd.f32 %v98, %v3798
    %v3805 = vadd.f32 %v99, %v3801
    %v3806 = vld [vmem:[%s9] sm:$0x1]
    %v3807 = vmul.f32 %v3804, %v3804
    %v3808 = vmul.f32 %v3805, %v3805
    %v3809 = vsel %vm109, %v3807, 0.0
    %3810 = vadd.xlane.f32.xlu0 %v3809
    %v3811 = vpop.xlane.xlu0 %3810
    %v3812 = vsel %vm109, %v3808, 0.0
    %3813 = vadd.xlane.f32.xlu0 %v3812
    %v3814 = vpop.xlane.xlu0 %3813
    %v3815 = vmul.f32 %v3811, %v116
    %v3816 = vmul.f32 %v3814, %v116
    %v3817 = vadd.f32 %v3815, 1e-06
    %v3818 = vadd.f32 %v3816, 1e-06
    %v3819 = vrsqrt.pop %v3817
    %v3820 = vrsqrt.pop %v3818
    %v3821 = vmul.f32 %v3804, %v3819
    %v3822 = vmul.f32 %v3805, %v3820
    %v3824 = vlaneseq
    %v3825 = vshrl.u32 %v3824, 7
    %v3826 = vsub.s32 0, %v3825
    %v3827 = vrot.slane %v3806, %v3826
    %v3829 = vmul.f32 %v3821, %v3827
    %v3830 = vmul.f32 %v3822, %v3827
    %v3831 = vpack.c.bf16 %v3830, %v3829
    %v3832 = vld [vmem:[%s10] sm:$0xf]
    %v3833 = vld [vmem:[%s10 + $0x4] sm:$0xf]
    %v3834 = vld [vmem:[%s10 + $0x8] sm:$0xf]
    %v3835 = vld [vmem:[%s10 + $0xc] sm:$0xf]
    %v3840 = vunpack.c.l.b16 %v3832
    %v3841 = vunpack.c.l.b16 %v3833
    %v3842 = vunpack.c.l.b16 %v3834
    %v3843 = vunpack.c.l.b16 %v3835
    %v3844 = vpack.c.b16 %v3841, %v3840
    %v3845 = vpack.c.b16 %v3843, %v3842
    %v3849 = vsel %vm109, %v3831, 0
    %3851 = vmatprep.subr.bf16.mxu0 0
    %3852 = vmatpush1.bf16.msra.mxu0 0
    %3853 = vmatprep.subr.bf16.mxu0 0
    %3854 = vmatpush1.bf16.msra.mxu0 0
    %3855 = vmatprep.subr.bf16.mxu0 0
    %3856 = vmatpush1.bf16.msra.mxu0 0
    %3857 = vmatprep.subr.bf16.mxu0 0
    %3858 = vmatpush1.bf16.msra.mxu0 0
    %3859 = vmatprep.subr.bf16.mxu0 0
    %3860 = vmatpush1.bf16.msra.mxu0 0
    %3861 = vmatprep.subr.bf16.mxu0 0
    %3862 = vmatpush1.bf16.msra.mxu0 0
    %3863 = vmatprep.subr.bf16.mxu0 0
    %3864 = vmatpush1.bf16.msra.mxu0 %v3845
    %3865 = vmatprep.subr.bf16.mxu0 0
    %3866 = vmatpush1.bf16.msra.mxu0 %v3844
    %3867 = vmatprep.subr.bf16.mxu0 0
    %3868 = vmatpush2.bf16.msra.mxu0 0
    %3869 = vmatprep.subr.bf16.mxu0 0
    %3870 = vmatpush2.bf16.msra.mxu0 0
    %3871 = vmatprep.subr.bf16.mxu0 0
    %3872 = vmatpush2.bf16.msra.mxu0 0
    %3873 = vmatprep.subr.bf16.mxu0 0
    %3874 = vmatpush2.bf16.msra.mxu0 0
    %3875 = vmatprep.subr.bf16.mxu0 0
    %3876 = vmatpush2.bf16.msra.mxu0 0
    %3877 = vmatprep.subr.bf16.mxu0 0
    %3878 = vmatpush2.bf16.msra.mxu0 0
    %3879 = vmatprep.subr.bf16.mxu0 0
    %3880 = vmatpush2.bf16.msra.mxu0 0
    %3881 = vmatprep.subr.bf16.mxu0 0
    %3882 = vmatpush2.bf16.msra.mxu0 0
    %3883 = vmatprep.mubr.bf16.mxu0 0
    %3884 = vmatmul.mubr.bf16.gmra.mxu0 %v3849
    %v3885 = vpop.f32.mrf.mxu0
    %v3886 = vadd.f32 0.0, %v3885
    %v3887 = vpop.f32.mrf.mxu0
    %v3888 = vpop.f32.mrf.mxu0
    %v3889 = vadd.f32 0.0, %v3888
    %v3890 = vpop.f32.mrf.mxu0
    %3891 = vdwg.mxu0
    %v3892 = vxor.u32 %v3886, 2147483648
    %v3893 = vxor.u32 %v3889, 2147483648
    %v3894 = vmul.f32 %v3892, 1.442695
    %v3895 = vpow.pop %v3894
    %v3896 = vmul.f32 %v3893, 1.442695
    %v3897 = vpow.pop %v3896
    %v3898 = vadd.f32 %v3895, 1.0
    %v3899 = vadd.f32 %v3897, 1.0
    %v3900 = vrcp.pop %v3898
    %v3901 = vmul.f32 1.0, %v3900
    %v3902 = vrcp.pop %v3899
    %v3903 = vmul.f32 1.0, %v3902
    %v3904 = vmul.f32 %v3886, %v3901
    %v3905 = vmul.f32 %v3889, %v3903
    %3908 = vrot.lane.b32.xlu0 %v3886, 64
    %v3909 = vpop.permute.xlu0 %3908
    %3910 = vrot.lane.b32.xlu0 %v3889, 64
    %v3911 = vpop.permute.xlu0 %3910
    %v3914 = vmul.f32 %v3904, %v3909
    %v3915 = vmul.f32 %v3905, %v3911
    %v3916 = vpack.c.bf16 %v3915, %v3914
    %v3917 = vld [vmem:[%s11] sm:$0xf]
    %v3918 = vld [vmem:[%s11 + $0x4] sm:$0xf]
    %v3919 = vld [vmem:[%s11 + $0x8] sm:$0xf]
    %v3920 = vld [vmem:[%s11 + $0xc] sm:$0xf]
    %v3921 = vld [vmem:[%s11 + $0x10] sm:$0xf]
    %v3922 = vld [vmem:[%s11 + $0x14] sm:$0xf]
    %v3923 = vld [vmem:[%s11 + $0x18] sm:$0xf]
    %v3924 = vld [vmem:[%s11 + $0x1c] sm:$0xf]
    %v3933 = vunpack.c.l.b16 %v3917
    %v3934 = vunpack.c.l.b16 %v3918
    %v3935 = vunpack.c.l.b16 %v3919
    %v3936 = vunpack.c.l.b16 %v3920
    %v3937 = vunpack.c.l.b16 %v3921
    %v3938 = vunpack.c.l.b16 %v3922
    %v3939 = vunpack.c.l.b16 %v3923
    %v3940 = vunpack.c.l.b16 %v3924
    %v3941 = vpack.c.b16 %v3934, %v3933
    %v3942 = vpack.c.b16 %v3936, %v3935
    %v3943 = vpack.c.b16 %v3938, %v3937
    %v3944 = vpack.c.b16 %v3940, %v3939
    %vm3949 = vcmask 523264
    %v3951 = vsel %vm3949, %v3916, 0
    %3953 = vmatprep.subr.bf16.mxu0 0
    %3954 = vmatpush1.bf16.msra.mxu0 0
    %3955 = vmatprep.subr.bf16.mxu0 0
    %3956 = vmatpush1.bf16.msra.mxu0 0
    %3957 = vmatprep.subr.bf16.mxu0 0
    %3958 = vmatpush1.bf16.msra.mxu0 0
    %3959 = vmatprep.subr.bf16.mxu0 0
    %3960 = vmatpush1.bf16.msra.mxu0 0
    %3961 = vmatprep.subr.bf16.mxu0 0
    %3962 = vmatpush1.bf16.msra.mxu0 %v3944
    %3963 = vmatprep.subr.bf16.mxu0 0
    %3964 = vmatpush1.bf16.msra.mxu0 %v3943
    %3965 = vmatprep.subr.bf16.mxu0 0
    %3966 = vmatpush1.bf16.msra.mxu0 %v3942
    %3967 = vmatprep.subr.bf16.mxu0 0
    %3968 = vmatpush1.bf16.msra.mxu0 %v3941
    %3969 = vmatprep.subr.bf16.mxu0 0
    %3970 = vmatpush2.bf16.msra.mxu0 0
    %3971 = vmatprep.subr.bf16.mxu0 0
    %3972 = vmatpush2.bf16.msra.mxu0 0
    %3973 = vmatprep.subr.bf16.mxu0 0
    %3974 = vmatpush2.bf16.msra.mxu0 0
    %3975 = vmatprep.subr.bf16.mxu0 0
    %3976 = vmatpush2.bf16.msra.mxu0 0
    %3977 = vmatprep.subr.bf16.mxu0 0
    %3978 = vmatpush2.bf16.msra.mxu0 0
    %3979 = vmatprep.subr.bf16.mxu0 0
    %3980 = vmatpush2.bf16.msra.mxu0 0
    %3981 = vmatprep.subr.bf16.mxu0 0
    %3982 = vmatpush2.bf16.msra.mxu0 0
    %3983 = vmatprep.subr.bf16.mxu0 0
    %3984 = vmatpush2.bf16.msra.mxu0 0
    %3985 = vmatprep.mubr.bf16.mxu0 0
    %3986 = vmatmul.mubr.bf16.gmra.mxu0 %v3951
    %v3987 = vpop.f32.mrf.mxu0
    %v3988 = vadd.f32 0.0, %v3987
    %v3989 = vpop.f32.mrf.mxu0
    %v3990 = vpop.f32.mrf.mxu0
    %v3991 = vadd.f32 0.0, %v3990
    %v3992 = vpop.f32.mrf.mxu0
    %3993 = vdwg.mxu0
    %v3994 = vadd.f32 %v3804, %v3988
    %v3995 = vadd.f32 %v3805, %v3991
    %s3996 = scalar_lea.vmem %s5, 1
    %v3997 = vld [vmem:[%s3996] sm:$0x1]
    %v3998 = vmul.f32 %v3994, %v3994
    %v3999 = vmul.f32 %v3995, %v3995
    %v4000 = vsel %vm109, %v3998, 0.0
    %4001 = vadd.xlane.f32.xlu0 %v4000
    %v4002 = vpop.xlane.xlu0 %4001
    %v4003 = vsel %vm109, %v3999, 0.0
    %4004 = vadd.xlane.f32.xlu0 %v4003
    %v4005 = vpop.xlane.xlu0 %4004
    %v4006 = vmul.f32 %v4002, %v116
    %v4007 = vmul.f32 %v4005, %v116
    %v4008 = vadd.f32 %v4006, 1e-06
    %v4009 = vadd.f32 %v4007, 1e-06
    %v4010 = vrsqrt.pop %v4008
    %v4011 = vrsqrt.pop %v4009
    %v4012 = vmul.f32 %v3994, %v4010
    %v4013 = vmul.f32 %v3995, %v4011
    %v4015 = vlaneseq
    %v4016 = vshrl.u32 %v4015, 7
    %v4017 = vsub.s32 0, %v4016
    %v4018 = vrot.slane %v3997, %v4017
    %v4020 = vmul.f32 %v4012, %v4018
    %v4021 = vmul.f32 %v4013, %v4018
    %v4022 = vpack.c.bf16 %v4021, %v4020
    %s4023 = scalar_lea.vmem %s6, 16
    %v4024 = vld [vmem:[%s4023] sm:$0xf]
    %v4025 = vld [vmem:[%s4023 + $0x4] sm:$0xf]
    %v4026 = vld [vmem:[%s4023 + $0x8] sm:$0xf]
    %v4027 = vld [vmem:[%s4023 + $0xc] sm:$0xf]
    %s4028 = scalar_lea.vmem %s7, 1
    %v4029 = vld [vmem:[%s4028] sm:$0x1]
    %v4031 = vlaneseq
    %v4032 = vshrl.u32 %v4031, 7
    %v4033 = vsub.s32 0, %v4032
    %v4034 = vrot.slane %v4029, %v4033
    %v4040 = vunpack.c.l.b16 %v4024
    %v4041 = vunpack.c.l.b16 %v4025
    %v4042 = vunpack.c.l.b16 %v4026
    %v4043 = vunpack.c.l.b16 %v4027
    %v4044 = vpack.c.b16 %v4041, %v4040
    %v4045 = vpack.c.b16 %v4043, %v4042
    %v4049 = vsel %vm109, %v4022, 0
    %4051 = vmatprep.subr.bf16.mxu0 0
    %4052 = vmatpush1.bf16.msra.mxu0 0
    %4053 = vmatprep.subr.bf16.mxu0 0
    %4054 = vmatpush1.bf16.msra.mxu0 0
    %4055 = vmatprep.subr.bf16.mxu0 0
    %4056 = vmatpush1.bf16.msra.mxu0 0
    %4057 = vmatprep.subr.bf16.mxu0 0
    %4058 = vmatpush1.bf16.msra.mxu0 0
    %4059 = vmatprep.subr.bf16.mxu0 0
    %4060 = vmatpush1.bf16.msra.mxu0 0
    %4061 = vmatprep.subr.bf16.mxu0 0
    %4062 = vmatpush1.bf16.msra.mxu0 0
    %4063 = vmatprep.subr.bf16.mxu0 0
    %4064 = vmatpush1.bf16.msra.mxu0 %v4045
    %4065 = vmatprep.subr.bf16.mxu0 0
    %4066 = vmatpush1.bf16.msra.mxu0 %v4044
    %4067 = vmatprep.subr.bf16.mxu0 0
    %4068 = vmatpush2.bf16.msra.mxu0 0
    %4069 = vmatprep.subr.bf16.mxu0 0
    %4070 = vmatpush2.bf16.msra.mxu0 0
    %4071 = vmatprep.subr.bf16.mxu0 0
    %4072 = vmatpush2.bf16.msra.mxu0 0
    %4073 = vmatprep.subr.bf16.mxu0 0
    %4074 = vmatpush2.bf16.msra.mxu0 0
    %4075 = vmatprep.subr.bf16.mxu0 0
    %4076 = vmatpush2.bf16.msra.mxu0 0
    %4077 = vmatprep.subr.bf16.mxu0 0
    %4078 = vmatpush2.bf16.msra.mxu0 0
    %4079 = vmatprep.subr.bf16.mxu0 0
    %4080 = vmatpush2.bf16.msra.mxu0 0
    %4081 = vmatprep.subr.bf16.mxu0 0
    %4082 = vmatpush2.bf16.msra.mxu0 0
    %4083 = vmatprep.mubr.bf16.mxu0 0
    %4084 = vmatmul.mubr.bf16.gmra.mxu0 %v4049
    %v4085 = vpop.f32.mrf.mxu0
    %v4086 = vadd.f32 %v4034, %v4085
    %v4087 = vpop.f32.mrf.mxu0
    %v4088 = vpop.f32.mrf.mxu0
    %v4089 = vadd.f32 %v4034, %v4088
    %v4090 = vpop.f32.mrf.mxu0
    %4091 = vdwg.mxu0
    %v4092 = vmul.f32 %v4086, %v100
    %v4093 = vmul.f32 %v4089, %v101
    %4096 = vrot.lane.b32.xlu0 %v4086, 112
    %v4097 = vpop.permute.xlu0 %4096
    %4098 = vrot.lane.b32.xlu0 %v4089, 112
    %v4099 = vpop.permute.xlu0 %4098
    %4102 = vrot.lane.b32.xlu0 %v4086, 16
    %v4103 = vpop.permute.xlu0 %4102
    %4104 = vrot.lane.b32.xlu0 %v4089, 16
    %v4105 = vpop.permute.xlu0 %4104
    %v4108 = vsel %vm217, %v4097, %v4103
    %v4109 = vsel %vm217, %v4099, %v4105
    %v4110 = vmul.f32 %v4108, %v102
    %v4111 = vmul.f32 %v4109, %v103
    %v4112 = vadd.f32 %v4092, %v4110
    %v4113 = vadd.f32 %v4093, %v4111
    %v4114 = vmul.f32 %v4086, %v227
    %v4115 = vmul.f32 %v4089, %v229
    %4116 = vrot.lane.b32.xlu0 %v4086, 80
    %v4117 = vpop.permute.xlu0 %4116
    %4118 = vrot.lane.b32.xlu0 %v4089, 80
    %v4119 = vpop.permute.xlu0 %4118
    %v4122 = vsel %vm217, %v4117, %v4097
    %v4123 = vsel %vm217, %v4119, %v4099
    %v4124 = vmul.f32 %v4122, %v102
    %v4125 = vmul.f32 %v4123, %v103
    %4128 = vrot.lane.b32.xlu0 %v4124, 32
    %v4129 = vpop.permute.xlu0 %4128
    %4130 = vrot.lane.b32.xlu0 %v4125, 32
    %v4131 = vpop.permute.xlu0 %4130
    %v4134 = vadd.f32 %v4114, %v4129
    %v4135 = vadd.f32 %v4115, %v4131
    %4138 = vrot.lane.b32.xlu0 %v4112, 124
    %v4139 = vpop.permute.xlu0 %4138
    %4140 = vrot.lane.b32.xlu0 %v4113, 124
    %v4141 = vpop.permute.xlu0 %4140
    %4144 = vrot.lane.b32.xlu0 %v4112, 120
    %v4145 = vpop.permute.xlu0 %4144
    %4146 = vrot.lane.b32.xlu0 %v4113, 120
    %v4147 = vpop.permute.xlu0 %4146
    %4150 = vrot.lane.b32.xlu0 %v4112, 116
    %v4151 = vpop.permute.xlu0 %4150
    %4152 = vrot.lane.b32.xlu0 %v4113, 116
    %v4153 = vpop.permute.xlu0 %4152
    %4156 = vrot.lane.b32.xlu0 %v4112, 112
    %v4157 = vpop.permute.xlu0 %4156
    %4158 = vrot.lane.b32.xlu0 %v4113, 112
    %v4159 = vpop.permute.xlu0 %4158
    %4162 = vrot.lane.b32.xlu0 %v4112, 108
    %v4163 = vpop.permute.xlu0 %4162
    %4164 = vrot.lane.b32.xlu0 %v4113, 108
    %v4165 = vpop.permute.xlu0 %4164
    %4168 = vrot.lane.b32.xlu0 %v4112, 104
    %v4169 = vpop.permute.xlu0 %4168
    %4170 = vrot.lane.b32.xlu0 %v4113, 104
    %v4171 = vpop.permute.xlu0 %4170
    %4174 = vrot.lane.b32.xlu0 %v4112, 100
    %v4175 = vpop.permute.xlu0 %4174
    %4176 = vrot.lane.b32.xlu0 %v4113, 100
    %v4177 = vpop.permute.xlu0 %4176
    %v4180 = vcombine.low %v4112, %v4145
    %v4181 = vcombine.high %v4112, %v4145
    %v4183 = vunpack.c.l.s4 1983009808
    %v4184 = vunpack.c.0.s8 %v4183
    %v4185 = vlaneseq
    %v4186 = vshrl.u32 %v4185, 7
    %v4187 = vsub.s32 %v4184, %v4186
    %v4188 = vrot.slane %v4180, %v4187
    %v4190 = vunpack.c.l.s4 1983009808
    %v4191 = vunpack.c.0.s8 %v4190
    %v4192 = vlaneseq
    %v4193 = vshrl.u32 %v4192, 7
    %v4194 = vsub.s32 %v4191, %v4193
    %v4195 = vrot.slane %v4181, %v4194
    %v4196 = vcombine.low %v4139, %v4151
    %v4197 = vcombine.high %v4139, %v4151
    %v4199 = vunpack.c.l.s4 1983009808
    %v4200 = vunpack.c.0.s8 %v4199
    %v4201 = vlaneseq
    %v4202 = vshrl.u32 %v4201, 7
    %v4203 = vsub.s32 %v4200, %v4202
    %v4204 = vrot.slane %v4196, %v4203
    %v4206 = vunpack.c.l.s4 1983009808
    %v4207 = vunpack.c.0.s8 %v4206
    %v4208 = vlaneseq
    %v4209 = vshrl.u32 %v4208, 7
    %v4210 = vsub.s32 %v4207, %v4209
    %v4211 = vrot.slane %v4197, %v4210
    %v4212 = vcombine.low %v4157, %v4169
    %v4213 = vcombine.high %v4157, %v4169
    %v4215 = vunpack.c.l.s4 1983009808
    %v4216 = vunpack.c.0.s8 %v4215
    %v4217 = vlaneseq
    %v4218 = vshrl.u32 %v4217, 7
    %v4219 = vsub.s32 %v4216, %v4218
    %v4220 = vrot.slane %v4212, %v4219
    %v4222 = vunpack.c.l.s4 1983009808
    %v4223 = vunpack.c.0.s8 %v4222
    %v4224 = vlaneseq
    %v4225 = vshrl.u32 %v4224, 7
    %v4226 = vsub.s32 %v4223, %v4225
    %v4227 = vrot.slane %v4213, %v4226
    %v4228 = vcombine.low %v4163, %v4175
    %v4229 = vcombine.high %v4163, %v4175
    %v4231 = vunpack.c.l.s4 1983009808
    %v4232 = vunpack.c.0.s8 %v4231
    %v4233 = vlaneseq
    %v4234 = vshrl.u32 %v4233, 7
    %v4235 = vsub.s32 %v4232, %v4234
    %v4236 = vrot.slane %v4228, %v4235
    %v4238 = vunpack.c.l.s4 1983009808
    %v4239 = vunpack.c.0.s8 %v4238
    %v4240 = vlaneseq
    %v4241 = vshrl.u32 %v4240, 7
    %v4242 = vsub.s32 %v4239, %v4241
    %v4243 = vrot.slane %v4229, %v4242
    %v4244 = vcombine.low %v4188, %v4204
    %v4245 = vcombine.high %v4188, %v4204
    %v4247 = vunpack.c.l.s4 1934713408
    %v4248 = vunpack.c.0.s8 %v4247
    %v4249 = vlaneseq
    %v4250 = vshrl.u32 %v4249, 7
    %v4251 = vsub.s32 %v4248, %v4250
    %v4252 = vrot.slane %v4244, %v4251
    %v4254 = vunpack.c.l.s4 1934713408
    %v4255 = vunpack.c.0.s8 %v4254
    %v4256 = vlaneseq
    %v4257 = vshrl.u32 %v4256, 7
    %v4258 = vsub.s32 %v4255, %v4257
    %v4259 = vrot.slane %v4245, %v4258
    %v4260 = vcombine.low %v4195, %v4211
    %v4261 = vcombine.high %v4195, %v4211
    %v4263 = vunpack.c.l.s4 1934713408
    %v4264 = vunpack.c.0.s8 %v4263
    %v4265 = vlaneseq
    %v4266 = vshrl.u32 %v4265, 7
    %v4267 = vsub.s32 %v4264, %v4266
    %v4268 = vrot.slane %v4260, %v4267
    %v4270 = vunpack.c.l.s4 1934713408
    %v4271 = vunpack.c.0.s8 %v4270
    %v4272 = vlaneseq
    %v4273 = vshrl.u32 %v4272, 7
    %v4274 = vsub.s32 %v4271, %v4273
    %v4275 = vrot.slane %v4261, %v4274
    %v4276 = vcombine.low %v4220, %v4236
    %v4277 = vcombine.high %v4220, %v4236
    %v4279 = vunpack.c.l.s4 1934713408
    %v4280 = vunpack.c.0.s8 %v4279
    %v4281 = vlaneseq
    %v4282 = vshrl.u32 %v4281, 7
    %v4283 = vsub.s32 %v4280, %v4282
    %v4284 = vrot.slane %v4276, %v4283
    %v4286 = vunpack.c.l.s4 1934713408
    %v4287 = vunpack.c.0.s8 %v4286
    %v4288 = vlaneseq
    %v4289 = vshrl.u32 %v4288, 7
    %v4290 = vsub.s32 %v4287, %v4289
    %v4291 = vrot.slane %v4277, %v4290
    %v4292 = vcombine.low %v4227, %v4243
    %v4293 = vcombine.high %v4227, %v4243
    %v4295 = vunpack.c.l.s4 1934713408
    %v4296 = vunpack.c.0.s8 %v4295
    %v4297 = vlaneseq
    %v4298 = vshrl.u32 %v4297, 7
    %v4299 = vsub.s32 %v4296, %v4298
    %v4300 = vrot.slane %v4292, %v4299
    %v4302 = vunpack.c.l.s4 1934713408
    %v4303 = vunpack.c.0.s8 %v4302
    %v4304 = vlaneseq
    %v4305 = vshrl.u32 %v4304, 7
    %v4306 = vsub.s32 %v4303, %v4305
    %v4307 = vrot.slane %v4293, %v4306
    %v4308 = vcombine.low %v4252, %v4284
    %v4309 = vcombine.high %v4252, %v4284
    %v4310 = vcombine.low %v4259, %v4291
    %v4311 = vcombine.high %v4259, %v4291
    %v4312 = vcombine.low %v4268, %v4300
    %v4313 = vcombine.high %v4268, %v4300
    %v4314 = vcombine.low %v4275, %v4307
    %v4315 = vcombine.high %v4275, %v4307
    %v4316 = vcombine.low %v4113, %v4147
    %v4317 = vcombine.high %v4113, %v4147
    %v4319 = vunpack.c.l.s4 1983009808
    %v4320 = vunpack.c.0.s8 %v4319
    %v4321 = vlaneseq
    %v4322 = vshrl.u32 %v4321, 7
    %v4323 = vsub.s32 %v4320, %v4322
    %v4324 = vrot.slane %v4316, %v4323
    %v4326 = vunpack.c.l.s4 1983009808
    %v4327 = vunpack.c.0.s8 %v4326
    %v4328 = vlaneseq
    %v4329 = vshrl.u32 %v4328, 7
    %v4330 = vsub.s32 %v4327, %v4329
    %v4331 = vrot.slane %v4317, %v4330
    %v4332 = vcombine.low %v4141, %v4153
    %v4333 = vcombine.high %v4141, %v4153
    %v4335 = vunpack.c.l.s4 1983009808
    %v4336 = vunpack.c.0.s8 %v4335
    %v4337 = vlaneseq
    %v4338 = vshrl.u32 %v4337, 7
    %v4339 = vsub.s32 %v4336, %v4338
    %v4340 = vrot.slane %v4332, %v4339
    %v4342 = vunpack.c.l.s4 1983009808
    %v4343 = vunpack.c.0.s8 %v4342
    %v4344 = vlaneseq
    %v4345 = vshrl.u32 %v4344, 7
    %v4346 = vsub.s32 %v4343, %v4345
    %v4347 = vrot.slane %v4333, %v4346
    %v4348 = vcombine.low %v4159, %v4171
    %v4349 = vcombine.high %v4159, %v4171
    %v4351 = vunpack.c.l.s4 1983009808
    %v4352 = vunpack.c.0.s8 %v4351
    %v4353 = vlaneseq
    %v4354 = vshrl.u32 %v4353, 7
    %v4355 = vsub.s32 %v4352, %v4354
    %v4356 = vrot.slane %v4348, %v4355
    %v4358 = vunpack.c.l.s4 1983009808
    %v4359 = vunpack.c.0.s8 %v4358
    %v4360 = vlaneseq
    %v4361 = vshrl.u32 %v4360, 7
    %v4362 = vsub.s32 %v4359, %v4361
    %v4363 = vrot.slane %v4349, %v4362
    %v4364 = vcombine.low %v4165, %v4177
    %v4365 = vcombine.high %v4165, %v4177
    %v4367 = vunpack.c.l.s4 1983009808
    %v4368 = vunpack.c.0.s8 %v4367
    %v4369 = vlaneseq
    %v4370 = vshrl.u32 %v4369, 7
    %v4371 = vsub.s32 %v4368, %v4370
    %v4372 = vrot.slane %v4364, %v4371
    %v4374 = vunpack.c.l.s4 1983009808
    %v4375 = vunpack.c.0.s8 %v4374
    %v4376 = vlaneseq
    %v4377 = vshrl.u32 %v4376, 7
    %v4378 = vsub.s32 %v4375, %v4377
    %v4379 = vrot.slane %v4365, %v4378
    %v4380 = vcombine.low %v4324, %v4340
    %v4381 = vcombine.high %v4324, %v4340
    %v4383 = vunpack.c.l.s4 1934713408
    %v4384 = vunpack.c.0.s8 %v4383
    %v4385 = vlaneseq
    %v4386 = vshrl.u32 %v4385, 7
    %v4387 = vsub.s32 %v4384, %v4386
    %v4388 = vrot.slane %v4380, %v4387
    %v4390 = vunpack.c.l.s4 1934713408
    %v4391 = vunpack.c.0.s8 %v4390
    %v4392 = vlaneseq
    %v4393 = vshrl.u32 %v4392, 7
    %v4394 = vsub.s32 %v4391, %v4393
    %v4395 = vrot.slane %v4381, %v4394
    %v4396 = vcombine.low %v4331, %v4347
    %v4397 = vcombine.high %v4331, %v4347
    %v4399 = vunpack.c.l.s4 1934713408
    %v4400 = vunpack.c.0.s8 %v4399
    %v4401 = vlaneseq
    %v4402 = vshrl.u32 %v4401, 7
    %v4403 = vsub.s32 %v4400, %v4402
    %v4404 = vrot.slane %v4396, %v4403
    %v4406 = vunpack.c.l.s4 1934713408
    %v4407 = vunpack.c.0.s8 %v4406
    %v4408 = vlaneseq
    %v4409 = vshrl.u32 %v4408, 7
    %v4410 = vsub.s32 %v4407, %v4409
    %v4411 = vrot.slane %v4397, %v4410
    %v4412 = vcombine.low %v4356, %v4372
    %v4413 = vcombine.high %v4356, %v4372
    %v4415 = vunpack.c.l.s4 1934713408
    %v4416 = vunpack.c.0.s8 %v4415
    %v4417 = vlaneseq
    %v4418 = vshrl.u32 %v4417, 7
    %v4419 = vsub.s32 %v4416, %v4418
    %v4420 = vrot.slane %v4412, %v4419
    %v4422 = vunpack.c.l.s4 1934713408
    %v4423 = vunpack.c.0.s8 %v4422
    %v4424 = vlaneseq
    %v4425 = vshrl.u32 %v4424, 7
    %v4426 = vsub.s32 %v4423, %v4425
    %v4427 = vrot.slane %v4413, %v4426
    %v4428 = vcombine.low %v4363, %v4379
    %v4429 = vcombine.high %v4363, %v4379
    %v4431 = vunpack.c.l.s4 1934713408
    %v4432 = vunpack.c.0.s8 %v4431
    %v4433 = vlaneseq
    %v4434 = vshrl.u32 %v4433, 7
    %v4435 = vsub.s32 %v4432, %v4434
    %v4436 = vrot.slane %v4428, %v4435
    %v4438 = vunpack.c.l.s4 1934713408
    %v4439 = vunpack.c.0.s8 %v4438
    %v4440 = vlaneseq
    %v4441 = vshrl.u32 %v4440, 7
    %v4442 = vsub.s32 %v4439, %v4441
    %v4443 = vrot.slane %v4429, %v4442
    %v4444 = vcombine.low %v4388, %v4420
    %v4445 = vcombine.high %v4388, %v4420
    %v4446 = vcombine.low %v4395, %v4427
    %v4447 = vcombine.high %v4395, %v4427
    %v4448 = vcombine.low %v4404, %v4436
    %v4449 = vcombine.high %v4404, %v4436
    %v4450 = vcombine.low %v4411, %v4443
    %v4451 = vcombine.high %v4411, %v4443
    %v4452 = vpack.c.bf16 %v4308, %v4308
    %v4453 = vpack.c.bf16 %v4309, %v4309
    %v4454 = vpack.c.bf16 %v4310, %v4310
    %v4455 = vpack.c.bf16 %v4311, %v4311
    %v4456 = vpack.c.bf16 %v4312, %v4312
    %v4457 = vpack.c.bf16 %v4313, %v4313
    %v4458 = vpack.c.bf16 %v4314, %v4314
    %v4459 = vpack.c.bf16 %v4315, %v4315
    %v4460 = vpack.c.bf16 %v4444, %v4444
    %v4461 = vpack.c.bf16 %v4445, %v4445
    %v4462 = vpack.c.bf16 %v4446, %v4446
    %v4463 = vpack.c.bf16 %v4447, %v4447
    %v4464 = vpack.c.bf16 %v4448, %v4448
    %v4465 = vpack.c.bf16 %v4449, %v4449
    %v4466 = vpack.c.bf16 %v4450, %v4450
    %v4467 = vpack.c.bf16 %v4451, %v4451
    %4470 = vrot.lane.b32.xlu0 %v4134, 124
    %v4471 = vpop.permute.xlu0 %4470
    %4472 = vrot.lane.b32.xlu0 %v4135, 124
    %v4473 = vpop.permute.xlu0 %4472
    %4474 = vrot.lane.b32.xlu0 %v4134, 120
    %v4475 = vpop.permute.xlu0 %4474
    %4476 = vrot.lane.b32.xlu0 %v4135, 120
    %v4477 = vpop.permute.xlu0 %4476
    %4478 = vrot.lane.b32.xlu0 %v4134, 116
    %v4479 = vpop.permute.xlu0 %4478
    %4480 = vrot.lane.b32.xlu0 %v4135, 116
    %v4481 = vpop.permute.xlu0 %4480
    %4482 = vrot.lane.b32.xlu0 %v4134, 112
    %v4483 = vpop.permute.xlu0 %4482
    %4484 = vrot.lane.b32.xlu0 %v4135, 112
    %v4485 = vpop.permute.xlu0 %4484
    %4486 = vrot.lane.b32.xlu0 %v4134, 108
    %v4487 = vpop.permute.xlu0 %4486
    %4488 = vrot.lane.b32.xlu0 %v4135, 108
    %v4489 = vpop.permute.xlu0 %4488
    %4490 = vrot.lane.b32.xlu0 %v4134, 104
    %v4491 = vpop.permute.xlu0 %4490
    %4492 = vrot.lane.b32.xlu0 %v4135, 104
    %v4493 = vpop.permute.xlu0 %4492
    %4494 = vrot.lane.b32.xlu0 %v4134, 100
    %v4495 = vpop.permute.xlu0 %4494
    %4496 = vrot.lane.b32.xlu0 %v4135, 100
    %v4497 = vpop.permute.xlu0 %4496
    %4498 = vrot.lane.b32.xlu0 %v4134, 96
    %v4499 = vpop.permute.xlu0 %4498
    %4500 = vrot.lane.b32.xlu0 %v4135, 96
    %v4501 = vpop.permute.xlu0 %4500
    %4502 = vrot.lane.b32.xlu0 %v4471, 96
    %v4503 = vpop.permute.xlu0 %4502
    %4504 = vrot.lane.b32.xlu0 %v4473, 96
    %v4505 = vpop.permute.xlu0 %4504
    %4506 = vrot.lane.b32.xlu0 %v4475, 96
    %v4507 = vpop.permute.xlu0 %4506
    %4508 = vrot.lane.b32.xlu0 %v4477, 96
    %v4509 = vpop.permute.xlu0 %4508
    %4510 = vrot.lane.b32.xlu0 %v4479, 96
    %v4511 = vpop.permute.xlu0 %4510
    %4512 = vrot.lane.b32.xlu0 %v4481, 96
    %v4513 = vpop.permute.xlu0 %4512
    %4514 = vrot.lane.b32.xlu0 %v4483, 96
    %v4515 = vpop.permute.xlu0 %4514
    %4516 = vrot.lane.b32.xlu0 %v4485, 96
    %v4517 = vpop.permute.xlu0 %4516
    %4518 = vrot.lane.b32.xlu0 %v4487, 96
    %v4519 = vpop.permute.xlu0 %4518
    %4520 = vrot.lane.b32.xlu0 %v4489, 96
    %v4521 = vpop.permute.xlu0 %4520
    %4522 = vrot.lane.b32.xlu0 %v4491, 96
    %v4523 = vpop.permute.xlu0 %4522
    %4524 = vrot.lane.b32.xlu0 %v4493, 96
    %v4525 = vpop.permute.xlu0 %4524
    %4526 = vrot.lane.b32.xlu0 %v4495, 96
    %v4527 = vpop.permute.xlu0 %4526
    %4528 = vrot.lane.b32.xlu0 %v4497, 96
    %v4529 = vpop.permute.xlu0 %4528
    %v4546 = vcombine.low %v4499, %v4507
    %v4547 = vcombine.high %v4499, %v4507
    %v4549 = vunpack.c.l.s4 1983009808
    %v4550 = vunpack.c.0.s8 %v4549
    %v4551 = vlaneseq
    %v4552 = vshrl.u32 %v4551, 7
    %v4553 = vsub.s32 %v4550, %v4552
    %v4554 = vrot.slane %v4546, %v4553
    %v4556 = vunpack.c.l.s4 1983009808
    %v4557 = vunpack.c.0.s8 %v4556
    %v4558 = vlaneseq
    %v4559 = vshrl.u32 %v4558, 7
    %v4560 = vsub.s32 %v4557, %v4559
    %v4561 = vrot.slane %v4547, %v4560
    %v4562 = vcombine.low %v4503, %v4511
    %v4563 = vcombine.high %v4503, %v4511
    %v4565 = vunpack.c.l.s4 1983009808
    %v4566 = vunpack.c.0.s8 %v4565
    %v4567 = vlaneseq
    %v4568 = vshrl.u32 %v4567, 7
    %v4569 = vsub.s32 %v4566, %v4568
    %v4570 = vrot.slane %v4562, %v4569
    %v4572 = vunpack.c.l.s4 1983009808
    %v4573 = vunpack.c.0.s8 %v4572
    %v4574 = vlaneseq
    %v4575 = vshrl.u32 %v4574, 7
    %v4576 = vsub.s32 %v4573, %v4575
    %v4577 = vrot.slane %v4563, %v4576
    %v4578 = vcombine.low %v4515, %v4523
    %v4579 = vcombine.high %v4515, %v4523
    %v4581 = vunpack.c.l.s4 1983009808
    %v4582 = vunpack.c.0.s8 %v4581
    %v4583 = vlaneseq
    %v4584 = vshrl.u32 %v4583, 7
    %v4585 = vsub.s32 %v4582, %v4584
    %v4586 = vrot.slane %v4578, %v4585
    %v4588 = vunpack.c.l.s4 1983009808
    %v4589 = vunpack.c.0.s8 %v4588
    %v4590 = vlaneseq
    %v4591 = vshrl.u32 %v4590, 7
    %v4592 = vsub.s32 %v4589, %v4591
    %v4593 = vrot.slane %v4579, %v4592
    %v4594 = vcombine.low %v4519, %v4527
    %v4595 = vcombine.high %v4519, %v4527
    %v4597 = vunpack.c.l.s4 1983009808
    %v4598 = vunpack.c.0.s8 %v4597
    %v4599 = vlaneseq
    %v4600 = vshrl.u32 %v4599, 7
    %v4601 = vsub.s32 %v4598, %v4600
    %v4602 = vrot.slane %v4594, %v4601
    %v4604 = vunpack.c.l.s4 1983009808
    %v4605 = vunpack.c.0.s8 %v4604
    %v4606 = vlaneseq
    %v4607 = vshrl.u32 %v4606, 7
    %v4608 = vsub.s32 %v4605, %v4607
    %v4609 = vrot.slane %v4595, %v4608
    %v4610 = vcombine.low %v4554, %v4570
    %v4611 = vcombine.high %v4554, %v4570
    %v4613 = vunpack.c.l.s4 1934713408
    %v4614 = vunpack.c.0.s8 %v4613
    %v4615 = vlaneseq
    %v4616 = vshrl.u32 %v4615, 7
    %v4617 = vsub.s32 %v4614, %v4616
    %v4618 = vrot.slane %v4610, %v4617
    %v4620 = vunpack.c.l.s4 1934713408
    %v4621 = vunpack.c.0.s8 %v4620
    %v4622 = vlaneseq
    %v4623 = vshrl.u32 %v4622, 7
    %v4624 = vsub.s32 %v4621, %v4623
    %v4625 = vrot.slane %v4611, %v4624
    %v4626 = vcombine.low %v4561, %v4577
    %v4627 = vcombine.high %v4561, %v4577
    %v4629 = vunpack.c.l.s4 1934713408
    %v4630 = vunpack.c.0.s8 %v4629
    %v4631 = vlaneseq
    %v4632 = vshrl.u32 %v4631, 7
    %v4633 = vsub.s32 %v4630, %v4632
    %v4634 = vrot.slane %v4626, %v4633
    %v4636 = vunpack.c.l.s4 1934713408
    %v4637 = vunpack.c.0.s8 %v4636
    %v4638 = vlaneseq
    %v4639 = vshrl.u32 %v4638, 7
    %v4640 = vsub.s32 %v4637, %v4639
    %v4641 = vrot.slane %v4627, %v4640
    %v4642 = vcombine.low %v4586, %v4602
    %v4643 = vcombine.high %v4586, %v4602
    %v4645 = vunpack.c.l.s4 1934713408
    %v4646 = vunpack.c.0.s8 %v4645
    %v4647 = vlaneseq
    %v4648 = vshrl.u32 %v4647, 7
    %v4649 = vsub.s32 %v4646, %v4648
    %v4650 = vrot.slane %v4642, %v4649
    %v4652 = vunpack.c.l.s4 1934713408
    %v4653 = vunpack.c.0.s8 %v4652
    %v4654 = vlaneseq
    %v4655 = vshrl.u32 %v4654, 7
    %v4656 = vsub.s32 %v4653, %v4655
    %v4657 = vrot.slane %v4643, %v4656
    %v4658 = vcombine.low %v4593, %v4609
    %v4659 = vcombine.high %v4593, %v4609
    %v4661 = vunpack.c.l.s4 1934713408
    %v4662 = vunpack.c.0.s8 %v4661
    %v4663 = vlaneseq
    %v4664 = vshrl.u32 %v4663, 7
    %v4665 = vsub.s32 %v4662, %v4664
    %v4666 = vrot.slane %v4658, %v4665
    %v4668 = vunpack.c.l.s4 1934713408
    %v4669 = vunpack.c.0.s8 %v4668
    %v4670 = vlaneseq
    %v4671 = vshrl.u32 %v4670, 7
    %v4672 = vsub.s32 %v4669, %v4671
    %v4673 = vrot.slane %v4659, %v4672
    %v4674 = vcombine.low %v4618, %v4650
    %v4675 = vcombine.high %v4618, %v4650
    %v4676 = vcombine.low %v4625, %v4657
    %v4677 = vcombine.high %v4625, %v4657
    %v4678 = vcombine.low %v4634, %v4666
    %v4679 = vcombine.high %v4634, %v4666
    %v4680 = vcombine.low %v4641, %v4673
    %v4681 = vcombine.high %v4641, %v4673
    %v4682 = vcombine.low %v4501, %v4509
    %v4683 = vcombine.high %v4501, %v4509
    %v4685 = vunpack.c.l.s4 1983009808
    %v4686 = vunpack.c.0.s8 %v4685
    %v4687 = vlaneseq
    %v4688 = vshrl.u32 %v4687, 7
    %v4689 = vsub.s32 %v4686, %v4688
    %v4690 = vrot.slane %v4682, %v4689
    %v4692 = vunpack.c.l.s4 1983009808
    %v4693 = vunpack.c.0.s8 %v4692
    %v4694 = vlaneseq
    %v4695 = vshrl.u32 %v4694, 7
    %v4696 = vsub.s32 %v4693, %v4695
    %v4697 = vrot.slane %v4683, %v4696
    %v4698 = vcombine.low %v4505, %v4513
    %v4699 = vcombine.high %v4505, %v4513
    %v4701 = vunpack.c.l.s4 1983009808
    %v4702 = vunpack.c.0.s8 %v4701
    %v4703 = vlaneseq
    %v4704 = vshrl.u32 %v4703, 7
    %v4705 = vsub.s32 %v4702, %v4704
    %v4706 = vrot.slane %v4698, %v4705
    %v4708 = vunpack.c.l.s4 1983009808
    %v4709 = vunpack.c.0.s8 %v4708
    %v4710 = vlaneseq
    %v4711 = vshrl.u32 %v4710, 7
    %v4712 = vsub.s32 %v4709, %v4711
    %v4713 = vrot.slane %v4699, %v4712
    %v4714 = vcombine.low %v4517, %v4525
    %v4715 = vcombine.high %v4517, %v4525
    %v4717 = vunpack.c.l.s4 1983009808
    %v4718 = vunpack.c.0.s8 %v4717
    %v4719 = vlaneseq
    %v4720 = vshrl.u32 %v4719, 7
    %v4721 = vsub.s32 %v4718, %v4720
    %v4722 = vrot.slane %v4714, %v4721
    %v4724 = vunpack.c.l.s4 1983009808
    %v4725 = vunpack.c.0.s8 %v4724
    %v4726 = vlaneseq
    %v4727 = vshrl.u32 %v4726, 7
    %v4728 = vsub.s32 %v4725, %v4727
    %v4729 = vrot.slane %v4715, %v4728
    %v4730 = vcombine.low %v4521, %v4529
    %v4731 = vcombine.high %v4521, %v4529
    %v4733 = vunpack.c.l.s4 1983009808
    %v4734 = vunpack.c.0.s8 %v4733
    %v4735 = vlaneseq
    %v4736 = vshrl.u32 %v4735, 7
    %v4737 = vsub.s32 %v4734, %v4736
    %v4738 = vrot.slane %v4730, %v4737
    %v4740 = vunpack.c.l.s4 1983009808
    %v4741 = vunpack.c.0.s8 %v4740
    %v4742 = vlaneseq
    %v4743 = vshrl.u32 %v4742, 7
    %v4744 = vsub.s32 %v4741, %v4743
    %v4745 = vrot.slane %v4731, %v4744
    %v4746 = vcombine.low %v4690, %v4706
    %v4747 = vcombine.high %v4690, %v4706
    %v4749 = vunpack.c.l.s4 1934713408
    %v4750 = vunpack.c.0.s8 %v4749
    %v4751 = vlaneseq
    %v4752 = vshrl.u32 %v4751, 7
    %v4753 = vsub.s32 %v4750, %v4752
    %v4754 = vrot.slane %v4746, %v4753
    %v4756 = vunpack.c.l.s4 1934713408
    %v4757 = vunpack.c.0.s8 %v4756
    %v4758 = vlaneseq
    %v4759 = vshrl.u32 %v4758, 7
    %v4760 = vsub.s32 %v4757, %v4759
    %v4761 = vrot.slane %v4747, %v4760
    %v4762 = vcombine.low %v4697, %v4713
    %v4763 = vcombine.high %v4697, %v4713
    %v4765 = vunpack.c.l.s4 1934713408
    %v4766 = vunpack.c.0.s8 %v4765
    %v4767 = vlaneseq
    %v4768 = vshrl.u32 %v4767, 7
    %v4769 = vsub.s32 %v4766, %v4768
    %v4770 = vrot.slane %v4762, %v4769
    %v4772 = vunpack.c.l.s4 1934713408
    %v4773 = vunpack.c.0.s8 %v4772
    %v4774 = vlaneseq
    %v4775 = vshrl.u32 %v4774, 7
    %v4776 = vsub.s32 %v4773, %v4775
    %v4777 = vrot.slane %v4763, %v4776
    %v4778 = vcombine.low %v4722, %v4738
    %v4779 = vcombine.high %v4722, %v4738
    %v4781 = vunpack.c.l.s4 1934713408
    %v4782 = vunpack.c.0.s8 %v4781
    %v4783 = vlaneseq
    %v4784 = vshrl.u32 %v4783, 7
    %v4785 = vsub.s32 %v4782, %v4784
    %v4786 = vrot.slane %v4778, %v4785
    %v4788 = vunpack.c.l.s4 1934713408
    %v4789 = vunpack.c.0.s8 %v4788
    %v4790 = vlaneseq
    %v4791 = vshrl.u32 %v4790, 7
    %v4792 = vsub.s32 %v4789, %v4791
    %v4793 = vrot.slane %v4779, %v4792
    %v4794 = vcombine.low %v4729, %v4745
    %v4795 = vcombine.high %v4729, %v4745
    %v4797 = vunpack.c.l.s4 1934713408
    %v4798 = vunpack.c.0.s8 %v4797
    %v4799 = vlaneseq
    %v4800 = vshrl.u32 %v4799, 7
    %v4801 = vsub.s32 %v4798, %v4800
    %v4802 = vrot.slane %v4794, %v4801
    %v4804 = vunpack.c.l.s4 1934713408
    %v4805 = vunpack.c.0.s8 %v4804
    %v4806 = vlaneseq
    %v4807 = vshrl.u32 %v4806, 7
    %v4808 = vsub.s32 %v4805, %v4807
    %v4809 = vrot.slane %v4795, %v4808
    %v4810 = vcombine.low %v4754, %v4786
    %v4811 = vcombine.high %v4754, %v4786
    %v4812 = vcombine.low %v4761, %v4793
    %v4813 = vcombine.high %v4761, %v4793
    %v4814 = vcombine.low %v4770, %v4802
    %v4815 = vcombine.high %v4770, %v4802
    %v4816 = vcombine.low %v4777, %v4809
    %v4817 = vcombine.high %v4777, %v4809
    %v4818 = vpack.c.bf16 %v4674, %v4674
    %v4819 = vpack.c.bf16 %v4675, %v4675
    %v4820 = vpack.c.bf16 %v4676, %v4676
    %v4821 = vpack.c.bf16 %v4677, %v4677
    %v4822 = vpack.c.bf16 %v4678, %v4678
    %v4823 = vpack.c.bf16 %v4679, %v4679
    %v4824 = vpack.c.bf16 %v4680, %v4680
    %v4825 = vpack.c.bf16 %v4681, %v4681
    %v4826 = vpack.c.bf16 %v4810, %v4810
    %v4827 = vpack.c.bf16 %v4811, %v4811
    %v4828 = vpack.c.bf16 %v4812, %v4812
    %v4829 = vpack.c.bf16 %v4813, %v4813
    %v4830 = vpack.c.bf16 %v4814, %v4814
    %v4831 = vpack.c.bf16 %v4815, %v4815
    %v4832 = vpack.c.bf16 %v4816, %v4816
    %v4833 = vpack.c.bf16 %v4817, %v4817
    %v4834 = vcombine.low %v4452, %v4456
    %v4836 = vunpack.c.l.s4 1983009808
    %v4837 = vunpack.c.0.s8 %v4836
    %v4838 = vlaneseq
    %v4839 = vshrl.u32 %v4838, 7
    %v4840 = vsub.s32 %v4837, %v4839
    %v4841 = vrot.slane %v4834, %v4840
    %v4842 = vcombine.low %v4454, %v4458
    %v4844 = vunpack.c.l.s4 1983009808
    %v4845 = vunpack.c.0.s8 %v4844
    %v4846 = vlaneseq
    %v4847 = vshrl.u32 %v4846, 7
    %v4848 = vsub.s32 %v4845, %v4847
    %v4849 = vrot.slane %v4842, %v4848
    %v4850 = vcombine.low %v4460, %v4464
    %v4852 = vunpack.c.l.s4 1983009808
    %v4853 = vunpack.c.0.s8 %v4852
    %v4854 = vlaneseq
    %v4855 = vshrl.u32 %v4854, 7
    %v4856 = vsub.s32 %v4853, %v4855
    %v4857 = vrot.slane %v4850, %v4856
    %v4858 = vcombine.low %v4462, %v4466
    %v4860 = vunpack.c.l.s4 1983009808
    %v4861 = vunpack.c.0.s8 %v4860
    %v4862 = vlaneseq
    %v4863 = vshrl.u32 %v4862, 7
    %v4864 = vsub.s32 %v4861, %v4863
    %v4865 = vrot.slane %v4858, %v4864
    %v4866 = vcombine.low %v4841, %v4849
    %v4867 = vcombine.high %v4841, %v4849
    %v4869 = vunpack.c.l.s4 1934713408
    %v4870 = vunpack.c.0.s8 %v4869
    %v4871 = vlaneseq
    %v4872 = vshrl.u32 %v4871, 7
    %v4873 = vsub.s32 %v4870, %v4872
    %v4874 = vrot.slane %v4866, %v4873
    %v4876 = vunpack.c.l.s4 1934713408
    %v4877 = vunpack.c.0.s8 %v4876
    %v4878 = vlaneseq
    %v4879 = vshrl.u32 %v4878, 7
    %v4880 = vsub.s32 %v4877, %v4879
    %v4881 = vrot.slane %v4867, %v4880
    %v4882 = vcombine.low %v4857, %v4865
    %v4883 = vcombine.high %v4857, %v4865
    %v4885 = vunpack.c.l.s4 1934713408
    %v4886 = vunpack.c.0.s8 %v4885
    %v4887 = vlaneseq
    %v4888 = vshrl.u32 %v4887, 7
    %v4889 = vsub.s32 %v4886, %v4888
    %v4890 = vrot.slane %v4882, %v4889
    %v4892 = vunpack.c.l.s4 1934713408
    %v4893 = vunpack.c.0.s8 %v4892
    %v4894 = vlaneseq
    %v4895 = vshrl.u32 %v4894, 7
    %v4896 = vsub.s32 %v4893, %v4895
    %v4897 = vrot.slane %v4883, %v4896
    %v4898 = vcombine.low %v4874, %v4890
    %v4899 = vcombine.high %v4874, %v4890
    %v4900 = vcombine.low %v4881, %v4897
    %v4901 = vcombine.high %v4881, %v4897
    %v4902 = vcombine.low %v4453, %v4457
    %v4904 = vunpack.c.l.s4 1983009808
    %v4905 = vunpack.c.0.s8 %v4904
    %v4906 = vlaneseq
    %v4907 = vshrl.u32 %v4906, 7
    %v4908 = vsub.s32 %v4905, %v4907
    %v4909 = vrot.slane %v4902, %v4908
    %v4910 = vcombine.low %v4455, %v4459
    %v4912 = vunpack.c.l.s4 1983009808
    %v4913 = vunpack.c.0.s8 %v4912
    %v4914 = vlaneseq
    %v4915 = vshrl.u32 %v4914, 7
    %v4916 = vsub.s32 %v4913, %v4915
    %v4917 = vrot.slane %v4910, %v4916
    %v4918 = vcombine.low %v4461, %v4465
    %v4920 = vunpack.c.l.s4 1983009808
    %v4921 = vunpack.c.0.s8 %v4920
    %v4922 = vlaneseq
    %v4923 = vshrl.u32 %v4922, 7
    %v4924 = vsub.s32 %v4921, %v4923
    %v4925 = vrot.slane %v4918, %v4924
    %v4926 = vcombine.low %v4463, %v4467
    %v4928 = vunpack.c.l.s4 1983009808
    %v4929 = vunpack.c.0.s8 %v4928
    %v4930 = vlaneseq
    %v4931 = vshrl.u32 %v4930, 7
    %v4932 = vsub.s32 %v4929, %v4931
    %v4933 = vrot.slane %v4926, %v4932
    %v4934 = vcombine.low %v4909, %v4917
    %v4935 = vcombine.high %v4909, %v4917
    %v4937 = vunpack.c.l.s4 1934713408
    %v4938 = vunpack.c.0.s8 %v4937
    %v4939 = vlaneseq
    %v4940 = vshrl.u32 %v4939, 7
    %v4941 = vsub.s32 %v4938, %v4940
    %v4942 = vrot.slane %v4934, %v4941
    %v4944 = vunpack.c.l.s4 1934713408
    %v4945 = vunpack.c.0.s8 %v4944
    %v4946 = vlaneseq
    %v4947 = vshrl.u32 %v4946, 7
    %v4948 = vsub.s32 %v4945, %v4947
    %v4949 = vrot.slane %v4935, %v4948
    %v4950 = vcombine.low %v4925, %v4933
    %v4951 = vcombine.high %v4925, %v4933
    %v4953 = vunpack.c.l.s4 1934713408
    %v4954 = vunpack.c.0.s8 %v4953
    %v4955 = vlaneseq
    %v4956 = vshrl.u32 %v4955, 7
    %v4957 = vsub.s32 %v4954, %v4956
    %v4958 = vrot.slane %v4950, %v4957
    %v4960 = vunpack.c.l.s4 1934713408
    %v4961 = vunpack.c.0.s8 %v4960
    %v4962 = vlaneseq
    %v4963 = vshrl.u32 %v4962, 7
    %v4964 = vsub.s32 %v4961, %v4963
    %v4965 = vrot.slane %v4951, %v4964
    %v4966 = vcombine.low %v4942, %v4958
    %v4967 = vcombine.high %v4942, %v4958
    %v4968 = vcombine.low %v4949, %v4965
    %v4969 = vcombine.high %v4949, %v4965
    %v4972 = vpack.i.b16 %v4966, %v4898
    %v4973 = vshrl.u32 %v4898, 16
    %v4974 = vshrl.u32 %v4966, 16
    %v4975 = vpack.i.b16 %v4974, %v4973
    %v4978 = vpack.i.b16 %v4967, %v4899
    %v4979 = vshrl.u32 %v4899, 16
    %v4980 = vshrl.u32 %v4967, 16
    %v4981 = vpack.i.b16 %v4980, %v4979
    %v4984 = vpack.i.b16 %v4968, %v4900
    %v4985 = vshrl.u32 %v4900, 16
    %v4986 = vshrl.u32 %v4968, 16
    %v4987 = vpack.i.b16 %v4986, %v4985
    %v4990 = vpack.i.b16 %v4969, %v4901
    %v4991 = vshrl.u32 %v4901, 16
    %v4992 = vshrl.u32 %v4969, 16
    %v4993 = vpack.i.b16 %v4992, %v4991
    %4994 = vxpose.xlu0.c.b16.start [1/8] %v4818, 128
    %4995 = vxpose.xlu0.c.b16.cont [2/8] 0, 128
    %4996 = vxpose.xlu0.c.b16.cont [3/8] 0, 128
    %4997 = vxpose.xlu0.c.b16.cont [4/8] 0, 128
    %4998 = vxpose.xlu0.c.b16.cont [5/8] 0, 128
    %4999 = vxpose.xlu0.c.b16.cont [6/8] 0, 128
    %5000 = vxpose.xlu0.c.b16.cont [7/8] 0, 128
    %5001 = vxpose.xlu0.c.b16.end [8/8] 0, 128
    %v5002 = vpop.trf.xlu0
    %v5003 = vpop.trf.xlu0
    %v5004 = vpop.trf.xlu0
    %v5005 = vpop.trf.xlu0
    %v5006 = vpop.trf.xlu0
    %v5007 = vpop.trf.xlu0
    %v5008 = vpop.trf.xlu0
    %v5009 = vpop.trf.xlu0
    %5010 = vxpose.xlu0.c.b16.start [1/8] %v4819, 128
    %5011 = vxpose.xlu0.c.b16.cont [2/8] 0, 128
    %5012 = vxpose.xlu0.c.b16.cont [3/8] 0, 128
    %5013 = vxpose.xlu0.c.b16.cont [4/8] 0, 128
    %5014 = vxpose.xlu0.c.b16.cont [5/8] 0, 128
    %5015 = vxpose.xlu0.c.b16.cont [6/8] 0, 128
    %5016 = vxpose.xlu0.c.b16.cont [7/8] 0, 128
    %5017 = vxpose.xlu0.c.b16.end [8/8] 0, 128
    %v5018 = vpop.trf.xlu0
    %v5019 = vpop.trf.xlu0
    %v5020 = vpop.trf.xlu0
    %v5021 = vpop.trf.xlu0
    %v5022 = vpop.trf.xlu0
    %v5023 = vpop.trf.xlu0
    %v5024 = vpop.trf.xlu0
    %v5025 = vpop.trf.xlu0
    %5026 = vxpose.xlu0.c.b16.start [1/8] %v4820, 128
    %5027 = vxpose.xlu0.c.b16.cont [2/8] 0, 128
    %5028 = vxpose.xlu0.c.b16.cont [3/8] 0, 128
    %5029 = vxpose.xlu0.c.b16.cont [4/8] 0, 128
    %5030 = vxpose.xlu0.c.b16.cont [5/8] 0, 128
    %5031 = vxpose.xlu0.c.b16.cont [6/8] 0, 128
    %5032 = vxpose.xlu0.c.b16.cont [7/8] 0, 128
    %5033 = vxpose.xlu0.c.b16.end [8/8] 0, 128
    %v5034 = vpop.trf.xlu0
    %v5035 = vpop.trf.xlu0
    %v5036 = vpop.trf.xlu0
    %v5037 = vpop.trf.xlu0
    %v5038 = vpop.trf.xlu0
    %v5039 = vpop.trf.xlu0
    %v5040 = vpop.trf.xlu0
    %v5041 = vpop.trf.xlu0
    %5042 = vxpose.xlu0.c.b16.start [1/8] %v4821, 128
    %5043 = vxpose.xlu0.c.b16.cont [2/8] 0, 128
    %5044 = vxpose.xlu0.c.b16.cont [3/8] 0, 128
    %5045 = vxpose.xlu0.c.b16.cont [4/8] 0, 128
    %5046 = vxpose.xlu0.c.b16.cont [5/8] 0, 128
    %5047 = vxpose.xlu0.c.b16.cont [6/8] 0, 128
    %5048 = vxpose.xlu0.c.b16.cont [7/8] 0, 128
    %5049 = vxpose.xlu0.c.b16.end [8/8] 0, 128
    %v5050 = vpop.trf.xlu0
    %v5051 = vpop.trf.xlu0
    %v5052 = vpop.trf.xlu0
    %v5053 = vpop.trf.xlu0
    %v5054 = vpop.trf.xlu0
    %v5055 = vpop.trf.xlu0
    %v5056 = vpop.trf.xlu0
    %v5057 = vpop.trf.xlu0
    %5058 = vxpose.xlu0.c.b16.start [1/8] %v4822, 128
    %5059 = vxpose.xlu0.c.b16.cont [2/8] 0, 128
    %5060 = vxpose.xlu0.c.b16.cont [3/8] 0, 128
    %5061 = vxpose.xlu0.c.b16.cont [4/8] 0, 128
    %5062 = vxpose.xlu0.c.b16.cont [5/8] 0, 128
    %5063 = vxpose.xlu0.c.b16.cont [6/8] 0, 128
    %5064 = vxpose.xlu0.c.b16.cont [7/8] 0, 128
    %5065 = vxpose.xlu0.c.b16.end [8/8] 0, 128
    %v5066 = vpop.trf.xlu0
    %v5067 = vpop.trf.xlu0
    %v5068 = vpop.trf.xlu0
    %v5069 = vpop.trf.xlu0
    %v5070 = vpop.trf.xlu0
    %v5071 = vpop.trf.xlu0
    %v5072 = vpop.trf.xlu0
    %v5073 = vpop.trf.xlu0
    %5074 = vxpose.xlu0.c.b16.start [1/8] %v4823, 128
    %5075 = vxpose.xlu0.c.b16.cont [2/8] 0, 128
    %5076 = vxpose.xlu0.c.b16.cont [3/8] 0, 128
    %5077 = vxpose.xlu0.c.b16.cont [4/8] 0, 128
    %5078 = vxpose.xlu0.c.b16.cont [5/8] 0, 128
    %5079 = vxpose.xlu0.c.b16.cont [6/8] 0, 128
    %5080 = vxpose.xlu0.c.b16.cont [7/8] 0, 128
    %5081 = vxpose.xlu0.c.b16.end [8/8] 0, 128
    %v5082 = vpop.trf.xlu0
    %v5083 = vpop.trf.xlu0
    %v5084 = vpop.trf.xlu0
    %v5085 = vpop.trf.xlu0
    %v5086 = vpop.trf.xlu0
    %v5087 = vpop.trf.xlu0
    %v5088 = vpop.trf.xlu0
    %v5089 = vpop.trf.xlu0
    %5090 = vxpose.xlu0.c.b16.start [1/8] %v4824, 128
    %5091 = vxpose.xlu0.c.b16.cont [2/8] 0, 128
    %5092 = vxpose.xlu0.c.b16.cont [3/8] 0, 128
    %5093 = vxpose.xlu0.c.b16.cont [4/8] 0, 128
    %5094 = vxpose.xlu0.c.b16.cont [5/8] 0, 128
    %5095 = vxpose.xlu0.c.b16.cont [6/8] 0, 128
    %5096 = vxpose.xlu0.c.b16.cont [7/8] 0, 128
    %5097 = vxpose.xlu0.c.b16.end [8/8] 0, 128
    %v5098 = vpop.trf.xlu0
    %v5099 = vpop.trf.xlu0
    %v5100 = vpop.trf.xlu0
    %v5101 = vpop.trf.xlu0
    %v5102 = vpop.trf.xlu0
    %v5103 = vpop.trf.xlu0
    %v5104 = vpop.trf.xlu0
    %v5105 = vpop.trf.xlu0
    %5106 = vxpose.xlu0.c.b16.start [1/8] %v4825, 128
    %5107 = vxpose.xlu0.c.b16.cont [2/8] 0, 128
    %5108 = vxpose.xlu0.c.b16.cont [3/8] 0, 128
    %5109 = vxpose.xlu0.c.b16.cont [4/8] 0, 128
    %5110 = vxpose.xlu0.c.b16.cont [5/8] 0, 128
    %5111 = vxpose.xlu0.c.b16.cont [6/8] 0, 128
    %5112 = vxpose.xlu0.c.b16.cont [7/8] 0, 128
    %5113 = vxpose.xlu0.c.b16.end [8/8] 0, 128
    %v5114 = vpop.trf.xlu0
    %v5115 = vpop.trf.xlu0
    %v5116 = vpop.trf.xlu0
    %v5117 = vpop.trf.xlu0
    %v5118 = vpop.trf.xlu0
    %v5119 = vpop.trf.xlu0
    %v5120 = vpop.trf.xlu0
    %v5121 = vpop.trf.xlu0
    %5122 = vxpose.xlu0.c.b16.start [1/8] %v4826, 128
    %5123 = vxpose.xlu0.c.b16.cont [2/8] 0, 128
    %5124 = vxpose.xlu0.c.b16.cont [3/8] 0, 128
    %5125 = vxpose.xlu0.c.b16.cont [4/8] 0, 128
    %5126 = vxpose.xlu0.c.b16.cont [5/8] 0, 128
    %5127 = vxpose.xlu0.c.b16.cont [6/8] 0, 128
    %5128 = vxpose.xlu0.c.b16.cont [7/8] 0, 128
    %5129 = vxpose.xlu0.c.b16.end [8/8] 0, 128
    %v5130 = vpop.trf.xlu0
    %v5131 = vpop.trf.xlu0
    %v5132 = vpop.trf.xlu0
    %v5133 = vpop.trf.xlu0
    %v5134 = vpop.trf.xlu0
    %v5135 = vpop.trf.xlu0
    %v5136 = vpop.trf.xlu0
    %v5137 = vpop.trf.xlu0
    %5138 = vxpose.xlu0.c.b16.start [1/8] %v4827, 128
    %5139 = vxpose.xlu0.c.b16.cont [2/8] 0, 128
    %5140 = vxpose.xlu0.c.b16.cont [3/8] 0, 128
    %5141 = vxpose.xlu0.c.b16.cont [4/8] 0, 128
    %5142 = vxpose.xlu0.c.b16.cont [5/8] 0, 128
    %5143 = vxpose.xlu0.c.b16.cont [6/8] 0, 128
    %5144 = vxpose.xlu0.c.b16.cont [7/8] 0, 128
    %5145 = vxpose.xlu0.c.b16.end [8/8] 0, 128
    %v5146 = vpop.trf.xlu0
    %v5147 = vpop.trf.xlu0
    %v5148 = vpop.trf.xlu0
    %v5149 = vpop.trf.xlu0
    %v5150 = vpop.trf.xlu0
    %v5151 = vpop.trf.xlu0
    %v5152 = vpop.trf.xlu0
    %v5153 = vpop.trf.xlu0
    %5154 = vxpose.xlu0.c.b16.start [1/8] %v4828, 128
    %5155 = vxpose.xlu0.c.b16.cont [2/8] 0, 128
    %5156 = vxpose.xlu0.c.b16.cont [3/8] 0, 128
    %5157 = vxpose.xlu0.c.b16.cont [4/8] 0, 128
    %5158 = vxpose.xlu0.c.b16.cont [5/8] 0, 128
    %5159 = vxpose.xlu0.c.b16.cont [6/8] 0, 128
    %5160 = vxpose.xlu0.c.b16.cont [7/8] 0, 128
    %5161 = vxpose.xlu0.c.b16.end [8/8] 0, 128
    %v5162 = vpop.trf.xlu0
    %v5163 = vpop.trf.xlu0
    %v5164 = vpop.trf.xlu0
    %v5165 = vpop.trf.xlu0
    %v5166 = vpop.trf.xlu0
    %v5167 = vpop.trf.xlu0
    %v5168 = vpop.trf.xlu0
    %v5169 = vpop.trf.xlu0
    %5170 = vxpose.xlu0.c.b16.start [1/8] %v4829, 128
    %5171 = vxpose.xlu0.c.b16.cont [2/8] 0, 128
    %5172 = vxpose.xlu0.c.b16.cont [3/8] 0, 128
    %5173 = vxpose.xlu0.c.b16.cont [4/8] 0, 128
    %5174 = vxpose.xlu0.c.b16.cont [5/8] 0, 128
    %5175 = vxpose.xlu0.c.b16.cont [6/8] 0, 128
    %5176 = vxpose.xlu0.c.b16.cont [7/8] 0, 128
    %5177 = vxpose.xlu0.c.b16.end [8/8] 0, 128
    %v5178 = vpop.trf.xlu0
    %v5179 = vpop.trf.xlu0
    %v5180 = vpop.trf.xlu0
    %v5181 = vpop.trf.xlu0
    %v5182 = vpop.trf.xlu0
    %v5183 = vpop.trf.xlu0
    %v5184 = vpop.trf.xlu0
    %v5185 = vpop.trf.xlu0
    %5186 = vxpose.xlu0.c.b16.start [1/8] %v4830, 128
    %5187 = vxpose.xlu0.c.b16.cont [2/8] 0, 128
    %5188 = vxpose.xlu0.c.b16.cont [3/8] 0, 128
    %5189 = vxpose.xlu0.c.b16.cont [4/8] 0, 128
    %5190 = vxpose.xlu0.c.b16.cont [5/8] 0, 128
    %5191 = vxpose.xlu0.c.b16.cont [6/8] 0, 128
    %5192 = vxpose.xlu0.c.b16.cont [7/8] 0, 128
    %5193 = vxpose.xlu0.c.b16.end [8/8] 0, 128
    %v5194 = vpop.trf.xlu0
    %v5195 = vpop.trf.xlu0
    %v5196 = vpop.trf.xlu0
    %v5197 = vpop.trf.xlu0
    %v5198 = vpop.trf.xlu0
    %v5199 = vpop.trf.xlu0
    %v5200 = vpop.trf.xlu0
    %v5201 = vpop.trf.xlu0
    %5202 = vxpose.xlu0.c.b16.start [1/8] %v4831, 128
    %5203 = vxpose.xlu0.c.b16.cont [2/8] 0, 128
    %5204 = vxpose.xlu0.c.b16.cont [3/8] 0, 128
    %5205 = vxpose.xlu0.c.b16.cont [4/8] 0, 128
    %5206 = vxpose.xlu0.c.b16.cont [5/8] 0, 128
    %5207 = vxpose.xlu0.c.b16.cont [6/8] 0, 128
    %5208 = vxpose.xlu0.c.b16.cont [7/8] 0, 128
    %5209 = vxpose.xlu0.c.b16.end [8/8] 0, 128
    %v5210 = vpop.trf.xlu0
    %v5211 = vpop.trf.xlu0
    %v5212 = vpop.trf.xlu0
    %v5213 = vpop.trf.xlu0
    %v5214 = vpop.trf.xlu0
    %v5215 = vpop.trf.xlu0
    %v5216 = vpop.trf.xlu0
    %v5217 = vpop.trf.xlu0
    %5218 = vxpose.xlu0.c.b16.start [1/8] %v4832, 128
    %5219 = vxpose.xlu0.c.b16.cont [2/8] 0, 128
    %5220 = vxpose.xlu0.c.b16.cont [3/8] 0, 128
    %5221 = vxpose.xlu0.c.b16.cont [4/8] 0, 128
    %5222 = vxpose.xlu0.c.b16.cont [5/8] 0, 128
    %5223 = vxpose.xlu0.c.b16.cont [6/8] 0, 128
    %5224 = vxpose.xlu0.c.b16.cont [7/8] 0, 128
    %5225 = vxpose.xlu0.c.b16.end [8/8] 0, 128
    %v5226 = vpop.trf.xlu0
    %v5227 = vpop.trf.xlu0
    %v5228 = vpop.trf.xlu0
    %v5229 = vpop.trf.xlu0
    %v5230 = vpop.trf.xlu0
    %v5231 = vpop.trf.xlu0
    %v5232 = vpop.trf.xlu0
    %v5233 = vpop.trf.xlu0
    %5234 = vxpose.xlu0.c.b16.start [1/8] %v4833, 128
    %5235 = vxpose.xlu0.c.b16.cont [2/8] 0, 128
    %5236 = vxpose.xlu0.c.b16.cont [3/8] 0, 128
    %5237 = vxpose.xlu0.c.b16.cont [4/8] 0, 128
    %5238 = vxpose.xlu0.c.b16.cont [5/8] 0, 128
    %5239 = vxpose.xlu0.c.b16.cont [6/8] 0, 128
    %5240 = vxpose.xlu0.c.b16.cont [7/8] 0, 128
    %5241 = vxpose.xlu0.c.b16.end [8/8] 0, 128
    %v5242 = vpop.trf.xlu0
    %v5243 = vpop.trf.xlu0
    %v5244 = vpop.trf.xlu0
    %v5245 = vpop.trf.xlu0
    %v5246 = vpop.trf.xlu0
    %v5247 = vpop.trf.xlu0
    %v5248 = vpop.trf.xlu0
    %v5249 = vpop.trf.xlu0
    %v5250 = vcombine.low %v5002, %v5066
    %v5252 = vunpack.c.l.s4 1983009808
    %v5253 = vunpack.c.0.s8 %v5252
    %v5254 = vlaneseq
    %v5255 = vshrl.u32 %v5254, 7
    %v5256 = vsub.s32 %v5253, %v5255
    %v5257 = vrot.slane %v5250, %v5256
    %v5258 = vcombine.low %v5034, %v5098
    %v5260 = vunpack.c.l.s4 1983009808
    %v5261 = vunpack.c.0.s8 %v5260
    %v5262 = vlaneseq
    %v5263 = vshrl.u32 %v5262, 7
    %v5264 = vsub.s32 %v5261, %v5263
    %v5265 = vrot.slane %v5258, %v5264
    %v5266 = vcombine.low %v5130, %v5194
    %v5268 = vunpack.c.l.s4 1983009808
    %v5269 = vunpack.c.0.s8 %v5268
    %v5270 = vlaneseq
    %v5271 = vshrl.u32 %v5270, 7
    %v5272 = vsub.s32 %v5269, %v5271
    %v5273 = vrot.slane %v5266, %v5272
    %v5274 = vcombine.low %v5162, %v5226
    %v5276 = vunpack.c.l.s4 1983009808
    %v5277 = vunpack.c.0.s8 %v5276
    %v5278 = vlaneseq
    %v5279 = vshrl.u32 %v5278, 7
    %v5280 = vsub.s32 %v5277, %v5279
    %v5281 = vrot.slane %v5274, %v5280
    %v5282 = vcombine.low %v5257, %v5265
    %v5284 = vunpack.c.l.s4 1934713408
    %v5285 = vunpack.c.0.s8 %v5284
    %v5286 = vlaneseq
    %v5287 = vshrl.u32 %v5286, 7
    %v5288 = vsub.s32 %v5285, %v5287
    %v5289 = vrot.slane %v5282, %v5288
    %v5290 = vcombine.low %v5273, %v5281
    %v5292 = vunpack.c.l.s4 1934713408
    %v5293 = vunpack.c.0.s8 %v5292
    %v5294 = vlaneseq
    %v5295 = vshrl.u32 %v5294, 7
    %v5296 = vsub.s32 %v5293, %v5295
    %v5297 = vrot.slane %v5290, %v5296
    %v5298 = vcombine.low %v5289, %v5297
    %v5299 = vcombine.high %v5289, %v5297
    %v5300 = vcombine.low %v5018, %v5082
    %v5302 = vunpack.c.l.s4 1983009808
    %v5303 = vunpack.c.0.s8 %v5302
    %v5304 = vlaneseq
    %v5305 = vshrl.u32 %v5304, 7
    %v5306 = vsub.s32 %v5303, %v5305
    %v5307 = vrot.slane %v5300, %v5306
    %v5308 = vcombine.low %v5050, %v5114
    %v5310 = vunpack.c.l.s4 1983009808
    %v5311 = vunpack.c.0.s8 %v5310
    %v5312 = vlaneseq
    %v5313 = vshrl.u32 %v5312, 7
    %v5314 = vsub.s32 %v5311, %v5313
    %v5315 = vrot.slane %v5308, %v5314
    %v5316 = vcombine.low %v5146, %v5210
    %v5318 = vunpack.c.l.s4 1983009808
    %v5319 = vunpack.c.0.s8 %v5318
    %v5320 = vlaneseq
    %v5321 = vshrl.u32 %v5320, 7
    %v5322 = vsub.s32 %v5319, %v5321
    %v5323 = vrot.slane %v5316, %v5322
    %v5324 = vcombine.low %v5178, %v5242
    %v5326 = vunpack.c.l.s4 1983009808
    %v5327 = vunpack.c.0.s8 %v5326
    %v5328 = vlaneseq
    %v5329 = vshrl.u32 %v5328, 7
    %v5330 = vsub.s32 %v5327, %v5329
    %v5331 = vrot.slane %v5324, %v5330
    %v5332 = vcombine.low %v5307, %v5315
    %v5334 = vunpack.c.l.s4 1934713408
    %v5335 = vunpack.c.0.s8 %v5334
    %v5336 = vlaneseq
    %v5337 = vshrl.u32 %v5336, 7
    %v5338 = vsub.s32 %v5335, %v5337
    %v5339 = vrot.slane %v5332, %v5338
    %v5340 = vcombine.low %v5323, %v5331
    %v5342 = vunpack.c.l.s4 1934713408
    %v5343 = vunpack.c.0.s8 %v5342
    %v5344 = vlaneseq
    %v5345 = vshrl.u32 %v5344, 7
    %v5346 = vsub.s32 %v5343, %v5345
    %v5347 = vrot.slane %v5340, %v5346
    %v5348 = vcombine.low %v5339, %v5347
    %v5349 = vcombine.high %v5339, %v5347
    %v5352 = vpack.i.b16 %v5348, %v5298
    %v5354 = vshrl.u32 %v5298, 16
    %v5355 = vshrl.u32 %v5348, 16
    %v5356 = vpack.i.b16 %v5355, %v5354
    %v5360 = vpack.i.b16 %v5349, %v5299
    %v5362 = vshrl.u32 %v5299, 16
    %v5363 = vshrl.u32 %v5349, 16
    %v5364 = vpack.i.b16 %v5363, %v5362
    %5366 = vxpose.xlu0.c.b16.start [1/8] %v5352, 128
    %5367 = vxpose.xlu0.c.b16.cont [2/8] 0, 128
    %5368 = vxpose.xlu0.c.b16.cont [3/8] 0, 128
    %5369 = vxpose.xlu0.c.b16.cont [4/8] 0, 128
    %5370 = vxpose.xlu0.c.b16.cont [5/8] 0, 128
    %5371 = vxpose.xlu0.c.b16.cont [6/8] 0, 128
    %5372 = vxpose.xlu0.c.b16.cont [7/8] 0, 128
    %5373 = vxpose.xlu0.c.b16.end [8/8] 0, 128
    %v5374 = vpop.trf.xlu0
    %v5375 = vpop.trf.xlu0
    %v5376 = vpop.trf.xlu0
    %v5377 = vpop.trf.xlu0
    %v5378 = vpop.trf.xlu0
    %v5379 = vpop.trf.xlu0
    %v5380 = vpop.trf.xlu0
    %v5381 = vpop.trf.xlu0
    %5382 = vxpose.xlu0.c.b16.start [1/8] %v5356, 128
    %5383 = vxpose.xlu0.c.b16.cont [2/8] 0, 128
    %5384 = vxpose.xlu0.c.b16.cont [3/8] 0, 128
    %5385 = vxpose.xlu0.c.b16.cont [4/8] 0, 128
    %5386 = vxpose.xlu0.c.b16.cont [5/8] 0, 128
    %5387 = vxpose.xlu0.c.b16.cont [6/8] 0, 128
    %5388 = vxpose.xlu0.c.b16.cont [7/8] 0, 128
    %5389 = vxpose.xlu0.c.b16.end [8/8] 0, 128
    %v5390 = vpop.trf.xlu0
    %v5391 = vpop.trf.xlu0
    %v5392 = vpop.trf.xlu0
    %v5393 = vpop.trf.xlu0
    %v5394 = vpop.trf.xlu0
    %v5395 = vpop.trf.xlu0
    %v5396 = vpop.trf.xlu0
    %v5397 = vpop.trf.xlu0
    %5398 = vxpose.xlu0.c.b16.start [1/8] %v5360, 128
    %5399 = vxpose.xlu0.c.b16.cont [2/8] 0, 128
    %5400 = vxpose.xlu0.c.b16.cont [3/8] 0, 128
    %5401 = vxpose.xlu0.c.b16.cont [4/8] 0, 128
    %5402 = vxpose.xlu0.c.b16.cont [5/8] 0, 128
    %5403 = vxpose.xlu0.c.b16.cont [6/8] 0, 128
    %5404 = vxpose.xlu0.c.b16.cont [7/8] 0, 128
    %5405 = vxpose.xlu0.c.b16.end [8/8] 0, 128
    %v5406 = vpop.trf.xlu0
    %v5407 = vpop.trf.xlu0
    %v5408 = vpop.trf.xlu0
    %v5409 = vpop.trf.xlu0
    %v5410 = vpop.trf.xlu0
    %v5411 = vpop.trf.xlu0
    %v5412 = vpop.trf.xlu0
    %v5413 = vpop.trf.xlu0
    %5414 = vxpose.xlu0.c.b16.start [1/8] %v5364, 128
    %5415 = vxpose.xlu0.c.b16.cont [2/8] 0, 128
    %5416 = vxpose.xlu0.c.b16.cont [3/8] 0, 128
    %5417 = vxpose.xlu0.c.b16.cont [4/8] 0, 128
    %5418 = vxpose.xlu0.c.b16.cont [5/8] 0, 128
    %5419 = vxpose.xlu0.c.b16.cont [6/8] 0, 128
    %5420 = vxpose.xlu0.c.b16.cont [7/8] 0, 128
    %5421 = vxpose.xlu0.c.b16.end [8/8] 0, 128
    %v5422 = vpop.trf.xlu0
    %v5423 = vpop.trf.xlu0
    %v5424 = vpop.trf.xlu0
    %v5425 = vpop.trf.xlu0
    %v5426 = vpop.trf.xlu0
    %v5427 = vpop.trf.xlu0
    %v5428 = vpop.trf.xlu0
    %v5429 = vpop.trf.xlu0
    %v5431 = vunpack.c.l.s4 1983009808
    %v5432 = vunpack.c.0.s8 %v5431
    %v5433 = vlaneseq
    %v5434 = vshrl.u32 %v5433, 7
    %v5435 = vsub.s32 %v5432, %v5434
    %v5436 = vrot.slane %v5374, %v5435
    %v5438 = vunpack.c.l.s4 1983009808
    %v5439 = vunpack.c.0.s8 %v5438
    %v5440 = vlaneseq
    %v5441 = vshrl.u32 %v5440, 7
    %v5442 = vsub.s32 %v5439, %v5441
    %v5443 = vrot.slane %v5406, %v5442
    %v5444 = vcombine.low %v5436, %v5443
    %v5445 = vcombine.high %v5436, %v5443
    %v5447 = vunpack.c.l.s4 1934713408
    %v5448 = vunpack.c.0.s8 %v5447
    %v5449 = vlaneseq
    %v5450 = vshrl.u32 %v5449, 7
    %v5451 = vsub.s32 %v5448, %v5450
    %v5452 = vrot.slane %v5444, %v5451
    %v5454 = vunpack.c.l.s4 1934713408
    %v5455 = vunpack.c.0.s8 %v5454
    %v5456 = vlaneseq
    %v5457 = vshrl.u32 %v5456, 7
    %v5458 = vsub.s32 %v5455, %v5457
    %v5459 = vrot.slane %v5445, %v5458
    %v5460 = vcombine.high %v5452, 0
    %v5461 = vcombine.high %v5459, 0
    %v5463 = vunpack.c.l.s4 1983009808
    %v5464 = vunpack.c.0.s8 %v5463
    %v5465 = vlaneseq
    %v5466 = vshrl.u32 %v5465, 7
    %v5467 = vsub.s32 %v5464, %v5466
    %v5468 = vrot.slane %v5390, %v5467
    %v5470 = vunpack.c.l.s4 1983009808
    %v5471 = vunpack.c.0.s8 %v5470
    %v5472 = vlaneseq
    %v5473 = vshrl.u32 %v5472, 7
    %v5474 = vsub.s32 %v5471, %v5473
    %v5475 = vrot.slane %v5422, %v5474
    %v5476 = vcombine.low %v5468, %v5475
    %v5477 = vcombine.high %v5468, %v5475
    %v5479 = vunpack.c.l.s4 1934713408
    %v5480 = vunpack.c.0.s8 %v5479
    %v5481 = vlaneseq
    %v5482 = vshrl.u32 %v5481, 7
    %v5483 = vsub.s32 %v5480, %v5482
    %v5484 = vrot.slane %v5476, %v5483
    %v5486 = vunpack.c.l.s4 1934713408
    %v5487 = vunpack.c.0.s8 %v5486
    %v5488 = vlaneseq
    %v5489 = vshrl.u32 %v5488, 7
    %v5490 = vsub.s32 %v5487, %v5489
    %v5491 = vrot.slane %v5477, %v5490
    %v5492 = vcombine.high %v5484, 0
    %v5493 = vcombine.high %v5491, 0
    %v5496 = vpack.i.b16 %v5484, %v5452
    %v5497 = vshrl.u32 %v5452, 16
    %v5498 = vshrl.u32 %v5484, 16
    %v5499 = vpack.i.b16 %v5498, %v5497
    %v5502 = vpack.i.b16 %v5492, %v5460
    %v5503 = vshrl.u32 %v5460, 16
    %v5504 = vshrl.u32 %v5492, 16
    %v5505 = vpack.i.b16 %v5504, %v5503
    %v5508 = vpack.i.b16 %v5491, %v5459
    %v5509 = vshrl.u32 %v5459, 16
    %v5510 = vshrl.u32 %v5491, 16
    %v5511 = vpack.i.b16 %v5510, %v5509
    %v5514 = vpack.i.b16 %v5493, %v5461
    %v5515 = vshrl.u32 %v5461, 16
    %v5516 = vshrl.u32 %v5493, 16
    %v5517 = vpack.i.b16 %v5516, %v5515
    %v5519 = vsel %vm1636, %v4972, 0
    %v5522 = vsel %vm1640, %v5496, 0
    %5524 = vmatprep.subr.bf16.mxu0 0
    %5525 = vmatpush1.bf16.msra.mxu0 0
    %5526 = vmatprep.subr.bf16.mxu0 0
    %5527 = vmatpush1.bf16.msra.mxu0 0
    %5528 = vmatprep.subr.bf16.mxu0 0
    %5529 = vmatpush1.bf16.msra.mxu0 0
    %5530 = vmatprep.subr.bf16.mxu0 0
    %5531 = vmatpush1.bf16.msra.mxu0 0
    %5532 = vmatprep.subr.bf16.mxu0 0
    %5533 = vmatpush1.bf16.msra.mxu0 0
    %5534 = vmatprep.subr.bf16.mxu0 0
    %5535 = vmatpush1.bf16.msra.mxu0 0
    %5536 = vmatprep.subr.bf16.mxu0 0
    %5537 = vmatpush1.bf16.msra.mxu0 0
    %5538 = vmatprep.subr.bf16.mxu0 0
    %5539 = vmatpush1.bf16.msra.mxu0 %v5522
    %5540 = vmatprep.subr.bf16.mxu0 0
    %5541 = vmatpush2.bf16.msra.mxu0 0
    %5542 = vmatprep.subr.bf16.mxu0 0
    %5543 = vmatpush2.bf16.msra.mxu0 0
    %5544 = vmatprep.subr.bf16.mxu0 0
    %5545 = vmatpush2.bf16.msra.mxu0 0
    %5546 = vmatprep.subr.bf16.mxu0 0
    %5547 = vmatpush2.bf16.msra.mxu0 0
    %5548 = vmatprep.subr.bf16.mxu0 0
    %5549 = vmatpush2.bf16.msra.mxu0 0
    %5550 = vmatprep.subr.bf16.mxu0 0
    %5551 = vmatpush2.bf16.msra.mxu0 0
    %5552 = vmatprep.subr.bf16.mxu0 0
    %5553 = vmatpush2.bf16.msra.mxu0 0
    %5554 = vmatprep.subr.bf16.mxu0 0
    %5555 = vmatpush2.bf16.msra.mxu0 0
    %5556 = vmatprep.mubr.bf16.mxu0 0
    %5557 = vmatmul.mubr.bf16.gmra.mxu0 %v5519
    %v5558 = vpop.f32.mrf.mxu0
    %v5559 = vadd.f32 0.0, %v5558
    %v5560 = vpop.f32.mrf.mxu0
    %v5561 = vpop.f32.mrf.mxu0
    %v5562 = vadd.f32 0.0, %v5561
    %v5563 = vpop.f32.mrf.mxu0
    %5564 = vdwg.mxu0
    %v5566 = vsel %vm1636, %v4975, 0
    %v5569 = vsel %vm1640, %v5499, 0
    %5571 = vmatprep.subr.bf16.mxu0 0
    %5572 = vmatpush1.bf16.msra.mxu0 0
    %5573 = vmatprep.subr.bf16.mxu0 0
    %5574 = vmatpush1.bf16.msra.mxu0 0
    %5575 = vmatprep.subr.bf16.mxu0 0
    %5576 = vmatpush1.bf16.msra.mxu0 0
    %5577 = vmatprep.subr.bf16.mxu0 0
    %5578 = vmatpush1.bf16.msra.mxu0 0
    %5579 = vmatprep.subr.bf16.mxu0 0
    %5580 = vmatpush1.bf16.msra.mxu0 0
    %5581 = vmatprep.subr.bf16.mxu0 0
    %5582 = vmatpush1.bf16.msra.mxu0 0
    %5583 = vmatprep.subr.bf16.mxu0 0
    %5584 = vmatpush1.bf16.msra.mxu0 0
    %5585 = vmatprep.subr.bf16.mxu0 0
    %5586 = vmatpush1.bf16.msra.mxu0 %v5569
    %5587 = vmatprep.subr.bf16.mxu0 0
    %5588 = vmatpush2.bf16.msra.mxu0 0
    %5589 = vmatprep.subr.bf16.mxu0 0
    %5590 = vmatpush2.bf16.msra.mxu0 0
    %5591 = vmatprep.subr.bf16.mxu0 0
    %5592 = vmatpush2.bf16.msra.mxu0 0
    %5593 = vmatprep.subr.bf16.mxu0 0
    %5594 = vmatpush2.bf16.msra.mxu0 0
    %5595 = vmatprep.subr.bf16.mxu0 0
    %5596 = vmatpush2.bf16.msra.mxu0 0
    %5597 = vmatprep.subr.bf16.mxu0 0
    %5598 = vmatpush2.bf16.msra.mxu0 0
    %5599 = vmatprep.subr.bf16.mxu0 0
    %5600 = vmatpush2.bf16.msra.mxu0 0
    %5601 = vmatprep.subr.bf16.mxu0 0
    %5602 = vmatpush2.bf16.msra.mxu0 0
    %5603 = vmatprep.mubr.bf16.mxu0 0
    %5604 = vmatmul.mubr.bf16.gmra.mxu0 %v5566
    %v5605 = vpop.f32.mrf.mxu0
    %v5606 = vadd.f32 0.0, %v5605
    %v5607 = vpop.f32.mrf.mxu0
    %v5608 = vpop.f32.mrf.mxu0
    %v5609 = vadd.f32 0.0, %v5608
    %v5610 = vpop.f32.mrf.mxu0
    %5611 = vdwg.mxu0
    %v5613 = vsel %vm1636, %v4978, 0
    %v5616 = vsel %vm1640, %v5502, 0
    %5618 = vmatprep.subr.bf16.mxu0 0
    %5619 = vmatpush1.bf16.msra.mxu0 0
    %5620 = vmatprep.subr.bf16.mxu0 0
    %5621 = vmatpush1.bf16.msra.mxu0 0
    %5622 = vmatprep.subr.bf16.mxu0 0
    %5623 = vmatpush1.bf16.msra.mxu0 0
    %5624 = vmatprep.subr.bf16.mxu0 0
    %5625 = vmatpush1.bf16.msra.mxu0 0
    %5626 = vmatprep.subr.bf16.mxu0 0
    %5627 = vmatpush1.bf16.msra.mxu0 0
    %5628 = vmatprep.subr.bf16.mxu0 0
    %5629 = vmatpush1.bf16.msra.mxu0 0
    %5630 = vmatprep.subr.bf16.mxu0 0
    %5631 = vmatpush1.bf16.msra.mxu0 0
    %5632 = vmatprep.subr.bf16.mxu0 0
    %5633 = vmatpush1.bf16.msra.mxu0 %v5616
    %5634 = vmatprep.subr.bf16.mxu0 0
    %5635 = vmatpush2.bf16.msra.mxu0 0
    %5636 = vmatprep.subr.bf16.mxu0 0
    %5637 = vmatpush2.bf16.msra.mxu0 0
    %5638 = vmatprep.subr.bf16.mxu0 0
    %5639 = vmatpush2.bf16.msra.mxu0 0
    %5640 = vmatprep.subr.bf16.mxu0 0
    %5641 = vmatpush2.bf16.msra.mxu0 0
    %5642 = vmatprep.subr.bf16.mxu0 0
    %5643 = vmatpush2.bf16.msra.mxu0 0
    %5644 = vmatprep.subr.bf16.mxu0 0
    %5645 = vmatpush2.bf16.msra.mxu0 0
    %5646 = vmatprep.subr.bf16.mxu0 0
    %5647 = vmatpush2.bf16.msra.mxu0 0
    %5648 = vmatprep.subr.bf16.mxu0 0
    %5649 = vmatpush2.bf16.msra.mxu0 0
    %5650 = vmatprep.mubr.bf16.mxu0 0
    %5651 = vmatmul.mubr.bf16.gmra.mxu0 %v5613
    %v5652 = vpop.f32.mrf.mxu0
    %v5653 = vadd.f32 0.0, %v5652
    %v5654 = vpop.f32.mrf.mxu0
    %v5655 = vpop.f32.mrf.mxu0
    %v5656 = vadd.f32 0.0, %v5655
    %v5657 = vpop.f32.mrf.mxu0
    %5658 = vdwg.mxu0
    %v5660 = vsel %vm1636, %v4981, 0
    %v5663 = vsel %vm1640, %v5505, 0
    %5665 = vmatprep.subr.bf16.mxu0 0
    %5666 = vmatpush1.bf16.msra.mxu0 0
    %5667 = vmatprep.subr.bf16.mxu0 0
    %5668 = vmatpush1.bf16.msra.mxu0 0
    %5669 = vmatprep.subr.bf16.mxu0 0
    %5670 = vmatpush1.bf16.msra.mxu0 0
    %5671 = vmatprep.subr.bf16.mxu0 0
    %5672 = vmatpush1.bf16.msra.mxu0 0
    %5673 = vmatprep.subr.bf16.mxu0 0
    %5674 = vmatpush1.bf16.msra.mxu0 0
    %5675 = vmatprep.subr.bf16.mxu0 0
    %5676 = vmatpush1.bf16.msra.mxu0 0
    %5677 = vmatprep.subr.bf16.mxu0 0
    %5678 = vmatpush1.bf16.msra.mxu0 0
    %5679 = vmatprep.subr.bf16.mxu0 0
    %5680 = vmatpush1.bf16.msra.mxu0 %v5663
    %5681 = vmatprep.subr.bf16.mxu0 0
    %5682 = vmatpush2.bf16.msra.mxu0 0
    %5683 = vmatprep.subr.bf16.mxu0 0
    %5684 = vmatpush2.bf16.msra.mxu0 0
    %5685 = vmatprep.subr.bf16.mxu0 0
    %5686 = vmatpush2.bf16.msra.mxu0 0
    %5687 = vmatprep.subr.bf16.mxu0 0
    %5688 = vmatpush2.bf16.msra.mxu0 0
    %5689 = vmatprep.subr.bf16.mxu0 0
    %5690 = vmatpush2.bf16.msra.mxu0 0
    %5691 = vmatprep.subr.bf16.mxu0 0
    %5692 = vmatpush2.bf16.msra.mxu0 0
    %5693 = vmatprep.subr.bf16.mxu0 0
    %5694 = vmatpush2.bf16.msra.mxu0 0
    %5695 = vmatprep.subr.bf16.mxu0 0
    %5696 = vmatpush2.bf16.msra.mxu0 0
    %5697 = vmatprep.mubr.bf16.mxu0 0
    %5698 = vmatmul.mubr.bf16.gmra.mxu0 %v5660
    %v5699 = vpop.f32.mrf.mxu0
    %v5700 = vadd.f32 0.0, %v5699
    %v5701 = vpop.f32.mrf.mxu0
    %v5702 = vpop.f32.mrf.mxu0
    %v5703 = vadd.f32 0.0, %v5702
    %v5704 = vpop.f32.mrf.mxu0
    %5705 = vdwg.mxu0
    %v5707 = vsel %vm1636, %v4984, 0
    %v5710 = vsel %vm1640, %v5508, 0
    %5712 = vmatprep.subr.bf16.mxu0 0
    %5713 = vmatpush1.bf16.msra.mxu0 0
    %5714 = vmatprep.subr.bf16.mxu0 0
    %5715 = vmatpush1.bf16.msra.mxu0 0
    %5716 = vmatprep.subr.bf16.mxu0 0
    %5717 = vmatpush1.bf16.msra.mxu0 0
    %5718 = vmatprep.subr.bf16.mxu0 0
    %5719 = vmatpush1.bf16.msra.mxu0 0
    %5720 = vmatprep.subr.bf16.mxu0 0
    %5721 = vmatpush1.bf16.msra.mxu0 0
    %5722 = vmatprep.subr.bf16.mxu0 0
    %5723 = vmatpush1.bf16.msra.mxu0 0
    %5724 = vmatprep.subr.bf16.mxu0 0
    %5725 = vmatpush1.bf16.msra.mxu0 0
    %5726 = vmatprep.subr.bf16.mxu0 0
    %5727 = vmatpush1.bf16.msra.mxu0 %v5710
    %5728 = vmatprep.subr.bf16.mxu0 0
    %5729 = vmatpush2.bf16.msra.mxu0 0
    %5730 = vmatprep.subr.bf16.mxu0 0
    %5731 = vmatpush2.bf16.msra.mxu0 0
    %5732 = vmatprep.subr.bf16.mxu0 0
    %5733 = vmatpush2.bf16.msra.mxu0 0
    %5734 = vmatprep.subr.bf16.mxu0 0
    %5735 = vmatpush2.bf16.msra.mxu0 0
    %5736 = vmatprep.subr.bf16.mxu0 0
    %5737 = vmatpush2.bf16.msra.mxu0 0
    %5738 = vmatprep.subr.bf16.mxu0 0
    %5739 = vmatpush2.bf16.msra.mxu0 0
    %5740 = vmatprep.subr.bf16.mxu0 0
    %5741 = vmatpush2.bf16.msra.mxu0 0
    %5742 = vmatprep.subr.bf16.mxu0 0
    %5743 = vmatpush2.bf16.msra.mxu0 0
    %5744 = vmatprep.mubr.bf16.mxu0 0
    %5745 = vmatmul.mubr.bf16.gmra.mxu0 %v5707
    %v5746 = vpop.f32.mrf.mxu0
    %v5747 = vadd.f32 0.0, %v5746
    %v5748 = vpop.f32.mrf.mxu0
    %v5749 = vpop.f32.mrf.mxu0
    %v5750 = vadd.f32 0.0, %v5749
    %v5751 = vpop.f32.mrf.mxu0
    %5752 = vdwg.mxu0
    %v5754 = vsel %vm1636, %v4987, 0
    %v5757 = vsel %vm1640, %v5511, 0
    %5759 = vmatprep.subr.bf16.mxu0 0
    %5760 = vmatpush1.bf16.msra.mxu0 0
    %5761 = vmatprep.subr.bf16.mxu0 0
    %5762 = vmatpush1.bf16.msra.mxu0 0
    %5763 = vmatprep.subr.bf16.mxu0 0
    %5764 = vmatpush1.bf16.msra.mxu0 0
    %5765 = vmatprep.subr.bf16.mxu0 0
    %5766 = vmatpush1.bf16.msra.mxu0 0
    %5767 = vmatprep.subr.bf16.mxu0 0
    %5768 = vmatpush1.bf16.msra.mxu0 0
    %5769 = vmatprep.subr.bf16.mxu0 0
    %5770 = vmatpush1.bf16.msra.mxu0 0
    %5771 = vmatprep.subr.bf16.mxu0 0
    %5772 = vmatpush1.bf16.msra.mxu0 0
    %5773 = vmatprep.subr.bf16.mxu0 0
    %5774 = vmatpush1.bf16.msra.mxu0 %v5757
    %5775 = vmatprep.subr.bf16.mxu0 0
    %5776 = vmatpush2.bf16.msra.mxu0 0
    %5777 = vmatprep.subr.bf16.mxu0 0
    %5778 = vmatpush2.bf16.msra.mxu0 0
    %5779 = vmatprep.subr.bf16.mxu0 0
    %5780 = vmatpush2.bf16.msra.mxu0 0
    %5781 = vmatprep.subr.bf16.mxu0 0
    %5782 = vmatpush2.bf16.msra.mxu0 0
    %5783 = vmatprep.subr.bf16.mxu0 0
    %5784 = vmatpush2.bf16.msra.mxu0 0
    %5785 = vmatprep.subr.bf16.mxu0 0
    %5786 = vmatpush2.bf16.msra.mxu0 0
    %5787 = vmatprep.subr.bf16.mxu0 0
    %5788 = vmatpush2.bf16.msra.mxu0 0
    %5789 = vmatprep.subr.bf16.mxu0 0
    %5790 = vmatpush2.bf16.msra.mxu0 0
    %5791 = vmatprep.mubr.bf16.mxu0 0
    %5792 = vmatmul.mubr.bf16.gmra.mxu0 %v5754
    %v5793 = vpop.f32.mrf.mxu0
    %v5794 = vadd.f32 0.0, %v5793
    %v5795 = vpop.f32.mrf.mxu0
    %v5796 = vpop.f32.mrf.mxu0
    %v5797 = vadd.f32 0.0, %v5796
    %v5798 = vpop.f32.mrf.mxu0
    %5799 = vdwg.mxu0
    %v5801 = vsel %vm1636, %v4990, 0
    %v5804 = vsel %vm1640, %v5514, 0
    %5806 = vmatprep.subr.bf16.mxu0 0
    %5807 = vmatpush1.bf16.msra.mxu0 0
    %5808 = vmatprep.subr.bf16.mxu0 0
    %5809 = vmatpush1.bf16.msra.mxu0 0
    %5810 = vmatprep.subr.bf16.mxu0 0
    %5811 = vmatpush1.bf16.msra.mxu0 0
    %5812 = vmatprep.subr.bf16.mxu0 0
    %5813 = vmatpush1.bf16.msra.mxu0 0
    %5814 = vmatprep.subr.bf16.mxu0 0
    %5815 = vmatpush1.bf16.msra.mxu0 0
    %5816 = vmatprep.subr.bf16.mxu0 0
    %5817 = vmatpush1.bf16.msra.mxu0 0
    %5818 = vmatprep.subr.bf16.mxu0 0
    %5819 = vmatpush1.bf16.msra.mxu0 0
    %5820 = vmatprep.subr.bf16.mxu0 0
    %5821 = vmatpush1.bf16.msra.mxu0 %v5804
    %5822 = vmatprep.subr.bf16.mxu0 0
    %5823 = vmatpush2.bf16.msra.mxu0 0
    %5824 = vmatprep.subr.bf16.mxu0 0
    %5825 = vmatpush2.bf16.msra.mxu0 0
    %5826 = vmatprep.subr.bf16.mxu0 0
    %5827 = vmatpush2.bf16.msra.mxu0 0
    %5828 = vmatprep.subr.bf16.mxu0 0
    %5829 = vmatpush2.bf16.msra.mxu0 0
    %5830 = vmatprep.subr.bf16.mxu0 0
    %5831 = vmatpush2.bf16.msra.mxu0 0
    %5832 = vmatprep.subr.bf16.mxu0 0
    %5833 = vmatpush2.bf16.msra.mxu0 0
    %5834 = vmatprep.subr.bf16.mxu0 0
    %5835 = vmatpush2.bf16.msra.mxu0 0
    %5836 = vmatprep.subr.bf16.mxu0 0
    %5837 = vmatpush2.bf16.msra.mxu0 0
    %5838 = vmatprep.mubr.bf16.mxu0 0
    %5839 = vmatmul.mubr.bf16.gmra.mxu0 %v5801
    %v5840 = vpop.f32.mrf.mxu0
    %v5841 = vadd.f32 0.0, %v5840
    %v5842 = vpop.f32.mrf.mxu0
    %v5843 = vpop.f32.mrf.mxu0
    %v5844 = vadd.f32 0.0, %v5843
    %v5845 = vpop.f32.mrf.mxu0
    %5846 = vdwg.mxu0
    %v5848 = vsel %vm1636, %v4993, 0
    %v5851 = vsel %vm1640, %v5517, 0
    %5853 = vmatprep.subr.bf16.mxu0 0
    %5854 = vmatpush1.bf16.msra.mxu0 0
    %5855 = vmatprep.subr.bf16.mxu0 0
    %5856 = vmatpush1.bf16.msra.mxu0 0
    %5857 = vmatprep.subr.bf16.mxu0 0
    %5858 = vmatpush1.bf16.msra.mxu0 0
    %5859 = vmatprep.subr.bf16.mxu0 0
    %5860 = vmatpush1.bf16.msra.mxu0 0
    %5861 = vmatprep.subr.bf16.mxu0 0
    %5862 = vmatpush1.bf16.msra.mxu0 0
    %5863 = vmatprep.subr.bf16.mxu0 0
    %5864 = vmatpush1.bf16.msra.mxu0 0
    %5865 = vmatprep.subr.bf16.mxu0 0
    %5866 = vmatpush1.bf16.msra.mxu0 0
    %5867 = vmatprep.subr.bf16.mxu0 0
    %5868 = vmatpush1.bf16.msra.mxu0 %v5851
    %5869 = vmatprep.subr.bf16.mxu0 0
    %5870 = vmatpush2.bf16.msra.mxu0 0
    %5871 = vmatprep.subr.bf16.mxu0 0
    %5872 = vmatpush2.bf16.msra.mxu0 0
    %5873 = vmatprep.subr.bf16.mxu0 0
    %5874 = vmatpush2.bf16.msra.mxu0 0
    %5875 = vmatprep.subr.bf16.mxu0 0
    %5876 = vmatpush2.bf16.msra.mxu0 0
    %5877 = vmatprep.subr.bf16.mxu0 0
    %5878 = vmatpush2.bf16.msra.mxu0 0
    %5879 = vmatprep.subr.bf16.mxu0 0
    %5880 = vmatpush2.bf16.msra.mxu0 0
    %5881 = vmatprep.subr.bf16.mxu0 0
    %5882 = vmatpush2.bf16.msra.mxu0 0
    %5883 = vmatprep.subr.bf16.mxu0 0
    %5884 = vmatpush2.bf16.msra.mxu0 0
    %5885 = vmatprep.mubr.bf16.mxu0 0
    %5886 = vmatmul.mubr.bf16.gmra.mxu0 %v5848
    %v5887 = vpop.f32.mrf.mxu0
    %v5888 = vadd.f32 0.0, %v5887
    %v5889 = vpop.f32.mrf.mxu0
    %v5890 = vpop.f32.mrf.mxu0
    %v5891 = vadd.f32 0.0, %v5890
    %v5892 = vpop.f32.mrf.mxu0
    %5893 = vdwg.mxu0
    %v5894 = vadd.f32 %v5559, %v5747
    %v5895 = vadd.f32 %v5562, %v5750
    %v5896 = vadd.f32 %v5606, %v5794
    %v5897 = vadd.f32 %v5609, %v5797
    %v5898 = vadd.f32 %v5653, %v5841
    %v5899 = vadd.f32 %v5656, %v5844
    %v5900 = vadd.f32 %v5700, %v5888
    %v5901 = vadd.f32 %v5703, %v5891
    %v5902 = vadd.f32 %v5894, %v104
    %v5903 = vadd.f32 %v5895, %v105
    %v5904 = vadd.f32 %v5896, %v104
    %v5905 = vadd.f32 %v5897, %v105
    %v5906 = vadd.f32 %v5898, %v104
    %v5907 = vadd.f32 %v5899, %v105
    %v5908 = vadd.f32 %v5900, %v104
    %v5909 = vadd.f32 %v5901, %v105
    %v5910 = vsel %vm217, %v5902, -inf
    %5911 = vmax.xlane.f32.xlu0 %v5910
    %v5912 = vpop.xlane.xlu0 %5911
    %v5913 = vsel %vm217, %v5903, -inf
    %5914 = vmax.xlane.f32.xlu0 %v5913
    %v5915 = vpop.xlane.xlu0 %5914
    %v5916 = vsel %vm217, %v5904, -inf
    %5917 = vmax.xlane.f32.xlu0 %v5916
    %v5918 = vpop.xlane.xlu0 %5917
    %v5919 = vsel %vm217, %v5905, -inf
    %5920 = vmax.xlane.f32.xlu0 %v5919
    %v5921 = vpop.xlane.xlu0 %5920
    %v5922 = vsel %vm217, %v5906, -inf
    %5923 = vmax.xlane.f32.xlu0 %v5922
    %v5924 = vpop.xlane.xlu0 %5923
    %v5925 = vsel %vm217, %v5907, -inf
    %5926 = vmax.xlane.f32.xlu0 %v5925
    %v5927 = vpop.xlane.xlu0 %5926
    %v5928 = vsel %vm217, %v5908, -inf
    %5929 = vmax.xlane.f32.xlu0 %v5928
    %v5930 = vpop.xlane.xlu0 %5929
    %v5931 = vsel %vm217, %v5909, -inf
    %5932 = vmax.xlane.f32.xlu0 %v5931
    %v5933 = vpop.xlane.xlu0 %5932
    %v5934 = vsub.f32 %v5902, %v5912
    %v5935 = vsub.f32 %v5903, %v5915
    %v5936 = vsub.f32 %v5904, %v5918
    %v5937 = vsub.f32 %v5905, %v5921
    %v5938 = vsub.f32 %v5906, %v5924
    %v5939 = vsub.f32 %v5907, %v5927
    %v5940 = vsub.f32 %v5908, %v5930
    %v5941 = vsub.f32 %v5909, %v5933
    %v5942 = vmul.f32 %v5934, 1.442695
    %v5943 = vpow.pop %v5942
    %v5944 = vmul.f32 %v5935, 1.442695
    %v5945 = vpow.pop %v5944
    %v5946 = vmul.f32 %v5936, 1.442695
    %v5947 = vpow.pop %v5946
    %v5948 = vmul.f32 %v5937, 1.442695
    %v5949 = vpow.pop %v5948
    %v5950 = vmul.f32 %v5938, 1.442695
    %v5951 = vpow.pop %v5950
    %v5952 = vmul.f32 %v5939, 1.442695
    %v5953 = vpow.pop %v5952
    %v5954 = vmul.f32 %v5940, 1.442695
    %v5955 = vpow.pop %v5954
    %v5956 = vmul.f32 %v5941, 1.442695
    %v5957 = vpow.pop %v5956
    %v5958 = vsel %vm217, %v5943, 0.0
    %5959 = vadd.xlane.f32.xlu0 %v5958
    %v5960 = vpop.xlane.xlu0 %5959
    %v5961 = vsel %vm217, %v5945, 0.0
    %5962 = vadd.xlane.f32.xlu0 %v5961
    %v5963 = vpop.xlane.xlu0 %5962
    %v5964 = vsel %vm217, %v5947, 0.0
    %5965 = vadd.xlane.f32.xlu0 %v5964
    %v5966 = vpop.xlane.xlu0 %5965
    %v5967 = vsel %vm217, %v5949, 0.0
    %5968 = vadd.xlane.f32.xlu0 %v5967
    %v5969 = vpop.xlane.xlu0 %5968
    %v5970 = vsel %vm217, %v5951, 0.0
    %5971 = vadd.xlane.f32.xlu0 %v5970
    %v5972 = vpop.xlane.xlu0 %5971
    %v5973 = vsel %vm217, %v5953, 0.0
    %5974 = vadd.xlane.f32.xlu0 %v5973
    %v5975 = vpop.xlane.xlu0 %5974
    %v5976 = vsel %vm217, %v5955, 0.0
    %5977 = vadd.xlane.f32.xlu0 %v5976
    %v5978 = vpop.xlane.xlu0 %5977
    %v5979 = vsel %vm217, %v5957, 0.0
    %5980 = vadd.xlane.f32.xlu0 %v5979
    %v5981 = vpop.xlane.xlu0 %5980
    %5982 = vrot.lane.b32.xlu0 %v4086, 120
    %v5983 = vpop.permute.xlu0 %5982
    %5984 = vrot.lane.b32.xlu0 %v4089, 120
    %v5985 = vpop.permute.xlu0 %5984
    %5986 = vrot.lane.b32.xlu0 %v4086, 104
    %v5987 = vpop.permute.xlu0 %5986
    %5988 = vrot.lane.b32.xlu0 %v4089, 104
    %v5989 = vpop.permute.xlu0 %5988
    %5990 = vrot.lane.b32.xlu0 %v4086, 64
    %v5991 = vpop.permute.xlu0 %5990
    %5992 = vrot.lane.b32.xlu0 %v4089, 64
    %v5993 = vpop.permute.xlu0 %5992
    %5994 = vrot.lane.b32.xlu0 %v5983, 64
    %v5995 = vpop.permute.xlu0 %5994
    %5996 = vrot.lane.b32.xlu0 %v5985, 64
    %v5997 = vpop.permute.xlu0 %5996
    %5998 = vrot.lane.b32.xlu0 %v4097, 64
    %v5999 = vpop.permute.xlu0 %5998
    %6000 = vrot.lane.b32.xlu0 %v4099, 64
    %v6001 = vpop.permute.xlu0 %6000
    %6002 = vrot.lane.b32.xlu0 %v5987, 64
    %v6003 = vpop.permute.xlu0 %6002
    %6004 = vrot.lane.b32.xlu0 %v5989, 64
    %v6005 = vpop.permute.xlu0 %6004
    %v6014 = vcombine.low %v5991, %v5999
    %v6015 = vcombine.high %v5991, %v5999
    %v6017 = vunpack.c.l.s4 1983009808
    %v6018 = vunpack.c.0.s8 %v6017
    %v6019 = vlaneseq
    %v6020 = vshrl.u32 %v6019, 7
    %v6021 = vsub.s32 %v6018, %v6020
    %v6022 = vrot.slane %v6014, %v6021
    %v6024 = vunpack.c.l.s4 1983009808
    %v6025 = vunpack.c.0.s8 %v6024
    %v6026 = vlaneseq
    %v6027 = vshrl.u32 %v6026, 7
    %v6028 = vsub.s32 %v6025, %v6027
    %v6029 = vrot.slane %v6015, %v6028
    %v6030 = vcombine.low %v5995, %v6003
    %v6031 = vcombine.high %v5995, %v6003
    %v6033 = vunpack.c.l.s4 1983009808
    %v6034 = vunpack.c.0.s8 %v6033
    %v6035 = vlaneseq
    %v6036 = vshrl.u32 %v6035, 7
    %v6037 = vsub.s32 %v6034, %v6036
    %v6038 = vrot.slane %v6030, %v6037
    %v6040 = vunpack.c.l.s4 1983009808
    %v6041 = vunpack.c.0.s8 %v6040
    %v6042 = vlaneseq
    %v6043 = vshrl.u32 %v6042, 7
    %v6044 = vsub.s32 %v6041, %v6043
    %v6045 = vrot.slane %v6031, %v6044
    %v6046 = vcombine.low %v6022, %v6038
    %v6047 = vcombine.high %v6022, %v6038
    %v6049 = vunpack.c.l.s4 1934713408
    %v6050 = vunpack.c.0.s8 %v6049
    %v6051 = vlaneseq
    %v6052 = vshrl.u32 %v6051, 7
    %v6053 = vsub.s32 %v6050, %v6052
    %v6054 = vrot.slane %v6046, %v6053
    %v6056 = vunpack.c.l.s4 1934713408
    %v6057 = vunpack.c.0.s8 %v6056
    %v6058 = vlaneseq
    %v6059 = vshrl.u32 %v6058, 7
    %v6060 = vsub.s32 %v6057, %v6059
    %v6061 = vrot.slane %v6047, %v6060
    %v6062 = vcombine.low %v6029, %v6045
    %v6063 = vcombine.high %v6029, %v6045
    %v6065 = vunpack.c.l.s4 1934713408
    %v6066 = vunpack.c.0.s8 %v6065
    %v6067 = vlaneseq
    %v6068 = vshrl.u32 %v6067, 7
    %v6069 = vsub.s32 %v6066, %v6068
    %v6070 = vrot.slane %v6062, %v6069
    %v6072 = vunpack.c.l.s4 1934713408
    %v6073 = vunpack.c.0.s8 %v6072
    %v6074 = vlaneseq
    %v6075 = vshrl.u32 %v6074, 7
    %v6076 = vsub.s32 %v6073, %v6075
    %v6077 = vrot.slane %v6063, %v6076
    %v6078 = vcombine.high %v6054, 0.0
    %v6079 = vcombine.high %v6061, 0.0
    %v6080 = vcombine.high %v6070, 0.0
    %v6081 = vcombine.high %v6077, 0.0
    %v6082 = vcombine.low %v5993, %v6001
    %v6083 = vcombine.high %v5993, %v6001
    %v6085 = vunpack.c.l.s4 1983009808
    %v6086 = vunpack.c.0.s8 %v6085
    %v6087 = vlaneseq
    %v6088 = vshrl.u32 %v6087, 7
    %v6089 = vsub.s32 %v6086, %v6088
    %v6090 = vrot.slane %v6082, %v6089
    %v6092 = vunpack.c.l.s4 1983009808
    %v6093 = vunpack.c.0.s8 %v6092
    %v6094 = vlaneseq
    %v6095 = vshrl.u32 %v6094, 7
    %v6096 = vsub.s32 %v6093, %v6095
    %v6097 = vrot.slane %v6083, %v6096
    %v6098 = vcombine.low %v5997, %v6005
    %v6099 = vcombine.high %v5997, %v6005
    %v6101 = vunpack.c.l.s4 1983009808
    %v6102 = vunpack.c.0.s8 %v6101
    %v6103 = vlaneseq
    %v6104 = vshrl.u32 %v6103, 7
    %v6105 = vsub.s32 %v6102, %v6104
    %v6106 = vrot.slane %v6098, %v6105
    %v6108 = vunpack.c.l.s4 1983009808
    %v6109 = vunpack.c.0.s8 %v6108
    %v6110 = vlaneseq
    %v6111 = vshrl.u32 %v6110, 7
    %v6112 = vsub.s32 %v6109, %v6111
    %v6113 = vrot.slane %v6099, %v6112
    %v6114 = vcombine.low %v6090, %v6106
    %v6115 = vcombine.high %v6090, %v6106
    %v6117 = vunpack.c.l.s4 1934713408
    %v6118 = vunpack.c.0.s8 %v6117
    %v6119 = vlaneseq
    %v6120 = vshrl.u32 %v6119, 7
    %v6121 = vsub.s32 %v6118, %v6120
    %v6122 = vrot.slane %v6114, %v6121
    %v6124 = vunpack.c.l.s4 1934713408
    %v6125 = vunpack.c.0.s8 %v6124
    %v6126 = vlaneseq
    %v6127 = vshrl.u32 %v6126, 7
    %v6128 = vsub.s32 %v6125, %v6127
    %v6129 = vrot.slane %v6115, %v6128
    %v6130 = vcombine.low %v6097, %v6113
    %v6131 = vcombine.high %v6097, %v6113
    %v6133 = vunpack.c.l.s4 1934713408
    %v6134 = vunpack.c.0.s8 %v6133
    %v6135 = vlaneseq
    %v6136 = vshrl.u32 %v6135, 7
    %v6137 = vsub.s32 %v6134, %v6136
    %v6138 = vrot.slane %v6130, %v6137
    %v6140 = vunpack.c.l.s4 1934713408
    %v6141 = vunpack.c.0.s8 %v6140
    %v6142 = vlaneseq
    %v6143 = vshrl.u32 %v6142, 7
    %v6144 = vsub.s32 %v6141, %v6143
    %v6145 = vrot.slane %v6131, %v6144
    %v6146 = vcombine.high %v6122, 0.0
    %v6147 = vcombine.high %v6129, 0.0
    %v6148 = vcombine.high %v6138, 0.0
    %v6149 = vcombine.high %v6145, 0.0
    %v6150 = vpack.c.bf16 %v6054, %v6054
    %v6151 = vpack.c.bf16 %v6078, %v6078
    %v6152 = vpack.c.bf16 %v6061, %v6061
    %v6153 = vpack.c.bf16 %v6079, %v6079
    %v6154 = vpack.c.bf16 %v6070, %v6070
    %v6155 = vpack.c.bf16 %v6080, %v6080
    %v6156 = vpack.c.bf16 %v6077, %v6077
    %v6157 = vpack.c.bf16 %v6081, %v6081
    %v6158 = vpack.c.bf16 %v6122, %v6122
    %v6159 = vpack.c.bf16 %v6146, %v6146
    %v6160 = vpack.c.bf16 %v6129, %v6129
    %v6161 = vpack.c.bf16 %v6147, %v6147
    %v6162 = vpack.c.bf16 %v6138, %v6138
    %v6163 = vpack.c.bf16 %v6148, %v6148
    %v6164 = vpack.c.bf16 %v6145, %v6145
    %v6165 = vpack.c.bf16 %v6149, %v6149
    %v6166 = vpack.c.bf16 %v5945, %v5943
    %v6167 = vpack.c.bf16 %v5949, %v5947
    %v6168 = vpack.c.bf16 %v5953, %v5951
    %v6169 = vpack.c.bf16 %v5957, %v5955
    %6170 = vxpose.xlu0.c.b16.start [1/8] %v6150, 128
    %6171 = vxpose.xlu0.c.b16.cont [2/8] 0, 128
    %6172 = vxpose.xlu0.c.b16.cont [3/8] 0, 128
    %6173 = vxpose.xlu0.c.b16.cont [4/8] 0, 128
    %6174 = vxpose.xlu0.c.b16.cont [5/8] 0, 128
    %6175 = vxpose.xlu0.c.b16.cont [6/8] 0, 128
    %6176 = vxpose.xlu0.c.b16.cont [7/8] 0, 128
    %6177 = vxpose.xlu0.c.b16.end [8/8] 0, 128
    %v6178 = vpop.trf.xlu0
    %v6179 = vpop.trf.xlu0
    %v6180 = vpop.trf.xlu0
    %v6181 = vpop.trf.xlu0
    %v6182 = vpop.trf.xlu0
    %v6183 = vpop.trf.xlu0
    %v6184 = vpop.trf.xlu0
    %v6185 = vpop.trf.xlu0
    %6186 = vxpose.xlu0.c.b16.start [1/8] %v6151, 128
    %6187 = vxpose.xlu0.c.b16.cont [2/8] 0, 128
    %6188 = vxpose.xlu0.c.b16.cont [3/8] 0, 128
    %6189 = vxpose.xlu0.c.b16.cont [4/8] 0, 128
    %6190 = vxpose.xlu0.c.b16.cont [5/8] 0, 128
    %6191 = vxpose.xlu0.c.b16.cont [6/8] 0, 128
    %6192 = vxpose.xlu0.c.b16.cont [7/8] 0, 128
    %6193 = vxpose.xlu0.c.b16.end [8/8] 0, 128
    %v6194 = vpop.trf.xlu0
    %v6195 = vpop.trf.xlu0
    %v6196 = vpop.trf.xlu0
    %v6197 = vpop.trf.xlu0
    %v6198 = vpop.trf.xlu0
    %v6199 = vpop.trf.xlu0
    %v6200 = vpop.trf.xlu0
    %v6201 = vpop.trf.xlu0
    %6202 = vxpose.xlu0.c.b16.start [1/8] %v6152, 128
    %6203 = vxpose.xlu0.c.b16.cont [2/8] 0, 128
    %6204 = vxpose.xlu0.c.b16.cont [3/8] 0, 128
    %6205 = vxpose.xlu0.c.b16.cont [4/8] 0, 128
    %6206 = vxpose.xlu0.c.b16.cont [5/8] 0, 128
    %6207 = vxpose.xlu0.c.b16.cont [6/8] 0, 128
    %6208 = vxpose.xlu0.c.b16.cont [7/8] 0, 128
    %6209 = vxpose.xlu0.c.b16.end [8/8] 0, 128
    %v6210 = vpop.trf.xlu0
    %v6211 = vpop.trf.xlu0
    %v6212 = vpop.trf.xlu0
    %v6213 = vpop.trf.xlu0
    %v6214 = vpop.trf.xlu0
    %v6215 = vpop.trf.xlu0
    %v6216 = vpop.trf.xlu0
    %v6217 = vpop.trf.xlu0
    %6218 = vxpose.xlu0.c.b16.start [1/8] %v6153, 128
    %6219 = vxpose.xlu0.c.b16.cont [2/8] 0, 128
    %6220 = vxpose.xlu0.c.b16.cont [3/8] 0, 128
    %6221 = vxpose.xlu0.c.b16.cont [4/8] 0, 128
    %6222 = vxpose.xlu0.c.b16.cont [5/8] 0, 128
    %6223 = vxpose.xlu0.c.b16.cont [6/8] 0, 128
    %6224 = vxpose.xlu0.c.b16.cont [7/8] 0, 128
    %6225 = vxpose.xlu0.c.b16.end [8/8] 0, 128
    %v6226 = vpop.trf.xlu0
    %v6227 = vpop.trf.xlu0
    %v6228 = vpop.trf.xlu0
    %v6229 = vpop.trf.xlu0
    %v6230 = vpop.trf.xlu0
    %v6231 = vpop.trf.xlu0
    %v6232 = vpop.trf.xlu0
    %v6233 = vpop.trf.xlu0
    %6234 = vxpose.xlu0.c.b16.start [1/8] %v6154, 128
    %6235 = vxpose.xlu0.c.b16.cont [2/8] 0, 128
    %6236 = vxpose.xlu0.c.b16.cont [3/8] 0, 128
    %6237 = vxpose.xlu0.c.b16.cont [4/8] 0, 128
    %6238 = vxpose.xlu0.c.b16.cont [5/8] 0, 128
    %6239 = vxpose.xlu0.c.b16.cont [6/8] 0, 128
    %6240 = vxpose.xlu0.c.b16.cont [7/8] 0, 128
    %6241 = vxpose.xlu0.c.b16.end [8/8] 0, 128
    %v6242 = vpop.trf.xlu0
    %v6243 = vpop.trf.xlu0
    %v6244 = vpop.trf.xlu0
    %v6245 = vpop.trf.xlu0
    %v6246 = vpop.trf.xlu0
    %v6247 = vpop.trf.xlu0
    %v6248 = vpop.trf.xlu0
    %v6249 = vpop.trf.xlu0
    %6250 = vxpose.xlu0.c.b16.start [1/8] %v6155, 128
    %6251 = vxpose.xlu0.c.b16.cont [2/8] 0, 128
    %6252 = vxpose.xlu0.c.b16.cont [3/8] 0, 128
    %6253 = vxpose.xlu0.c.b16.cont [4/8] 0, 128
    %6254 = vxpose.xlu0.c.b16.cont [5/8] 0, 128
    %6255 = vxpose.xlu0.c.b16.cont [6/8] 0, 128
    %6256 = vxpose.xlu0.c.b16.cont [7/8] 0, 128
    %6257 = vxpose.xlu0.c.b16.end [8/8] 0, 128
    %v6258 = vpop.trf.xlu0
    %v6259 = vpop.trf.xlu0
    %v6260 = vpop.trf.xlu0
    %v6261 = vpop.trf.xlu0
    %v6262 = vpop.trf.xlu0
    %v6263 = vpop.trf.xlu0
    %v6264 = vpop.trf.xlu0
    %v6265 = vpop.trf.xlu0
    %6266 = vxpose.xlu0.c.b16.start [1/8] %v6156, 128
    %6267 = vxpose.xlu0.c.b16.cont [2/8] 0, 128
    %6268 = vxpose.xlu0.c.b16.cont [3/8] 0, 128
    %6269 = vxpose.xlu0.c.b16.cont [4/8] 0, 128
    %6270 = vxpose.xlu0.c.b16.cont [5/8] 0, 128
    %6271 = vxpose.xlu0.c.b16.cont [6/8] 0, 128
    %6272 = vxpose.xlu0.c.b16.cont [7/8] 0, 128
    %6273 = vxpose.xlu0.c.b16.end [8/8] 0, 128
    %v6274 = vpop.trf.xlu0
    %v6275 = vpop.trf.xlu0
    %v6276 = vpop.trf.xlu0
    %v6277 = vpop.trf.xlu0
    %v6278 = vpop.trf.xlu0
    %v6279 = vpop.trf.xlu0
    %v6280 = vpop.trf.xlu0
    %v6281 = vpop.trf.xlu0
    %6282 = vxpose.xlu0.c.b16.start [1/8] %v6157, 128
    %6283 = vxpose.xlu0.c.b16.cont [2/8] 0, 128
    %6284 = vxpose.xlu0.c.b16.cont [3/8] 0, 128
    %6285 = vxpose.xlu0.c.b16.cont [4/8] 0, 128
    %6286 = vxpose.xlu0.c.b16.cont [5/8] 0, 128
    %6287 = vxpose.xlu0.c.b16.cont [6/8] 0, 128
    %6288 = vxpose.xlu0.c.b16.cont [7/8] 0, 128
    %6289 = vxpose.xlu0.c.b16.end [8/8] 0, 128
    %v6290 = vpop.trf.xlu0
    %v6291 = vpop.trf.xlu0
    %v6292 = vpop.trf.xlu0
    %v6293 = vpop.trf.xlu0
    %v6294 = vpop.trf.xlu0
    %v6295 = vpop.trf.xlu0
    %v6296 = vpop.trf.xlu0
    %v6297 = vpop.trf.xlu0
    %6298 = vxpose.xlu0.c.b16.start [1/8] %v6158, 128
    %6299 = vxpose.xlu0.c.b16.cont [2/8] 0, 128
    %6300 = vxpose.xlu0.c.b16.cont [3/8] 0, 128
    %6301 = vxpose.xlu0.c.b16.cont [4/8] 0, 128
    %6302 = vxpose.xlu0.c.b16.cont [5/8] 0, 128
    %6303 = vxpose.xlu0.c.b16.cont [6/8] 0, 128
    %6304 = vxpose.xlu0.c.b16.cont [7/8] 0, 128
    %6305 = vxpose.xlu0.c.b16.end [8/8] 0, 128
    %v6306 = vpop.trf.xlu0
    %v6307 = vpop.trf.xlu0
    %v6308 = vpop.trf.xlu0
    %v6309 = vpop.trf.xlu0
    %v6310 = vpop.trf.xlu0
    %v6311 = vpop.trf.xlu0
    %v6312 = vpop.trf.xlu0
    %v6313 = vpop.trf.xlu0
    %6314 = vxpose.xlu0.c.b16.start [1/8] %v6159, 128
    %6315 = vxpose.xlu0.c.b16.cont [2/8] 0, 128
    %6316 = vxpose.xlu0.c.b16.cont [3/8] 0, 128
    %6317 = vxpose.xlu0.c.b16.cont [4/8] 0, 128
    %6318 = vxpose.xlu0.c.b16.cont [5/8] 0, 128
    %6319 = vxpose.xlu0.c.b16.cont [6/8] 0, 128
    %6320 = vxpose.xlu0.c.b16.cont [7/8] 0, 128
    %6321 = vxpose.xlu0.c.b16.end [8/8] 0, 128
    %v6322 = vpop.trf.xlu0
    %v6323 = vpop.trf.xlu0
    %v6324 = vpop.trf.xlu0
    %v6325 = vpop.trf.xlu0
    %v6326 = vpop.trf.xlu0
    %v6327 = vpop.trf.xlu0
    %v6328 = vpop.trf.xlu0
    %v6329 = vpop.trf.xlu0
    %6330 = vxpose.xlu0.c.b16.start [1/8] %v6160, 128
    %6331 = vxpose.xlu0.c.b16.cont [2/8] 0, 128
    %6332 = vxpose.xlu0.c.b16.cont [3/8] 0, 128
    %6333 = vxpose.xlu0.c.b16.cont [4/8] 0, 128
    %6334 = vxpose.xlu0.c.b16.cont [5/8] 0, 128
    %6335 = vxpose.xlu0.c.b16.cont [6/8] 0, 128
    %6336 = vxpose.xlu0.c.b16.cont [7/8] 0, 128
    %6337 = vxpose.xlu0.c.b16.end [8/8] 0, 128
    %v6338 = vpop.trf.xlu0
    %v6339 = vpop.trf.xlu0
    %v6340 = vpop.trf.xlu0
    %v6341 = vpop.trf.xlu0
    %v6342 = vpop.trf.xlu0
    %v6343 = vpop.trf.xlu0
    %v6344 = vpop.trf.xlu0
    %v6345 = vpop.trf.xlu0
    %6346 = vxpose.xlu0.c.b16.start [1/8] %v6161, 128
    %6347 = vxpose.xlu0.c.b16.cont [2/8] 0, 128
    %6348 = vxpose.xlu0.c.b16.cont [3/8] 0, 128
    %6349 = vxpose.xlu0.c.b16.cont [4/8] 0, 128
    %6350 = vxpose.xlu0.c.b16.cont [5/8] 0, 128
    %6351 = vxpose.xlu0.c.b16.cont [6/8] 0, 128
    %6352 = vxpose.xlu0.c.b16.cont [7/8] 0, 128
    %6353 = vxpose.xlu0.c.b16.end [8/8] 0, 128
    %v6354 = vpop.trf.xlu0
    %v6355 = vpop.trf.xlu0
    %v6356 = vpop.trf.xlu0
    %v6357 = vpop.trf.xlu0
    %v6358 = vpop.trf.xlu0
    %v6359 = vpop.trf.xlu0
    %v6360 = vpop.trf.xlu0
    %v6361 = vpop.trf.xlu0
    %6362 = vxpose.xlu0.c.b16.start [1/8] %v6162, 128
    %6363 = vxpose.xlu0.c.b16.cont [2/8] 0, 128
    %6364 = vxpose.xlu0.c.b16.cont [3/8] 0, 128
    %6365 = vxpose.xlu0.c.b16.cont [4/8] 0, 128
    %6366 = vxpose.xlu0.c.b16.cont [5/8] 0, 128
    %6367 = vxpose.xlu0.c.b16.cont [6/8] 0, 128
    %6368 = vxpose.xlu0.c.b16.cont [7/8] 0, 128
    %6369 = vxpose.xlu0.c.b16.end [8/8] 0, 128
    %v6370 = vpop.trf.xlu0
    %v6371 = vpop.trf.xlu0
    %v6372 = vpop.trf.xlu0
    %v6373 = vpop.trf.xlu0
    %v6374 = vpop.trf.xlu0
    %v6375 = vpop.trf.xlu0
    %v6376 = vpop.trf.xlu0
    %v6377 = vpop.trf.xlu0
    %6378 = vxpose.xlu0.c.b16.start [1/8] %v6163, 128
    %6379 = vxpose.xlu0.c.b16.cont [2/8] 0, 128
    %6380 = vxpose.xlu0.c.b16.cont [3/8] 0, 128
    %6381 = vxpose.xlu0.c.b16.cont [4/8] 0, 128
    %6382 = vxpose.xlu0.c.b16.cont [5/8] 0, 128
    %6383 = vxpose.xlu0.c.b16.cont [6/8] 0, 128
    %6384 = vxpose.xlu0.c.b16.cont [7/8] 0, 128
    %6385 = vxpose.xlu0.c.b16.end [8/8] 0, 128
    %v6386 = vpop.trf.xlu0
    %v6387 = vpop.trf.xlu0
    %v6388 = vpop.trf.xlu0
    %v6389 = vpop.trf.xlu0
    %v6390 = vpop.trf.xlu0
    %v6391 = vpop.trf.xlu0
    %v6392 = vpop.trf.xlu0
    %v6393 = vpop.trf.xlu0
    %6394 = vxpose.xlu0.c.b16.start [1/8] %v6164, 128
    %6395 = vxpose.xlu0.c.b16.cont [2/8] 0, 128
    %6396 = vxpose.xlu0.c.b16.cont [3/8] 0, 128
    %6397 = vxpose.xlu0.c.b16.cont [4/8] 0, 128
    %6398 = vxpose.xlu0.c.b16.cont [5/8] 0, 128
    %6399 = vxpose.xlu0.c.b16.cont [6/8] 0, 128
    %6400 = vxpose.xlu0.c.b16.cont [7/8] 0, 128
    %6401 = vxpose.xlu0.c.b16.end [8/8] 0, 128
    %v6402 = vpop.trf.xlu0
    %v6403 = vpop.trf.xlu0
    %v6404 = vpop.trf.xlu0
    %v6405 = vpop.trf.xlu0
    %v6406 = vpop.trf.xlu0
    %v6407 = vpop.trf.xlu0
    %v6408 = vpop.trf.xlu0
    %v6409 = vpop.trf.xlu0
    %6410 = vxpose.xlu0.c.b16.start [1/8] %v6165, 128
    %6411 = vxpose.xlu0.c.b16.cont [2/8] 0, 128
    %6412 = vxpose.xlu0.c.b16.cont [3/8] 0, 128
    %6413 = vxpose.xlu0.c.b16.cont [4/8] 0, 128
    %6414 = vxpose.xlu0.c.b16.cont [5/8] 0, 128
    %6415 = vxpose.xlu0.c.b16.cont [6/8] 0, 128
    %6416 = vxpose.xlu0.c.b16.cont [7/8] 0, 128
    %6417 = vxpose.xlu0.c.b16.end [8/8] 0, 128
    %v6418 = vpop.trf.xlu0
    %v6419 = vpop.trf.xlu0
    %v6420 = vpop.trf.xlu0
    %v6421 = vpop.trf.xlu0
    %v6422 = vpop.trf.xlu0
    %v6423 = vpop.trf.xlu0
    %v6424 = vpop.trf.xlu0
    %v6425 = vpop.trf.xlu0
    %v6426 = vcombine.low %v6178, %v6242
    %v6428 = vunpack.c.l.s4 1983009808
    %v6429 = vunpack.c.0.s8 %v6428
    %v6430 = vlaneseq
    %v6431 = vshrl.u32 %v6430, 7
    %v6432 = vsub.s32 %v6429, %v6431
    %v6433 = vrot.slane %v6426, %v6432
    %v6434 = vcombine.low %v6210, %v6274
    %v6436 = vunpack.c.l.s4 1983009808
    %v6437 = vunpack.c.0.s8 %v6436
    %v6438 = vlaneseq
    %v6439 = vshrl.u32 %v6438, 7
    %v6440 = vsub.s32 %v6437, %v6439
    %v6441 = vrot.slane %v6434, %v6440
    %v6442 = vcombine.low %v6306, %v6370
    %v6444 = vunpack.c.l.s4 1983009808
    %v6445 = vunpack.c.0.s8 %v6444
    %v6446 = vlaneseq
    %v6447 = vshrl.u32 %v6446, 7
    %v6448 = vsub.s32 %v6445, %v6447
    %v6449 = vrot.slane %v6442, %v6448
    %v6450 = vcombine.low %v6338, %v6402
    %v6452 = vunpack.c.l.s4 1983009808
    %v6453 = vunpack.c.0.s8 %v6452
    %v6454 = vlaneseq
    %v6455 = vshrl.u32 %v6454, 7
    %v6456 = vsub.s32 %v6453, %v6455
    %v6457 = vrot.slane %v6450, %v6456
    %v6458 = vcombine.low %v6433, %v6441
    %v6459 = vcombine.high %v6433, %v6441
    %v6461 = vunpack.c.l.s4 1934713408
    %v6462 = vunpack.c.0.s8 %v6461
    %v6463 = vlaneseq
    %v6464 = vshrl.u32 %v6463, 7
    %v6465 = vsub.s32 %v6462, %v6464
    %v6466 = vrot.slane %v6458, %v6465
    %v6468 = vunpack.c.l.s4 1934713408
    %v6469 = vunpack.c.0.s8 %v6468
    %v6470 = vlaneseq
    %v6471 = vshrl.u32 %v6470, 7
    %v6472 = vsub.s32 %v6469, %v6471
    %v6473 = vrot.slane %v6459, %v6472
    %v6474 = vcombine.low %v6449, %v6457
    %v6475 = vcombine.high %v6449, %v6457
    %v6477 = vunpack.c.l.s4 1934713408
    %v6478 = vunpack.c.0.s8 %v6477
    %v6479 = vlaneseq
    %v6480 = vshrl.u32 %v6479, 7
    %v6481 = vsub.s32 %v6478, %v6480
    %v6482 = vrot.slane %v6474, %v6481
    %v6484 = vunpack.c.l.s4 1934713408
    %v6485 = vunpack.c.0.s8 %v6484
    %v6486 = vlaneseq
    %v6487 = vshrl.u32 %v6486, 7
    %v6488 = vsub.s32 %v6485, %v6487
    %v6489 = vrot.slane %v6475, %v6488
    %v6490 = vcombine.low %v6466, %v6482
    %v6491 = vcombine.high %v6466, %v6482
    %v6492 = vcombine.low %v6473, %v6489
    %v6493 = vcombine.high %v6473, %v6489
    %v6494 = vcombine.low %v6194, %v6258
    %v6496 = vunpack.c.l.s4 1983009808
    %v6497 = vunpack.c.0.s8 %v6496
    %v6498 = vlaneseq
    %v6499 = vshrl.u32 %v6498, 7
    %v6500 = vsub.s32 %v6497, %v6499
    %v6501 = vrot.slane %v6494, %v6500
    %v6502 = vcombine.low %v6226, %v6290
    %v6504 = vunpack.c.l.s4 1983009808
    %v6505 = vunpack.c.0.s8 %v6504
    %v6506 = vlaneseq
    %v6507 = vshrl.u32 %v6506, 7
    %v6508 = vsub.s32 %v6505, %v6507
    %v6509 = vrot.slane %v6502, %v6508
    %v6510 = vcombine.low %v6322, %v6386
    %v6512 = vunpack.c.l.s4 1983009808
    %v6513 = vunpack.c.0.s8 %v6512
    %v6514 = vlaneseq
    %v6515 = vshrl.u32 %v6514, 7
    %v6516 = vsub.s32 %v6513, %v6515
    %v6517 = vrot.slane %v6510, %v6516
    %v6518 = vcombine.low %v6354, %v6418
    %v6520 = vunpack.c.l.s4 1983009808
    %v6521 = vunpack.c.0.s8 %v6520
    %v6522 = vlaneseq
    %v6523 = vshrl.u32 %v6522, 7
    %v6524 = vsub.s32 %v6521, %v6523
    %v6525 = vrot.slane %v6518, %v6524
    %v6526 = vcombine.low %v6501, %v6509
    %v6527 = vcombine.high %v6501, %v6509
    %v6529 = vunpack.c.l.s4 1934713408
    %v6530 = vunpack.c.0.s8 %v6529
    %v6531 = vlaneseq
    %v6532 = vshrl.u32 %v6531, 7
    %v6533 = vsub.s32 %v6530, %v6532
    %v6534 = vrot.slane %v6526, %v6533
    %v6536 = vunpack.c.l.s4 1934713408
    %v6537 = vunpack.c.0.s8 %v6536
    %v6538 = vlaneseq
    %v6539 = vshrl.u32 %v6538, 7
    %v6540 = vsub.s32 %v6537, %v6539
    %v6541 = vrot.slane %v6527, %v6540
    %v6542 = vcombine.low %v6517, %v6525
    %v6543 = vcombine.high %v6517, %v6525
    %v6545 = vunpack.c.l.s4 1934713408
    %v6546 = vunpack.c.0.s8 %v6545
    %v6547 = vlaneseq
    %v6548 = vshrl.u32 %v6547, 7
    %v6549 = vsub.s32 %v6546, %v6548
    %v6550 = vrot.slane %v6542, %v6549
    %v6552 = vunpack.c.l.s4 1934713408
    %v6553 = vunpack.c.0.s8 %v6552
    %v6554 = vlaneseq
    %v6555 = vshrl.u32 %v6554, 7
    %v6556 = vsub.s32 %v6553, %v6555
    %v6557 = vrot.slane %v6543, %v6556
    %v6558 = vcombine.low %v6534, %v6550
    %v6559 = vcombine.high %v6534, %v6550
    %v6560 = vcombine.low %v6541, %v6557
    %v6561 = vcombine.high %v6541, %v6557
    %v6564 = vpack.i.b16 %v6558, %v6490
    %v6566 = vshrl.u32 %v6490, 16
    %v6567 = vshrl.u32 %v6558, 16
    %v6568 = vpack.i.b16 %v6567, %v6566
    %v6572 = vpack.i.b16 %v6559, %v6491
    %v6574 = vshrl.u32 %v6491, 16
    %v6575 = vshrl.u32 %v6559, 16
    %v6576 = vpack.i.b16 %v6575, %v6574
    %v6580 = vpack.i.b16 %v6560, %v6492
    %v6582 = vshrl.u32 %v6492, 16
    %v6583 = vshrl.u32 %v6560, 16
    %v6584 = vpack.i.b16 %v6583, %v6582
    %v6588 = vpack.i.b16 %v6561, %v6493
    %v6590 = vshrl.u32 %v6493, 16
    %v6591 = vshrl.u32 %v6561, 16
    %v6592 = vpack.i.b16 %v6591, %v6590
    %6594 = vxpose.xlu0.c.b16.start [1/8] %v6564, 128
    %6595 = vxpose.xlu0.c.b16.cont [2/8] 0, 128
    %6596 = vxpose.xlu0.c.b16.cont [3/8] 0, 128
    %6597 = vxpose.xlu0.c.b16.cont [4/8] 0, 128
    %6598 = vxpose.xlu0.c.b16.cont [5/8] 0, 128
    %6599 = vxpose.xlu0.c.b16.cont [6/8] 0, 128
    %6600 = vxpose.xlu0.c.b16.cont [7/8] 0, 128
    %6601 = vxpose.xlu0.c.b16.end [8/8] 0, 128
    %v6602 = vpop.trf.xlu0
    %v6603 = vpop.trf.xlu0
    %v6604 = vpop.trf.xlu0
    %v6605 = vpop.trf.xlu0
    %v6606 = vpop.trf.xlu0
    %v6607 = vpop.trf.xlu0
    %v6608 = vpop.trf.xlu0
    %v6609 = vpop.trf.xlu0
    %6610 = vxpose.xlu0.c.b16.start [1/8] %v6568, 128
    %6611 = vxpose.xlu0.c.b16.cont [2/8] 0, 128
    %6612 = vxpose.xlu0.c.b16.cont [3/8] 0, 128
    %6613 = vxpose.xlu0.c.b16.cont [4/8] 0, 128
    %6614 = vxpose.xlu0.c.b16.cont [5/8] 0, 128
    %6615 = vxpose.xlu0.c.b16.cont [6/8] 0, 128
    %6616 = vxpose.xlu0.c.b16.cont [7/8] 0, 128
    %6617 = vxpose.xlu0.c.b16.end [8/8] 0, 128
    %v6618 = vpop.trf.xlu0
    %v6619 = vpop.trf.xlu0
    %v6620 = vpop.trf.xlu0
    %v6621 = vpop.trf.xlu0
    %v6622 = vpop.trf.xlu0
    %v6623 = vpop.trf.xlu0
    %v6624 = vpop.trf.xlu0
    %v6625 = vpop.trf.xlu0
    %6626 = vxpose.xlu0.c.b16.start [1/8] %v6572, 128
    %6627 = vxpose.xlu0.c.b16.cont [2/8] 0, 128
    %6628 = vxpose.xlu0.c.b16.cont [3/8] 0, 128
    %6629 = vxpose.xlu0.c.b16.cont [4/8] 0, 128
    %6630 = vxpose.xlu0.c.b16.cont [5/8] 0, 128
    %6631 = vxpose.xlu0.c.b16.cont [6/8] 0, 128
    %6632 = vxpose.xlu0.c.b16.cont [7/8] 0, 128
    %6633 = vxpose.xlu0.c.b16.end [8/8] 0, 128
    %v6634 = vpop.trf.xlu0
    %v6635 = vpop.trf.xlu0
    %v6636 = vpop.trf.xlu0
    %v6637 = vpop.trf.xlu0
    %v6638 = vpop.trf.xlu0
    %v6639 = vpop.trf.xlu0
    %v6640 = vpop.trf.xlu0
    %v6641 = vpop.trf.xlu0
    %6642 = vxpose.xlu0.c.b16.start [1/8] %v6576, 128
    %6643 = vxpose.xlu0.c.b16.cont [2/8] 0, 128
    %6644 = vxpose.xlu0.c.b16.cont [3/8] 0, 128
    %6645 = vxpose.xlu0.c.b16.cont [4/8] 0, 128
    %6646 = vxpose.xlu0.c.b16.cont [5/8] 0, 128
    %6647 = vxpose.xlu0.c.b16.cont [6/8] 0, 128
    %6648 = vxpose.xlu0.c.b16.cont [7/8] 0, 128
    %6649 = vxpose.xlu0.c.b16.end [8/8] 0, 128
    %v6650 = vpop.trf.xlu0
    %v6651 = vpop.trf.xlu0
    %v6652 = vpop.trf.xlu0
    %v6653 = vpop.trf.xlu0
    %v6654 = vpop.trf.xlu0
    %v6655 = vpop.trf.xlu0
    %v6656 = vpop.trf.xlu0
    %v6657 = vpop.trf.xlu0
    %6658 = vxpose.xlu0.c.b16.start [1/8] %v6580, 128
    %6659 = vxpose.xlu0.c.b16.cont [2/8] 0, 128
    %6660 = vxpose.xlu0.c.b16.cont [3/8] 0, 128
    %6661 = vxpose.xlu0.c.b16.cont [4/8] 0, 128
    %6662 = vxpose.xlu0.c.b16.cont [5/8] 0, 128
    %6663 = vxpose.xlu0.c.b16.cont [6/8] 0, 128
    %6664 = vxpose.xlu0.c.b16.cont [7/8] 0, 128
    %6665 = vxpose.xlu0.c.b16.end [8/8] 0, 128
    %v6666 = vpop.trf.xlu0
    %v6667 = vpop.trf.xlu0
    %v6668 = vpop.trf.xlu0
    %v6669 = vpop.trf.xlu0
    %v6670 = vpop.trf.xlu0
    %v6671 = vpop.trf.xlu0
    %v6672 = vpop.trf.xlu0
    %v6673 = vpop.trf.xlu0
    %6674 = vxpose.xlu0.c.b16.start [1/8] %v6584, 128
    %6675 = vxpose.xlu0.c.b16.cont [2/8] 0, 128
    %6676 = vxpose.xlu0.c.b16.cont [3/8] 0, 128
    %6677 = vxpose.xlu0.c.b16.cont [4/8] 0, 128
    %6678 = vxpose.xlu0.c.b16.cont [5/8] 0, 128
    %6679 = vxpose.xlu0.c.b16.cont [6/8] 0, 128
    %6680 = vxpose.xlu0.c.b16.cont [7/8] 0, 128
    %6681 = vxpose.xlu0.c.b16.end [8/8] 0, 128
    %v6682 = vpop.trf.xlu0
    %v6683 = vpop.trf.xlu0
    %v6684 = vpop.trf.xlu0
    %v6685 = vpop.trf.xlu0
    %v6686 = vpop.trf.xlu0
    %v6687 = vpop.trf.xlu0
    %v6688 = vpop.trf.xlu0
    %v6689 = vpop.trf.xlu0
    %6690 = vxpose.xlu0.c.b16.start [1/8] %v6588, 128
    %6691 = vxpose.xlu0.c.b16.cont [2/8] 0, 128
    %6692 = vxpose.xlu0.c.b16.cont [3/8] 0, 128
    %6693 = vxpose.xlu0.c.b16.cont [4/8] 0, 128
    %6694 = vxpose.xlu0.c.b16.cont [5/8] 0, 128
    %6695 = vxpose.xlu0.c.b16.cont [6/8] 0, 128
    %6696 = vxpose.xlu0.c.b16.cont [7/8] 0, 128
    %6697 = vxpose.xlu0.c.b16.end [8/8] 0, 128
    %v6698 = vpop.trf.xlu0
    %v6699 = vpop.trf.xlu0
    %v6700 = vpop.trf.xlu0
    %v6701 = vpop.trf.xlu0
    %v6702 = vpop.trf.xlu0
    %v6703 = vpop.trf.xlu0
    %v6704 = vpop.trf.xlu0
    %v6705 = vpop.trf.xlu0
    %6706 = vxpose.xlu0.c.b16.start [1/8] %v6592, 128
    %6707 = vxpose.xlu0.c.b16.cont [2/8] 0, 128
    %6708 = vxpose.xlu0.c.b16.cont [3/8] 0, 128
    %6709 = vxpose.xlu0.c.b16.cont [4/8] 0, 128
    %6710 = vxpose.xlu0.c.b16.cont [5/8] 0, 128
    %6711 = vxpose.xlu0.c.b16.cont [6/8] 0, 128
    %6712 = vxpose.xlu0.c.b16.cont [7/8] 0, 128
    %6713 = vxpose.xlu0.c.b16.end [8/8] 0, 128
    %v6714 = vpop.trf.xlu0
    %v6715 = vpop.trf.xlu0
    %v6716 = vpop.trf.xlu0
    %v6717 = vpop.trf.xlu0
    %v6718 = vpop.trf.xlu0
    %v6719 = vpop.trf.xlu0
    %v6720 = vpop.trf.xlu0
    %v6721 = vpop.trf.xlu0
    %v6722 = vcombine.low %v6602, %v6666
    %v6724 = vunpack.c.l.s4 1983009808
    %v6725 = vunpack.c.0.s8 %v6724
    %v6726 = vlaneseq
    %v6727 = vshrl.u32 %v6726, 7
    %v6728 = vsub.s32 %v6725, %v6727
    %v6729 = vrot.slane %v6722, %v6728
    %v6730 = vcombine.low %v6634, %v6698
    %v6732 = vunpack.c.l.s4 1983009808
    %v6733 = vunpack.c.0.s8 %v6732
    %v6734 = vlaneseq
    %v6735 = vshrl.u32 %v6734, 7
    %v6736 = vsub.s32 %v6733, %v6735
    %v6737 = vrot.slane %v6730, %v6736
    %v6738 = vcombine.low %v6729, %v6737
    %v6740 = vunpack.c.l.s4 1934713408
    %v6741 = vunpack.c.0.s8 %v6740
    %v6742 = vlaneseq
    %v6743 = vshrl.u32 %v6742, 7
    %v6744 = vsub.s32 %v6741, %v6743
    %v6745 = vrot.slane %v6738, %v6744
    %v6746 = vcombine.high %v6745, 0
    %v6747 = vcombine.low %v6618, %v6682
    %v6749 = vunpack.c.l.s4 1983009808
    %v6750 = vunpack.c.0.s8 %v6749
    %v6751 = vlaneseq
    %v6752 = vshrl.u32 %v6751, 7
    %v6753 = vsub.s32 %v6750, %v6752
    %v6754 = vrot.slane %v6747, %v6753
    %v6755 = vcombine.low %v6650, %v6714
    %v6757 = vunpack.c.l.s4 1983009808
    %v6758 = vunpack.c.0.s8 %v6757
    %v6759 = vlaneseq
    %v6760 = vshrl.u32 %v6759, 7
    %v6761 = vsub.s32 %v6758, %v6760
    %v6762 = vrot.slane %v6755, %v6761
    %v6763 = vcombine.low %v6754, %v6762
    %v6765 = vunpack.c.l.s4 1934713408
    %v6766 = vunpack.c.0.s8 %v6765
    %v6767 = vlaneseq
    %v6768 = vshrl.u32 %v6767, 7
    %v6769 = vsub.s32 %v6766, %v6768
    %v6770 = vrot.slane %v6763, %v6769
    %v6771 = vcombine.high %v6770, 0
    %v6774 = vpack.i.b16 %v6770, %v6745
    %v6775 = vshrl.u32 %v6745, 16
    %v6776 = vshrl.u32 %v6770, 16
    %v6777 = vpack.i.b16 %v6776, %v6775
    %v6780 = vpack.i.b16 %v6771, %v6746
    %v6781 = vshrl.u32 %v6746, 16
    %v6782 = vshrl.u32 %v6771, 16
    %v6783 = vpack.i.b16 %v6782, %v6781
    %v6785 = vsel %vm217, %v6774, 0
    %v6788 = vsel %vm217, %v6166, 0
    %6790 = vmatprep.subr.bf16.mxu0 0
    %6791 = vmatpush1.bf16.xpose.msra.mxu0 0
    %6792 = vmatprep.subr.bf16.mxu0 0
    %6793 = vmatpush1.bf16.xpose.msra.mxu0 0
    %6794 = vmatprep.subr.bf16.mxu0 0
    %6795 = vmatpush1.bf16.xpose.msra.mxu0 0
    %6796 = vmatprep.subr.bf16.mxu0 0
    %6797 = vmatpush1.bf16.xpose.msra.mxu0 0
    %6798 = vmatprep.subr.bf16.mxu0 0
    %6799 = vmatpush1.bf16.xpose.msra.mxu0 0
    %6800 = vmatprep.subr.bf16.mxu0 0
    %6801 = vmatpush1.bf16.xpose.msra.mxu0 0
    %6802 = vmatprep.subr.bf16.mxu0 0
    %6803 = vmatpush1.bf16.xpose.msra.mxu0 0
    %6804 = vmatprep.subr.bf16.mxu0 0
    %6805 = vmatpush1.bf16.xpose.msra.mxu0 %v6788
    %6806 = vmatprep.subr.bf16.mxu0 0
    %6807 = vmatpush2.bf16.xpose.msra.mxu0 0
    %6808 = vmatprep.subr.bf16.mxu0 0
    %6809 = vmatpush2.bf16.xpose.msra.mxu0 0
    %6810 = vmatprep.subr.bf16.mxu0 0
    %6811 = vmatpush2.bf16.xpose.msra.mxu0 0
    %6812 = vmatprep.subr.bf16.mxu0 0
    %6813 = vmatpush2.bf16.xpose.msra.mxu0 0
    %6814 = vmatprep.subr.bf16.mxu0 0
    %6815 = vmatpush2.bf16.xpose.msra.mxu0 0
    %6816 = vmatprep.subr.bf16.mxu0 0
    %6817 = vmatpush2.bf16.xpose.msra.mxu0 0
    %6818 = vmatprep.subr.bf16.mxu0 0
    %6819 = vmatpush2.bf16.xpose.msra.mxu0 0
    %6820 = vmatprep.subr.bf16.mxu0 0
    %6821 = vmatpush2.bf16.xpose.msra.mxu0 0
    %6822 = vmatprep.mubr.bf16.mxu0 0
    %6823 = vmatmul.mubr.bf16.gmra.mxu0 %v6785
    %v6824 = vpop.f32.mrf.mxu0
    %v6825 = vadd.f32 0.0, %v6824
    %v6826 = vpop.f32.mrf.mxu0
    %v6827 = vpop.f32.mrf.mxu0
    %v6828 = vpop.f32.mrf.mxu0
    %6829 = vdwg.mxu0
    %v6831 = vsel %vm217, %v6777, 0
    %v6834 = vsel %vm217, %v6167, 0
    %6836 = vmatprep.subr.bf16.mxu0 0
    %6837 = vmatpush1.bf16.xpose.msra.mxu0 0
    %6838 = vmatprep.subr.bf16.mxu0 0
    %6839 = vmatpush1.bf16.xpose.msra.mxu0 0
    %6840 = vmatprep.subr.bf16.mxu0 0
    %6841 = vmatpush1.bf16.xpose.msra.mxu0 0
    %6842 = vmatprep.subr.bf16.mxu0 0
    %6843 = vmatpush1.bf16.xpose.msra.mxu0 0
    %6844 = vmatprep.subr.bf16.mxu0 0
    %6845 = vmatpush1.bf16.xpose.msra.mxu0 0
    %6846 = vmatprep.subr.bf16.mxu0 0
    %6847 = vmatpush1.bf16.xpose.msra.mxu0 0
    %6848 = vmatprep.subr.bf16.mxu0 0
    %6849 = vmatpush1.bf16.xpose.msra.mxu0 0
    %6850 = vmatprep.subr.bf16.mxu0 0
    %6851 = vmatpush1.bf16.xpose.msra.mxu0 %v6834
    %6852 = vmatprep.subr.bf16.mxu0 0
    %6853 = vmatpush2.bf16.xpose.msra.mxu0 0
    %6854 = vmatprep.subr.bf16.mxu0 0
    %6855 = vmatpush2.bf16.xpose.msra.mxu0 0
    %6856 = vmatprep.subr.bf16.mxu0 0
    %6857 = vmatpush2.bf16.xpose.msra.mxu0 0
    %6858 = vmatprep.subr.bf16.mxu0 0
    %6859 = vmatpush2.bf16.xpose.msra.mxu0 0
    %6860 = vmatprep.subr.bf16.mxu0 0
    %6861 = vmatpush2.bf16.xpose.msra.mxu0 0
    %6862 = vmatprep.subr.bf16.mxu0 0
    %6863 = vmatpush2.bf16.xpose.msra.mxu0 0
    %6864 = vmatprep.subr.bf16.mxu0 0
    %6865 = vmatpush2.bf16.xpose.msra.mxu0 0
    %6866 = vmatprep.subr.bf16.mxu0 0
    %6867 = vmatpush2.bf16.xpose.msra.mxu0 0
    %6868 = vmatprep.mubr.bf16.mxu0 0
    %6869 = vmatmul.mubr.bf16.gmra.mxu0 %v6831
    %v6870 = vpop.f32.mrf.mxu0
    %v6871 = vadd.f32 0.0, %v6870
    %v6872 = vpop.f32.mrf.mxu0
    %v6873 = vpop.f32.mrf.mxu0
    %v6874 = vpop.f32.mrf.mxu0
    %6875 = vdwg.mxu0
    %v6877 = vsel %vm217, %v6780, 0
    %v6880 = vsel %vm217, %v6168, 0
    %6882 = vmatprep.subr.bf16.mxu0 0
    %6883 = vmatpush1.bf16.xpose.msra.mxu0 0
    %6884 = vmatprep.subr.bf16.mxu0 0
    %6885 = vmatpush1.bf16.xpose.msra.mxu0 0
    %6886 = vmatprep.subr.bf16.mxu0 0
    %6887 = vmatpush1.bf16.xpose.msra.mxu0 0
    %6888 = vmatprep.subr.bf16.mxu0 0
    %6889 = vmatpush1.bf16.xpose.msra.mxu0 0
    %6890 = vmatprep.subr.bf16.mxu0 0
    %6891 = vmatpush1.bf16.xpose.msra.mxu0 0
    %6892 = vmatprep.subr.bf16.mxu0 0
    %6893 = vmatpush1.bf16.xpose.msra.mxu0 0
    %6894 = vmatprep.subr.bf16.mxu0 0
    %6895 = vmatpush1.bf16.xpose.msra.mxu0 0
    %6896 = vmatprep.subr.bf16.mxu0 0
    %6897 = vmatpush1.bf16.xpose.msra.mxu0 %v6880
    %6898 = vmatprep.subr.bf16.mxu0 0
    %6899 = vmatpush2.bf16.xpose.msra.mxu0 0
    %6900 = vmatprep.subr.bf16.mxu0 0
    %6901 = vmatpush2.bf16.xpose.msra.mxu0 0
    %6902 = vmatprep.subr.bf16.mxu0 0
    %6903 = vmatpush2.bf16.xpose.msra.mxu0 0
    %6904 = vmatprep.subr.bf16.mxu0 0
    %6905 = vmatpush2.bf16.xpose.msra.mxu0 0
    %6906 = vmatprep.subr.bf16.mxu0 0
    %6907 = vmatpush2.bf16.xpose.msra.mxu0 0
    %6908 = vmatprep.subr.bf16.mxu0 0
    %6909 = vmatpush2.bf16.xpose.msra.mxu0 0
    %6910 = vmatprep.subr.bf16.mxu0 0
    %6911 = vmatpush2.bf16.xpose.msra.mxu0 0
    %6912 = vmatprep.subr.bf16.mxu0 0
    %6913 = vmatpush2.bf16.xpose.msra.mxu0 0
    %6914 = vmatprep.mubr.bf16.mxu0 0
    %6915 = vmatmul.mubr.bf16.gmra.mxu0 %v6877
    %v6916 = vpop.f32.mrf.mxu0
    %v6917 = vadd.f32 0.0, %v6916
    %v6918 = vpop.f32.mrf.mxu0
    %v6919 = vpop.f32.mrf.mxu0
    %v6920 = vpop.f32.mrf.mxu0
    %6921 = vdwg.mxu0
    %v6923 = vsel %vm217, %v6783, 0
    %v6926 = vsel %vm217, %v6169, 0
    %6928 = vmatprep.subr.bf16.mxu0 0
    %6929 = vmatpush1.bf16.xpose.msra.mxu0 0
    %6930 = vmatprep.subr.bf16.mxu0 0
    %6931 = vmatpush1.bf16.xpose.msra.mxu0 0
    %6932 = vmatprep.subr.bf16.mxu0 0
    %6933 = vmatpush1.bf16.xpose.msra.mxu0 0
    %6934 = vmatprep.subr.bf16.mxu0 0
    %6935 = vmatpush1.bf16.xpose.msra.mxu0 0
    %6936 = vmatprep.subr.bf16.mxu0 0
    %6937 = vmatpush1.bf16.xpose.msra.mxu0 0
    %6938 = vmatprep.subr.bf16.mxu0 0
    %6939 = vmatpush1.bf16.xpose.msra.mxu0 0
    %6940 = vmatprep.subr.bf16.mxu0 0
    %6941 = vmatpush1.bf16.xpose.msra.mxu0 0
    %6942 = vmatprep.subr.bf16.mxu0 0
    %6943 = vmatpush1.bf16.xpose.msra.mxu0 %v6926
    %6944 = vmatprep.subr.bf16.mxu0 0
    %6945 = vmatpush2.bf16.xpose.msra.mxu0 0
    %6946 = vmatprep.subr.bf16.mxu0 0
    %6947 = vmatpush2.bf16.xpose.msra.mxu0 0
    %6948 = vmatprep.subr.bf16.mxu0 0
    %6949 = vmatpush2.bf16.xpose.msra.mxu0 0
    %6950 = vmatprep.subr.bf16.mxu0 0
    %6951 = vmatpush2.bf16.xpose.msra.mxu0 0
    %6952 = vmatprep.subr.bf16.mxu0 0
    %6953 = vmatpush2.bf16.xpose.msra.mxu0 0
    %6954 = vmatprep.subr.bf16.mxu0 0
    %6955 = vmatpush2.bf16.xpose.msra.mxu0 0
    %6956 = vmatprep.subr.bf16.mxu0 0
    %6957 = vmatpush2.bf16.xpose.msra.mxu0 0
    %6958 = vmatprep.subr.bf16.mxu0 0
    %6959 = vmatpush2.bf16.xpose.msra.mxu0 0
    %6960 = vmatprep.mubr.bf16.mxu0 0
    %6961 = vmatmul.mubr.bf16.gmra.mxu0 %v6923
    %v6962 = vpop.f32.mrf.mxu0
    %v6963 = vadd.f32 0.0, %v6962
    %v6964 = vpop.f32.mrf.mxu0
    %v6965 = vpop.f32.mrf.mxu0
    %v6966 = vpop.f32.mrf.mxu0
    %6967 = vdwg.mxu0
    %6968 = vxpose.xlu0.b32.start [1/16] %v6825, 128
    %6969 = vxpose.xlu0.b32.cont [2/16] 0.0, 128
    %6970 = vxpose.xlu0.b32.cont [3/16] 0.0, 128
    %6971 = vxpose.xlu0.b32.cont [4/16] 0.0, 128
    %6972 = vxpose.xlu0.b32.cont [5/16] 0.0, 128
    %6973 = vxpose.xlu0.b32.cont [6/16] 0.0, 128
    %6974 = vxpose.xlu0.b32.cont [7/16] 0.0, 128
    %6975 = vxpose.xlu0.b32.cont [8/16] 0.0, 128
    %6976 = vxpose.xlu0.b32.cont [9/16] 0.0, 128
    %6977 = vxpose.xlu0.b32.cont [10/16] 0.0, 128
    %6978 = vxpose.xlu0.b32.cont [11/16] 0.0, 128
    %6979 = vxpose.xlu0.b32.cont [12/16] 0.0, 128
    %6980 = vxpose.xlu0.b32.cont [13/16] 0.0, 128
    %6981 = vxpose.xlu0.b32.cont [14/16] 0.0, 128
    %6982 = vxpose.xlu0.b32.cont [15/16] 0.0, 128
    %6983 = vxpose.xlu0.b32.end [16/16] 0.0, 128
    %v6984 = vpop.trf.xlu0
    %v6985 = vpop.trf.xlu0
    %v6986 = vpop.trf.xlu0
    %v6987 = vpop.trf.xlu0
    %v6988 = vpop.trf.xlu0
    %v6989 = vpop.trf.xlu0
    %v6990 = vpop.trf.xlu0
    %v6991 = vpop.trf.xlu0
    %v6992 = vpop.trf.xlu0
    %v6993 = vpop.trf.xlu0
    %v6994 = vpop.trf.xlu0
    %v6995 = vpop.trf.xlu0
    %v6996 = vpop.trf.xlu0
    %v6997 = vpop.trf.xlu0
    %v6998 = vpop.trf.xlu0
    %v6999 = vpop.trf.xlu0
    %7000 = vxpose.xlu0.b32.start [1/16] %v6871, 128
    %7001 = vxpose.xlu0.b32.cont [2/16] 0.0, 128
    %7002 = vxpose.xlu0.b32.cont [3/16] 0.0, 128
    %7003 = vxpose.xlu0.b32.cont [4/16] 0.0, 128
    %7004 = vxpose.xlu0.b32.cont [5/16] 0.0, 128
    %7005 = vxpose.xlu0.b32.cont [6/16] 0.0, 128
    %7006 = vxpose.xlu0.b32.cont [7/16] 0.0, 128
    %7007 = vxpose.xlu0.b32.cont [8/16] 0.0, 128
    %7008 = vxpose.xlu0.b32.cont [9/16] 0.0, 128
    %7009 = vxpose.xlu0.b32.cont [10/16] 0.0, 128
    %7010 = vxpose.xlu0.b32.cont [11/16] 0.0, 128
    %7011 = vxpose.xlu0.b32.cont [12/16] 0.0, 128
    %7012 = vxpose.xlu0.b32.cont [13/16] 0.0, 128
    %7013 = vxpose.xlu0.b32.cont [14/16] 0.0, 128
    %7014 = vxpose.xlu0.b32.cont [15/16] 0.0, 128
    %7015 = vxpose.xlu0.b32.end [16/16] 0.0, 128
    %v7016 = vpop.trf.xlu0
    %v7017 = vpop.trf.xlu0
    %v7018 = vpop.trf.xlu0
    %v7019 = vpop.trf.xlu0
    %v7020 = vpop.trf.xlu0
    %v7021 = vpop.trf.xlu0
    %v7022 = vpop.trf.xlu0
    %v7023 = vpop.trf.xlu0
    %v7024 = vpop.trf.xlu0
    %v7025 = vpop.trf.xlu0
    %v7026 = vpop.trf.xlu0
    %v7027 = vpop.trf.xlu0
    %v7028 = vpop.trf.xlu0
    %v7029 = vpop.trf.xlu0
    %v7030 = vpop.trf.xlu0
    %v7031 = vpop.trf.xlu0
    %7032 = vxpose.xlu0.b32.start [1/16] %v6917, 128
    %7033 = vxpose.xlu0.b32.cont [2/16] 0.0, 128
    %7034 = vxpose.xlu0.b32.cont [3/16] 0.0, 128
    %7035 = vxpose.xlu0.b32.cont [4/16] 0.0, 128
    %7036 = vxpose.xlu0.b32.cont [5/16] 0.0, 128
    %7037 = vxpose.xlu0.b32.cont [6/16] 0.0, 128
    %7038 = vxpose.xlu0.b32.cont [7/16] 0.0, 128
    %7039 = vxpose.xlu0.b32.cont [8/16] 0.0, 128
    %7040 = vxpose.xlu0.b32.cont [9/16] 0.0, 128
    %7041 = vxpose.xlu0.b32.cont [10/16] 0.0, 128
    %7042 = vxpose.xlu0.b32.cont [11/16] 0.0, 128
    %7043 = vxpose.xlu0.b32.cont [12/16] 0.0, 128
    %7044 = vxpose.xlu0.b32.cont [13/16] 0.0, 128
    %7045 = vxpose.xlu0.b32.cont [14/16] 0.0, 128
    %7046 = vxpose.xlu0.b32.cont [15/16] 0.0, 128
    %7047 = vxpose.xlu0.b32.end [16/16] 0.0, 128
    %v7048 = vpop.trf.xlu0
    %v7049 = vpop.trf.xlu0
    %v7050 = vpop.trf.xlu0
    %v7051 = vpop.trf.xlu0
    %v7052 = vpop.trf.xlu0
    %v7053 = vpop.trf.xlu0
    %v7054 = vpop.trf.xlu0
    %v7055 = vpop.trf.xlu0
    %v7056 = vpop.trf.xlu0
    %v7057 = vpop.trf.xlu0
    %v7058 = vpop.trf.xlu0
    %v7059 = vpop.trf.xlu0
    %v7060 = vpop.trf.xlu0
    %v7061 = vpop.trf.xlu0
    %v7062 = vpop.trf.xlu0
    %v7063 = vpop.trf.xlu0
    %7064 = vxpose.xlu0.b32.start [1/16] %v6963, 128
    %7065 = vxpose.xlu0.b32.cont [2/16] 0.0, 128
    %7066 = vxpose.xlu0.b32.cont [3/16] 0.0, 128
    %7067 = vxpose.xlu0.b32.cont [4/16] 0.0, 128
    %7068 = vxpose.xlu0.b32.cont [5/16] 0.0, 128
    %7069 = vxpose.xlu0.b32.cont [6/16] 0.0, 128
    %7070 = vxpose.xlu0.b32.cont [7/16] 0.0, 128
    %7071 = vxpose.xlu0.b32.cont [8/16] 0.0, 128
    %7072 = vxpose.xlu0.b32.cont [9/16] 0.0, 128
    %7073 = vxpose.xlu0.b32.cont [10/16] 0.0, 128
    %7074 = vxpose.xlu0.b32.cont [11/16] 0.0, 128
    %7075 = vxpose.xlu0.b32.cont [12/16] 0.0, 128
    %7076 = vxpose.xlu0.b32.cont [13/16] 0.0, 128
    %7077 = vxpose.xlu0.b32.cont [14/16] 0.0, 128
    %7078 = vxpose.xlu0.b32.cont [15/16] 0.0, 128
    %7079 = vxpose.xlu0.b32.end [16/16] 0.0, 128
    %v7080 = vpop.trf.xlu0
    %v7081 = vpop.trf.xlu0
    %v7082 = vpop.trf.xlu0
    %v7083 = vpop.trf.xlu0
    %v7084 = vpop.trf.xlu0
    %v7085 = vpop.trf.xlu0
    %v7086 = vpop.trf.xlu0
    %v7087 = vpop.trf.xlu0
    %v7088 = vpop.trf.xlu0
    %v7089 = vpop.trf.xlu0
    %v7090 = vpop.trf.xlu0
    %v7091 = vpop.trf.xlu0
    %v7092 = vpop.trf.xlu0
    %v7093 = vpop.trf.xlu0
    %v7094 = vpop.trf.xlu0
    %v7095 = vpop.trf.xlu0
    %v7096 = vcombine.low %v6984, %v7048
    %v7097 = vcombine.high %v6984, %v7048
    %v7099 = vunpack.c.l.s4 1983009808
    %v7100 = vunpack.c.0.s8 %v7099
    %v7101 = vlaneseq
    %v7102 = vshrl.u32 %v7101, 7
    %v7103 = vsub.s32 %v7100, %v7102
    %v7104 = vrot.slane %v7096, %v7103
    %v7106 = vunpack.c.l.s4 1983009808
    %v7107 = vunpack.c.0.s8 %v7106
    %v7108 = vlaneseq
    %v7109 = vshrl.u32 %v7108, 7
    %v7110 = vsub.s32 %v7107, %v7109
    %v7111 = vrot.slane %v7097, %v7110
    %v7112 = vcombine.low %v7016, %v7080
    %v7113 = vcombine.high %v7016, %v7080
    %v7115 = vunpack.c.l.s4 1983009808
    %v7116 = vunpack.c.0.s8 %v7115
    %v7117 = vlaneseq
    %v7118 = vshrl.u32 %v7117, 7
    %v7119 = vsub.s32 %v7116, %v7118
    %v7120 = vrot.slane %v7112, %v7119
    %v7122 = vunpack.c.l.s4 1983009808
    %v7123 = vunpack.c.0.s8 %v7122
    %v7124 = vlaneseq
    %v7125 = vshrl.u32 %v7124, 7
    %v7126 = vsub.s32 %v7123, %v7125
    %v7127 = vrot.slane %v7113, %v7126
    %v7128 = vcombine.low %v7104, %v7120
    %v7129 = vcombine.high %v7104, %v7120
    %v7131 = vunpack.c.l.s4 1934713408
    %v7132 = vunpack.c.0.s8 %v7131
    %v7133 = vlaneseq
    %v7134 = vshrl.u32 %v7133, 7
    %v7135 = vsub.s32 %v7132, %v7134
    %v7136 = vrot.slane %v7128, %v7135
    %v7138 = vunpack.c.l.s4 1934713408
    %v7139 = vunpack.c.0.s8 %v7138
    %v7140 = vlaneseq
    %v7141 = vshrl.u32 %v7140, 7
    %v7142 = vsub.s32 %v7139, %v7141
    %v7143 = vrot.slane %v7129, %v7142
    %v7144 = vcombine.low %v7111, %v7127
    %v7145 = vcombine.high %v7111, %v7127
    %v7147 = vunpack.c.l.s4 1934713408
    %v7148 = vunpack.c.0.s8 %v7147
    %v7149 = vlaneseq
    %v7150 = vshrl.u32 %v7149, 7
    %v7151 = vsub.s32 %v7148, %v7150
    %v7152 = vrot.slane %v7144, %v7151
    %v7154 = vunpack.c.l.s4 1934713408
    %v7155 = vunpack.c.0.s8 %v7154
    %v7156 = vlaneseq
    %v7157 = vshrl.u32 %v7156, 7
    %v7158 = vsub.s32 %v7155, %v7157
    %v7159 = vrot.slane %v7145, %v7158
    %v7160 = vcombine.high %v7136, 0.0
    %v7161 = vcombine.high %v7143, 0.0
    %v7162 = vcombine.high %v7152, 0.0
    %v7163 = vcombine.high %v7159, 0.0
    %v7164 = vcombine.low %v6985, %v7049
    %v7165 = vcombine.high %v6985, %v7049
    %v7167 = vunpack.c.l.s4 1983009808
    %v7168 = vunpack.c.0.s8 %v7167
    %v7169 = vlaneseq
    %v7170 = vshrl.u32 %v7169, 7
    %v7171 = vsub.s32 %v7168, %v7170
    %v7172 = vrot.slane %v7164, %v7171
    %v7174 = vunpack.c.l.s4 1983009808
    %v7175 = vunpack.c.0.s8 %v7174
    %v7176 = vlaneseq
    %v7177 = vshrl.u32 %v7176, 7
    %v7178 = vsub.s32 %v7175, %v7177
    %v7179 = vrot.slane %v7165, %v7178
    %v7180 = vcombine.low %v7017, %v7081
    %v7181 = vcombine.high %v7017, %v7081
    %v7183 = vunpack.c.l.s4 1983009808
    %v7184 = vunpack.c.0.s8 %v7183
    %v7185 = vlaneseq
    %v7186 = vshrl.u32 %v7185, 7
    %v7187 = vsub.s32 %v7184, %v7186
    %v7188 = vrot.slane %v7180, %v7187
    %v7190 = vunpack.c.l.s4 1983009808
    %v7191 = vunpack.c.0.s8 %v7190
    %v7192 = vlaneseq
    %v7193 = vshrl.u32 %v7192, 7
    %v7194 = vsub.s32 %v7191, %v7193
    %v7195 = vrot.slane %v7181, %v7194
    %v7196 = vcombine.low %v7172, %v7188
    %v7197 = vcombine.high %v7172, %v7188
    %v7199 = vunpack.c.l.s4 1934713408
    %v7200 = vunpack.c.0.s8 %v7199
    %v7201 = vlaneseq
    %v7202 = vshrl.u32 %v7201, 7
    %v7203 = vsub.s32 %v7200, %v7202
    %v7204 = vrot.slane %v7196, %v7203
    %v7206 = vunpack.c.l.s4 1934713408
    %v7207 = vunpack.c.0.s8 %v7206
    %v7208 = vlaneseq
    %v7209 = vshrl.u32 %v7208, 7
    %v7210 = vsub.s32 %v7207, %v7209
    %v7211 = vrot.slane %v7197, %v7210
    %v7212 = vcombine.low %v7179, %v7195
    %v7213 = vcombine.high %v7179, %v7195
    %v7215 = vunpack.c.l.s4 1934713408
    %v7216 = vunpack.c.0.s8 %v7215
    %v7217 = vlaneseq
    %v7218 = vshrl.u32 %v7217, 7
    %v7219 = vsub.s32 %v7216, %v7218
    %v7220 = vrot.slane %v7212, %v7219
    %v7222 = vunpack.c.l.s4 1934713408
    %v7223 = vunpack.c.0.s8 %v7222
    %v7224 = vlaneseq
    %v7225 = vshrl.u32 %v7224, 7
    %v7226 = vsub.s32 %v7223, %v7225
    %v7227 = vrot.slane %v7213, %v7226
    %v7228 = vcombine.high %v7204, 0.0
    %v7229 = vcombine.high %v7211, 0.0
    %v7230 = vcombine.high %v7220, 0.0
    %v7231 = vcombine.high %v7227, 0.0
    %v7232 = vrcp.pop %v5960
    %v7233 = vrcp.pop %v5963
    %v7234 = vrcp.pop %v5966
    %v7235 = vrcp.pop %v5969
    %v7236 = vrcp.pop %v5972
    %v7237 = vrcp.pop %v5975
    %v7238 = vrcp.pop %v5978
    %v7239 = vrcp.pop %v5981
    %v7248 = vlaneseq
    %v7249 = vshrl.u32 %v7248, 7
    %v7250 = vsub.s32 %v3369, %v7249
    %v7251 = vrot.slane %v7232, %v7250
    %v7252 = vlaneseq
    %v7253 = vshrl.u32 %v7252, 7
    %v7254 = vsub.s32 %v3374, %v7253
    %v7255 = vrot.slane %v7233, %v7254
    %v7256 = vsel %vm3379, %v7255, %v7251
    %v7257 = vlaneseq
    %v7258 = vshrl.u32 %v7257, 7
    %v7259 = vsub.s32 %v3369, %v7258
    %v7260 = vrot.slane %v7234, %v7259
    %v7261 = vlaneseq
    %v7262 = vshrl.u32 %v7261, 7
    %v7263 = vsub.s32 %v3374, %v7262
    %v7264 = vrot.slane %v7235, %v7263
    %v7265 = vsel %vm3379, %v7264, %v7260
    %v7266 = vlaneseq
    %v7267 = vshrl.u32 %v7266, 7
    %v7268 = vsub.s32 %v3369, %v7267
    %v7269 = vrot.slane %v7236, %v7268
    %v7270 = vlaneseq
    %v7271 = vshrl.u32 %v7270, 7
    %v7272 = vsub.s32 %v3374, %v7271
    %v7273 = vrot.slane %v7237, %v7272
    %v7274 = vsel %vm3379, %v7273, %v7269
    %v7275 = vlaneseq
    %v7276 = vshrl.u32 %v7275, 7
    %v7277 = vsub.s32 %v3369, %v7276
    %v7278 = vrot.slane %v7238, %v7277
    %v7279 = vlaneseq
    %v7280 = vshrl.u32 %v7279, 7
    %v7281 = vsub.s32 %v3374, %v7280
    %v7282 = vrot.slane %v7239, %v7281
    %v7283 = vsel %vm3379, %v7282, %v7278
    %v7284 = vsel %vm3408, %v7265, %v7256
    %v7285 = vsel %vm3410, %v7274, %v7284
    %v7286 = vsel %vm3412, %v7283, %v7285
    %7288 = vxpose.xlu0.b32.start [1/16] %v7286, 128
    %7289 = vxpose.xlu0.b32.cont [2/16] 0.0, 128
    %7290 = vxpose.xlu0.b32.cont [3/16] 0.0, 128
    %7291 = vxpose.xlu0.b32.cont [4/16] 0.0, 128
    %7292 = vxpose.xlu0.b32.cont [5/16] 0.0, 128
    %7293 = vxpose.xlu0.b32.cont [6/16] 0.0, 128
    %7294 = vxpose.xlu0.b32.cont [7/16] 0.0, 128
    %7295 = vxpose.xlu0.b32.cont [8/16] 0.0, 128
    %7296 = vxpose.xlu0.b32.cont [9/16] 0.0, 128
    %7297 = vxpose.xlu0.b32.cont [10/16] 0.0, 128
    %7298 = vxpose.xlu0.b32.cont [11/16] 0.0, 128
    %7299 = vxpose.xlu0.b32.cont [12/16] 0.0, 128
    %7300 = vxpose.xlu0.b32.cont [13/16] 0.0, 128
    %7301 = vxpose.xlu0.b32.cont [14/16] 0.0, 128
    %7302 = vxpose.xlu0.b32.cont [15/16] 0.0, 128
    %7303 = vxpose.xlu0.b32.end [16/16] 0.0, 128
    %v7304 = vpop.trf.xlu0
    %v7305 = vpop.trf.xlu0
    %v7306 = vpop.trf.xlu0
    %v7307 = vpop.trf.xlu0
    %v7308 = vpop.trf.xlu0
    %v7309 = vpop.trf.xlu0
    %v7310 = vpop.trf.xlu0
    %v7311 = vpop.trf.xlu0
    %v7312 = vpop.trf.xlu0
    %v7313 = vpop.trf.xlu0
    %v7314 = vpop.trf.xlu0
    %v7315 = vpop.trf.xlu0
    %v7316 = vpop.trf.xlu0
    %v7317 = vpop.trf.xlu0
    %v7318 = vpop.trf.xlu0
    %v7319 = vpop.trf.xlu0
    %v7320 = vlaneseq
    %v7321 = vshrl.u32 %v7320, 7
    %v7322 = vsub.s32 0, %v7321
    %v7323 = vrot.slane %v7304, %v7322
    %7325 = vbcast.lane.b32.xlu0 %v7323, 256
    %v7326 = vpop.permute.xlu0 %7325
    %v7327 = vlaneseq
    %v7328 = vshrl.u32 %v7327, 7
    %v7329 = vsub.s32 1, %v7328
    %v7330 = vrot.slane %v7304, %v7329
    %7332 = vbcast.lane.b32.xlu0 %v7330, 256
    %v7333 = vpop.permute.xlu0 %7332
    %v7334 = vlaneseq
    %v7335 = vshrl.u32 %v7334, 7
    %v7336 = vsub.s32 2, %v7335
    %v7337 = vrot.slane %v7304, %v7336
    %7339 = vbcast.lane.b32.xlu0 %v7337, 256
    %v7340 = vpop.permute.xlu0 %7339
    %v7341 = vlaneseq
    %v7342 = vshrl.u32 %v7341, 7
    %v7343 = vsub.s32 3, %v7342
    %v7344 = vrot.slane %v7304, %v7343
    %7346 = vbcast.lane.b32.xlu0 %v7344, 256
    %v7347 = vpop.permute.xlu0 %7346
    %v7348 = vlaneseq
    %v7349 = vshrl.u32 %v7348, 7
    %v7350 = vsub.s32 4, %v7349
    %v7351 = vrot.slane %v7304, %v7350
    %7353 = vbcast.lane.b32.xlu0 %v7351, 256
    %v7354 = vpop.permute.xlu0 %7353
    %v7355 = vlaneseq
    %v7356 = vshrl.u32 %v7355, 7
    %v7357 = vsub.s32 5, %v7356
    %v7358 = vrot.slane %v7304, %v7357
    %7360 = vbcast.lane.b32.xlu0 %v7358, 256
    %v7361 = vpop.permute.xlu0 %7360
    %v7362 = vlaneseq
    %v7363 = vshrl.u32 %v7362, 7
    %v7364 = vsub.s32 6, %v7363
    %v7365 = vrot.slane %v7304, %v7364
    %7367 = vbcast.lane.b32.xlu0 %v7365, 256
    %v7368 = vpop.permute.xlu0 %7367
    %v7369 = vlaneseq
    %v7370 = vshrl.u32 %v7369, 7
    %v7371 = vsub.s32 7, %v7370
    %v7372 = vrot.slane %v7304, %v7371
    %7374 = vbcast.lane.b32.xlu0 %v7372, 256
    %v7375 = vpop.permute.xlu0 %7374
    %v7376 = vlaneseq
    %v7377 = vshrl.u32 %v7376, 7
    %v7378 = vsub.s32 0, %v7377
    %v7379 = vrot.slane %v7305, %v7378
    %7381 = vbcast.lane.b32.xlu0 %v7379, 256
    %v7382 = vpop.permute.xlu0 %7381
    %v7383 = vlaneseq
    %v7384 = vshrl.u32 %v7383, 7
    %v7385 = vsub.s32 1, %v7384
    %v7386 = vrot.slane %v7305, %v7385
    %7388 = vbcast.lane.b32.xlu0 %v7386, 256
    %v7389 = vpop.permute.xlu0 %7388
    %v7390 = vlaneseq
    %v7391 = vshrl.u32 %v7390, 7
    %v7392 = vsub.s32 2, %v7391
    %v7393 = vrot.slane %v7305, %v7392
    %7395 = vbcast.lane.b32.xlu0 %v7393, 256
    %v7396 = vpop.permute.xlu0 %7395
    %v7397 = vlaneseq
    %v7398 = vshrl.u32 %v7397, 7
    %v7399 = vsub.s32 3, %v7398
    %v7400 = vrot.slane %v7305, %v7399
    %7402 = vbcast.lane.b32.xlu0 %v7400, 256
    %v7403 = vpop.permute.xlu0 %7402
    %v7404 = vlaneseq
    %v7405 = vshrl.u32 %v7404, 7
    %v7406 = vsub.s32 4, %v7405
    %v7407 = vrot.slane %v7305, %v7406
    %7409 = vbcast.lane.b32.xlu0 %v7407, 256
    %v7410 = vpop.permute.xlu0 %7409
    %v7411 = vlaneseq
    %v7412 = vshrl.u32 %v7411, 7
    %v7413 = vsub.s32 5, %v7412
    %v7414 = vrot.slane %v7305, %v7413
    %7416 = vbcast.lane.b32.xlu0 %v7414, 256
    %v7417 = vpop.permute.xlu0 %7416
    %v7418 = vlaneseq
    %v7419 = vshrl.u32 %v7418, 7
    %v7420 = vsub.s32 6, %v7419
    %v7421 = vrot.slane %v7305, %v7420
    %7423 = vbcast.lane.b32.xlu0 %v7421, 256
    %v7424 = vpop.permute.xlu0 %7423
    %v7425 = vlaneseq
    %v7426 = vshrl.u32 %v7425, 7
    %v7427 = vsub.s32 7, %v7426
    %v7428 = vrot.slane %v7305, %v7427
    %7430 = vbcast.lane.b32.xlu0 %v7428, 256
    %v7431 = vpop.permute.xlu0 %7430
    %v7432 = vmul.f32 %v7136, %v7326
    %v7433 = vmul.f32 %v7160, %v7333
    %v7434 = vmul.f32 %v7143, %v7340
    %v7435 = vmul.f32 %v7161, %v7347
    %v7436 = vmul.f32 %v7152, %v7354
    %v7437 = vmul.f32 %v7162, %v7361
    %v7438 = vmul.f32 %v7159, %v7368
    %v7439 = vmul.f32 %v7163, %v7375
    %v7440 = vmul.f32 %v7204, %v7382
    %v7441 = vmul.f32 %v7228, %v7389
    %v7442 = vmul.f32 %v7211, %v7396
    %v7443 = vmul.f32 %v7229, %v7403
    %v7444 = vmul.f32 %v7220, %v7410
    %v7445 = vmul.f32 %v7230, %v7417
    %v7446 = vmul.f32 %v7227, %v7424
    %v7447 = vmul.f32 %v7231, %v7431
    %v7448 = vcombine.low %v7432, %v7434
    %v7450 = vunpack.c.l.s4 1983009808
    %v7451 = vunpack.c.0.s8 %v7450
    %v7452 = vlaneseq
    %v7453 = vshrl.u32 %v7452, 7
    %v7454 = vsub.s32 %v7451, %v7453
    %v7455 = vrot.slane %v7448, %v7454
    %v7456 = vcombine.low %v7433, %v7435
    %v7458 = vunpack.c.l.s4 1983009808
    %v7459 = vunpack.c.0.s8 %v7458
    %v7460 = vlaneseq
    %v7461 = vshrl.u32 %v7460, 7
    %v7462 = vsub.s32 %v7459, %v7461
    %v7463 = vrot.slane %v7456, %v7462
    %v7464 = vcombine.low %v7436, %v7438
    %v7466 = vunpack.c.l.s4 1983009808
    %v7467 = vunpack.c.0.s8 %v7466
    %v7468 = vlaneseq
    %v7469 = vshrl.u32 %v7468, 7
    %v7470 = vsub.s32 %v7467, %v7469
    %v7471 = vrot.slane %v7464, %v7470
    %v7472 = vcombine.low %v7437, %v7439
    %v7474 = vunpack.c.l.s4 1983009808
    %v7475 = vunpack.c.0.s8 %v7474
    %v7476 = vlaneseq
    %v7477 = vshrl.u32 %v7476, 7
    %v7478 = vsub.s32 %v7475, %v7477
    %v7479 = vrot.slane %v7472, %v7478
    %v7480 = vcombine.low %v7455, %v7463
    %v7481 = vcombine.high %v7455, %v7463
    %v7483 = vunpack.c.l.s4 1934713408
    %v7484 = vunpack.c.0.s8 %v7483
    %v7485 = vlaneseq
    %v7486 = vshrl.u32 %v7485, 7
    %v7487 = vsub.s32 %v7484, %v7486
    %v7488 = vrot.slane %v7480, %v7487
    %v7490 = vunpack.c.l.s4 1934713408
    %v7491 = vunpack.c.0.s8 %v7490
    %v7492 = vlaneseq
    %v7493 = vshrl.u32 %v7492, 7
    %v7494 = vsub.s32 %v7491, %v7493
    %v7495 = vrot.slane %v7481, %v7494
    %v7496 = vcombine.low %v7471, %v7479
    %v7497 = vcombine.high %v7471, %v7479
    %v7499 = vunpack.c.l.s4 1934713408
    %v7500 = vunpack.c.0.s8 %v7499
    %v7501 = vlaneseq
    %v7502 = vshrl.u32 %v7501, 7
    %v7503 = vsub.s32 %v7500, %v7502
    %v7504 = vrot.slane %v7496, %v7503
    %v7506 = vunpack.c.l.s4 1934713408
    %v7507 = vunpack.c.0.s8 %v7506
    %v7508 = vlaneseq
    %v7509 = vshrl.u32 %v7508, 7
    %v7510 = vsub.s32 %v7507, %v7509
    %v7511 = vrot.slane %v7497, %v7510
    %v7512 = vcombine.low %v7488, %v7504
    %v7513 = vcombine.high %v7488, %v7504
    %v7514 = vcombine.low %v7495, %v7511
    %v7515 = vcombine.high %v7495, %v7511
    %v7516 = vcombine.low %v7440, %v7442
    %v7518 = vunpack.c.l.s4 1983009808
    %v7519 = vunpack.c.0.s8 %v7518
    %v7520 = vlaneseq
    %v7521 = vshrl.u32 %v7520, 7
    %v7522 = vsub.s32 %v7519, %v7521
    %v7523 = vrot.slane %v7516, %v7522
    %v7524 = vcombine.low %v7441, %v7443
    %v7526 = vunpack.c.l.s4 1983009808
    %v7527 = vunpack.c.0.s8 %v7526
    %v7528 = vlaneseq
    %v7529 = vshrl.u32 %v7528, 7
    %v7530 = vsub.s32 %v7527, %v7529
    %v7531 = vrot.slane %v7524, %v7530
    %v7532 = vcombine.low %v7444, %v7446
    %v7534 = vunpack.c.l.s4 1983009808
    %v7535 = vunpack.c.0.s8 %v7534
    %v7536 = vlaneseq
    %v7537 = vshrl.u32 %v7536, 7
    %v7538 = vsub.s32 %v7535, %v7537
    %v7539 = vrot.slane %v7532, %v7538
    %v7540 = vcombine.low %v7445, %v7447
    %v7542 = vunpack.c.l.s4 1983009808
    %v7543 = vunpack.c.0.s8 %v7542
    %v7544 = vlaneseq
    %v7545 = vshrl.u32 %v7544, 7
    %v7546 = vsub.s32 %v7543, %v7545
    %v7547 = vrot.slane %v7540, %v7546
    %v7548 = vcombine.low %v7523, %v7531
    %v7549 = vcombine.high %v7523, %v7531
    %v7551 = vunpack.c.l.s4 1934713408
    %v7552 = vunpack.c.0.s8 %v7551
    %v7553 = vlaneseq
    %v7554 = vshrl.u32 %v7553, 7
    %v7555 = vsub.s32 %v7552, %v7554
    %v7556 = vrot.slane %v7548, %v7555
    %v7558 = vunpack.c.l.s4 1934713408
    %v7559 = vunpack.c.0.s8 %v7558
    %v7560 = vlaneseq
    %v7561 = vshrl.u32 %v7560, 7
    %v7562 = vsub.s32 %v7559, %v7561
    %v7563 = vrot.slane %v7549, %v7562
    %v7564 = vcombine.low %v7539, %v7547
    %v7565 = vcombine.high %v7539, %v7547
    %v7567 = vunpack.c.l.s4 1934713408
    %v7568 = vunpack.c.0.s8 %v7567
    %v7569 = vlaneseq
    %v7570 = vshrl.u32 %v7569, 7
    %v7571 = vsub.s32 %v7568, %v7570
    %v7572 = vrot.slane %v7564, %v7571
    %v7574 = vunpack.c.l.s4 1934713408
    %v7575 = vunpack.c.0.s8 %v7574
    %v7576 = vlaneseq
    %v7577 = vshrl.u32 %v7576, 7
    %v7578 = vsub.s32 %v7575, %v7577
    %v7579 = vrot.slane %v7565, %v7578
    %v7580 = vcombine.low %v7556, %v7572
    %v7581 = vcombine.high %v7556, %v7572
    %v7582 = vcombine.low %v7563, %v7579
    %v7583 = vcombine.high %v7563, %v7579
    %7586 = vrot.lane.b32.xlu0 %v7513, 8
    %v7587 = vpop.permute.xlu0 %7586
    %7588 = vrot.lane.b32.xlu0 %v7581, 8
    %v7589 = vpop.permute.xlu0 %7588
    %7594 = vrot.lane.b32.xlu0 %v7514, 16
    %v7595 = vpop.permute.xlu0 %7594
    %7596 = vrot.lane.b32.xlu0 %v7582, 16
    %v7597 = vpop.permute.xlu0 %7596
    %7602 = vrot.lane.b32.xlu0 %v7515, 24
    %v7603 = vpop.permute.xlu0 %7602
    %7604 = vrot.lane.b32.xlu0 %v7583, 24
    %v7605 = vpop.permute.xlu0 %7604
    %v7608 = vsel %vm3735, %v7512, %v7587
    %v7609 = vsel %vm3735, %v7580, %v7589
    %v7610 = vsel %vm217, %v7608, %v7595
    %v7611 = vsel %vm217, %v7609, %v7597
    %v7612 = vsel %vm3740, %v7610, %v7603
    %v7613 = vsel %vm3740, %v7611, %v7605
    %v7614 = vpack.c.bf16 %v7613, %v7612
    %s7615 = scalar_lea.vmem %s8, 16
    %v7616 = vld [vmem:[%s7615] sm:$0xf]
    %v7617 = vld [vmem:[%s7615 + $0x4] sm:$0xf]
    %v7618 = vld [vmem:[%s7615 + $0x8] sm:$0xf]
    %v7619 = vld [vmem:[%s7615 + $0xc] sm:$0xf]
    %v7624 = vunpack.c.l.b16 %v7616
    %v7625 = vunpack.c.l.b16 %v7617
    %v7626 = vunpack.c.l.b16 %v7618
    %v7627 = vunpack.c.l.b16 %v7619
    %v7628 = vpack.c.b16 %v7625, %v7624
    %v7629 = vpack.c.b16 %v7627, %v7626
    %v7633 = vsel %vm109, %v7614, 0
    %7635 = vmatprep.subr.bf16.mxu0 0
    %7636 = vmatpush1.bf16.msra.mxu0 0
    %7637 = vmatprep.subr.bf16.mxu0 0
    %7638 = vmatpush1.bf16.msra.mxu0 0
    %7639 = vmatprep.subr.bf16.mxu0 0
    %7640 = vmatpush1.bf16.msra.mxu0 0
    %7641 = vmatprep.subr.bf16.mxu0 0
    %7642 = vmatpush1.bf16.msra.mxu0 0
    %7643 = vmatprep.subr.bf16.mxu0 0
    %7644 = vmatpush1.bf16.msra.mxu0 0
    %7645 = vmatprep.subr.bf16.mxu0 0
    %7646 = vmatpush1.bf16.msra.mxu0 0
    %7647 = vmatprep.subr.bf16.mxu0 0
    %7648 = vmatpush1.bf16.msra.mxu0 %v7629
    %7649 = vmatprep.subr.bf16.mxu0 0
    %7650 = vmatpush1.bf16.msra.mxu0 %v7628
    %7651 = vmatprep.subr.bf16.mxu0 0
    %7652 = vmatpush2.bf16.msra.mxu0 0
    %7653 = vmatprep.subr.bf16.mxu0 0
    %7654 = vmatpush2.bf16.msra.mxu0 0
    %7655 = vmatprep.subr.bf16.mxu0 0
    %7656 = vmatpush2.bf16.msra.mxu0 0
    %7657 = vmatprep.subr.bf16.mxu0 0
    %7658 = vmatpush2.bf16.msra.mxu0 0
    %7659 = vmatprep.subr.bf16.mxu0 0
    %7660 = vmatpush2.bf16.msra.mxu0 0
    %7661 = vmatprep.subr.bf16.mxu0 0
    %7662 = vmatpush2.bf16.msra.mxu0 0
    %7663 = vmatprep.subr.bf16.mxu0 0
    %7664 = vmatpush2.bf16.msra.mxu0 0
    %7665 = vmatprep.subr.bf16.mxu0 0
    %7666 = vmatpush2.bf16.msra.mxu0 0
    %7667 = vmatprep.mubr.bf16.mxu0 0
    %7668 = vmatmul.mubr.bf16.gmra.mxu0 %v7633
    %v7669 = vpop.f32.mrf.mxu0
    %v7670 = vadd.f32 0.0, %v7669
    %v7671 = vpop.f32.mrf.mxu0
    %v7672 = vpop.f32.mrf.mxu0
    %v7673 = vadd.f32 0.0, %v7672
    %v7674 = vpop.f32.mrf.mxu0
    %7675 = vdwg.mxu0
    %v7676 = vadd.f32 %v3994, %v7670
    %v7677 = vadd.f32 %v3995, %v7673
    %s7678 = scalar_lea.vmem %s9, 1
    %v7679 = vld [vmem:[%s7678] sm:$0x1]
    %v7680 = vmul.f32 %v7676, %v7676
    %v7681 = vmul.f32 %v7677, %v7677
    %v7682 = vsel %vm109, %v7680, 0.0
    %7683 = vadd.xlane.f32.xlu0 %v7682
    %v7684 = vpop.xlane.xlu0 %7683
    %v7685 = vsel %vm109, %v7681, 0.0
    %7686 = vadd.xlane.f32.xlu0 %v7685
    %v7687 = vpop.xlane.xlu0 %7686
    %v7688 = vmul.f32 %v7684, %v116
    %v7689 = vmul.f32 %v7687, %v116
    %v7690 = vadd.f32 %v7688, 1e-06
    %v7691 = vadd.f32 %v7689, 1e-06
    %v7692 = vrsqrt.pop %v7690
    %v7693 = vrsqrt.pop %v7691
    %v7694 = vmul.f32 %v7676, %v7692
    %v7695 = vmul.f32 %v7677, %v7693
    %v7697 = vlaneseq
    %v7698 = vshrl.u32 %v7697, 7
    %v7699 = vsub.s32 0, %v7698
    %v7700 = vrot.slane %v7679, %v7699
    %v7702 = vmul.f32 %v7694, %v7700
    %v7703 = vmul.f32 %v7695, %v7700
    %v7704 = vpack.c.bf16 %v7703, %v7702
    %s7705 = scalar_lea.vmem %s10, 16
    %v7706 = vld [vmem:[%s7705] sm:$0xf]
    %v7707 = vld [vmem:[%s7705 + $0x4] sm:$0xf]
    %v7708 = vld [vmem:[%s7705 + $0x8] sm:$0xf]
    %v7709 = vld [vmem:[%s7705 + $0xc] sm:$0xf]
    %v7714 = vunpack.c.l.b16 %v7706
    %v7715 = vunpack.c.l.b16 %v7707
    %v7716 = vunpack.c.l.b16 %v7708
    %v7717 = vunpack.c.l.b16 %v7709
    %v7718 = vpack.c.b16 %v7715, %v7714
    %v7719 = vpack.c.b16 %v7717, %v7716
    %v7723 = vsel %vm109, %v7704, 0
    %7725 = vmatprep.subr.bf16.mxu0 0
    %7726 = vmatpush1.bf16.msra.mxu0 0
    %7727 = vmatprep.subr.bf16.mxu0 0
    %7728 = vmatpush1.bf16.msra.mxu0 0
    %7729 = vmatprep.subr.bf16.mxu0 0
    %7730 = vmatpush1.bf16.msra.mxu0 0
    %7731 = vmatprep.subr.bf16.mxu0 0
    %7732 = vmatpush1.bf16.msra.mxu0 0
    %7733 = vmatprep.subr.bf16.mxu0 0
    %7734 = vmatpush1.bf16.msra.mxu0 0
    %7735 = vmatprep.subr.bf16.mxu0 0
    %7736 = vmatpush1.bf16.msra.mxu0 0
    %7737 = vmatprep.subr.bf16.mxu0 0
    %7738 = vmatpush1.bf16.msra.mxu0 %v7719
    %7739 = vmatprep.subr.bf16.mxu0 0
    %7740 = vmatpush1.bf16.msra.mxu0 %v7718
    %7741 = vmatprep.subr.bf16.mxu0 0
    %7742 = vmatpush2.bf16.msra.mxu0 0
    %7743 = vmatprep.subr.bf16.mxu0 0
    %7744 = vmatpush2.bf16.msra.mxu0 0
    %7745 = vmatprep.subr.bf16.mxu0 0
    %7746 = vmatpush2.bf16.msra.mxu0 0
    %7747 = vmatprep.subr.bf16.mxu0 0
    %7748 = vmatpush2.bf16.msra.mxu0 0
    %7749 = vmatprep.subr.bf16.mxu0 0
    %7750 = vmatpush2.bf16.msra.mxu0 0
    %7751 = vmatprep.subr.bf16.mxu0 0
    %7752 = vmatpush2.bf16.msra.mxu0 0
    %7753 = vmatprep.subr.bf16.mxu0 0
    %7754 = vmatpush2.bf16.msra.mxu0 0
    %7755 = vmatprep.subr.bf16.mxu0 0
    %7756 = vmatpush2.bf16.msra.mxu0 0
    %7757 = vmatprep.mubr.bf16.mxu0 0
    %7758 = vmatmul.mubr.bf16.gmra.mxu0 %v7723
    %v7759 = vpop.f32.mrf.mxu0
    %v7760 = vadd.f32 0.0, %v7759
    %v7761 = vpop.f32.mrf.mxu0
    %v7762 = vpop.f32.mrf.mxu0
    %v7763 = vadd.f32 0.0, %v7762
    %v7764 = vpop.f32.mrf.mxu0
    %7765 = vdwg.mxu0
    %v7766 = vxor.u32 %v7760, 2147483648
    %v7767 = vxor.u32 %v7763, 2147483648
    %v7768 = vmul.f32 %v7766, 1.442695
    %v7769 = vpow.pop %v7768
    %v7770 = vmul.f32 %v7767, 1.442695
    %v7771 = vpow.pop %v7770
    %v7772 = vadd.f32 %v7769, 1.0
    %v7773 = vadd.f32 %v7771, 1.0
    %v7774 = vrcp.pop %v7772
    %v7775 = vmul.f32 1.0, %v7774
    %v7776 = vrcp.pop %v7773
    %v7777 = vmul.f32 1.0, %v7776
    %v7778 = vmul.f32 %v7760, %v7775
    %v7779 = vmul.f32 %v7763, %v7777
    %7782 = vrot.lane.b32.xlu0 %v7760, 64
    %v7783 = vpop.permute.xlu0 %7782
    %7784 = vrot.lane.b32.xlu0 %v7763, 64
    %v7785 = vpop.permute.xlu0 %7784
    %v7788 = vmul.f32 %v7778, %v7783
    %v7789 = vmul.f32 %v7779, %v7785
    %v7790 = vpack.c.bf16 %v7789, %v7788
    %s7791 = scalar_lea.vmem %s11, 32
    %v7792 = vld [vmem:[%s7791] sm:$0xf]
    %v7793 = vld [vmem:[%s7791 + $0x4] sm:$0xf]
    %v7794 = vld [vmem:[%s7791 + $0x8] sm:$0xf]
    %v7795 = vld [vmem:[%s7791 + $0xc] sm:$0xf]
    %v7796 = vld [vmem:[%s7791 + $0x10] sm:$0xf]
    %v7797 = vld [vmem:[%s7791 + $0x14] sm:$0xf]
    %v7798 = vld [vmem:[%s7791 + $0x18] sm:$0xf]
    %v7799 = vld [vmem:[%s7791 + $0x1c] sm:$0xf]
    %v7808 = vunpack.c.l.b16 %v7792
    %v7809 = vunpack.c.l.b16 %v7793
    %v7810 = vunpack.c.l.b16 %v7794
    %v7811 = vunpack.c.l.b16 %v7795
    %v7812 = vunpack.c.l.b16 %v7796
    %v7813 = vunpack.c.l.b16 %v7797
    %v7814 = vunpack.c.l.b16 %v7798
    %v7815 = vunpack.c.l.b16 %v7799
    %v7816 = vpack.c.b16 %v7809, %v7808
    %v7817 = vpack.c.b16 %v7811, %v7810
    %v7818 = vpack.c.b16 %v7813, %v7812
    %v7819 = vpack.c.b16 %v7815, %v7814
    %v7825 = vsel %vm3949, %v7790, 0
    %7827 = vmatprep.subr.bf16.mxu0 0
    %7828 = vmatpush1.bf16.msra.mxu0 0
    %7829 = vmatprep.subr.bf16.mxu0 0
    %7830 = vmatpush1.bf16.msra.mxu0 0
    %7831 = vmatprep.subr.bf16.mxu0 0
    %7832 = vmatpush1.bf16.msra.mxu0 0
    %7833 = vmatprep.subr.bf16.mxu0 0
    %7834 = vmatpush1.bf16.msra.mxu0 0
    %7835 = vmatprep.subr.bf16.mxu0 0
    %7836 = vmatpush1.bf16.msra.mxu0 %v7819
    %7837 = vmatprep.subr.bf16.mxu0 0
    %7838 = vmatpush1.bf16.msra.mxu0 %v7818
    %7839 = vmatprep.subr.bf16.mxu0 0
    %7840 = vmatpush1.bf16.msra.mxu0 %v7817
    %7841 = vmatprep.subr.bf16.mxu0 0
    %7842 = vmatpush1.bf16.msra.mxu0 %v7816
    %7843 = vmatprep.subr.bf16.mxu0 0
    %7844 = vmatpush2.bf16.msra.mxu0 0
    %7845 = vmatprep.subr.bf16.mxu0 0
    %7846 = vmatpush2.bf16.msra.mxu0 0
    %7847 = vmatprep.subr.bf16.mxu0 0
    %7848 = vmatpush2.bf16.msra.mxu0 0
    %7849 = vmatprep.subr.bf16.mxu0 0
    %7850 = vmatpush2.bf16.msra.mxu0 0
    %7851 = vmatprep.subr.bf16.mxu0 0
    %7852 = vmatpush2.bf16.msra.mxu0 0
    %7853 = vmatprep.subr.bf16.mxu0 0
    %7854 = vmatpush2.bf16.msra.mxu0 0
    %7855 = vmatprep.subr.bf16.mxu0 0
    %7856 = vmatpush2.bf16.msra.mxu0 0
    %7857 = vmatprep.subr.bf16.mxu0 0
    %7858 = vmatpush2.bf16.msra.mxu0 0
    %7859 = vmatprep.mubr.bf16.mxu0 0
    %7860 = vmatmul.mubr.bf16.gmra.mxu0 %v7825
    %v7861 = vpop.f32.mrf.mxu0
    %v7862 = vadd.f32 0.0, %v7861
    %v7863 = vpop.f32.mrf.mxu0
    %v7864 = vpop.f32.mrf.mxu0
    %v7865 = vadd.f32 0.0, %v7864
    %v7866 = vpop.f32.mrf.mxu0
    %7867 = vdwg.mxu0
    %v7868 = vadd.f32 %v7676, %v7862
    %v7869 = vadd.f32 %v7677, %v7865
    %v7870 = vld [vmem:[%s4] sm:$0x1]
    %v7871 = vmul.f32 %v7868, %v7868
    %v7872 = vmul.f32 %v7869, %v7869
    %v7873 = vsel %vm109, %v7871, 0.0
    %7874 = vadd.xlane.f32.xlu0 %v7873
    %v7875 = vpop.xlane.xlu0 %7874
    %v7876 = vsel %vm109, %v7872, 0.0
    %7877 = vadd.xlane.f32.xlu0 %v7876
    %v7878 = vpop.xlane.xlu0 %7877
    %v7879 = vmul.f32 %v7875, %v116
    %v7880 = vmul.f32 %v7878, %v116
    %v7881 = vadd.f32 %v7879, 1e-06
    %v7882 = vadd.f32 %v7880, 1e-06
    %v7883 = vrsqrt.pop %v7881
    %v7884 = vrsqrt.pop %v7882
    %v7885 = vmul.f32 %v7868, %v7883
    %v7886 = vmul.f32 %v7869, %v7884
    %v7888 = vlaneseq
    %v7889 = vshrl.u32 %v7888, 7
    %v7890 = vsub.s32 0, %v7889
    %v7891 = vrot.slane %v7870, %v7890
    %v7893 = vmul.f32 %v7885, %v7891
    %v7894 = vmul.f32 %v7886, %v7891
    %v7895 = vpack.c.bf16 %v7894, %v7893
    %v7897 = vunpack.c.l.b16 %v7895
    %v7898 = vunpack.c.h.b16 %v7895
    %v7899 = vpack.c.b16 %v7897, %v7897
    %v7900 = vpack.c.b16 %v7898, %v7898
    %vm7903 = vcmask 257024
    %7904 = vst.msk [vmem:[#allocation10] sm:$0xf] %vm7903, %v7899
    %7905 = vst.msk [vmem:[#allocation10 + $0x4] sm:$0xf] %vm7903, %v7900
    // Predicated region
    $region66: #{tpu_custom_call.1} parent=1 // pred_check
      _
    $region67: #{tpu_custom_call.1} parent=1 // pred_check_branch
      %7907 = sbr.rel (0) target = $region69
    $region68: #{tpu_custom_call.1} parent=1 // pred_region
      %s7909 = ssub.s32 128, 128
      %7910 = vsyncadd [#allocation4], %s7909
      %s7911 = sshll.u32 [#allocation10], 4
      %s7912 = int_to_ptr.vmem [resolvable:$true] %s7911
      %7917 = dma.vmem_to_hbm [thread:$0]  %s7912, 128, %s12, [#allocation4], 64, 64, 4
    $region69: #{tpu_custom_call.1} parent=1 // pred_fallthru
      _
    // Predicated region
    $region70: #{tpu_custom_call.1} parent=1 // pred_check
      _
    $region71: #{tpu_custom_call.1} parent=1 // pred_check_branch
      %7919 = sbr.rel (0) target = $region73
    $region72: #{tpu_custom_call.1} parent=1 // pred_region
      %7920 = dma.done [#allocation4], 128
    $region73: #{tpu_custom_call.1} parent=1 // pred_fallthru
      _
    %7921 = vsyncpa [#allocation3], 1
    %7922 = vsyncpa [#allocation6], 1
    %7923 = vsyncpa [#allocation9], 1
    %7924 = vsyncpa [#allocation4], 1

</llo_original>
